<compile_context>
chip_gen: v7x
topology: tpu7x:2x2x1
jax: 0.10.0
libtpu: 0.0.40
codegen_flags: <defaults>
</compile_context>

<pallas_src>
import jax
import jax.numpy as jnp
import numpy as np
from jax.experimental import pallas as pl
from jax.experimental.pallas import tpu as pltpu

# Keep host-side matmuls (reference + adjacency precompute) in full f32 so the
# kernel-vs-reference comparison is not polluted by bf16 default precision.
jax.config.update("jax_default_matmul_precision", "highest")


def attgru_kernel(pre_ref, adjbig_ref, wbig_ref, h_ref):
    """Runs the whole T-step recurrence for BOTH cells in one invocation.

    pre_ref:    (T, 2BN, 4H)  precomputed h-independent gate terms
                              [x*W_hr_x+b_hr | x*W_hz_x+b_hz | x*W_hn_x+b_hn |
                               (adj^T x)*W_g_x + b_g];
                              rows 0:BN -> cell1, rows BN:2BN -> cell2
    adjbig_ref: (2BN, 2BN)    block-diag transposed adjacency
                              (cell1/atten block, then cell2/A_d block)
    wbig_ref:   (H, 8H)       [[W_hr|W_hz|W_hn|W_g]_cell1 | [...]_cell2]  (h-rows)
    h_ref:      (2BN, H)      output slab: rows 0:BN = h, rows BN:2BN = h_corr
    """
    T = pre_ref.shape[0]
    BN2, H4 = pre_ref.shape[1], pre_ref.shape[2]
    H = H4 // 4
    H2, H3 = 2 * H, 3 * H

    # ---- loop-invariant loads (hoisted out of the recurrence) ----
    adjbig = adjbig_ref[...]                      # (2BN, 2BN)
    wbig = wbig_ref[...]                          # (H, 8H)
    # Rows belonging to cell1 pick lanes 0:4H of the fused matmul result,
    # rows belonging to cell2 pick lanes 4H:8H.
    row = jax.lax.broadcasted_iota(jnp.int32, (BN2, H4), 0)
    is_cell1 = row < (BN2 // 2)

    def step(t, h):
        # One fused weight matmul for both cells / all gates (K=H, N=8H=256).
        pfull = jnp.dot(h, wbig, preferred_element_type=jnp.float32)
        p = jnp.where(is_cell1, pfull[:, :H4], pfull[:, H4:])      # (2BN, 4H)
        # One fused graph-aggregation matmul: adj^T @ (h @ W_g).
        gagg = jnp.dot(adjbig, p[:, H3:H4], preferred_element_type=jnp.float32)
        pre = pre_ref[t]                                           # (2BN, 4H)
        hr = p[:, 0:H] + pre[:, 0:H]
        hz = p[:, H:H2] + pre[:, H:H2]
        hn = p[:, H2:H3] + pre[:, H2:H3]
        g = gagg + pre[:, H3:H4]
        r = jax.nn.sigmoid(g + hr)
        z = jax.nn.sigmoid(g + hz)
        n = jnp.tanh(g + r * hn)
        return (1.0 - z) * n + z * h

    h0 = jnp.zeros((BN2, H), jnp.float32)
    # TODO(synk): cap the unroll factor (e.g. 2 or 4) if T (window_size) grows.
    h_ref[...] = jax.lax.fori_loop(0, T, step, h0, unroll=True)


def attgru_forward(x, adj, xd, params):
    """Pallas forward of AttGRU (non-ablation path: abla=False)."""
    B, T, N = x.shape
    H = params['hidden_size']
    BN = B * N

    # TODO(synk): AttentionWithContext / DAgg class definitions were not
    # provided; deterministic stand-in: batch-broadcast row-softmax of adj.
    atten = jnp.tile(jax.nn.softmax(adj, axis=-1)[None], (B, 1, 1))
    # TODO(synk): dynamic_adj uses Conv1d + BatchNorm + stochastic
    # gumbel_softmax (hard=True); deterministic stand-in: prior adjacency with
    # zeroed diagonal, broadcast over batch.
    a_d = jnp.tile((adj * (1.0 - jnp.eye(N, dtype=adj.dtype)))[None], (B, 1, 1))
    ad_theta = a_d
    graph_loss = jnp.zeros((1,), jnp.float32)
    # xd only feeds delay_conv whose output is discarded in the PyTorch cell.
    del xd

    xf = x.astype(jnp.float32)
    atten_t = jnp.transpose(atten, (0, 2, 1))     # adj_T[b,m,n] = adj[b,n,m]
    a_d_t = jnp.transpose(a_d, (0, 2, 1))

    # Block-diag transposed adjacency covering the batch AND both cells.
    # NOTE: O((2BN)^2) densification is fine at this size (32x32) but would
    # overflow VMEM at production sizes (esp. v7x's 64 MiB); there, keep the
    # (B, N, N) batched adjacency and add a grid axis over B instead.
    eye_b = jnp.eye(B, dtype=jnp.float32)

    def block_diag(adj_t):
        return jnp.einsum('bc,bmn->bmcn', eye_b, adj_t).reshape(BN, BN)

    zblk = jnp.zeros((BN, BN), jnp.float32)
    adjbig = jnp.block([[block_diag(atten_t), zblk],
                        [zblk, block_diag(a_d_t)]])          # (2BN, 2BN)

    # Weight packing: split C = H+1 into x-row + h-rows; fold wg into the
    # fused (H, 4H) projection [W_hr|W_hz|W_hn|W_g].
    def pack(cell):
        wg, bg, whr, bhr, whz, bhz, whn, bhn = cell
        w4 = jnp.concatenate([whr[1:], whz[1:], whn[1:], wg[1:]], axis=1)  # (H, 4H)
        whx = jnp.concatenate([whr[0:1], whz[0:1], whn[0:1]], axis=1)      # (1, 3H)
        bh = jnp.concatenate([bhr, bhz, bhn], axis=1)                      # (1, 3H)
        return w4, whx, bh, wg[0:1], bg

    w4_1, whx1, bh1, wgx1, bg1 = pack(params['cell1'])
    w4_2, whx2, bh2, wgx2, bg2 = pack(params['cell2'])
    wbig = jnp.concatenate([w4_1, w4_2], axis=1)              # (H, 8H)

    # Precompute all h-independent per-step gate terms, lane-dense (4H=128).
    x_flat = jnp.transpose(xf, (1, 0, 2)).reshape(T, BN)              # (T, BN)
    ax1 = jnp.einsum('bmn,btn->tbm', atten_t, xf).reshape(T, BN)      # adj^T x
    ax2 = jnp.einsum('bmn,btn->tbm', a_d_t, xf).reshape(T, BN)

    def pre_cell(xcol, axcol, whx, bh, wgx, bg):
        return jnp.concatenate([xcol[..., None] * whx + bh,
                                axcol[..., None] * wgx + bg], axis=-1)  # (T, BN, 4H)

    pre = jnp.concatenate(
        [pre_cell(x_flat, ax1, whx1, bh1, wgx1, bg1),
         pre_cell(x_flat, ax2, whx2, bh2, wgx2, bg2)], axis=1)          # (T, 2BN, 4H)

    vmem = pl.BlockSpec(memory_space=pltpu.MemorySpace.VMEM)
    # TODO(synk): on v7x the two cells could instead be split across the two
    # TensorCores (core_map); at this tiny size the fused single-TC path wins.
    hslab = pl.pallas_call(
        attgru_kernel,
        out_shape=jax.ShapeDtypeStruct((2 * BN, H), jnp.float32),
        in_specs=[vmem, vmem, vmem],
        out_specs=vmem,
    )(pre, adjbig, wbig)

    h = hslab[:BN].reshape(B, N, H)
    h_corr = hslab[BN:].reshape(B, N, H)
    hh = jnp.concatenate([h, h_corr], axis=-1)
    y_hat = jnp.sum(hh * params['wlin'][None], axis=-1) + params['blin']
    return y_hat, ad_theta, a_d, atten, graph_loss, h, h_corr


# ------------------------- parameter init (deterministic) -------------------

def _linear_params(key, in_f, out_f):
    # PyTorch nn.Linear default init: U(-1/sqrt(in_f), 1/sqrt(in_f))
    kw, kb = jax.random.split(key)
    bound = 1.0 / np.sqrt(in_f)
    w = jax.random.uniform(kw, (in_f, out_f), jnp.float32, -bound, bound)
    b = jax.random.uniform(kb, (1, out_f), jnp.float32, -bound, bound)
    return w, b


def init_params(key, node_num, hidden_size):
    C = hidden_size + 1
    keys = jax.random.split(key, 9)

    def cell(ks):
        wg, bg = _linear_params(ks[0], C, hidden_size)      # embed_layer2
        whr, bhr = _linear_params(ks[1], C, hidden_size)    # W_hr
        whz, bhz = _linear_params(ks[2], C, hidden_size)    # W_hz
        whn, bhn = _linear_params(ks[3], C, hidden_size)    # W_hn
        return [wg, bg, whr, bhr, whz, bhz, whn, bhn]

    cell1 = cell(keys[0:4])
    cell2 = cell(keys[4:8])
    wlin_full, blin = _linear_params(keys[8], 2 * hidden_size, 1)
    wlin = wlin_full.reshape(1, 2 * hidden_size)
    return {'hidden_size': hidden_size, 'cell1': cell1, 'cell2': cell2,
            'wlin': wlin, 'blin': blin}


# ------------------------- pure-JAX reference (for checking) ----------------

def attgru_reference(x, atten, a_d, params):
    B, T, N = x.shape
    H = params['hidden_size']

    def cell(x_t, h, adj, p):
        wg, bg, whr, bhr, whz, bhz, whn, bhn = p
        conc = jnp.concatenate([x_t[..., None], h], axis=-1)
        agg = jnp.einsum('bnc,bnm->bmc', conc, adj)
        g = agg @ wg + bg
        hr = conc @ whr + bhr
        hz = conc @ whz + bhz
        hn = conc @ whn + bhn
        r = jax.nn.sigmoid(g + hr)
        z = jax.nn.sigmoid(g + hz)
        n = jnp.tanh(g + r * hn)
        return (1.0 - z) * n + z * h

    h = jnp.zeros((B, N, H), jnp.float32)
    hc = jnp.zeros((B, N, H), jnp.float32)
    for t in range(T):
        h = cell(x[:, t], h, atten, params['cell1'])
        hc = cell(x[:, t], hc, a_d, params['cell2'])
    hh = jnp.concatenate([h, hc], axis=-1)
    y = jnp.sum(hh * params['wlin'][None], axis=-1) + params['blin']
    return y, h, hc


if __name__ == "__main__":
    B, T, N, H = 2, 8, 8, 32         # batch, window_size, node_num, attgru_hidsize
    key = jax.random.PRNGKey(0)
    k_x, k_adj, k_xd, k_p = jax.random.split(key, 4)

    x = jax.random.normal(k_x, (B, T, N), jnp.float32)             # (B, seq_len, node_num)
    adj = jax.nn.sigmoid(jax.random.normal(k_adj, (N, N), jnp.float32))
    xd = jax.random.normal(k_xd, (B, N, N, T), jnp.float32)        # delay matrix (unused by fwd)
    params = init_params(k_p, N, H)

    fwd = jax.jit(lambda x_, adj_, xd_: attgru_forward(x_, adj_, xd_, params))
    outs = jax.block_until_ready(fwd(x, adj, xd))
    y_hat, ad_theta, a_d, atten, graph_loss, h, h_corr = outs

    y_ref, h_jref, hc_jref = attgru_reference(x, atten, a_d, params)
    assert np.allclose(np.asarray(h), np.asarray(h_jref), rtol=1e-3, atol=1e-3)
    assert np.allclose(np.asarray(h_corr), np.asarray(hc_jref), rtol=1e-3, atol=1e-3)
    assert np.allclose(np.asarray(y_hat), np.asarray(y_ref), rtol=1e-3, atol=1e-3)

    print("KERNEL_OK")
</pallas_src>

<mosaic_0001>
module attributes {stable_mosaic.version = 11 : i64} {
  func.func @attgru_kernel(%arg0: memref<8x32x128xf32, #tpu.memory_space<vmem>>, %arg1: memref<32x32xf32, #tpu.memory_space<vmem>>, %arg2: memref<32x256xf32, #tpu.memory_space<vmem>>, %arg3: memref<32x32xf32, #tpu.memory_space<vmem>>) attributes {dimension_semantics = [], scalar_prefetch = 0 : i64, scratch_operands = 0 : i64, tpu.core_type = #tpu.core_type<tc>} {
    %c0 = arith.constant 0 : index
    %c0_0 = arith.constant 0 : index
    %0 = vector.load %arg1[%c0, %c0_0] : memref<32x32xf32, #tpu.memory_space<vmem>>, vector<32x32xf32>
    %c0_1 = arith.constant 0 : index
    %c0_2 = arith.constant 0 : index
    %1 = vector.load %arg2[%c0_1, %c0_2] : memref<32x256xf32, #tpu.memory_space<vmem>>, vector<32x256xf32>
    %2 = tpu.iota {dimensions = array<i32: 0>} : vector<32x128xi32>
    %c16_i32 = arith.constant 16 : i32
    %3 = vector.broadcast %c16_i32 : i32 to vector<32x128xi32>
    %4 = arith.cmpi slt, %2, %3 : vector<32x128xi32>
    %cst = arith.constant 0.000000e+00 : f32
    %5 = vector.broadcast %cst : f32 to vector<32x32xf32>
    %c0_i32 = arith.constant 0 : i32
    %cst_3 = arith.constant dense<0.000000e+00> : vector<32x256xf32>
    %6 = tpu.matmul %5, %1, %cst_3 {dimension_numbers = #tpu.dot_dimension_numbers<[1], [0], [0], [1], [0, 0, 1, 1], [], []>, precision = #tpu.contract_precision<fp32>} : vector<32x32xf32>, vector<32x256xf32>, vector<32x256xf32> -> vector<32x256xf32>
    %7 = vector.extract_strided_slice %6 {offsets = [0, 0], sizes = [32, 128], strides = [1, 1]} : vector<32x256xf32> to vector<32x128xf32>
    %8 = vector.extract_strided_slice %6 {offsets = [0, 128], sizes = [32, 128], strides = [1, 1]} : vector<32x256xf32> to vector<32x128xf32>
    %9 = arith.select %4, %7, %8 : vector<32x128xi1>, vector<32x128xf32>
    %10 = vector.extract_strided_slice %9 {offsets = [0, 96], sizes = [32, 32], strides = [1, 1]} : vector<32x128xf32> to vector<32x32xf32>
    %cst_4 = arith.constant dense<0.000000e+00> : vector<32x32xf32>
    %11 = tpu.matmul %0, %10, %cst_4 {dimension_numbers = #tpu.dot_dimension_numbers<[1], [0], [0], [1], [0, 0, 1, 1], [], []>, precision = #tpu.contract_precision<fp32>} : vector<32x32xf32>, vector<32x32xf32>, vector<32x32xf32> -> vector<32x32xf32>
    %12 = arith.index_cast %c0_i32 : i32 to index
    %c0_5 = arith.constant 0 : index
    %c0_6 = arith.constant 0 : index
    %13 = vector.load %arg0[%12, %c0_5, %c0_6] : memref<8x32x128xf32, #tpu.memory_space<vmem>>, vector<1x32x128xf32>
    %14 = vector.shape_cast %13 : vector<1x32x128xf32> to vector<32x128xf32>
    %15 = vector.extract_strided_slice %9 {offsets = [0, 0], sizes = [32, 32], strides = [1, 1]} : vector<32x128xf32> to vector<32x32xf32>
    %16 = vector.extract_strided_slice %14 {offsets = [0, 0], sizes = [32, 32], strides = [1, 1]} : vector<32x128xf32> to vector<32x32xf32>
    %17 = arith.addf %15, %16 : vector<32x32xf32>
    %18 = vector.extract_strided_slice %9 {offsets = [0, 32], sizes = [32, 32], strides = [1, 1]} : vector<32x128xf32> to vector<32x32xf32>
    %19 = vector.extract_strided_slice %14 {offsets = [0, 32], sizes = [32, 32], strides = [1, 1]} : vector<32x128xf32> to vector<32x32xf32>
    %20 = arith.addf %18, %19 : vector<32x32xf32>
    %21 = vector.extract_strided_slice %9 {offsets = [0, 64], sizes = [32, 32], strides = [1, 1]} : vector<32x128xf32> to vector<32x32xf32>
    %22 = vector.extract_strided_slice %14 {offsets = [0, 64], sizes = [32, 32], strides = [1, 1]} : vector<32x128xf32> to vector<32x32xf32>
    %23 = arith.addf %21, %22 : vector<32x32xf32>
    %24 = vector.extract_strided_slice %14 {offsets = [0, 96], sizes = [32, 32], strides = [1, 1]} : vector<32x128xf32> to vector<32x32xf32>
    %25 = arith.addf %11, %24 : vector<32x32xf32>
    %26 = arith.addf %25, %17 : vector<32x32xf32>
    %27 = arith.negf %26 : vector<32x32xf32>
    %28 = math.exp %27 : vector<32x32xf32>
    %cst_7 = arith.constant 1.000000e+00 : f32
    %29 = vector.broadcast %cst_7 : f32 to vector<32x32xf32>
    %30 = arith.addf %29, %28 : vector<32x32xf32>
    %31 = arith.divf %29, %30 : vector<32x32xf32>
    %32 = arith.addf %25, %20 : vector<32x32xf32>
    %33 = arith.negf %32 : vector<32x32xf32>
    %34 = math.exp %33 : vector<32x32xf32>
    %cst_8 = arith.constant 1.000000e+00 : f32
    %35 = vector.broadcast %cst_8 : f32 to vector<32x32xf32>
    %36 = arith.addf %35, %34 : vector<32x32xf32>
    %37 = arith.divf %35, %36 : vector<32x32xf32>
    %38 = arith.mulf %31, %23 : vector<32x32xf32>
    %39 = arith.addf %25, %38 : vector<32x32xf32>
    %40 = math.tanh %39 : vector<32x32xf32>
    %cst_9 = arith.constant 1.000000e+00 : f32
    %41 = vector.broadcast %cst_9 : f32 to vector<32x32xf32>
    %42 = arith.subf %41, %37 : vector<32x32xf32>
    %43 = arith.mulf %42, %40 : vector<32x32xf32>
    %44 = arith.mulf %37, %5 : vector<32x32xf32>
    %45 = arith.addf %43, %44 : vector<32x32xf32>
    %c1_i32 = arith.constant 1 : i32
    %cst_10 = arith.constant dense<0.000000e+00> : vector<32x256xf32>
    %46 = tpu.matmul %45, %1, %cst_10 {dimension_numbers = #tpu.dot_dimension_numbers<[1], [0], [0], [1], [0, 0, 1, 1], [], []>, precision = #tpu.contract_precision<fp32>} : vector<32x32xf32>, vector<32x256xf32>, vector<32x256xf32> -> vector<32x256xf32>
    %47 = vector.extract_strided_slice %46 {offsets = [0, 0], sizes = [32, 128], strides = [1, 1]} : vector<32x256xf32> to vector<32x128xf32>
    %48 = vector.extract_strided_slice %46 {offsets = [0, 128], sizes = [32, 128], strides = [1, 1]} : vector<32x256xf32> to vector<32x128xf32>
    %49 = arith.select %4, %47, %48 : vector<32x128xi1>, vector<32x128xf32>
    %50 = vector.extract_strided_slice %49 {offsets = [0, 96], sizes = [32, 32], strides = [1, 1]} : vector<32x128xf32> to vector<32x32xf32>
    %cst_11 = arith.constant dense<0.000000e+00> : vector<32x32xf32>
    %51 = tpu.matmul %0, %50, %cst_11 {dimension_numbers = #tpu.dot_dimension_numbers<[1], [0], [0], [1], [0, 0, 1, 1], [], []>, precision = #tpu.contract_precision<fp32>} : vector<32x32xf32>, vector<32x32xf32>, vector<32x32xf32> -> vector<32x32xf32>
    %52 = arith.index_cast %c1_i32 : i32 to index
    %c0_12 = arith.constant 0 : index
    %c0_13 = arith.constant 0 : index
    %53 = vector.load %arg0[%52, %c0_12, %c0_13] : memref<8x32x128xf32, #tpu.memory_space<vmem>>, vector<1x32x128xf32>
    %54 = vector.shape_cast %53 : vector<1x32x128xf32> to vector<32x128xf32>
    %55 = vector.extract_strided_slice %49 {offsets = [0, 0], sizes = [32, 32], strides = [1, 1]} : vector<32x128xf32> to vector<32x32xf32>
    %56 = vector.extract_strided_slice %54 {offsets = [0, 0], sizes = [32, 32], strides = [1, 1]} : vector<32x128xf32> to vector<32x32xf32>
    %57 = arith.addf %55, %56 : vector<32x32xf32>
    %58 = vector.extract_strided_slice %49 {offsets = [0, 32], sizes = [32, 32], strides = [1, 1]} : vector<32x128xf32> to vector<32x32xf32>
    %59 = vector.extract_strided_slice %54 {offsets = [0, 32], sizes = [32, 32], strides = [1, 1]} : vector<32x128xf32> to vector<32x32xf32>
    %60 = arith.addf %58, %59 : vector<32x32xf32>
    %61 = vector.extract_strided_slice %49 {offsets = [0, 64], sizes = [32, 32], strides = [1, 1]} : vector<32x128xf32> to vector<32x32xf32>
    %62 = vector.extract_strided_slice %54 {offsets = [0, 64], sizes = [32, 32], strides = [1, 1]} : vector<32x128xf32> to vector<32x32xf32>
    %63 = arith.addf %61, %62 : vector<32x32xf32>
    %64 = vector.extract_strided_slice %54 {offsets = [0, 96], sizes = [32, 32], strides = [1, 1]} : vector<32x128xf32> to vector<32x32xf32>
    %65 = arith.addf %51, %64 : vector<32x32xf32>
    %66 = arith.addf %65, %57 : vector<32x32xf32>
    %67 = arith.negf %66 : vector<32x32xf32>
    %68 = math.exp %67 : vector<32x32xf32>
    %cst_14 = arith.constant 1.000000e+00 : f32
    %69 = vector.broadcast %cst_14 : f32 to vector<32x32xf32>
    %70 = arith.addf %69, %68 : vector<32x32xf32>
    %71 = arith.divf %69, %70 : vector<32x32xf32>
    %72 = arith.addf %65, %60 : vector<32x32xf32>
    %73 = arith.negf %72 : vector<32x32xf32>
    %74 = math.exp %73 : vector<32x32xf32>
    %cst_15 = arith.constant 1.000000e+00 : f32
    %75 = vector.broadcast %cst_15 : f32 to vector<32x32xf32>
    %76 = arith.addf %75, %74 : vector<32x32xf32>
    %77 = arith.divf %75, %76 : vector<32x32xf32>
    %78 = arith.mulf %71, %63 : vector<32x32xf32>
    %79 = arith.addf %65, %78 : vector<32x32xf32>
    %80 = math.tanh %79 : vector<32x32xf32>
    %cst_16 = arith.constant 1.000000e+00 : f32
    %81 = vector.broadcast %cst_16 : f32 to vector<32x32xf32>
    %82 = arith.subf %81, %77 : vector<32x32xf32>
    %83 = arith.mulf %82, %80 : vector<32x32xf32>
    %84 = arith.mulf %77, %45 : vector<32x32xf32>
    %85 = arith.addf %83, %84 : vector<32x32xf32>
    %c2_i32 = arith.constant 2 : i32
    %cst_17 = arith.constant dense<0.000000e+00> : vector<32x256xf32>
    %86 = tpu.matmul %85, %1, %cst_17 {dimension_numbers = #tpu.dot_dimension_numbers<[1], [0], [0], [1], [0, 0, 1, 1], [], []>, precision = #tpu.contract_precision<fp32>} : vector<32x32xf32>, vector<32x256xf32>, vector<32x256xf32> -> vector<32x256xf32>
    %87 = vector.extract_strided_slice %86 {offsets = [0, 0], sizes = [32, 128], strides = [1, 1]} : vector<32x256xf32> to vector<32x128xf32>
    %88 = vector.extract_strided_slice %86 {offsets = [0, 128], sizes = [32, 128], strides = [1, 1]} : vector<32x256xf32> to vector<32x128xf32>
    %89 = arith.select %4, %87, %88 : vector<32x128xi1>, vector<32x128xf32>
    %90 = vector.extract_strided_slice %89 {offsets = [0, 96], sizes = [32, 32], strides = [1, 1]} : vector<32x128xf32> to vector<32x32xf32>
    %cst_18 = arith.constant dense<0.000000e+00> : vector<32x32xf32>
    %91 = tpu.matmul %0, %90, %cst_18 {dimension_numbers = #tpu.dot_dimension_numbers<[1], [0], [0], [1], [0, 0, 1, 1], [], []>, precision = #tpu.contract_precision<fp32>} : vector<32x32xf32>, vector<32x32xf32>, vector<32x32xf32> -> vector<32x32xf32>
    %92 = arith.index_cast %c2_i32 : i32 to index
    %c0_19 = arith.constant 0 : index
    %c0_20 = arith.constant 0 : index
    %93 = vector.load %arg0[%92, %c0_19, %c0_20] : memref<8x32x128xf32, #tpu.memory_space<vmem>>, vector<1x32x128xf32>
    %94 = vector.shape_cast %93 : vector<1x32x128xf32> to vector<32x128xf32>
    %95 = vector.extract_strided_slice %89 {offsets = [0, 0], sizes = [32, 32], strides = [1, 1]} : vector<32x128xf32> to vector<32x32xf32>
    %96 = vector.extract_strided_slice %94 {offsets = [0, 0], sizes = [32, 32], strides = [1, 1]} : vector<32x128xf32> to vector<32x32xf32>
    %97 = arith.addf %95, %96 : vector<32x32xf32>
    %98 = vector.extract_strided_slice %89 {offsets = [0, 32], sizes = [32, 32], strides = [1, 1]} : vector<32x128xf32> to vector<32x32xf32>
    %99 = vector.extract_strided_slice %94 {offsets = [0, 32], sizes = [32, 32], strides = [1, 1]} : vector<32x128xf32> to vector<32x32xf32>
    %100 = arith.addf %98, %99 : vector<32x32xf32>
    %101 = vector.extract_strided_slice %89 {offsets = [0, 64], sizes = [32, 32], strides = [1, 1]} : vector<32x128xf32> to vector<32x32xf32>
    %102 = vector.extract_strided_slice %94 {offsets = [0, 64], sizes = [32, 32], strides = [1, 1]} : vector<32x128xf32> to vector<32x32xf32>
    %103 = arith.addf %101, %102 : vector<32x32xf32>
    %104 = vector.extract_strided_slice %94 {offsets = [0, 96], sizes = [32, 32], strides = [1, 1]} : vector<32x128xf32> to vector<32x32xf32>
    %105 = arith.addf %91, %104 : vector<32x32xf32>
    %106 = arith.addf %105, %97 : vector<32x32xf32>
    %107 = arith.negf %106 : vector<32x32xf32>
    %108 = math.exp %107 : vector<32x32xf32>
    %cst_21 = arith.constant 1.000000e+00 : f32
    %109 = vector.broadcast %cst_21 : f32 to vector<32x32xf32>
    %110 = arith.addf %109, %108 : vector<32x32xf32>
    %111 = arith.divf %109, %110 : vector<32x32xf32>
    %112 = arith.addf %105, %100 : vector<32x32xf32>
    %113 = arith.negf %112 : vector<32x32xf32>
    %114 = math.exp %113 : vector<32x32xf32>
    %cst_22 = arith.constant 1.000000e+00 : f32
    %115 = vector.broadcast %cst_22 : f32 to vector<32x32xf32>
    %116 = arith.addf %115, %114 : vector<32x32xf32>
    %117 = arith.divf %115, %116 : vector<32x32xf32>
    %118 = arith.mulf %111, %103 : vector<32x32xf32>
    %119 = arith.addf %105, %118 : vector<32x32xf32>
    %120 = math.tanh %119 : vector<32x32xf32>
    %cst_23 = arith.constant 1.000000e+00 : f32
    %121 = vector.broadcast %cst_23 : f32 to vector<32x32xf32>
    %122 = arith.subf %121, %117 : vector<32x32xf32>
    %123 = arith.mulf %122, %120 : vector<32x32xf32>
    %124 = arith.mulf %117, %85 : vector<32x32xf32>
    %125 = arith.addf %123, %124 : vector<32x32xf32>
    %c3_i32 = arith.constant 3 : i32
    %cst_24 = arith.constant dense<0.000000e+00> : vector<32x256xf32>
    %126 = tpu.matmul %125, %1, %cst_24 {dimension_numbers = #tpu.dot_dimension_numbers<[1], [0], [0], [1], [0, 0, 1, 1], [], []>, precision = #tpu.contract_precision<fp32>} : vector<32x32xf32>, vector<32x256xf32>, vector<32x256xf32> -> vector<32x256xf32>
    %127 = vector.extract_strided_slice %126 {offsets = [0, 0], sizes = [32, 128], strides = [1, 1]} : vector<32x256xf32> to vector<32x128xf32>
    %128 = vector.extract_strided_slice %126 {offsets = [0, 128], sizes = [32, 128], strides = [1, 1]} : vector<32x256xf32> to vector<32x128xf32>
    %129 = arith.select %4, %127, %128 : vector<32x128xi1>, vector<32x128xf32>
    %130 = vector.extract_strided_slice %129 {offsets = [0, 96], sizes = [32, 32], strides = [1, 1]} : vector<32x128xf32> to vector<32x32xf32>
    %cst_25 = arith.constant dense<0.000000e+00> : vector<32x32xf32>
    %131 = tpu.matmul %0, %130, %cst_25 {dimension_numbers = #tpu.dot_dimension_numbers<[1], [0], [0], [1], [0, 0, 1, 1], [], []>, precision = #tpu.contract_precision<fp32>} : vector<32x32xf32>, vector<32x32xf32>, vector<32x32xf32> -> vector<32x32xf32>
    %132 = arith.index_cast %c3_i32 : i32 to index
    %c0_26 = arith.constant 0 : index
    %c0_27 = arith.constant 0 : index
    %133 = vector.load %arg0[%132, %c0_26, %c0_27] : memref<8x32x128xf32, #tpu.memory_space<vmem>>, vector<1x32x128xf32>
    %134 = vector.shape_cast %133 : vector<1x32x128xf32> to vector<32x128xf32>
    %135 = vector.extract_strided_slice %129 {offsets = [0, 0], sizes = [32, 32], strides = [1, 1]} : vector<32x128xf32> to vector<32x32xf32>
    %136 = vector.extract_strided_slice %134 {offsets = [0, 0], sizes = [32, 32], strides = [1, 1]} : vector<32x128xf32> to vector<32x32xf32>
    %137 = arith.addf %135, %136 : vector<32x32xf32>
    %138 = vector.extract_strided_slice %129 {offsets = [0, 32], sizes = [32, 32], strides = [1, 1]} : vector<32x128xf32> to vector<32x32xf32>
    %139 = vector.extract_strided_slice %134 {offsets = [0, 32], sizes = [32, 32], strides = [1, 1]} : vector<32x128xf32> to vector<32x32xf32>
    %140 = arith.addf %138, %139 : vector<32x32xf32>
    %141 = vector.extract_strided_slice %129 {offsets = [0, 64], sizes = [32, 32], strides = [1, 1]} : vector<32x128xf32> to vector<32x32xf32>
    %142 = vector.extract_strided_slice %134 {offsets = [0, 64], sizes = [32, 32], strides = [1, 1]} : vector<32x128xf32> to vector<32x32xf32>
    %143 = arith.addf %141, %142 : vector<32x32xf32>
    %144 = vector.extract_strided_slice %134 {offsets = [0, 96], sizes = [32, 32], strides = [1, 1]} : vector<32x128xf32> to vector<32x32xf32>
    %145 = arith.addf %131, %144 : vector<32x32xf32>
    %146 = arith.addf %145, %137 : vector<32x32xf32>
    %147 = arith.negf %146 : vector<32x32xf32>
    %148 = math.exp %147 : vector<32x32xf32>
    %cst_28 = arith.constant 1.000000e+00 : f32
    %149 = vector.broadcast %cst_28 : f32 to vector<32x32xf32>
    %150 = arith.addf %149, %148 : vector<32x32xf32>
    %151 = arith.divf %149, %150 : vector<32x32xf32>
    %152 = arith.addf %145, %140 : vector<32x32xf32>
    %153 = arith.negf %152 : vector<32x32xf32>
    %154 = math.exp %153 : vector<32x32xf32>
    %cst_29 = arith.constant 1.000000e+00 : f32
    %155 = vector.broadcast %cst_29 : f32 to vector<32x32xf32>
    %156 = arith.addf %155, %154 : vector<32x32xf32>
    %157 = arith.divf %155, %156 : vector<32x32xf32>
    %158 = arith.mulf %151, %143 : vector<32x32xf32>
    %159 = arith.addf %145, %158 : vector<32x32xf32>
    %160 = math.tanh %159 : vector<32x32xf32>
    %cst_30 = arith.constant 1.000000e+00 : f32
    %161 = vector.broadcast %cst_30 : f32 to vector<32x32xf32>
    %162 = arith.subf %161, %157 : vector<32x32xf32>
    %163 = arith.mulf %162, %160 : vector<32x32xf32>
    %164 = arith.mulf %157, %125 : vector<32x32xf32>
    %165 = arith.addf %163, %164 : vector<32x32xf32>
    %c4_i32 = arith.constant 4 : i32
    %cst_31 = arith.constant dense<0.000000e+00> : vector<32x256xf32>
    %166 = tpu.matmul %165, %1, %cst_31 {dimension_numbers = #tpu.dot_dimension_numbers<[1], [0], [0], [1], [0, 0, 1, 1], [], []>, precision = #tpu.contract_precision<fp32>} : vector<32x32xf32>, vector<32x256xf32>, vector<32x256xf32> -> vector<32x256xf32>
    %167 = vector.extract_strided_slice %166 {offsets = [0, 0], sizes = [32, 128], strides = [1, 1]} : vector<32x256xf32> to vector<32x128xf32>
    %168 = vector.extract_strided_slice %166 {offsets = [0, 128], sizes = [32, 128], strides = [1, 1]} : vector<32x256xf32> to vector<32x128xf32>
    %169 = arith.select %4, %167, %168 : vector<32x128xi1>, vector<32x128xf32>
    %170 = vector.extract_strided_slice %169 {offsets = [0, 96], sizes = [32, 32], strides = [1, 1]} : vector<32x128xf32> to vector<32x32xf32>
    %cst_32 = arith.constant dense<0.000000e+00> : vector<32x32xf32>
    %171 = tpu.matmul %0, %170, %cst_32 {dimension_numbers = #tpu.dot_dimension_numbers<[1], [0], [0], [1], [0, 0, 1, 1], [], []>, precision = #tpu.contract_precision<fp32>} : vector<32x32xf32>, vector<32x32xf32>, vector<32x32xf32> -> vector<32x32xf32>
    %172 = arith.index_cast %c4_i32 : i32 to index
    %c0_33 = arith.constant 0 : index
    %c0_34 = arith.constant 0 : index
    %173 = vector.load %arg0[%172, %c0_33, %c0_34] : memref<8x32x128xf32, #tpu.memory_space<vmem>>, vector<1x32x128xf32>
    %174 = vector.shape_cast %173 : vector<1x32x128xf32> to vector<32x128xf32>
    %175 = vector.extract_strided_slice %169 {offsets = [0, 0], sizes = [32, 32], strides = [1, 1]} : vector<32x128xf32> to vector<32x32xf32>
    %176 = vector.extract_strided_slice %174 {offsets = [0, 0], sizes = [32, 32], strides = [1, 1]} : vector<32x128xf32> to vector<32x32xf32>
    %177 = arith.addf %175, %176 : vector<32x32xf32>
    %178 = vector.extract_strided_slice %169 {offsets = [0, 32], sizes = [32, 32], strides = [1, 1]} : vector<32x128xf32> to vector<32x32xf32>
    %179 = vector.extract_strided_slice %174 {offsets = [0, 32], sizes = [32, 32], strides = [1, 1]} : vector<32x128xf32> to vector<32x32xf32>
    %180 = arith.addf %178, %179 : vector<32x32xf32>
    %181 = vector.extract_strided_slice %169 {offsets = [0, 64], sizes = [32, 32], strides = [1, 1]} : vector<32x128xf32> to vector<32x32xf32>
    %182 = vector.extract_strided_slice %174 {offsets = [0, 64], sizes = [32, 32], strides = [1, 1]} : vector<32x128xf32> to vector<32x32xf32>
    %183 = arith.addf %181, %182 : vector<32x32xf32>
    %184 = vector.extract_strided_slice %174 {offsets = [0, 96], sizes = [32, 32], strides = [1, 1]} : vector<32x128xf32> to vector<32x32xf32>
    %185 = arith.addf %171, %184 : vector<32x32xf32>
    %186 = arith.addf %185, %177 : vector<32x32xf32>
    %187 = arith.negf %186 : vector<32x32xf32>
    %188 = math.exp %187 : vector<32x32xf32>
    %cst_35 = arith.constant 1.000000e+00 : f32
    %189 = vector.broadcast %cst_35 : f32 to vector<32x32xf32>
    %190 = arith.addf %189, %188 : vector<32x32xf32>
    %191 = arith.divf %189, %190 : vector<32x32xf32>
    %192 = arith.addf %185, %180 : vector<32x32xf32>
    %193 = arith.negf %192 : vector<32x32xf32>
    %194 = math.exp %193 : vector<32x32xf32>
    %cst_36 = arith.constant 1.000000e+00 : f32
    %195 = vector.broadcast %cst_36 : f32 to vector<32x32xf32>
    %196 = arith.addf %195, %194 : vector<32x32xf32>
    %197 = arith.divf %195, %196 : vector<32x32xf32>
    %198 = arith.mulf %191, %183 : vector<32x32xf32>
    %199 = arith.addf %185, %198 : vector<32x32xf32>
    %200 = math.tanh %199 : vector<32x32xf32>
    %cst_37 = arith.constant 1.000000e+00 : f32
    %201 = vector.broadcast %cst_37 : f32 to vector<32x32xf32>
    %202 = arith.subf %201, %197 : vector<32x32xf32>
    %203 = arith.mulf %202, %200 : vector<32x32xf32>
    %204 = arith.mulf %197, %165 : vector<32x32xf32>
    %205 = arith.addf %203, %204 : vector<32x32xf32>
    %c5_i32 = arith.constant 5 : i32
    %cst_38 = arith.constant dense<0.000000e+00> : vector<32x256xf32>
    %206 = tpu.matmul %205, %1, %cst_38 {dimension_numbers = #tpu.dot_dimension_numbers<[1], [0], [0], [1], [0, 0, 1, 1], [], []>, precision = #tpu.contract_precision<fp32>} : vector<32x32xf32>, vector<32x256xf32>, vector<32x256xf32> -> vector<32x256xf32>
    %207 = vector.extract_strided_slice %206 {offsets = [0, 0], sizes = [32, 128], strides = [1, 1]} : vector<32x256xf32> to vector<32x128xf32>
    %208 = vector.extract_strided_slice %206 {offsets = [0, 128], sizes = [32, 128], strides = [1, 1]} : vector<32x256xf32> to vector<32x128xf32>
    %209 = arith.select %4, %207, %208 : vector<32x128xi1>, vector<32x128xf32>
    %210 = vector.extract_strided_slice %209 {offsets = [0, 96], sizes = [32, 32], strides = [1, 1]} : vector<32x128xf32> to vector<32x32xf32>
    %cst_39 = arith.constant dense<0.000000e+00> : vector<32x32xf32>
    %211 = tpu.matmul %0, %210, %cst_39 {dimension_numbers = #tpu.dot_dimension_numbers<[1], [0], [0], [1], [0, 0, 1, 1], [], []>, precision = #tpu.contract_precision<fp32>} : vector<32x32xf32>, vector<32x32xf32>, vector<32x32xf32> -> vector<32x32xf32>
    %212 = arith.index_cast %c5_i32 : i32 to index
    %c0_40 = arith.constant 0 : index
    %c0_41 = arith.constant 0 : index
    %213 = vector.load %arg0[%212, %c0_40, %c0_41] : memref<8x32x128xf32, #tpu.memory_space<vmem>>, vector<1x32x128xf32>
    %214 = vector.shape_cast %213 : vector<1x32x128xf32> to vector<32x128xf32>
    %215 = vector.extract_strided_slice %209 {offsets = [0, 0], sizes = [32, 32], strides = [1, 1]} : vector<32x128xf32> to vector<32x32xf32>
    %216 = vector.extract_strided_slice %214 {offsets = [0, 0], sizes = [32, 32], strides = [1, 1]} : vector<32x128xf32> to vector<32x32xf32>
    %217 = arith.addf %215, %216 : vector<32x32xf32>
    %218 = vector.extract_strided_slice %209 {offsets = [0, 32], sizes = [32, 32], strides = [1, 1]} : vector<32x128xf32> to vector<32x32xf32>
    %219 = vector.extract_strided_slice %214 {offsets = [0, 32], sizes = [32, 32], strides = [1, 1]} : vector<32x128xf32> to vector<32x32xf32>
    %220 = arith.addf %218, %219 : vector<32x32xf32>
    %221 = vector.extract_strided_slice %209 {offsets = [0, 64], sizes = [32, 32], strides = [1, 1]} : vector<32x128xf32> to vector<32x32xf32>
    %222 = vector.extract_strided_slice %214 {offsets = [0, 64], sizes = [32, 32], strides = [1, 1]} : vector<32x128xf32> to vector<32x32xf32>
    %223 = arith.addf %221, %222 : vector<32x32xf32>
    %224 = vector.extract_strided_slice %214 {offsets = [0, 96], sizes = [32, 32], strides = [1, 1]} : vector<32x128xf32> to vector<32x32xf32>
    %225 = arith.addf %211, %224 : vector<32x32xf32>
    %226 = arith.addf %225, %217 : vector<32x32xf32>
    %227 = arith.negf %226 : vector<32x32xf32>
    %228 = math.exp %227 : vector<32x32xf32>
    %cst_42 = arith.constant 1.000000e+00 : f32
    %229 = vector.broadcast %cst_42 : f32 to vector<32x32xf32>
    %230 = arith.addf %229, %228 : vector<32x32xf32>
    %231 = arith.divf %229, %230 : vector<32x32xf32>
    %232 = arith.addf %225, %220 : vector<32x32xf32>
    %233 = arith.negf %232 : vector<32x32xf32>
    %234 = math.exp %233 : vector<32x32xf32>
    %cst_43 = arith.constant 1.000000e+00 : f32
    %235 = vector.broadcast %cst_43 : f32 to vector<32x32xf32>
    %236 = arith.addf %235, %234 : vector<32x32xf32>
    %237 = arith.divf %235, %236 : vector<32x32xf32>
    %238 = arith.mulf %231, %223 : vector<32x32xf32>
    %239 = arith.addf %225, %238 : vector<32x32xf32>
    %240 = math.tanh %239 : vector<32x32xf32>
    %cst_44 = arith.constant 1.000000e+00 : f32
    %241 = vector.broadcast %cst_44 : f32 to vector<32x32xf32>
    %242 = arith.subf %241, %237 : vector<32x32xf32>
    %243 = arith.mulf %242, %240 : vector<32x32xf32>
    %244 = arith.mulf %237, %205 : vector<32x32xf32>
    %245 = arith.addf %243, %244 : vector<32x32xf32>
    %c6_i32 = arith.constant 6 : i32
    %cst_45 = arith.constant dense<0.000000e+00> : vector<32x256xf32>
    %246 = tpu.matmul %245, %1, %cst_45 {dimension_numbers = #tpu.dot_dimension_numbers<[1], [0], [0], [1], [0, 0, 1, 1], [], []>, precision = #tpu.contract_precision<fp32>} : vector<32x32xf32>, vector<32x256xf32>, vector<32x256xf32> -> vector<32x256xf32>
    %247 = vector.extract_strided_slice %246 {offsets = [0, 0], sizes = [32, 128], strides = [1, 1]} : vector<32x256xf32> to vector<32x128xf32>
    %248 = vector.extract_strided_slice %246 {offsets = [0, 128], sizes = [32, 128], strides = [1, 1]} : vector<32x256xf32> to vector<32x128xf32>
    %249 = arith.select %4, %247, %248 : vector<32x128xi1>, vector<32x128xf32>
    %250 = vector.extract_strided_slice %249 {offsets = [0, 96], sizes = [32, 32], strides = [1, 1]} : vector<32x128xf32> to vector<32x32xf32>
    %cst_46 = arith.constant dense<0.000000e+00> : vector<32x32xf32>
    %251 = tpu.matmul %0, %250, %cst_46 {dimension_numbers = #tpu.dot_dimension_numbers<[1], [0], [0], [1], [0, 0, 1, 1], [], []>, precision = #tpu.contract_precision<fp32>} : vector<32x32xf32>, vector<32x32xf32>, vector<32x32xf32> -> vector<32x32xf32>
    %252 = arith.index_cast %c6_i32 : i32 to index
    %c0_47 = arith.constant 0 : index
    %c0_48 = arith.constant 0 : index
    %253 = vector.load %arg0[%252, %c0_47, %c0_48] : memref<8x32x128xf32, #tpu.memory_space<vmem>>, vector<1x32x128xf32>
    %254 = vector.shape_cast %253 : vector<1x32x128xf32> to vector<32x128xf32>
    %255 = vector.extract_strided_slice %249 {offsets = [0, 0], sizes = [32, 32], strides = [1, 1]} : vector<32x128xf32> to vector<32x32xf32>
    %256 = vector.extract_strided_slice %254 {offsets = [0, 0], sizes = [32, 32], strides = [1, 1]} : vector<32x128xf32> to vector<32x32xf32>
    %257 = arith.addf %255, %256 : vector<32x32xf32>
    %258 = vector.extract_strided_slice %249 {offsets = [0, 32], sizes = [32, 32], strides = [1, 1]} : vector<32x128xf32> to vector<32x32xf32>
    %259 = vector.extract_strided_slice %254 {offsets = [0, 32], sizes = [32, 32], strides = [1, 1]} : vector<32x128xf32> to vector<32x32xf32>
    %260 = arith.addf %258, %259 : vector<32x32xf32>
    %261 = vector.extract_strided_slice %249 {offsets = [0, 64], sizes = [32, 32], strides = [1, 1]} : vector<32x128xf32> to vector<32x32xf32>
    %262 = vector.extract_strided_slice %254 {offsets = [0, 64], sizes = [32, 32], strides = [1, 1]} : vector<32x128xf32> to vector<32x32xf32>
    %263 = arith.addf %261, %262 : vector<32x32xf32>
    %264 = vector.extract_strided_slice %254 {offsets = [0, 96], sizes = [32, 32], strides = [1, 1]} : vector<32x128xf32> to vector<32x32xf32>
    %265 = arith.addf %251, %264 : vector<32x32xf32>
    %266 = arith.addf %265, %257 : vector<32x32xf32>
    %267 = arith.negf %266 : vector<32x32xf32>
    %268 = math.exp %267 : vector<32x32xf32>
    %cst_49 = arith.constant 1.000000e+00 : f32
    %269 = vector.broadcast %cst_49 : f32 to vector<32x32xf32>
    %270 = arith.addf %269, %268 : vector<32x32xf32>
    %271 = arith.divf %269, %270 : vector<32x32xf32>
    %272 = arith.addf %265, %260 : vector<32x32xf32>
    %273 = arith.negf %272 : vector<32x32xf32>
    %274 = math.exp %273 : vector<32x32xf32>
    %cst_50 = arith.constant 1.000000e+00 : f32
    %275 = vector.broadcast %cst_50 : f32 to vector<32x32xf32>
    %276 = arith.addf %275, %274 : vector<32x32xf32>
    %277 = arith.divf %275, %276 : vector<32x32xf32>
    %278 = arith.mulf %271, %263 : vector<32x32xf32>
    %279 = arith.addf %265, %278 : vector<32x32xf32>
    %280 = math.tanh %279 : vector<32x32xf32>
    %cst_51 = arith.constant 1.000000e+00 : f32
    %281 = vector.broadcast %cst_51 : f32 to vector<32x32xf32>
    %282 = arith.subf %281, %277 : vector<32x32xf32>
    %283 = arith.mulf %282, %280 : vector<32x32xf32>
    %284 = arith.mulf %277, %245 : vector<32x32xf32>
    %285 = arith.addf %283, %284 : vector<32x32xf32>
    %c7_i32 = arith.constant 7 : i32
    %cst_52 = arith.constant dense<0.000000e+00> : vector<32x256xf32>
    %286 = tpu.matmul %285, %1, %cst_52 {dimension_numbers = #tpu.dot_dimension_numbers<[1], [0], [0], [1], [0, 0, 1, 1], [], []>, precision = #tpu.contract_precision<fp32>} : vector<32x32xf32>, vector<32x256xf32>, vector<32x256xf32> -> vector<32x256xf32>
    %287 = vector.extract_strided_slice %286 {offsets = [0, 0], sizes = [32, 128], strides = [1, 1]} : vector<32x256xf32> to vector<32x128xf32>
    %288 = vector.extract_strided_slice %286 {offsets = [0, 128], sizes = [32, 128], strides = [1, 1]} : vector<32x256xf32> to vector<32x128xf32>
    %289 = arith.select %4, %287, %288 : vector<32x128xi1>, vector<32x128xf32>
    %290 = vector.extract_strided_slice %289 {offsets = [0, 96], sizes = [32, 32], strides = [1, 1]} : vector<32x128xf32> to vector<32x32xf32>
    %cst_53 = arith.constant dense<0.000000e+00> : vector<32x32xf32>
    %291 = tpu.matmul %0, %290, %cst_53 {dimension_numbers = #tpu.dot_dimension_numbers<[1], [0], [0], [1], [0, 0, 1, 1], [], []>, precision = #tpu.contract_precision<fp32>} : vector<32x32xf32>, vector<32x32xf32>, vector<32x32xf32> -> vector<32x32xf32>
    %292 = arith.index_cast %c7_i32 : i32 to index
    %c0_54 = arith.constant 0 : index
    %c0_55 = arith.constant 0 : index
    %293 = vector.load %arg0[%292, %c0_54, %c0_55] : memref<8x32x128xf32, #tpu.memory_space<vmem>>, vector<1x32x128xf32>
    %294 = vector.shape_cast %293 : vector<1x32x128xf32> to vector<32x128xf32>
    %295 = vector.extract_strided_slice %289 {offsets = [0, 0], sizes = [32, 32], strides = [1, 1]} : vector<32x128xf32> to vector<32x32xf32>
    %296 = vector.extract_strided_slice %294 {offsets = [0, 0], sizes = [32, 32], strides = [1, 1]} : vector<32x128xf32> to vector<32x32xf32>
    %297 = arith.addf %295, %296 : vector<32x32xf32>
    %298 = vector.extract_strided_slice %289 {offsets = [0, 32], sizes = [32, 32], strides = [1, 1]} : vector<32x128xf32> to vector<32x32xf32>
    %299 = vector.extract_strided_slice %294 {offsets = [0, 32], sizes = [32, 32], strides = [1, 1]} : vector<32x128xf32> to vector<32x32xf32>
    %300 = arith.addf %298, %299 : vector<32x32xf32>
    %301 = vector.extract_strided_slice %289 {offsets = [0, 64], sizes = [32, 32], strides = [1, 1]} : vector<32x128xf32> to vector<32x32xf32>
    %302 = vector.extract_strided_slice %294 {offsets = [0, 64], sizes = [32, 32], strides = [1, 1]} : vector<32x128xf32> to vector<32x32xf32>
    %303 = arith.addf %301, %302 : vector<32x32xf32>
    %304 = vector.extract_strided_slice %294 {offsets = [0, 96], sizes = [32, 32], strides = [1, 1]} : vector<32x128xf32> to vector<32x32xf32>
    %305 = arith.addf %291, %304 : vector<32x32xf32>
    %306 = arith.addf %305, %297 : vector<32x32xf32>
    %307 = arith.negf %306 : vector<32x32xf32>
    %308 = math.exp %307 : vector<32x32xf32>
    %cst_56 = arith.constant 1.000000e+00 : f32
    %309 = vector.broadcast %cst_56 : f32 to vector<32x32xf32>
    %310 = arith.addf %309, %308 : vector<32x32xf32>
    %311 = arith.divf %309, %310 : vector<32x32xf32>
    %312 = arith.addf %305, %300 : vector<32x32xf32>
    %313 = arith.negf %312 : vector<32x32xf32>
    %314 = math.exp %313 : vector<32x32xf32>
    %cst_57 = arith.constant 1.000000e+00 : f32
    %315 = vector.broadcast %cst_57 : f32 to vector<32x32xf32>
    %316 = arith.addf %315, %314 : vector<32x32xf32>
    %317 = arith.divf %315, %316 : vector<32x32xf32>
    %318 = arith.mulf %311, %303 : vector<32x32xf32>
    %319 = arith.addf %305, %318 : vector<32x32xf32>
    %320 = math.tanh %319 : vector<32x32xf32>
    %cst_58 = arith.constant 1.000000e+00 : f32
    %321 = vector.broadcast %cst_58 : f32 to vector<32x32xf32>
    %322 = arith.subf %321, %317 : vector<32x32xf32>
    %323 = arith.mulf %322, %320 : vector<32x32xf32>
    %324 = arith.mulf %317, %285 : vector<32x32xf32>
    %325 = arith.addf %323, %324 : vector<32x32xf32>
    %c8_i32 = arith.constant 8 : i32
    %c0_59 = arith.constant 0 : index
    %c0_60 = arith.constant 0 : index
    %326 = vector.load %arg3[%c0_59, %c0_60] : memref<32x32xf32, #tpu.memory_space<vmem>>, vector<32x32xf32>
    tpu.vector_store %arg3[%c0_59, %c0_60], %325 {strides = array<i32>} : memref<32x32xf32, #tpu.memory_space<vmem>>, vector<32x32xf32>,
    return
  }
}

</mosaic_0001>

<llo_original>
// kernel: mul.35
$region0: #{mul.35}
  %s0 = inlined_call_operand.vmem [shape: f32[8,2,8], index: 0, kind: input, shape index: {}]
  %s1 = inlined_call_operand.vmem [shape: f32[8,16], index: 1, kind: output, shape index: {}]
  $region1: #{mul.35} parent=0
    #allocation0 [shape = 'u8[32768]{0}', space=vmem, size = 0x8000, scoped, tag = 'scoped mem for input reshape']
    %s3 = sshllo.u32 0, 2
    %s4 = smul.addr 2, 7
    %s5 = scalar_lea.vmem %s0, %s4
    %v6 = vld [vmem:[%s5] sm:%s3]
    %s7 = scalar_lea.vmem [#allocation0], 56
    %8 = vst [vmem:[%s7] sm:%s3] %v6
    %s9 = smul.addr 2, 6
    %s10 = scalar_lea.vmem %s0, %s9
    %v11 = vld [vmem:[%s10] sm:%s3]
    %s12 = scalar_lea.vmem [#allocation0], 48
    %13 = vst [vmem:[%s12] sm:%s3] %v11
    %s14 = smul.addr 2, 5
    %s15 = scalar_lea.vmem %s0, %s14
    %v16 = vld [vmem:[%s15] sm:%s3]
    %s17 = scalar_lea.vmem [#allocation0], 40
    %18 = vst [vmem:[%s17] sm:%s3] %v16
    %s19 = smul.addr 2, 4
    %s20 = scalar_lea.vmem %s0, %s19
    %v21 = vld [vmem:[%s20] sm:%s3]
    %s22 = scalar_lea.vmem [#allocation0], 32
    %23 = vst [vmem:[%s22] sm:%s3] %v21
    %s24 = smul.addr 2, 3
    %s25 = scalar_lea.vmem %s0, %s24
    %v26 = vld [vmem:[%s25] sm:%s3]
    %s27 = scalar_lea.vmem [#allocation0], 24
    %28 = vst [vmem:[%s27] sm:%s3] %v26
    %s29 = smul.addr 2, 2
    %s30 = scalar_lea.vmem %s0, %s29
    %v31 = vld [vmem:[%s30] sm:%s3]
    %s32 = scalar_lea.vmem [#allocation0], 16
    %33 = vst [vmem:[%s32] sm:%s3] %v31
    %s34 = scalar_lea.vmem %s0, 2
    %v35 = vld [vmem:[%s34] sm:%s3]
    %s36 = scalar_lea.vmem [#allocation0], 8
    %37 = vst [vmem:[%s36] sm:%s3] %v35
    %v38 = vld [vmem:[%s0] sm:%s3]
    %39 = vst [vmem:[#allocation0] sm:%s3] %v38
    %v40 = vld [vmem:[#allocation0] ss:$8 sm:$0xf]
    %v41 = vld [vmem:[#allocation0] ss:$8 sm:$0xf0]
    %vm42 = vcmask 1047556
    %v43 = vsel %vm42, %v41, %v40
    %vm44 = vcmask 64512
    %45 = vst.msk [vmem:[%s1] sm:$0xff] %vm44, %v43
    %s46 = scalar_lea.vmem [#allocation0], 1
    %v47 = vld [vmem:[%s46] ss:$8 sm:$0xf]
    %s48 = scalar_lea.vmem [#allocation0], 1
    %v49 = vld [vmem:[%s48] ss:$8 sm:$0xf0]
    %vm50 = vcmask 1047556
    %v51 = vsel %vm50, %v49, %v47
    %52 = vrot.lane.b32.xlu0 %v51, 8
    %v53 = vpop.permute.xlu0 %52
    %vm54 = vcmask 130112
    %55 = vst.msk [vmem:[%s1] sm:$0xff] %vm54, %v53

// kernel: _lambda_.1
$region0: #{_lambda_.1}
  #allocation0 [shape = 'u32[]', space=smem, size = 0x4, offset = 0x4, fixed_abs, tag = 'smem constant byte address 0x4 - core index']
  #allocation1 [shape = 'u32[144,128]{1,0:T(1,128)}', space=vmem, size = 0x12000, scoped, tag = 'internal scratch']
  %s0 = inlined_call_operand.vmem [shape: f32[8,32,128], index: 0, kind: input, shape index: {}]
  %s1 = inlined_call_operand.vmem [shape: f32[32,32], index: 1, kind: input, shape index: {}]
  %s2 = inlined_call_operand.vmem [shape: f32[32,256], index: 2, kind: input, shape index: {}]
  %s3 = inlined_call_operand.vmem [shape: f32[32,32], index: 3, kind: output, shape index: {}]
  %s4 = sld [smem:[#allocation0]]
  $region22: #{_lambda_.1} parent=0
    _
  %s6 = ssub.s32 1, %s4
  %s7 = scalar_select 0, %s6, %s4
  // Predicated region
  $region2: #{_lambda_.1} parent=0 // pred_check
    _
  $region3: #{_lambda_.1} parent=0 // pred_check_branch
    %9 = sbr.rel (0) target = $region5
  $region4: #{_lambda_.1} parent=0 // pred_region
    _
  $region5: #{_lambda_.1} parent=0 // pred_fallthru
    _
  // Predicated region
  $region6: #{_lambda_.1} parent=0 // pred_check
    _
  $region7: #{_lambda_.1} parent=0 // pred_check_branch
    %11 = sbr.rel (0) target = $region9
  $region8: #{_lambda_.1} parent=0 // pred_region
    _
  $region9: #{_lambda_.1} parent=0 // pred_fallthru
    _
  // Predicated region
  $region10: #{_lambda_.1} parent=0 // pred_check
    _
  $region11: #{_lambda_.1} parent=0 // pred_check_branch
    %13 = sbr.rel (0) target = $region13
  $region12: #{_lambda_.1} parent=0 // pred_region
    _
  $region13: #{_lambda_.1} parent=0 // pred_fallthru
    _
  %v14 = vld [vmem:[%s1] sm:$0xff]
  %v15 = vld [vmem:[%s1 + $0x8] sm:$0xff]
  %v16 = vld [vmem:[%s1 + $0x10] sm:$0xff]
  %v17 = vld [vmem:[%s1 + $0x18] sm:$0xff]
  %v18 = vld [vmem:[%s2] sm:$0xff]
  %v19 = vld [vmem:[%s2 + $0x8] sm:$0xff]
  %v20 = vld [vmem:[%s2 + $0x10] sm:$0xff]
  %v21 = vld [vmem:[%s2 + $0x18] sm:$0xff]
  %v22 = vld [vmem:[%s2 + $0x20] sm:$0xff]
  %v23 = vld [vmem:[%s2 + $0x28] sm:$0xff]
  %v24 = vld [vmem:[%s2 + $0x30] sm:$0xff]
  %v25 = vld [vmem:[%s2 + $0x38] sm:$0xff]
  %v26 = vlaneseq
  %v27 = vshrl.u32 %v26, 7
  %v28 = vadd.s32 %v27, 8
  %v29 = vadd.s32 %v27, 16
  %v30 = vadd.s32 %v27, 24
  %vm31 = vcmp.lt.s32.totalorder %v27, 16
  %vm32 = vcmp.lt.s32.totalorder %v28, 16
  %vm33 = vcmp.lt.s32.totalorder %v29, 16
  %vm34 = vcmp.lt.s32.totalorder %v30, 16
  %vm35 = vcmask 261120
  %v37 = vsel %vm35, 0.0, 0
  %v39 = vand.u32 %v19, 4294901760
  %40 = vmatprep.subr.mxu0 %v39
  %v41 = vand.u32 %v18, 4294901760
  %42 = vmatpush1.msra.mxu0 %v41
  %v43 = vand.u32 %v21, 4294901760
  %44 = vmatprep.subr.mxu0 %v43
  %v45 = vand.u32 %v20, 4294901760
  %46 = vmatpush1.msra.mxu0 %v45
  %v47 = vand.u32 %v23, 4294901760
  %48 = vmatprep.subr.mxu0 %v47
  %v49 = vand.u32 %v22, 4294901760
  %50 = vmatpush1.msra.mxu0 %v49
  %v51 = vand.u32 %v25, 4294901760
  %52 = vmatprep.subr.mxu0 %v51
  %v53 = vand.u32 %v24, 4294901760
  %54 = vmatpush1.msra.mxu0 %v53
  %55 = vmatprep.subr.mxu0 0.0
  %56 = vmatpush1.msra.mxu0 0.0
  %57 = vmatprep.subr.mxu0 0.0
  %58 = vmatpush1.msra.mxu0 0.0
  %59 = vmatprep.subr.mxu0 0.0
  %60 = vmatpush1.msra.mxu0 0.0
  %61 = vmatprep.subr.mxu0 0.0
  %62 = vmatpush1.msra.mxu0 0.0
  %63 = vmatprep.subr.mxu0 0.0
  %64 = vmatpush1.msra.mxu0 0.0
  %65 = vmatprep.subr.mxu0 0.0
  %66 = vmatpush1.msra.mxu0 0.0
  %67 = vmatprep.subr.mxu0 0.0
  %68 = vmatpush1.msra.mxu0 0.0
  %69 = vmatprep.subr.mxu0 0.0
  %70 = vmatpush1.msra.mxu0 0.0
  %71 = vmatprep.subr.mxu0 0.0
  %72 = vmatpush1.msra.mxu0 0.0
  %73 = vmatprep.subr.mxu0 0.0
  %74 = vmatpush1.msra.mxu0 0.0
  %75 = vmatprep.subr.mxu0 0.0
  %76 = vmatpush1.msra.mxu0 0.0
  %77 = vmatprep.subr.mxu0 0.0
  %78 = vmatpush1.msra.mxu0 0.0
  %79 = vmatprep.subr.mxu0 0.0
  %80 = vmatpush1.msra.mxu0 0.0
  %81 = vmatprep.subr.mxu0 0.0
  %82 = vmatpush1.msra.mxu0 0.0
  %83 = vmatprep.subr.mxu0 0.0
  %84 = vmatpush1.msra.mxu0 0.0
  %85 = vmatprep.subr.mxu0 0.0
  %86 = vmatpush1.msra.mxu0 0.0
  %87 = vmatprep.subr.mxu0 0.0
  %88 = vmatpush1.msra.mxu0 0.0
  %89 = vmatprep.subr.mxu0 0.0
  %90 = vmatpush1.msra.mxu0 0.0
  %91 = vmatprep.subr.mxu0 0.0
  %92 = vmatpush1.msra.mxu0 0.0
  %93 = vmatprep.subr.mxu0 0.0
  %94 = vmatpush1.msra.mxu0 0.0
  %95 = vmatprep.subr.mxu0 0.0
  %96 = vmatpush1.msra.mxu0 0.0
  %97 = vmatprep.subr.mxu0 0.0
  %98 = vmatpush1.msra.mxu0 0.0
  %99 = vmatprep.subr.mxu0 0.0
  %100 = vmatpush1.msra.mxu0 0.0
  %101 = vmatprep.subr.mxu0 0.0
  %102 = vmatpush1.msra.mxu0 0.0
  %103 = vmatprep.subr.mxu0 0.0
  %104 = vmatpush1.msra.mxu0 0.0
  %105 = vmatprep.subr.mxu0 0.0
  %106 = vmatpush1.msra.mxu0 0.0
  %107 = vmatprep.subr.mxu0 0.0
  %108 = vmatpush1.msra.mxu0 0.0
  %109 = vmatprep.subr.mxu0 0.0
  %110 = vmatpush1.msra.mxu0 0.0
  %111 = vmatprep.mubr.f32.mxu0 0.0
  %v112 = vand.u32 %v37, 4294901760
  %v113 = vsub.f32 %v37, %v112
  %v114 = vand.u32 %v113, 4294901760
  %v115 = vsub.f32 %v113, %v114
  %v116 = vand.u32 %v115, 4294901760
  %117 = vmatmul.mubr.f32.gmra.mrb[0].mxu0 %v116
  %v118 = vpop.f32.mrb[0].mxu0
  %v119 = vadd.f32 0.0, %v118
  %v120 = vpop.f32.mrb[0].mxu0
  %v121 = vadd.f32 0.0, %v120
  %122 = vmatprep.mubr.f32.mxu0 0.0
  %v123 = vand.u32 %v37, 4294901760
  %v124 = vsub.f32 %v37, %v123
  %v125 = vand.u32 %v124, 4294901760
  %v126 = vsub.f32 %v124, %v125
  %v127 = vand.u32 %v126, 4294901760
  %128 = vmatmul.mubr.f32.gmra.mrb[0].mxu0 %v127
  %v129 = vpop.f32.mrb[0].mxu0
  %v130 = vadd.f32 0.0, %v129
  %v131 = vpop.f32.mrb[0].mxu0
  %v132 = vadd.f32 0.0, %v131
  %133 = vmatprep.mubr.f32.mxu0 0.0
  %v134 = vand.u32 %v37, 4294901760
  %v135 = vsub.f32 %v37, %v134
  %v136 = vand.u32 %v135, 4294901760
  %v137 = vsub.f32 %v135, %v136
  %v138 = vand.u32 %v137, 4294901760
  %139 = vmatmul.mubr.f32.gmra.mrb[0].mxu0 %v138
  %v140 = vpop.f32.mrb[0].mxu0
  %v141 = vadd.f32 0.0, %v140
  %v142 = vpop.f32.mrb[0].mxu0
  %v143 = vadd.f32 0.0, %v142
  %144 = vmatprep.mubr.f32.mxu0 0.0
  %v145 = vand.u32 %v37, 4294901760
  %v146 = vsub.f32 %v37, %v145
  %v147 = vand.u32 %v146, 4294901760
  %v148 = vsub.f32 %v146, %v147
  %v149 = vand.u32 %v148, 4294901760
  %150 = vmatmul.mubr.f32.gmra.mrb[0].mxu0 %v149
  %v151 = vpop.f32.mrb[0].mxu0
  %v152 = vadd.f32 0.0, %v151
  %v153 = vpop.f32.mrb[0].mxu0
  %v154 = vadd.f32 0.0, %v153
  %155 = vdwg.mxu0
  %v156 = vand.u32 %v19, 4294901760
  %v157 = vsub.f32 %v19, %v156
  %v158 = vand.u32 %v157, 4294901760
  %v159 = vsub.f32 %v157, %v158
  %v160 = vand.u32 %v159, 4294901760
  %161 = vmatprep.subr.mxu0 %v160
  %v162 = vand.u32 %v18, 4294901760
  %v163 = vsub.f32 %v18, %v162
  %v164 = vand.u32 %v163, 4294901760
  %v165 = vsub.f32 %v163, %v164
  %v166 = vand.u32 %v165, 4294901760
  %167 = vmatpush1.msra.mxu0 %v166
  %v168 = vand.u32 %v21, 4294901760
  %v169 = vsub.f32 %v21, %v168
  %v170 = vand.u32 %v169, 4294901760
  %v171 = vsub.f32 %v169, %v170
  %v172 = vand.u32 %v171, 4294901760
  %173 = vmatprep.subr.mxu0 %v172
  %v174 = vand.u32 %v20, 4294901760
  %v175 = vsub.f32 %v20, %v174
  %v176 = vand.u32 %v175, 4294901760
  %v177 = vsub.f32 %v175, %v176
  %v178 = vand.u32 %v177, 4294901760
  %179 = vmatpush1.msra.mxu0 %v178
  %v180 = vand.u32 %v23, 4294901760
  %v181 = vsub.f32 %v23, %v180
  %v182 = vand.u32 %v181, 4294901760
  %v183 = vsub.f32 %v181, %v182
  %v184 = vand.u32 %v183, 4294901760
  %185 = vmatprep.subr.mxu0 %v184
  %v186 = vand.u32 %v22, 4294901760
  %v187 = vsub.f32 %v22, %v186
  %v188 = vand.u32 %v187, 4294901760
  %v189 = vsub.f32 %v187, %v188
  %v190 = vand.u32 %v189, 4294901760
  %191 = vmatpush1.msra.mxu0 %v190
  %v192 = vand.u32 %v25, 4294901760
  %v193 = vsub.f32 %v25, %v192
  %v194 = vand.u32 %v193, 4294901760
  %v195 = vsub.f32 %v193, %v194
  %v196 = vand.u32 %v195, 4294901760
  %197 = vmatprep.subr.mxu0 %v196
  %v198 = vand.u32 %v24, 4294901760
  %v199 = vsub.f32 %v24, %v198
  %v200 = vand.u32 %v199, 4294901760
  %v201 = vsub.f32 %v199, %v200
  %v202 = vand.u32 %v201, 4294901760
  %203 = vmatpush1.msra.mxu0 %v202
  %204 = vmatprep.subr.mxu0 0.0
  %205 = vmatpush1.msra.mxu0 0.0
  %206 = vmatprep.subr.mxu0 0.0
  %207 = vmatpush1.msra.mxu0 0.0
  %208 = vmatprep.subr.mxu0 0.0
  %209 = vmatpush1.msra.mxu0 0.0
  %210 = vmatprep.subr.mxu0 0.0
  %211 = vmatpush1.msra.mxu0 0.0
  %212 = vmatprep.subr.mxu0 0.0
  %213 = vmatpush1.msra.mxu0 0.0
  %214 = vmatprep.subr.mxu0 0.0
  %215 = vmatpush1.msra.mxu0 0.0
  %216 = vmatprep.subr.mxu0 0.0
  %217 = vmatpush1.msra.mxu0 0.0
  %218 = vmatprep.subr.mxu0 0.0
  %219 = vmatpush1.msra.mxu0 0.0
  %220 = vmatprep.subr.mxu0 0.0
  %221 = vmatpush1.msra.mxu0 0.0
  %222 = vmatprep.subr.mxu0 0.0
  %223 = vmatpush1.msra.mxu0 0.0
  %224 = vmatprep.subr.mxu0 0.0
  %225 = vmatpush1.msra.mxu0 0.0
  %226 = vmatprep.subr.mxu0 0.0
  %227 = vmatpush1.msra.mxu0 0.0
  %228 = vmatprep.subr.mxu0 0.0
  %229 = vmatpush1.msra.mxu0 0.0
  %230 = vmatprep.subr.mxu0 0.0
  %231 = vmatpush1.msra.mxu0 0.0
  %232 = vmatprep.subr.mxu0 0.0
  %233 = vmatpush1.msra.mxu0 0.0
  %234 = vmatprep.subr.mxu0 0.0
  %235 = vmatpush1.msra.mxu0 0.0
  %236 = vmatprep.subr.mxu0 0.0
  %237 = vmatpush1.msra.mxu0 0.0
  %238 = vmatprep.subr.mxu0 0.0
  %239 = vmatpush1.msra.mxu0 0.0
  %240 = vmatprep.subr.mxu0 0.0
  %241 = vmatpush1.msra.mxu0 0.0
  %242 = vmatprep.subr.mxu0 0.0
  %243 = vmatpush1.msra.mxu0 0.0
  %244 = vmatprep.subr.mxu0 0.0
  %245 = vmatpush1.msra.mxu0 0.0
  %246 = vmatprep.subr.mxu0 0.0
  %247 = vmatpush1.msra.mxu0 0.0
  %248 = vmatprep.subr.mxu0 0.0
  %249 = vmatpush1.msra.mxu0 0.0
  %250 = vmatprep.subr.mxu0 0.0
  %251 = vmatpush1.msra.mxu0 0.0
  %252 = vmatprep.subr.mxu0 0.0
  %253 = vmatpush1.msra.mxu0 0.0
  %254 = vmatprep.subr.mxu0 0.0
  %255 = vmatpush1.msra.mxu0 0.0
  %256 = vmatprep.subr.mxu0 0.0
  %257 = vmatpush1.msra.mxu0 0.0
  %258 = vmatprep.subr.mxu0 0.0
  %259 = vmatpush1.msra.mxu0 0.0
  %260 = vmatprep.mubr.f32.mxu0 0.0
  %v261 = vand.u32 %v37, 4294901760
  %262 = vmatmul.mubr.f32.gmra.mrb[0].mxu0 %v261
  %v263 = vpop.f32.mrb[0].mxu0
  %v264 = vadd.f32 %v119, %v263
  %v265 = vpop.f32.mrb[0].mxu0
  %v266 = vadd.f32 %v121, %v265
  %267 = vmatprep.mubr.f32.mxu0 0.0
  %v268 = vand.u32 %v37, 4294901760
  %269 = vmatmul.mubr.f32.gmra.mrb[0].mxu0 %v268
  %v270 = vpop.f32.mrb[0].mxu0
  %v271 = vadd.f32 %v130, %v270
  %v272 = vpop.f32.mrb[0].mxu0
  %v273 = vadd.f32 %v132, %v272
  %274 = vmatprep.mubr.f32.mxu0 0.0
  %v275 = vand.u32 %v37, 4294901760
  %276 = vmatmul.mubr.f32.gmra.mrb[0].mxu0 %v275
  %v277 = vpop.f32.mrb[0].mxu0
  %v278 = vadd.f32 %v141, %v277
  %v279 = vpop.f32.mrb[0].mxu0
  %v280 = vadd.f32 %v143, %v279
  %281 = vmatprep.mubr.f32.mxu0 0.0
  %v282 = vand.u32 %v37, 4294901760
  %283 = vmatmul.mubr.f32.gmra.mrb[0].mxu0 %v282
  %v284 = vpop.f32.mrb[0].mxu0
  %v285 = vadd.f32 %v152, %v284
  %v286 = vpop.f32.mrb[0].mxu0
  %v287 = vadd.f32 %v154, %v286
  %288 = vdwg.mxu0
  %v289 = vand.u32 %v19, 4294901760
  %v290 = vsub.f32 %v19, %v289
  %291 = vmatprep.subr.mxu0 %v290
  %v292 = vand.u32 %v18, 4294901760
  %v293 = vsub.f32 %v18, %v292
  %294 = vmatpush1.msra.mxu0 %v293
  %v295 = vand.u32 %v21, 4294901760
  %v296 = vsub.f32 %v21, %v295
  %297 = vmatprep.subr.mxu0 %v296
  %v298 = vand.u32 %v20, 4294901760
  %v299 = vsub.f32 %v20, %v298
  %300 = vmatpush1.msra.mxu0 %v299
  %v301 = vand.u32 %v23, 4294901760
  %v302 = vsub.f32 %v23, %v301
  %303 = vmatprep.subr.mxu0 %v302
  %v304 = vand.u32 %v22, 4294901760
  %v305 = vsub.f32 %v22, %v304
  %306 = vmatpush1.msra.mxu0 %v305
  %v307 = vand.u32 %v25, 4294901760
  %v308 = vsub.f32 %v25, %v307
  %309 = vmatprep.subr.mxu0 %v308
  %v310 = vand.u32 %v24, 4294901760
  %v311 = vsub.f32 %v24, %v310
  %312 = vmatpush1.msra.mxu0 %v311
  %313 = vmatprep.subr.mxu0 0.0
  %314 = vmatpush1.msra.mxu0 0.0
  %315 = vmatprep.subr.mxu0 0.0
  %316 = vmatpush1.msra.mxu0 0.0
  %317 = vmatprep.subr.mxu0 0.0
  %318 = vmatpush1.msra.mxu0 0.0
  %319 = vmatprep.subr.mxu0 0.0
  %320 = vmatpush1.msra.mxu0 0.0
  %321 = vmatprep.subr.mxu0 0.0
  %322 = vmatpush1.msra.mxu0 0.0
  %323 = vmatprep.subr.mxu0 0.0
  %324 = vmatpush1.msra.mxu0 0.0
  %325 = vmatprep.subr.mxu0 0.0
  %326 = vmatpush1.msra.mxu0 0.0
  %327 = vmatprep.subr.mxu0 0.0
  %328 = vmatpush1.msra.mxu0 0.0
  %329 = vmatprep.subr.mxu0 0.0
  %330 = vmatpush1.msra.mxu0 0.0
  %331 = vmatprep.subr.mxu0 0.0
  %332 = vmatpush1.msra.mxu0 0.0
  %333 = vmatprep.subr.mxu0 0.0
  %334 = vmatpush1.msra.mxu0 0.0
  %335 = vmatprep.subr.mxu0 0.0
  %336 = vmatpush1.msra.mxu0 0.0
  %337 = vmatprep.subr.mxu0 0.0
  %338 = vmatpush1.msra.mxu0 0.0
  %339 = vmatprep.subr.mxu0 0.0
  %340 = vmatpush1.msra.mxu0 0.0
  %341 = vmatprep.subr.mxu0 0.0
  %342 = vmatpush1.msra.mxu0 0.0
  %343 = vmatprep.subr.mxu0 0.0
  %344 = vmatpush1.msra.mxu0 0.0
  %345 = vmatprep.subr.mxu0 0.0
  %346 = vmatpush1.msra.mxu0 0.0
  %347 = vmatprep.subr.mxu0 0.0
  %348 = vmatpush1.msra.mxu0 0.0
  %349 = vmatprep.subr.mxu0 0.0
  %350 = vmatpush1.msra.mxu0 0.0
  %351 = vmatprep.subr.mxu0 0.0
  %352 = vmatpush1.msra.mxu0 0.0
  %353 = vmatprep.subr.mxu0 0.0
  %354 = vmatpush1.msra.mxu0 0.0
  %355 = vmatprep.subr.mxu0 0.0
  %356 = vmatpush1.msra.mxu0 0.0
  %357 = vmatprep.subr.mxu0 0.0
  %358 = vmatpush1.msra.mxu0 0.0
  %359 = vmatprep.subr.mxu0 0.0
  %360 = vmatpush1.msra.mxu0 0.0
  %361 = vmatprep.subr.mxu0 0.0
  %362 = vmatpush1.msra.mxu0 0.0
  %363 = vmatprep.subr.mxu0 0.0
  %364 = vmatpush1.msra.mxu0 0.0
  %365 = vmatprep.subr.mxu0 0.0
  %366 = vmatpush1.msra.mxu0 0.0
  %367 = vmatprep.subr.mxu0 0.0
  %368 = vmatpush1.msra.mxu0 0.0
  %369 = vmatprep.mubr.f32.mxu0 0.0
  %v370 = vand.u32 %v37, 4294901760
  %v371 = vsub.f32 %v37, %v370
  %372 = vmatmul.mubr.f32.gmra.mrb[0].mxu0 %v371
  %v373 = vpop.f32.mrb[0].mxu0
  %v374 = vadd.f32 %v264, %v373
  %v375 = vpop.f32.mrb[0].mxu0
  %v376 = vadd.f32 %v266, %v375
  %377 = vmatprep.mubr.f32.mxu0 0.0
  %v378 = vand.u32 %v37, 4294901760
  %v379 = vsub.f32 %v37, %v378
  %380 = vmatmul.mubr.f32.gmra.mrb[0].mxu0 %v379
  %v381 = vpop.f32.mrb[0].mxu0
  %v382 = vadd.f32 %v271, %v381
  %v383 = vpop.f32.mrb[0].mxu0
  %v384 = vadd.f32 %v273, %v383
  %385 = vmatprep.mubr.f32.mxu0 0.0
  %v386 = vand.u32 %v37, 4294901760
  %v387 = vsub.f32 %v37, %v386
  %388 = vmatmul.mubr.f32.gmra.mrb[0].mxu0 %v387
  %v389 = vpop.f32.mrb[0].mxu0
  %v390 = vadd.f32 %v278, %v389
  %v391 = vpop.f32.mrb[0].mxu0
  %v392 = vadd.f32 %v280, %v391
  %393 = vmatprep.mubr.f32.mxu0 0.0
  %v394 = vand.u32 %v37, 4294901760
  %v395 = vsub.f32 %v37, %v394
  %396 = vmatmul.mubr.f32.gmra.mrb[0].mxu0 %v395
  %v397 = vpop.f32.mrb[0].mxu0
  %v398 = vadd.f32 %v285, %v397
  %v399 = vpop.f32.mrb[0].mxu0
  %v400 = vadd.f32 %v287, %v399
  %401 = vdwg.mxu0
  %v402 = vand.u32 %v19, 4294901760
  %403 = vmatprep.subr.mxu0 %v402
  %v404 = vand.u32 %v18, 4294901760
  %405 = vmatpush1.msra.mxu0 %v404
  %v406 = vand.u32 %v21, 4294901760
  %407 = vmatprep.subr.mxu0 %v406
  %v408 = vand.u32 %v20, 4294901760
  %409 = vmatpush1.msra.mxu0 %v408
  %v410 = vand.u32 %v23, 4294901760
  %411 = vmatprep.subr.mxu0 %v410
  %v412 = vand.u32 %v22, 4294901760
  %413 = vmatpush1.msra.mxu0 %v412
  %v414 = vand.u32 %v25, 4294901760
  %415 = vmatprep.subr.mxu0 %v414
  %v416 = vand.u32 %v24, 4294901760
  %417 = vmatpush1.msra.mxu0 %v416
  %418 = vmatprep.subr.mxu0 0.0
  %419 = vmatpush1.msra.mxu0 0.0
  %420 = vmatprep.subr.mxu0 0.0
  %421 = vmatpush1.msra.mxu0 0.0
  %422 = vmatprep.subr.mxu0 0.0
  %423 = vmatpush1.msra.mxu0 0.0
  %424 = vmatprep.subr.mxu0 0.0
  %425 = vmatpush1.msra.mxu0 0.0
  %426 = vmatprep.subr.mxu0 0.0
  %427 = vmatpush1.msra.mxu0 0.0
  %428 = vmatprep.subr.mxu0 0.0
  %429 = vmatpush1.msra.mxu0 0.0
  %430 = vmatprep.subr.mxu0 0.0
  %431 = vmatpush1.msra.mxu0 0.0
  %432 = vmatprep.subr.mxu0 0.0
  %433 = vmatpush1.msra.mxu0 0.0
  %434 = vmatprep.subr.mxu0 0.0
  %435 = vmatpush1.msra.mxu0 0.0
  %436 = vmatprep.subr.mxu0 0.0
  %437 = vmatpush1.msra.mxu0 0.0
  %438 = vmatprep.subr.mxu0 0.0
  %439 = vmatpush1.msra.mxu0 0.0
  %440 = vmatprep.subr.mxu0 0.0
  %441 = vmatpush1.msra.mxu0 0.0
  %442 = vmatprep.subr.mxu0 0.0
  %443 = vmatpush1.msra.mxu0 0.0
  %444 = vmatprep.subr.mxu0 0.0
  %445 = vmatpush1.msra.mxu0 0.0
  %446 = vmatprep.subr.mxu0 0.0
  %447 = vmatpush1.msra.mxu0 0.0
  %448 = vmatprep.subr.mxu0 0.0
  %449 = vmatpush1.msra.mxu0 0.0
  %450 = vmatprep.subr.mxu0 0.0
  %451 = vmatpush1.msra.mxu0 0.0
  %452 = vmatprep.subr.mxu0 0.0
  %453 = vmatpush1.msra.mxu0 0.0
  %454 = vmatprep.subr.mxu0 0.0
  %455 = vmatpush1.msra.mxu0 0.0
  %456 = vmatprep.subr.mxu0 0.0
  %457 = vmatpush1.msra.mxu0 0.0
  %458 = vmatprep.subr.mxu0 0.0
  %459 = vmatpush1.msra.mxu0 0.0
  %460 = vmatprep.subr.mxu0 0.0
  %461 = vmatpush1.msra.mxu0 0.0
  %462 = vmatprep.subr.mxu0 0.0
  %463 = vmatpush1.msra.mxu0 0.0
  %464 = vmatprep.subr.mxu0 0.0
  %465 = vmatpush1.msra.mxu0 0.0
  %466 = vmatprep.subr.mxu0 0.0
  %467 = vmatpush1.msra.mxu0 0.0
  %468 = vmatprep.subr.mxu0 0.0
  %469 = vmatpush1.msra.mxu0 0.0
  %470 = vmatprep.subr.mxu0 0.0
  %471 = vmatpush1.msra.mxu0 0.0
  %472 = vmatprep.subr.mxu0 0.0
  %473 = vmatpush1.msra.mxu0 0.0
  %474 = vmatprep.mubr.f32.mxu0 0.0
  %v475 = vand.u32 %v37, 4294901760
  %v476 = vsub.f32 %v37, %v475
  %v477 = vand.u32 %v476, 4294901760
  %478 = vmatmul.mubr.f32.gmra.mrb[0].mxu0 %v477
  %v479 = vpop.f32.mrb[0].mxu0
  %v480 = vadd.f32 %v374, %v479
  %v481 = vpop.f32.mrb[0].mxu0
  %v482 = vadd.f32 %v376, %v481
  %483 = vmatprep.mubr.f32.mxu0 0.0
  %v484 = vand.u32 %v37, 4294901760
  %v485 = vsub.f32 %v37, %v484
  %v486 = vand.u32 %v485, 4294901760
  %487 = vmatmul.mubr.f32.gmra.mrb[0].mxu0 %v486
  %v488 = vpop.f32.mrb[0].mxu0
  %v489 = vadd.f32 %v382, %v488
  %v490 = vpop.f32.mrb[0].mxu0
  %v491 = vadd.f32 %v384, %v490
  %492 = vmatprep.mubr.f32.mxu0 0.0
  %v493 = vand.u32 %v37, 4294901760
  %v494 = vsub.f32 %v37, %v493
  %v495 = vand.u32 %v494, 4294901760
  %496 = vmatmul.mubr.f32.gmra.mrb[0].mxu0 %v495
  %v497 = vpop.f32.mrb[0].mxu0
  %v498 = vadd.f32 %v390, %v497
  %v499 = vpop.f32.mrb[0].mxu0
  %v500 = vadd.f32 %v392, %v499
  %501 = vmatprep.mubr.f32.mxu0 0.0
  %v502 = vand.u32 %v37, 4294901760
  %v503 = vsub.f32 %v37, %v502
  %v504 = vand.u32 %v503, 4294901760
  %505 = vmatmul.mubr.f32.gmra.mrb[0].mxu0 %v504
  %v506 = vpop.f32.mrb[0].mxu0
  %v507 = vadd.f32 %v398, %v506
  %v508 = vpop.f32.mrb[0].mxu0
  %v509 = vadd.f32 %v400, %v508
  %510 = vdwg.mxu0
  %v511 = vand.u32 %v19, 4294901760
  %v512 = vsub.f32 %v19, %v511
  %v513 = vand.u32 %v512, 4294901760
  %514 = vmatprep.subr.mxu0 %v513
  %v515 = vand.u32 %v18, 4294901760
  %v516 = vsub.f32 %v18, %v515
  %v517 = vand.u32 %v516, 4294901760
  %518 = vmatpush1.msra.mxu0 %v517
  %v519 = vand.u32 %v21, 4294901760
  %v520 = vsub.f32 %v21, %v519
  %v521 = vand.u32 %v520, 4294901760
  %522 = vmatprep.subr.mxu0 %v521
  %v523 = vand.u32 %v20, 4294901760
  %v524 = vsub.f32 %v20, %v523
  %v525 = vand.u32 %v524, 4294901760
  %526 = vmatpush1.msra.mxu0 %v525
  %v527 = vand.u32 %v23, 4294901760
  %v528 = vsub.f32 %v23, %v527
  %v529 = vand.u32 %v528, 4294901760
  %530 = vmatprep.subr.mxu0 %v529
  %v531 = vand.u32 %v22, 4294901760
  %v532 = vsub.f32 %v22, %v531
  %v533 = vand.u32 %v532, 4294901760
  %534 = vmatpush1.msra.mxu0 %v533
  %v535 = vand.u32 %v25, 4294901760
  %v536 = vsub.f32 %v25, %v535
  %v537 = vand.u32 %v536, 4294901760
  %538 = vmatprep.subr.mxu0 %v537
  %v539 = vand.u32 %v24, 4294901760
  %v540 = vsub.f32 %v24, %v539
  %v541 = vand.u32 %v540, 4294901760
  %542 = vmatpush1.msra.mxu0 %v541
  %543 = vmatprep.subr.mxu0 0.0
  %544 = vmatpush1.msra.mxu0 0.0
  %545 = vmatprep.subr.mxu0 0.0
  %546 = vmatpush1.msra.mxu0 0.0
  %547 = vmatprep.subr.mxu0 0.0
  %548 = vmatpush1.msra.mxu0 0.0
  %549 = vmatprep.subr.mxu0 0.0
  %550 = vmatpush1.msra.mxu0 0.0
  %551 = vmatprep.subr.mxu0 0.0
  %552 = vmatpush1.msra.mxu0 0.0
  %553 = vmatprep.subr.mxu0 0.0
  %554 = vmatpush1.msra.mxu0 0.0
  %555 = vmatprep.subr.mxu0 0.0
  %556 = vmatpush1.msra.mxu0 0.0
  %557 = vmatprep.subr.mxu0 0.0
  %558 = vmatpush1.msra.mxu0 0.0
  %559 = vmatprep.subr.mxu0 0.0
  %560 = vmatpush1.msra.mxu0 0.0
  %561 = vmatprep.subr.mxu0 0.0
  %562 = vmatpush1.msra.mxu0 0.0
  %563 = vmatprep.subr.mxu0 0.0
  %564 = vmatpush1.msra.mxu0 0.0
  %565 = vmatprep.subr.mxu0 0.0
  %566 = vmatpush1.msra.mxu0 0.0
  %567 = vmatprep.subr.mxu0 0.0
  %568 = vmatpush1.msra.mxu0 0.0
  %569 = vmatprep.subr.mxu0 0.0
  %570 = vmatpush1.msra.mxu0 0.0
  %571 = vmatprep.subr.mxu0 0.0
  %572 = vmatpush1.msra.mxu0 0.0
  %573 = vmatprep.subr.mxu0 0.0
  %574 = vmatpush1.msra.mxu0 0.0
  %575 = vmatprep.subr.mxu0 0.0
  %576 = vmatpush1.msra.mxu0 0.0
  %577 = vmatprep.subr.mxu0 0.0
  %578 = vmatpush1.msra.mxu0 0.0
  %579 = vmatprep.subr.mxu0 0.0
  %580 = vmatpush1.msra.mxu0 0.0
  %581 = vmatprep.subr.mxu0 0.0
  %582 = vmatpush1.msra.mxu0 0.0
  %583 = vmatprep.subr.mxu0 0.0
  %584 = vmatpush1.msra.mxu0 0.0
  %585 = vmatprep.subr.mxu0 0.0
  %586 = vmatpush1.msra.mxu0 0.0
  %587 = vmatprep.subr.mxu0 0.0
  %588 = vmatpush1.msra.mxu0 0.0
  %589 = vmatprep.subr.mxu0 0.0
  %590 = vmatpush1.msra.mxu0 0.0
  %591 = vmatprep.subr.mxu0 0.0
  %592 = vmatpush1.msra.mxu0 0.0
  %593 = vmatprep.subr.mxu0 0.0
  %594 = vmatpush1.msra.mxu0 0.0
  %595 = vmatprep.subr.mxu0 0.0
  %596 = vmatpush1.msra.mxu0 0.0
  %597 = vmatprep.subr.mxu0 0.0
  %598 = vmatpush1.msra.mxu0 0.0
  %599 = vmatprep.mubr.f32.mxu0 0.0
  %v600 = vand.u32 %v37, 4294901760
  %601 = vmatmul.mubr.f32.gmra.mrb[0].mxu0 %v600
  %v602 = vpop.f32.mrb[0].mxu0
  %v603 = vadd.f32 %v480, %v602
  %v604 = vpop.f32.mrb[0].mxu0
  %v605 = vadd.f32 %v482, %v604
  %606 = vmatprep.mubr.f32.mxu0 0.0
  %v607 = vand.u32 %v37, 4294901760
  %608 = vmatmul.mubr.f32.gmra.mrb[0].mxu0 %v607
  %v609 = vpop.f32.mrb[0].mxu0
  %v610 = vadd.f32 %v489, %v609
  %v611 = vpop.f32.mrb[0].mxu0
  %v612 = vadd.f32 %v491, %v611
  %613 = vmatprep.mubr.f32.mxu0 0.0
  %v614 = vand.u32 %v37, 4294901760
  %615 = vmatmul.mubr.f32.gmra.mrb[0].mxu0 %v614
  %v616 = vpop.f32.mrb[0].mxu0
  %v617 = vadd.f32 %v498, %v616
  %v618 = vpop.f32.mrb[0].mxu0
  %v619 = vadd.f32 %v500, %v618
  %620 = vmatprep.mubr.f32.mxu0 0.0
  %v621 = vand.u32 %v37, 4294901760
  %622 = vmatmul.mubr.f32.gmra.mrb[0].mxu0 %v621
  %v623 = vpop.f32.mrb[0].mxu0
  %v624 = vadd.f32 %v507, %v623
  %v625 = vpop.f32.mrb[0].mxu0
  %v626 = vadd.f32 %v509, %v625
  %627 = vdwg.mxu0
  %v628 = vand.u32 %v19, 4294901760
  %629 = vmatprep.subr.mxu0 %v628
  %v630 = vand.u32 %v18, 4294901760
  %631 = vmatpush1.msra.mxu0 %v630
  %v632 = vand.u32 %v21, 4294901760
  %633 = vmatprep.subr.mxu0 %v632
  %v634 = vand.u32 %v20, 4294901760
  %635 = vmatpush1.msra.mxu0 %v634
  %v636 = vand.u32 %v23, 4294901760
  %637 = vmatprep.subr.mxu0 %v636
  %v638 = vand.u32 %v22, 4294901760
  %639 = vmatpush1.msra.mxu0 %v638
  %v640 = vand.u32 %v25, 4294901760
  %641 = vmatprep.subr.mxu0 %v640
  %v642 = vand.u32 %v24, 4294901760
  %643 = vmatpush1.msra.mxu0 %v642
  %644 = vmatprep.subr.mxu0 0.0
  %645 = vmatpush1.msra.mxu0 0.0
  %646 = vmatprep.subr.mxu0 0.0
  %647 = vmatpush1.msra.mxu0 0.0
  %648 = vmatprep.subr.mxu0 0.0
  %649 = vmatpush1.msra.mxu0 0.0
  %650 = vmatprep.subr.mxu0 0.0
  %651 = vmatpush1.msra.mxu0 0.0
  %652 = vmatprep.subr.mxu0 0.0
  %653 = vmatpush1.msra.mxu0 0.0
  %654 = vmatprep.subr.mxu0 0.0
  %655 = vmatpush1.msra.mxu0 0.0
  %656 = vmatprep.subr.mxu0 0.0
  %657 = vmatpush1.msra.mxu0 0.0
  %658 = vmatprep.subr.mxu0 0.0
  %659 = vmatpush1.msra.mxu0 0.0
  %660 = vmatprep.subr.mxu0 0.0
  %661 = vmatpush1.msra.mxu0 0.0
  %662 = vmatprep.subr.mxu0 0.0
  %663 = vmatpush1.msra.mxu0 0.0
  %664 = vmatprep.subr.mxu0 0.0
  %665 = vmatpush1.msra.mxu0 0.0
  %666 = vmatprep.subr.mxu0 0.0
  %667 = vmatpush1.msra.mxu0 0.0
  %668 = vmatprep.subr.mxu0 0.0
  %669 = vmatpush1.msra.mxu0 0.0
  %670 = vmatprep.subr.mxu0 0.0
  %671 = vmatpush1.msra.mxu0 0.0
  %672 = vmatprep.subr.mxu0 0.0
  %673 = vmatpush1.msra.mxu0 0.0
  %674 = vmatprep.subr.mxu0 0.0
  %675 = vmatpush1.msra.mxu0 0.0
  %676 = vmatprep.subr.mxu0 0.0
  %677 = vmatpush1.msra.mxu0 0.0
  %678 = vmatprep.subr.mxu0 0.0
  %679 = vmatpush1.msra.mxu0 0.0
  %680 = vmatprep.subr.mxu0 0.0
  %681 = vmatpush1.msra.mxu0 0.0
  %682 = vmatprep.subr.mxu0 0.0
  %683 = vmatpush1.msra.mxu0 0.0
  %684 = vmatprep.subr.mxu0 0.0
  %685 = vmatpush1.msra.mxu0 0.0
  %686 = vmatprep.subr.mxu0 0.0
  %687 = vmatpush1.msra.mxu0 0.0
  %688 = vmatprep.subr.mxu0 0.0
  %689 = vmatpush1.msra.mxu0 0.0
  %690 = vmatprep.subr.mxu0 0.0
  %691 = vmatpush1.msra.mxu0 0.0
  %692 = vmatprep.subr.mxu0 0.0
  %693 = vmatpush1.msra.mxu0 0.0
  %694 = vmatprep.subr.mxu0 0.0
  %695 = vmatpush1.msra.mxu0 0.0
  %696 = vmatprep.subr.mxu0 0.0
  %697 = vmatpush1.msra.mxu0 0.0
  %698 = vmatprep.subr.mxu0 0.0
  %699 = vmatpush1.msra.mxu0 0.0
  %700 = vmatprep.mubr.f32.mxu0 0.0
  %v701 = vand.u32 %v37, 4294901760
  %702 = vmatmul.mubr.f32.gmra.mrb[0].mxu0 %v701
  %v703 = vpop.f32.mrb[0].mxu0
  %v704 = vadd.f32 %v603, %v703
  %v705 = vpop.f32.mrb[0].mxu0
  %v706 = vadd.f32 %v605, %v705
  %707 = vmatprep.mubr.f32.mxu0 0.0
  %v708 = vand.u32 %v37, 4294901760
  %709 = vmatmul.mubr.f32.gmra.mrb[0].mxu0 %v708
  %v710 = vpop.f32.mrb[0].mxu0
  %v711 = vadd.f32 %v610, %v710
  %v712 = vpop.f32.mrb[0].mxu0
  %v713 = vadd.f32 %v612, %v712
  %714 = vmatprep.mubr.f32.mxu0 0.0
  %v715 = vand.u32 %v37, 4294901760
  %716 = vmatmul.mubr.f32.gmra.mrb[0].mxu0 %v715
  %v717 = vpop.f32.mrb[0].mxu0
  %v718 = vadd.f32 %v617, %v717
  %v719 = vpop.f32.mrb[0].mxu0
  %v720 = vadd.f32 %v619, %v719
  %721 = vmatprep.mubr.f32.mxu0 0.0
  %v722 = vand.u32 %v37, 4294901760
  %723 = vmatmul.mubr.f32.gmra.mrb[0].mxu0 %v722
  %v724 = vpop.f32.mrb[0].mxu0
  %v725 = vadd.f32 %v624, %v724
  %v726 = vpop.f32.mrb[0].mxu0
  %v727 = vadd.f32 %v626, %v726
  %728 = vdwg.mxu0
  %v729 = vsel %vm31, %v704, %v706
  %v730 = vsel %vm32, %v711, %v713
  %v731 = vsel %vm33, %v718, %v720
  %v732 = vsel %vm34, %v725, %v727
  %v733 = vld [vmem:[%s0] sm:$0xff]
  %v734 = vld [vmem:[%s0 + $0x8] sm:$0xff]
  %v735 = vld [vmem:[%s0 + $0x10] sm:$0xff]
  %v736 = vld [vmem:[%s0 + $0x18] sm:$0xff]
  %v737 = vadd.f32 %v729, %v733
  %v738 = vadd.f32 %v730, %v734
  %v739 = vadd.f32 %v731, %v735
  %v740 = vadd.f32 %v732, %v736
  %745 = vrot.lane.b32.xlu0 %v729, 32
  %v746 = vpop.permute.xlu0 %745
  %747 = vrot.lane.b32.xlu0 %v730, 32
  %v748 = vpop.permute.xlu0 %747
  %749 = vrot.lane.b32.xlu0 %v731, 32
  %v750 = vpop.permute.xlu0 %749
  %751 = vrot.lane.b32.xlu0 %v732, 32
  %v752 = vpop.permute.xlu0 %751
  %761 = vrot.lane.b32.xlu0 %v733, 32
  %v762 = vpop.permute.xlu0 %761
  %763 = vrot.lane.b32.xlu0 %v734, 32
  %v764 = vpop.permute.xlu0 %763
  %765 = vrot.lane.b32.xlu0 %v735, 32
  %v766 = vpop.permute.xlu0 %765
  %767 = vrot.lane.b32.xlu0 %v736, 32
  %v768 = vpop.permute.xlu0 %767
  %v774 = vsel %vm35, %v14, 0
  %v777 = vsel %vm35, %v15, 0
  %v780 = vsel %vm35, %v16, 0
  %v783 = vsel %vm35, %v17, 0
  %785 = vmatprep.subr.mxu0 0.0
  %v786 = vand.u32 %v746, 4294901760
  %787 = vmatpush1.msra.mxu0 %v786
  %788 = vmatprep.subr.mxu0 0.0
  %v789 = vand.u32 %v748, 4294901760
  %790 = vmatpush1.msra.mxu0 %v789
  %791 = vmatprep.subr.mxu0 0.0
  %v792 = vand.u32 %v750, 4294901760
  %793 = vmatpush1.msra.mxu0 %v792
  %794 = vmatprep.subr.mxu0 0.0
  %v795 = vand.u32 %v752, 4294901760
  %796 = vmatpush1.msra.mxu0 %v795
  %797 = vmatprep.subr.mxu0 0.0
  %798 = vmatpush1.msra.mxu0 0.0
  %799 = vmatprep.subr.mxu0 0.0
  %800 = vmatpush1.msra.mxu0 0.0
  %801 = vmatprep.subr.mxu0 0.0
  %802 = vmatpush1.msra.mxu0 0.0
  %803 = vmatprep.subr.mxu0 0.0
  %804 = vmatpush1.msra.mxu0 0.0
  %805 = vmatprep.subr.mxu0 0.0
  %806 = vmatpush1.msra.mxu0 0.0
  %807 = vmatprep.subr.mxu0 0.0
  %808 = vmatpush1.msra.mxu0 0.0
  %809 = vmatprep.subr.mxu0 0.0
  %810 = vmatpush1.msra.mxu0 0.0
  %811 = vmatprep.subr.mxu0 0.0
  %812 = vmatpush1.msra.mxu0 0.0
  %813 = vmatprep.subr.mxu0 0.0
  %814 = vmatpush1.msra.mxu0 0.0
  %815 = vmatprep.subr.mxu0 0.0
  %816 = vmatpush1.msra.mxu0 0.0
  %817 = vmatprep.subr.mxu0 0.0
  %818 = vmatpush1.msra.mxu0 0.0
  %819 = vmatprep.subr.mxu0 0.0
  %820 = vmatpush1.msra.mxu0 0.0
  %821 = vmatprep.subr.mxu0 0.0
  %822 = vmatpush1.msra.mxu0 0.0
  %823 = vmatprep.subr.mxu0 0.0
  %824 = vmatpush1.msra.mxu0 0.0
  %825 = vmatprep.subr.mxu0 0.0
  %826 = vmatpush1.msra.mxu0 0.0
  %827 = vmatprep.subr.mxu0 0.0
  %828 = vmatpush1.msra.mxu0 0.0
  %829 = vmatprep.subr.mxu0 0.0
  %830 = vmatpush1.msra.mxu0 0.0
  %831 = vmatprep.subr.mxu0 0.0
  %832 = vmatpush1.msra.mxu0 0.0
  %833 = vmatprep.subr.mxu0 0.0
  %834 = vmatpush1.msra.mxu0 0.0
  %835 = vmatprep.subr.mxu0 0.0
  %836 = vmatpush1.msra.mxu0 0.0
  %837 = vmatprep.subr.mxu0 0.0
  %838 = vmatpush1.msra.mxu0 0.0
  %839 = vmatprep.subr.mxu0 0.0
  %840 = vmatpush1.msra.mxu0 0.0
  %841 = vmatprep.subr.mxu0 0.0
  %842 = vmatpush1.msra.mxu0 0.0
  %843 = vmatprep.subr.mxu0 0.0
  %844 = vmatpush1.msra.mxu0 0.0
  %845 = vmatprep.subr.mxu0 0.0
  %846 = vmatpush1.msra.mxu0 0.0
  %847 = vmatprep.subr.mxu0 0.0
  %848 = vmatpush1.msra.mxu0 0.0
  %849 = vmatprep.subr.mxu0 0.0
  %850 = vmatpush1.msra.mxu0 0.0
  %851 = vmatprep.subr.mxu0 0.0
  %852 = vmatpush1.msra.mxu0 0.0
  %853 = vmatprep.mubr.f32.mxu0 0.0
  %v854 = vand.u32 %v774, 4294901760
  %v855 = vsub.f32 %v774, %v854
  %v856 = vand.u32 %v855, 4294901760
  %v857 = vsub.f32 %v855, %v856
  %v858 = vand.u32 %v857, 4294901760
  %859 = vmatmul.mubr.f32.gmra.mrb[0].mxu0 %v858
  %v860 = vpop.f32.mrb[0].mxu0
  %v861 = vadd.f32 %v762, %v860
  %v862 = vpop.f32.mrb[0].mxu0
  %863 = vmatprep.mubr.f32.mxu0 0.0
  %v864 = vand.u32 %v777, 4294901760
  %v865 = vsub.f32 %v777, %v864
  %v866 = vand.u32 %v865, 4294901760
  %v867 = vsub.f32 %v865, %v866
  %v868 = vand.u32 %v867, 4294901760
  %869 = vmatmul.mubr.f32.gmra.mrb[0].mxu0 %v868
  %v870 = vpop.f32.mrb[0].mxu0
  %v871 = vadd.f32 %v764, %v870
  %v872 = vpop.f32.mrb[0].mxu0
  %873 = vmatprep.mubr.f32.mxu0 0.0
  %v874 = vand.u32 %v780, 4294901760
  %v875 = vsub.f32 %v780, %v874
  %v876 = vand.u32 %v875, 4294901760
  %v877 = vsub.f32 %v875, %v876
  %v878 = vand.u32 %v877, 4294901760
  %879 = vmatmul.mubr.f32.gmra.mrb[0].mxu0 %v878
  %v880 = vpop.f32.mrb[0].mxu0
  %v881 = vadd.f32 %v766, %v880
  %v882 = vpop.f32.mrb[0].mxu0
  %883 = vmatprep.mubr.f32.mxu0 0.0
  %v884 = vand.u32 %v783, 4294901760
  %v885 = vsub.f32 %v783, %v884
  %v886 = vand.u32 %v885, 4294901760
  %v887 = vsub.f32 %v885, %v886
  %v888 = vand.u32 %v887, 4294901760
  %889 = vmatmul.mubr.f32.gmra.mrb[0].mxu0 %v888
  %v890 = vpop.f32.mrb[0].mxu0
  %v891 = vadd.f32 %v768, %v890
  %v892 = vpop.f32.mrb[0].mxu0
  %893 = vdwg.mxu0
  %894 = vmatprep.subr.mxu0 0.0
  %v895 = vand.u32 %v746, 4294901760
  %v896 = vsub.f32 %v746, %v895
  %v897 = vand.u32 %v896, 4294901760
  %v898 = vsub.f32 %v896, %v897
  %v899 = vand.u32 %v898, 4294901760
  %900 = vmatpush1.msra.mxu0 %v899
  %901 = vmatprep.subr.mxu0 0.0
  %v902 = vand.u32 %v748, 4294901760
  %v903 = vsub.f32 %v748, %v902
  %v904 = vand.u32 %v903, 4294901760
  %v905 = vsub.f32 %v903, %v904
  %v906 = vand.u32 %v905, 4294901760
  %907 = vmatpush1.msra.mxu0 %v906
  %908 = vmatprep.subr.mxu0 0.0
  %v909 = vand.u32 %v750, 4294901760
  %v910 = vsub.f32 %v750, %v909
  %v911 = vand.u32 %v910, 4294901760
  %v912 = vsub.f32 %v910, %v911
  %v913 = vand.u32 %v912, 4294901760
  %914 = vmatpush1.msra.mxu0 %v913
  %915 = vmatprep.subr.mxu0 0.0
  %v916 = vand.u32 %v752, 4294901760
  %v917 = vsub.f32 %v752, %v916
  %v918 = vand.u32 %v917, 4294901760
  %v919 = vsub.f32 %v917, %v918
  %v920 = vand.u32 %v919, 4294901760
  %921 = vmatpush1.msra.mxu0 %v920
  %922 = vmatprep.subr.mxu0 0.0
  %923 = vmatpush1.msra.mxu0 0.0
  %924 = vmatprep.subr.mxu0 0.0
  %925 = vmatpush1.msra.mxu0 0.0
  %926 = vmatprep.subr.mxu0 0.0
  %927 = vmatpush1.msra.mxu0 0.0
  %928 = vmatprep.subr.mxu0 0.0
  %929 = vmatpush1.msra.mxu0 0.0
  %930 = vmatprep.subr.mxu0 0.0
  %931 = vmatpush1.msra.mxu0 0.0
  %932 = vmatprep.subr.mxu0 0.0
  %933 = vmatpush1.msra.mxu0 0.0
  %934 = vmatprep.subr.mxu0 0.0
  %935 = vmatpush1.msra.mxu0 0.0
  %936 = vmatprep.subr.mxu0 0.0
  %937 = vmatpush1.msra.mxu0 0.0
  %938 = vmatprep.subr.mxu0 0.0
  %939 = vmatpush1.msra.mxu0 0.0
  %940 = vmatprep.subr.mxu0 0.0
  %941 = vmatpush1.msra.mxu0 0.0
  %942 = vmatprep.subr.mxu0 0.0
  %943 = vmatpush1.msra.mxu0 0.0
  %944 = vmatprep.subr.mxu0 0.0
  %945 = vmatpush1.msra.mxu0 0.0
  %946 = vmatprep.subr.mxu0 0.0
  %947 = vmatpush1.msra.mxu0 0.0
  %948 = vmatprep.subr.mxu0 0.0
  %949 = vmatpush1.msra.mxu0 0.0
  %950 = vmatprep.subr.mxu0 0.0
  %951 = vmatpush1.msra.mxu0 0.0
  %952 = vmatprep.subr.mxu0 0.0
  %953 = vmatpush1.msra.mxu0 0.0
  %954 = vmatprep.subr.mxu0 0.0
  %955 = vmatpush1.msra.mxu0 0.0
  %956 = vmatprep.subr.mxu0 0.0
  %957 = vmatpush1.msra.mxu0 0.0
  %958 = vmatprep.subr.mxu0 0.0
  %959 = vmatpush1.msra.mxu0 0.0
  %960 = vmatprep.subr.mxu0 0.0
  %961 = vmatpush1.msra.mxu0 0.0
  %962 = vmatprep.subr.mxu0 0.0
  %963 = vmatpush1.msra.mxu0 0.0
  %964 = vmatprep.subr.mxu0 0.0
  %965 = vmatpush1.msra.mxu0 0.0
  %966 = vmatprep.subr.mxu0 0.0
  %967 = vmatpush1.msra.mxu0 0.0
  %968 = vmatprep.subr.mxu0 0.0
  %969 = vmatpush1.msra.mxu0 0.0
  %970 = vmatprep.subr.mxu0 0.0
  %971 = vmatpush1.msra.mxu0 0.0
  %972 = vmatprep.subr.mxu0 0.0
  %973 = vmatpush1.msra.mxu0 0.0
  %974 = vmatprep.subr.mxu0 0.0
  %975 = vmatpush1.msra.mxu0 0.0
  %976 = vmatprep.subr.mxu0 0.0
  %977 = vmatpush1.msra.mxu0 0.0
  %978 = vmatprep.mubr.f32.mxu0 0.0
  %v979 = vand.u32 %v774, 4294901760
  %980 = vmatmul.mubr.f32.gmra.mrb[0].mxu0 %v979
  %v981 = vpop.f32.mrb[0].mxu0
  %v982 = vadd.f32 %v861, %v981
  %v983 = vpop.f32.mrb[0].mxu0
  %984 = vmatprep.mubr.f32.mxu0 0.0
  %v985 = vand.u32 %v777, 4294901760
  %986 = vmatmul.mubr.f32.gmra.mrb[0].mxu0 %v985
  %v987 = vpop.f32.mrb[0].mxu0
  %v988 = vadd.f32 %v871, %v987
  %v989 = vpop.f32.mrb[0].mxu0
  %990 = vmatprep.mubr.f32.mxu0 0.0
  %v991 = vand.u32 %v780, 4294901760
  %992 = vmatmul.mubr.f32.gmra.mrb[0].mxu0 %v991
  %v993 = vpop.f32.mrb[0].mxu0
  %v994 = vadd.f32 %v881, %v993
  %v995 = vpop.f32.mrb[0].mxu0
  %996 = vmatprep.mubr.f32.mxu0 0.0
  %v997 = vand.u32 %v783, 4294901760
  %998 = vmatmul.mubr.f32.gmra.mrb[0].mxu0 %v997
  %v999 = vpop.f32.mrb[0].mxu0
  %v1000 = vadd.f32 %v891, %v999
  %v1001 = vpop.f32.mrb[0].mxu0
  %1002 = vdwg.mxu0
  %1003 = vmatprep.subr.mxu0 0.0
  %v1004 = vand.u32 %v746, 4294901760
  %v1005 = vsub.f32 %v746, %v1004
  %1006 = vmatpush1.msra.mxu0 %v1005
  %1007 = vmatprep.subr.mxu0 0.0
  %v1008 = vand.u32 %v748, 4294901760
  %v1009 = vsub.f32 %v748, %v1008
  %1010 = vmatpush1.msra.mxu0 %v1009
  %1011 = vmatprep.subr.mxu0 0.0
  %v1012 = vand.u32 %v750, 4294901760
  %v1013 = vsub.f32 %v750, %v1012
  %1014 = vmatpush1.msra.mxu0 %v1013
  %1015 = vmatprep.subr.mxu0 0.0
  %v1016 = vand.u32 %v752, 4294901760
  %v1017 = vsub.f32 %v752, %v1016
  %1018 = vmatpush1.msra.mxu0 %v1017
  %1019 = vmatprep.subr.mxu0 0.0
  %1020 = vmatpush1.msra.mxu0 0.0
  %1021 = vmatprep.subr.mxu0 0.0
  %1022 = vmatpush1.msra.mxu0 0.0
  %1023 = vmatprep.subr.mxu0 0.0
  %1024 = vmatpush1.msra.mxu0 0.0
  %1025 = vmatprep.subr.mxu0 0.0
  %1026 = vmatpush1.msra.mxu0 0.0
  %1027 = vmatprep.subr.mxu0 0.0
  %1028 = vmatpush1.msra.mxu0 0.0
  %1029 = vmatprep.subr.mxu0 0.0
  %1030 = vmatpush1.msra.mxu0 0.0
  %1031 = vmatprep.subr.mxu0 0.0
  %1032 = vmatpush1.msra.mxu0 0.0
  %1033 = vmatprep.subr.mxu0 0.0
  %1034 = vmatpush1.msra.mxu0 0.0
  %1035 = vmatprep.subr.mxu0 0.0
  %1036 = vmatpush1.msra.mxu0 0.0
  %1037 = vmatprep.subr.mxu0 0.0
  %1038 = vmatpush1.msra.mxu0 0.0
  %1039 = vmatprep.subr.mxu0 0.0
  %1040 = vmatpush1.msra.mxu0 0.0
  %1041 = vmatprep.subr.mxu0 0.0
  %1042 = vmatpush1.msra.mxu0 0.0
  %1043 = vmatprep.subr.mxu0 0.0
  %1044 = vmatpush1.msra.mxu0 0.0
  %1045 = vmatprep.subr.mxu0 0.0
  %1046 = vmatpush1.msra.mxu0 0.0
  %1047 = vmatprep.subr.mxu0 0.0
  %1048 = vmatpush1.msra.mxu0 0.0
  %1049 = vmatprep.subr.mxu0 0.0
  %1050 = vmatpush1.msra.mxu0 0.0
  %1051 = vmatprep.subr.mxu0 0.0
  %1052 = vmatpush1.msra.mxu0 0.0
  %1053 = vmatprep.subr.mxu0 0.0
  %1054 = vmatpush1.msra.mxu0 0.0
  %1055 = vmatprep.subr.mxu0 0.0
  %1056 = vmatpush1.msra.mxu0 0.0
  %1057 = vmatprep.subr.mxu0 0.0
  %1058 = vmatpush1.msra.mxu0 0.0
  %1059 = vmatprep.subr.mxu0 0.0
  %1060 = vmatpush1.msra.mxu0 0.0
  %1061 = vmatprep.subr.mxu0 0.0
  %1062 = vmatpush1.msra.mxu0 0.0
  %1063 = vmatprep.subr.mxu0 0.0
  %1064 = vmatpush1.msra.mxu0 0.0
  %1065 = vmatprep.subr.mxu0 0.0
  %1066 = vmatpush1.msra.mxu0 0.0
  %1067 = vmatprep.subr.mxu0 0.0
  %1068 = vmatpush1.msra.mxu0 0.0
  %1069 = vmatprep.subr.mxu0 0.0
  %1070 = vmatpush1.msra.mxu0 0.0
  %1071 = vmatprep.subr.mxu0 0.0
  %1072 = vmatpush1.msra.mxu0 0.0
  %1073 = vmatprep.subr.mxu0 0.0
  %1074 = vmatpush1.msra.mxu0 0.0
  %1075 = vmatprep.mubr.f32.mxu0 0.0
  %v1076 = vand.u32 %v774, 4294901760
  %v1077 = vsub.f32 %v774, %v1076
  %1078 = vmatmul.mubr.f32.gmra.mrb[0].mxu0 %v1077
  %v1079 = vpop.f32.mrb[0].mxu0
  %v1080 = vadd.f32 %v982, %v1079
  %v1081 = vpop.f32.mrb[0].mxu0
  %1082 = vmatprep.mubr.f32.mxu0 0.0
  %v1083 = vand.u32 %v777, 4294901760
  %v1084 = vsub.f32 %v777, %v1083
  %1085 = vmatmul.mubr.f32.gmra.mrb[0].mxu0 %v1084
  %v1086 = vpop.f32.mrb[0].mxu0
  %v1087 = vadd.f32 %v988, %v1086
  %v1088 = vpop.f32.mrb[0].mxu0
  %1089 = vmatprep.mubr.f32.mxu0 0.0
  %v1090 = vand.u32 %v780, 4294901760
  %v1091 = vsub.f32 %v780, %v1090
  %1092 = vmatmul.mubr.f32.gmra.mrb[0].mxu0 %v1091
  %v1093 = vpop.f32.mrb[0].mxu0
  %v1094 = vadd.f32 %v994, %v1093
  %v1095 = vpop.f32.mrb[0].mxu0
  %1096 = vmatprep.mubr.f32.mxu0 0.0
  %v1097 = vand.u32 %v783, 4294901760
  %v1098 = vsub.f32 %v783, %v1097
  %1099 = vmatmul.mubr.f32.gmra.mrb[0].mxu0 %v1098
  %v1100 = vpop.f32.mrb[0].mxu0
  %v1101 = vadd.f32 %v1000, %v1100
  %v1102 = vpop.f32.mrb[0].mxu0
  %1103 = vdwg.mxu0
  %1104 = vmatprep.subr.mxu0 0.0
  %v1105 = vand.u32 %v746, 4294901760
  %1106 = vmatpush1.msra.mxu0 %v1105
  %1107 = vmatprep.subr.mxu0 0.0
  %v1108 = vand.u32 %v748, 4294901760
  %1109 = vmatpush1.msra.mxu0 %v1108
  %1110 = vmatprep.subr.mxu0 0.0
  %v1111 = vand.u32 %v750, 4294901760
  %1112 = vmatpush1.msra.mxu0 %v1111
  %1113 = vmatprep.subr.mxu0 0.0
  %v1114 = vand.u32 %v752, 4294901760
  %1115 = vmatpush1.msra.mxu0 %v1114
  %1116 = vmatprep.subr.mxu0 0.0
  %1117 = vmatpush1.msra.mxu0 0.0
  %1118 = vmatprep.subr.mxu0 0.0
  %1119 = vmatpush1.msra.mxu0 0.0
  %1120 = vmatprep.subr.mxu0 0.0
  %1121 = vmatpush1.msra.mxu0 0.0
  %1122 = vmatprep.subr.mxu0 0.0
  %1123 = vmatpush1.msra.mxu0 0.0
  %1124 = vmatprep.subr.mxu0 0.0
  %1125 = vmatpush1.msra.mxu0 0.0
  %1126 = vmatprep.subr.mxu0 0.0
  %1127 = vmatpush1.msra.mxu0 0.0
  %1128 = vmatprep.subr.mxu0 0.0
  %1129 = vmatpush1.msra.mxu0 0.0
  %1130 = vmatprep.subr.mxu0 0.0
  %1131 = vmatpush1.msra.mxu0 0.0
  %1132 = vmatprep.subr.mxu0 0.0
  %1133 = vmatpush1.msra.mxu0 0.0
  %1134 = vmatprep.subr.mxu0 0.0
  %1135 = vmatpush1.msra.mxu0 0.0
  %1136 = vmatprep.subr.mxu0 0.0
  %1137 = vmatpush1.msra.mxu0 0.0
  %1138 = vmatprep.subr.mxu0 0.0
  %1139 = vmatpush1.msra.mxu0 0.0
  %1140 = vmatprep.subr.mxu0 0.0
  %1141 = vmatpush1.msra.mxu0 0.0
  %1142 = vmatprep.subr.mxu0 0.0
  %1143 = vmatpush1.msra.mxu0 0.0
  %1144 = vmatprep.subr.mxu0 0.0
  %1145 = vmatpush1.msra.mxu0 0.0
  %1146 = vmatprep.subr.mxu0 0.0
  %1147 = vmatpush1.msra.mxu0 0.0
  %1148 = vmatprep.subr.mxu0 0.0
  %1149 = vmatpush1.msra.mxu0 0.0
  %1150 = vmatprep.subr.mxu0 0.0
  %1151 = vmatpush1.msra.mxu0 0.0
  %1152 = vmatprep.subr.mxu0 0.0
  %1153 = vmatpush1.msra.mxu0 0.0
  %1154 = vmatprep.subr.mxu0 0.0
  %1155 = vmatpush1.msra.mxu0 0.0
  %1156 = vmatprep.subr.mxu0 0.0
  %1157 = vmatpush1.msra.mxu0 0.0
  %1158 = vmatprep.subr.mxu0 0.0
  %1159 = vmatpush1.msra.mxu0 0.0
  %1160 = vmatprep.subr.mxu0 0.0
  %1161 = vmatpush1.msra.mxu0 0.0
  %1162 = vmatprep.subr.mxu0 0.0
  %1163 = vmatpush1.msra.mxu0 0.0
  %1164 = vmatprep.subr.mxu0 0.0
  %1165 = vmatpush1.msra.mxu0 0.0
  %1166 = vmatprep.subr.mxu0 0.0
  %1167 = vmatpush1.msra.mxu0 0.0
  %1168 = vmatprep.subr.mxu0 0.0
  %1169 = vmatpush1.msra.mxu0 0.0
  %1170 = vmatprep.subr.mxu0 0.0
  %1171 = vmatpush1.msra.mxu0 0.0
  %1172 = vmatprep.mubr.f32.mxu0 0.0
  %v1173 = vand.u32 %v774, 4294901760
  %v1174 = vsub.f32 %v774, %v1173
  %v1175 = vand.u32 %v1174, 4294901760
  %1176 = vmatmul.mubr.f32.gmra.mrb[0].mxu0 %v1175
  %v1177 = vpop.f32.mrb[0].mxu0
  %v1178 = vadd.f32 %v1080, %v1177
  %v1179 = vpop.f32.mrb[0].mxu0
  %1180 = vmatprep.mubr.f32.mxu0 0.0
  %v1181 = vand.u32 %v777, 4294901760
  %v1182 = vsub.f32 %v777, %v1181
  %v1183 = vand.u32 %v1182, 4294901760
  %1184 = vmatmul.mubr.f32.gmra.mrb[0].mxu0 %v1183
  %v1185 = vpop.f32.mrb[0].mxu0
  %v1186 = vadd.f32 %v1087, %v1185
  %v1187 = vpop.f32.mrb[0].mxu0
  %1188 = vmatprep.mubr.f32.mxu0 0.0
  %v1189 = vand.u32 %v780, 4294901760
  %v1190 = vsub.f32 %v780, %v1189
  %v1191 = vand.u32 %v1190, 4294901760
  %1192 = vmatmul.mubr.f32.gmra.mrb[0].mxu0 %v1191
  %v1193 = vpop.f32.mrb[0].mxu0
  %v1194 = vadd.f32 %v1094, %v1193
  %v1195 = vpop.f32.mrb[0].mxu0
  %1196 = vmatprep.mubr.f32.mxu0 0.0
  %v1197 = vand.u32 %v783, 4294901760
  %v1198 = vsub.f32 %v783, %v1197
  %v1199 = vand.u32 %v1198, 4294901760
  %1200 = vmatmul.mubr.f32.gmra.mrb[0].mxu0 %v1199
  %v1201 = vpop.f32.mrb[0].mxu0
  %v1202 = vadd.f32 %v1101, %v1201
  %v1203 = vpop.f32.mrb[0].mxu0
  %1204 = vdwg.mxu0
  %1205 = vmatprep.subr.mxu0 0.0
  %v1206 = vand.u32 %v746, 4294901760
  %v1207 = vsub.f32 %v746, %v1206
  %v1208 = vand.u32 %v1207, 4294901760
  %1209 = vmatpush1.msra.mxu0 %v1208
  %1210 = vmatprep.subr.mxu0 0.0
  %v1211 = vand.u32 %v748, 4294901760
  %v1212 = vsub.f32 %v748, %v1211
  %v1213 = vand.u32 %v1212, 4294901760
  %1214 = vmatpush1.msra.mxu0 %v1213
  %1215 = vmatprep.subr.mxu0 0.0
  %v1216 = vand.u32 %v750, 4294901760
  %v1217 = vsub.f32 %v750, %v1216
  %v1218 = vand.u32 %v1217, 4294901760
  %1219 = vmatpush1.msra.mxu0 %v1218
  %1220 = vmatprep.subr.mxu0 0.0
  %v1221 = vand.u32 %v752, 4294901760
  %v1222 = vsub.f32 %v752, %v1221
  %v1223 = vand.u32 %v1222, 4294901760
  %1224 = vmatpush1.msra.mxu0 %v1223
  %1225 = vmatprep.subr.mxu0 0.0
  %1226 = vmatpush1.msra.mxu0 0.0
  %1227 = vmatprep.subr.mxu0 0.0
  %1228 = vmatpush1.msra.mxu0 0.0
  %1229 = vmatprep.subr.mxu0 0.0
  %1230 = vmatpush1.msra.mxu0 0.0
  %1231 = vmatprep.subr.mxu0 0.0
  %1232 = vmatpush1.msra.mxu0 0.0
  %1233 = vmatprep.subr.mxu0 0.0
  %1234 = vmatpush1.msra.mxu0 0.0
  %1235 = vmatprep.subr.mxu0 0.0
  %1236 = vmatpush1.msra.mxu0 0.0
  %1237 = vmatprep.subr.mxu0 0.0
  %1238 = vmatpush1.msra.mxu0 0.0
  %1239 = vmatprep.subr.mxu0 0.0
  %1240 = vmatpush1.msra.mxu0 0.0
  %1241 = vmatprep.subr.mxu0 0.0
  %1242 = vmatpush1.msra.mxu0 0.0
  %1243 = vmatprep.subr.mxu0 0.0
  %1244 = vmatpush1.msra.mxu0 0.0
  %1245 = vmatprep.subr.mxu0 0.0
  %1246 = vmatpush1.msra.mxu0 0.0
  %1247 = vmatprep.subr.mxu0 0.0
  %1248 = vmatpush1.msra.mxu0 0.0
  %1249 = vmatprep.subr.mxu0 0.0
  %1250 = vmatpush1.msra.mxu0 0.0
  %1251 = vmatprep.subr.mxu0 0.0
  %1252 = vmatpush1.msra.mxu0 0.0
  %1253 = vmatprep.subr.mxu0 0.0
  %1254 = vmatpush1.msra.mxu0 0.0
  %1255 = vmatprep.subr.mxu0 0.0
  %1256 = vmatpush1.msra.mxu0 0.0
  %1257 = vmatprep.subr.mxu0 0.0
  %1258 = vmatpush1.msra.mxu0 0.0
  %1259 = vmatprep.subr.mxu0 0.0
  %1260 = vmatpush1.msra.mxu0 0.0
  %1261 = vmatprep.subr.mxu0 0.0
  %1262 = vmatpush1.msra.mxu0 0.0
  %1263 = vmatprep.subr.mxu0 0.0
  %1264 = vmatpush1.msra.mxu0 0.0
  %1265 = vmatprep.subr.mxu0 0.0
  %1266 = vmatpush1.msra.mxu0 0.0
  %1267 = vmatprep.subr.mxu0 0.0
  %1268 = vmatpush1.msra.mxu0 0.0
  %1269 = vmatprep.subr.mxu0 0.0
  %1270 = vmatpush1.msra.mxu0 0.0
  %1271 = vmatprep.subr.mxu0 0.0
  %1272 = vmatpush1.msra.mxu0 0.0
  %1273 = vmatprep.subr.mxu0 0.0
  %1274 = vmatpush1.msra.mxu0 0.0
  %1275 = vmatprep.subr.mxu0 0.0
  %1276 = vmatpush1.msra.mxu0 0.0
  %1277 = vmatprep.subr.mxu0 0.0
  %1278 = vmatpush1.msra.mxu0 0.0
  %1279 = vmatprep.subr.mxu0 0.0
  %1280 = vmatpush1.msra.mxu0 0.0
  %1281 = vmatprep.mubr.f32.mxu0 0.0
  %v1282 = vand.u32 %v774, 4294901760
  %1283 = vmatmul.mubr.f32.gmra.mrb[0].mxu0 %v1282
  %v1284 = vpop.f32.mrb[0].mxu0
  %v1285 = vadd.f32 %v1178, %v1284
  %v1286 = vpop.f32.mrb[0].mxu0
  %1287 = vmatprep.mubr.f32.mxu0 0.0
  %v1288 = vand.u32 %v777, 4294901760
  %1289 = vmatmul.mubr.f32.gmra.mrb[0].mxu0 %v1288
  %v1290 = vpop.f32.mrb[0].mxu0
  %v1291 = vadd.f32 %v1186, %v1290
  %v1292 = vpop.f32.mrb[0].mxu0
  %1293 = vmatprep.mubr.f32.mxu0 0.0
  %v1294 = vand.u32 %v780, 4294901760
  %1295 = vmatmul.mubr.f32.gmra.mrb[0].mxu0 %v1294
  %v1296 = vpop.f32.mrb[0].mxu0
  %v1297 = vadd.f32 %v1194, %v1296
  %v1298 = vpop.f32.mrb[0].mxu0
  %1299 = vmatprep.mubr.f32.mxu0 0.0
  %v1300 = vand.u32 %v783, 4294901760
  %1301 = vmatmul.mubr.f32.gmra.mrb[0].mxu0 %v1300
  %v1302 = vpop.f32.mrb[0].mxu0
  %v1303 = vadd.f32 %v1202, %v1302
  %v1304 = vpop.f32.mrb[0].mxu0
  %1305 = vdwg.mxu0
  %1306 = vmatprep.subr.mxu0 0.0
  %v1307 = vand.u32 %v746, 4294901760
  %1308 = vmatpush1.msra.mxu0 %v1307
  %1309 = vmatprep.subr.mxu0 0.0
  %v1310 = vand.u32 %v748, 4294901760
  %1311 = vmatpush1.msra.mxu0 %v1310
  %1312 = vmatprep.subr.mxu0 0.0
  %v1313 = vand.u32 %v750, 4294901760
  %1314 = vmatpush1.msra.mxu0 %v1313
  %1315 = vmatprep.subr.mxu0 0.0
  %v1316 = vand.u32 %v752, 4294901760
  %1317 = vmatpush1.msra.mxu0 %v1316
  %1318 = vmatprep.subr.mxu0 0.0
  %1319 = vmatpush1.msra.mxu0 0.0
  %1320 = vmatprep.subr.mxu0 0.0
  %1321 = vmatpush1.msra.mxu0 0.0
  %1322 = vmatprep.subr.mxu0 0.0
  %1323 = vmatpush1.msra.mxu0 0.0
  %1324 = vmatprep.subr.mxu0 0.0
  %1325 = vmatpush1.msra.mxu0 0.0
  %1326 = vmatprep.subr.mxu0 0.0
  %1327 = vmatpush1.msra.mxu0 0.0
  %1328 = vmatprep.subr.mxu0 0.0
  %1329 = vmatpush1.msra.mxu0 0.0
  %1330 = vmatprep.subr.mxu0 0.0
  %1331 = vmatpush1.msra.mxu0 0.0
  %1332 = vmatprep.subr.mxu0 0.0
  %1333 = vmatpush1.msra.mxu0 0.0
  %1334 = vmatprep.subr.mxu0 0.0
  %1335 = vmatpush1.msra.mxu0 0.0
  %1336 = vmatprep.subr.mxu0 0.0
  %1337 = vmatpush1.msra.mxu0 0.0
  %1338 = vmatprep.subr.mxu0 0.0
  %1339 = vmatpush1.msra.mxu0 0.0
  %1340 = vmatprep.subr.mxu0 0.0
  %1341 = vmatpush1.msra.mxu0 0.0
  %1342 = vmatprep.subr.mxu0 0.0
  %1343 = vmatpush1.msra.mxu0 0.0
  %1344 = vmatprep.subr.mxu0 0.0
  %1345 = vmatpush1.msra.mxu0 0.0
  %1346 = vmatprep.subr.mxu0 0.0
  %1347 = vmatpush1.msra.mxu0 0.0
  %1348 = vmatprep.subr.mxu0 0.0
  %1349 = vmatpush1.msra.mxu0 0.0
  %1350 = vmatprep.subr.mxu0 0.0
  %1351 = vmatpush1.msra.mxu0 0.0
  %1352 = vmatprep.subr.mxu0 0.0
  %1353 = vmatpush1.msra.mxu0 0.0
  %1354 = vmatprep.subr.mxu0 0.0
  %1355 = vmatpush1.msra.mxu0 0.0
  %1356 = vmatprep.subr.mxu0 0.0
  %1357 = vmatpush1.msra.mxu0 0.0
  %1358 = vmatprep.subr.mxu0 0.0
  %1359 = vmatpush1.msra.mxu0 0.0
  %1360 = vmatprep.subr.mxu0 0.0
  %1361 = vmatpush1.msra.mxu0 0.0
  %1362 = vmatprep.subr.mxu0 0.0
  %1363 = vmatpush1.msra.mxu0 0.0
  %1364 = vmatprep.subr.mxu0 0.0
  %1365 = vmatpush1.msra.mxu0 0.0
  %1366 = vmatprep.subr.mxu0 0.0
  %1367 = vmatpush1.msra.mxu0 0.0
  %1368 = vmatprep.subr.mxu0 0.0
  %1369 = vmatpush1.msra.mxu0 0.0
  %1370 = vmatprep.subr.mxu0 0.0
  %1371 = vmatpush1.msra.mxu0 0.0
  %1372 = vmatprep.subr.mxu0 0.0
  %1373 = vmatpush1.msra.mxu0 0.0
  %1374 = vmatprep.mubr.f32.mxu0 0.0
  %v1375 = vand.u32 %v774, 4294901760
  %1376 = vmatmul.mubr.f32.gmra.mrb[0].mxu0 %v1375
  %v1377 = vpop.f32.mrb[0].mxu0
  %v1378 = vadd.f32 %v1285, %v1377
  %v1379 = vpop.f32.mrb[0].mxu0
  %1380 = vmatprep.mubr.f32.mxu0 0.0
  %v1381 = vand.u32 %v777, 4294901760
  %1382 = vmatmul.mubr.f32.gmra.mrb[0].mxu0 %v1381
  %v1383 = vpop.f32.mrb[0].mxu0
  %v1384 = vadd.f32 %v1291, %v1383
  %v1385 = vpop.f32.mrb[0].mxu0
  %1386 = vmatprep.mubr.f32.mxu0 0.0
  %v1387 = vand.u32 %v780, 4294901760
  %1388 = vmatmul.mubr.f32.gmra.mrb[0].mxu0 %v1387
  %v1389 = vpop.f32.mrb[0].mxu0
  %v1390 = vadd.f32 %v1297, %v1389
  %v1391 = vpop.f32.mrb[0].mxu0
  %1392 = vmatprep.mubr.f32.mxu0 0.0
  %v1393 = vand.u32 %v783, 4294901760
  %1394 = vmatmul.mubr.f32.gmra.mrb[0].mxu0 %v1393
  %v1395 = vpop.f32.mrb[0].mxu0
  %v1396 = vadd.f32 %v1303, %v1395
  %v1397 = vpop.f32.mrb[0].mxu0
  %1398 = vdwg.mxu0
  %v1399 = vadd.f32 %v1378, %v737
  %v1400 = vadd.f32 %v1384, %v738
  %v1401 = vadd.f32 %v1390, %v739
  %v1402 = vadd.f32 %v1396, %v740
  %v1403 = vxor.u32 %v1399, 2147483648
  %v1404 = vxor.u32 %v1400, 2147483648
  %v1405 = vxor.u32 %v1401, 2147483648
  %v1406 = vxor.u32 %v1402, 2147483648
  %v1407 = vmul.f32 %v1403, 1.442695
  %v1408 = vpow.pop %v1407
  %v1409 = vmul.f32 %v1404, 1.442695
  %v1410 = vpow.pop %v1409
  %v1411 = vmul.f32 %v1405, 1.442695
  %v1412 = vpow.pop %v1411
  %v1413 = vmul.f32 %v1406, 1.442695
  %v1414 = vpow.pop %v1413
  %v1415 = vadd.f32 %v1408, 1.0
  %v1416 = vadd.f32 %v1410, 1.0
  %v1417 = vadd.f32 %v1412, 1.0
  %v1418 = vadd.f32 %v1414, 1.0
  %v1419 = vrcp.pop %v1415
  %v1420 = vmul.f32 1.0, %v1419
  %v1421 = vrcp.pop %v1416
  %v1422 = vmul.f32 1.0, %v1421
  %v1423 = vrcp.pop %v1417
  %v1424 = vmul.f32 1.0, %v1423
  %v1425 = vrcp.pop %v1418
  %v1426 = vmul.f32 1.0, %v1425
  %1431 = vrot.lane.b32.xlu0 %v737, 96
  %v1432 = vpop.permute.xlu0 %1431
  %1433 = vrot.lane.b32.xlu0 %v738, 96
  %v1434 = vpop.permute.xlu0 %1433
  %1435 = vrot.lane.b32.xlu0 %v739, 96
  %v1436 = vpop.permute.xlu0 %1435
  %1437 = vrot.lane.b32.xlu0 %v740, 96
  %v1438 = vpop.permute.xlu0 %1437
  %v1443 = vadd.f32 %v1378, %v1432
  %v1444 = vadd.f32 %v1384, %v1434
  %v1445 = vadd.f32 %v1390, %v1436
  %v1446 = vadd.f32 %v1396, %v1438
  %v1447 = vxor.u32 %v1443, 2147483648
  %v1448 = vxor.u32 %v1444, 2147483648
  %v1449 = vxor.u32 %v1445, 2147483648
  %v1450 = vxor.u32 %v1446, 2147483648
  %v1451 = vmul.f32 %v1447, 1.442695
  %v1452 = vpow.pop %v1451
  %v1453 = vmul.f32 %v1448, 1.442695
  %v1454 = vpow.pop %v1453
  %v1455 = vmul.f32 %v1449, 1.442695
  %v1456 = vpow.pop %v1455
  %v1457 = vmul.f32 %v1450, 1.442695
  %v1458 = vpow.pop %v1457
  %v1459 = vadd.f32 %v1452, 1.0
  %v1460 = vadd.f32 %v1454, 1.0
  %v1461 = vadd.f32 %v1456, 1.0
  %v1462 = vadd.f32 %v1458, 1.0
  %v1463 = vrcp.pop %v1459
  %v1464 = vmul.f32 1.0, %v1463
  %v1465 = vrcp.pop %v1460
  %v1466 = vmul.f32 1.0, %v1465
  %v1467 = vrcp.pop %v1461
  %v1468 = vmul.f32 1.0, %v1467
  %v1469 = vrcp.pop %v1462
  %v1470 = vmul.f32 1.0, %v1469
  %1471 = vrot.lane.b32.xlu0 %v737, 64
  %v1472 = vpop.permute.xlu0 %1471
  %1473 = vrot.lane.b32.xlu0 %v738, 64
  %v1474 = vpop.permute.xlu0 %1473
  %1475 = vrot.lane.b32.xlu0 %v739, 64
  %v1476 = vpop.permute.xlu0 %1475
  %1477 = vrot.lane.b32.xlu0 %v740, 64
  %v1478 = vpop.permute.xlu0 %1477
  %v1483 = vmul.f32 %v1420, %v1472
  %v1484 = vmul.f32 %v1422, %v1474
  %v1485 = vmul.f32 %v1424, %v1476
  %v1486 = vmul.f32 %v1426, %v1478
  %v1487 = vadd.f32 %v1378, %v1483
  %v1488 = vadd.f32 %v1384, %v1484
  %v1489 = vadd.f32 %v1390, %v1485
  %v1490 = vadd.f32 %v1396, %v1486
  %v1491 = vtanh.pop %v1487
  %v1492 = vtanh.pop %v1488
  %v1493 = vtanh.pop %v1489
  %v1494 = vtanh.pop %v1490
  %v1495 = vsub.f32 1.0, %v1464
  %v1496 = vsub.f32 1.0, %v1466
  %v1497 = vsub.f32 1.0, %v1468
  %v1498 = vsub.f32 1.0, %v1470
  %v1499 = vmul.f32 %v1495, %v1491
  %v1500 = vmul.f32 %v1496, %v1492
  %v1501 = vmul.f32 %v1497, %v1493
  %v1502 = vmul.f32 %v1498, %v1494
  %v1503 = vmul.f32 %v1464, 0.0
  %v1504 = vmul.f32 %v1466, 0.0
  %v1505 = vmul.f32 %v1468, 0.0
  %v1506 = vmul.f32 %v1470, 0.0
  %v1507 = vadd.f32 %v1499, %v1503
  %v1508 = vadd.f32 %v1500, %v1504
  %v1509 = vadd.f32 %v1501, %v1505
  %v1510 = vadd.f32 %v1502, %v1506
  %v1512 = vsel %vm35, %v1507, 0
  %v1515 = vsel %vm35, %v1508, 0
  %v1518 = vsel %vm35, %v1509, 0
  %v1521 = vsel %vm35, %v1510, 0
  %v1523 = vand.u32 %v19, 4294901760
  %1524 = vmatprep.subr.mxu0 %v1523
  %v1525 = vand.u32 %v18, 4294901760
  %1526 = vmatpush1.msra.mxu0 %v1525
  %v1527 = vand.u32 %v21, 4294901760
  %1528 = vmatprep.subr.mxu0 %v1527
  %v1529 = vand.u32 %v20, 4294901760
  %1530 = vmatpush1.msra.mxu0 %v1529
  %v1531 = vand.u32 %v23, 4294901760
  %1532 = vmatprep.subr.mxu0 %v1531
  %v1533 = vand.u32 %v22, 4294901760
  %1534 = vmatpush1.msra.mxu0 %v1533
  %v1535 = vand.u32 %v25, 4294901760
  %1536 = vmatprep.subr.mxu0 %v1535
  %v1537 = vand.u32 %v24, 4294901760
  %1538 = vmatpush1.msra.mxu0 %v1537
  %1539 = vmatprep.subr.mxu0 0.0
  %1540 = vmatpush1.msra.mxu0 0.0
  %1541 = vmatprep.subr.mxu0 0.0
  %1542 = vmatpush1.msra.mxu0 0.0
  %1543 = vmatprep.subr.mxu0 0.0
  %1544 = vmatpush1.msra.mxu0 0.0
  %1545 = vmatprep.subr.mxu0 0.0
  %1546 = vmatpush1.msra.mxu0 0.0
  %1547 = vmatprep.subr.mxu0 0.0
  %1548 = vmatpush1.msra.mxu0 0.0
  %1549 = vmatprep.subr.mxu0 0.0
  %1550 = vmatpush1.msra.mxu0 0.0
  %1551 = vmatprep.subr.mxu0 0.0
  %1552 = vmatpush1.msra.mxu0 0.0
  %1553 = vmatprep.subr.mxu0 0.0
  %1554 = vmatpush1.msra.mxu0 0.0
  %1555 = vmatprep.subr.mxu0 0.0
  %1556 = vmatpush1.msra.mxu0 0.0
  %1557 = vmatprep.subr.mxu0 0.0
  %1558 = vmatpush1.msra.mxu0 0.0
  %1559 = vmatprep.subr.mxu0 0.0
  %1560 = vmatpush1.msra.mxu0 0.0
  %1561 = vmatprep.subr.mxu0 0.0
  %1562 = vmatpush1.msra.mxu0 0.0
  %1563 = vmatprep.subr.mxu0 0.0
  %1564 = vmatpush1.msra.mxu0 0.0
  %1565 = vmatprep.subr.mxu0 0.0
  %1566 = vmatpush1.msra.mxu0 0.0
  %1567 = vmatprep.subr.mxu0 0.0
  %1568 = vmatpush1.msra.mxu0 0.0
  %1569 = vmatprep.subr.mxu0 0.0
  %1570 = vmatpush1.msra.mxu0 0.0
  %1571 = vmatprep.subr.mxu0 0.0
  %1572 = vmatpush1.msra.mxu0 0.0
  %1573 = vmatprep.subr.mxu0 0.0
  %1574 = vmatpush1.msra.mxu0 0.0
  %1575 = vmatprep.subr.mxu0 0.0
  %1576 = vmatpush1.msra.mxu0 0.0
  %1577 = vmatprep.subr.mxu0 0.0
  %1578 = vmatpush1.msra.mxu0 0.0
  %1579 = vmatprep.subr.mxu0 0.0
  %1580 = vmatpush1.msra.mxu0 0.0
  %1581 = vmatprep.subr.mxu0 0.0
  %1582 = vmatpush1.msra.mxu0 0.0
  %1583 = vmatprep.subr.mxu0 0.0
  %1584 = vmatpush1.msra.mxu0 0.0
  %1585 = vmatprep.subr.mxu0 0.0
  %1586 = vmatpush1.msra.mxu0 0.0
  %1587 = vmatprep.subr.mxu0 0.0
  %1588 = vmatpush1.msra.mxu0 0.0
  %1589 = vmatprep.subr.mxu0 0.0
  %1590 = vmatpush1.msra.mxu0 0.0
  %1591 = vmatprep.subr.mxu0 0.0
  %1592 = vmatpush1.msra.mxu0 0.0
  %1593 = vmatprep.subr.mxu0 0.0
  %1594 = vmatpush1.msra.mxu0 0.0
  %1595 = vmatprep.mubr.f32.mxu0 0.0
  %v1596 = vand.u32 %v1512, 4294901760
  %v1597 = vsub.f32 %v1512, %v1596
  %v1598 = vand.u32 %v1597, 4294901760
  %v1599 = vsub.f32 %v1597, %v1598
  %v1600 = vand.u32 %v1599, 4294901760
  %1601 = vmatmul.mubr.f32.gmra.mrb[0].mxu0 %v1600
  %v1602 = vpop.f32.mrb[0].mxu0
  %v1603 = vadd.f32 0.0, %v1602
  %v1604 = vpop.f32.mrb[0].mxu0
  %v1605 = vadd.f32 0.0, %v1604
  %1606 = vmatprep.mubr.f32.mxu0 0.0
  %v1607 = vand.u32 %v1515, 4294901760
  %v1608 = vsub.f32 %v1515, %v1607
  %v1609 = vand.u32 %v1608, 4294901760
  %v1610 = vsub.f32 %v1608, %v1609
  %v1611 = vand.u32 %v1610, 4294901760
  %1612 = vmatmul.mubr.f32.gmra.mrb[0].mxu0 %v1611
  %v1613 = vpop.f32.mrb[0].mxu0
  %v1614 = vadd.f32 0.0, %v1613
  %v1615 = vpop.f32.mrb[0].mxu0
  %v1616 = vadd.f32 0.0, %v1615
  %1617 = vmatprep.mubr.f32.mxu0 0.0
  %v1618 = vand.u32 %v1518, 4294901760
  %v1619 = vsub.f32 %v1518, %v1618
  %v1620 = vand.u32 %v1619, 4294901760
  %v1621 = vsub.f32 %v1619, %v1620
  %v1622 = vand.u32 %v1621, 4294901760
  %1623 = vmatmul.mubr.f32.gmra.mrb[0].mxu0 %v1622
  %v1624 = vpop.f32.mrb[0].mxu0
  %v1625 = vadd.f32 0.0, %v1624
  %v1626 = vpop.f32.mrb[0].mxu0
  %v1627 = vadd.f32 0.0, %v1626
  %1628 = vmatprep.mubr.f32.mxu0 0.0
  %v1629 = vand.u32 %v1521, 4294901760
  %v1630 = vsub.f32 %v1521, %v1629
  %v1631 = vand.u32 %v1630, 4294901760
  %v1632 = vsub.f32 %v1630, %v1631
  %v1633 = vand.u32 %v1632, 4294901760
  %1634 = vmatmul.mubr.f32.gmra.mrb[0].mxu0 %v1633
  %v1635 = vpop.f32.mrb[0].mxu0
  %v1636 = vadd.f32 0.0, %v1635
  %v1637 = vpop.f32.mrb[0].mxu0
  %v1638 = vadd.f32 0.0, %v1637
  %1639 = vdwg.mxu0
  %v1640 = vand.u32 %v19, 4294901760
  %v1641 = vsub.f32 %v19, %v1640
  %v1642 = vand.u32 %v1641, 4294901760
  %v1643 = vsub.f32 %v1641, %v1642
  %v1644 = vand.u32 %v1643, 4294901760
  %1645 = vmatprep.subr.mxu0 %v1644
  %v1646 = vand.u32 %v18, 4294901760
  %v1647 = vsub.f32 %v18, %v1646
  %v1648 = vand.u32 %v1647, 4294901760
  %v1649 = vsub.f32 %v1647, %v1648
  %v1650 = vand.u32 %v1649, 4294901760
  %1651 = vmatpush1.msra.mxu0 %v1650
  %v1652 = vand.u32 %v21, 4294901760
  %v1653 = vsub.f32 %v21, %v1652
  %v1654 = vand.u32 %v1653, 4294901760
  %v1655 = vsub.f32 %v1653, %v1654
  %v1656 = vand.u32 %v1655, 4294901760
  %1657 = vmatprep.subr.mxu0 %v1656
  %v1658 = vand.u32 %v20, 4294901760
  %v1659 = vsub.f32 %v20, %v1658
  %v1660 = vand.u32 %v1659, 4294901760
  %v1661 = vsub.f32 %v1659, %v1660
  %v1662 = vand.u32 %v1661, 4294901760
  %1663 = vmatpush1.msra.mxu0 %v1662
  %v1664 = vand.u32 %v23, 4294901760
  %v1665 = vsub.f32 %v23, %v1664
  %v1666 = vand.u32 %v1665, 4294901760
  %v1667 = vsub.f32 %v1665, %v1666
  %v1668 = vand.u32 %v1667, 4294901760
  %1669 = vmatprep.subr.mxu0 %v1668
  %v1670 = vand.u32 %v22, 4294901760
  %v1671 = vsub.f32 %v22, %v1670
  %v1672 = vand.u32 %v1671, 4294901760
  %v1673 = vsub.f32 %v1671, %v1672
  %v1674 = vand.u32 %v1673, 4294901760
  %1675 = vmatpush1.msra.mxu0 %v1674
  %v1676 = vand.u32 %v25, 4294901760
  %v1677 = vsub.f32 %v25, %v1676
  %v1678 = vand.u32 %v1677, 4294901760
  %v1679 = vsub.f32 %v1677, %v1678
  %v1680 = vand.u32 %v1679, 4294901760
  %1681 = vmatprep.subr.mxu0 %v1680
  %v1682 = vand.u32 %v24, 4294901760
  %v1683 = vsub.f32 %v24, %v1682
  %v1684 = vand.u32 %v1683, 4294901760
  %v1685 = vsub.f32 %v1683, %v1684
  %v1686 = vand.u32 %v1685, 4294901760
  %1687 = vmatpush1.msra.mxu0 %v1686
  %1688 = vmatprep.subr.mxu0 0.0
  %1689 = vmatpush1.msra.mxu0 0.0
  %1690 = vmatprep.subr.mxu0 0.0
  %1691 = vmatpush1.msra.mxu0 0.0
  %1692 = vmatprep.subr.mxu0 0.0
  %1693 = vmatpush1.msra.mxu0 0.0
  %1694 = vmatprep.subr.mxu0 0.0
  %1695 = vmatpush1.msra.mxu0 0.0
  %1696 = vmatprep.subr.mxu0 0.0
  %1697 = vmatpush1.msra.mxu0 0.0
  %1698 = vmatprep.subr.mxu0 0.0
  %1699 = vmatpush1.msra.mxu0 0.0
  %1700 = vmatprep.subr.mxu0 0.0
  %1701 = vmatpush1.msra.mxu0 0.0
  %1702 = vmatprep.subr.mxu0 0.0
  %1703 = vmatpush1.msra.mxu0 0.0
  %1704 = vmatprep.subr.mxu0 0.0
  %1705 = vmatpush1.msra.mxu0 0.0
  %1706 = vmatprep.subr.mxu0 0.0
  %1707 = vmatpush1.msra.mxu0 0.0
  %1708 = vmatprep.subr.mxu0 0.0
  %1709 = vmatpush1.msra.mxu0 0.0
  %1710 = vmatprep.subr.mxu0 0.0
  %1711 = vmatpush1.msra.mxu0 0.0
  %1712 = vmatprep.subr.mxu0 0.0
  %1713 = vmatpush1.msra.mxu0 0.0
  %1714 = vmatprep.subr.mxu0 0.0
  %1715 = vmatpush1.msra.mxu0 0.0
  %1716 = vmatprep.subr.mxu0 0.0
  %1717 = vmatpush1.msra.mxu0 0.0
  %1718 = vmatprep.subr.mxu0 0.0
  %1719 = vmatpush1.msra.mxu0 0.0
  %1720 = vmatprep.subr.mxu0 0.0
  %1721 = vmatpush1.msra.mxu0 0.0
  %1722 = vmatprep.subr.mxu0 0.0
  %1723 = vmatpush1.msra.mxu0 0.0
  %1724 = vmatprep.subr.mxu0 0.0
  %1725 = vmatpush1.msra.mxu0 0.0
  %1726 = vmatprep.subr.mxu0 0.0
  %1727 = vmatpush1.msra.mxu0 0.0
  %1728 = vmatprep.subr.mxu0 0.0
  %1729 = vmatpush1.msra.mxu0 0.0
  %1730 = vmatprep.subr.mxu0 0.0
  %1731 = vmatpush1.msra.mxu0 0.0
  %1732 = vmatprep.subr.mxu0 0.0
  %1733 = vmatpush1.msra.mxu0 0.0
  %1734 = vmatprep.subr.mxu0 0.0
  %1735 = vmatpush1.msra.mxu0 0.0
  %1736 = vmatprep.subr.mxu0 0.0
  %1737 = vmatpush1.msra.mxu0 0.0
  %1738 = vmatprep.subr.mxu0 0.0
  %1739 = vmatpush1.msra.mxu0 0.0
  %1740 = vmatprep.subr.mxu0 0.0
  %1741 = vmatpush1.msra.mxu0 0.0
  %1742 = vmatprep.subr.mxu0 0.0
  %1743 = vmatpush1.msra.mxu0 0.0
  %1744 = vmatprep.mubr.f32.mxu0 0.0
  %v1745 = vand.u32 %v1512, 4294901760
  %1746 = vmatmul.mubr.f32.gmra.mrb[0].mxu0 %v1745
  %v1747 = vpop.f32.mrb[0].mxu0
  %v1748 = vadd.f32 %v1603, %v1747
  %v1749 = vpop.f32.mrb[0].mxu0
  %v1750 = vadd.f32 %v1605, %v1749
  %1751 = vmatprep.mubr.f32.mxu0 0.0
  %v1752 = vand.u32 %v1515, 4294901760
  %1753 = vmatmul.mubr.f32.gmra.mrb[0].mxu0 %v1752
  %v1754 = vpop.f32.mrb[0].mxu0
  %v1755 = vadd.f32 %v1614, %v1754
  %v1756 = vpop.f32.mrb[0].mxu0
  %v1757 = vadd.f32 %v1616, %v1756
  %1758 = vmatprep.mubr.f32.mxu0 0.0
  %v1759 = vand.u32 %v1518, 4294901760
  %1760 = vmatmul.mubr.f32.gmra.mrb[0].mxu0 %v1759
  %v1761 = vpop.f32.mrb[0].mxu0
  %v1762 = vadd.f32 %v1625, %v1761
  %v1763 = vpop.f32.mrb[0].mxu0
  %v1764 = vadd.f32 %v1627, %v1763
  %1765 = vmatprep.mubr.f32.mxu0 0.0
  %v1766 = vand.u32 %v1521, 4294901760
  %1767 = vmatmul.mubr.f32.gmra.mrb[0].mxu0 %v1766
  %v1768 = vpop.f32.mrb[0].mxu0
  %v1769 = vadd.f32 %v1636, %v1768
  %v1770 = vpop.f32.mrb[0].mxu0
  %v1771 = vadd.f32 %v1638, %v1770
  %1772 = vdwg.mxu0
  %v1773 = vand.u32 %v19, 4294901760
  %v1774 = vsub.f32 %v19, %v1773
  %1775 = vmatprep.subr.mxu0 %v1774
  %v1776 = vand.u32 %v18, 4294901760
  %v1777 = vsub.f32 %v18, %v1776
  %1778 = vmatpush1.msra.mxu0 %v1777
  %v1779 = vand.u32 %v21, 4294901760
  %v1780 = vsub.f32 %v21, %v1779
  %1781 = vmatprep.subr.mxu0 %v1780
  %v1782 = vand.u32 %v20, 4294901760
  %v1783 = vsub.f32 %v20, %v1782
  %1784 = vmatpush1.msra.mxu0 %v1783
  %v1785 = vand.u32 %v23, 4294901760
  %v1786 = vsub.f32 %v23, %v1785
  %1787 = vmatprep.subr.mxu0 %v1786
  %v1788 = vand.u32 %v22, 4294901760
  %v1789 = vsub.f32 %v22, %v1788
  %1790 = vmatpush1.msra.mxu0 %v1789
  %v1791 = vand.u32 %v25, 4294901760
  %v1792 = vsub.f32 %v25, %v1791
  %1793 = vmatprep.subr.mxu0 %v1792
  %v1794 = vand.u32 %v24, 4294901760
  %v1795 = vsub.f32 %v24, %v1794
  %1796 = vmatpush1.msra.mxu0 %v1795
  %1797 = vmatprep.subr.mxu0 0.0
  %1798 = vmatpush1.msra.mxu0 0.0
  %1799 = vmatprep.subr.mxu0 0.0
  %1800 = vmatpush1.msra.mxu0 0.0
  %1801 = vmatprep.subr.mxu0 0.0
  %1802 = vmatpush1.msra.mxu0 0.0
  %1803 = vmatprep.subr.mxu0 0.0
  %1804 = vmatpush1.msra.mxu0 0.0
  %1805 = vmatprep.subr.mxu0 0.0
  %1806 = vmatpush1.msra.mxu0 0.0
  %1807 = vmatprep.subr.mxu0 0.0
  %1808 = vmatpush1.msra.mxu0 0.0
  %1809 = vmatprep.subr.mxu0 0.0
  %1810 = vmatpush1.msra.mxu0 0.0
  %1811 = vmatprep.subr.mxu0 0.0
  %1812 = vmatpush1.msra.mxu0 0.0
  %1813 = vmatprep.subr.mxu0 0.0
  %1814 = vmatpush1.msra.mxu0 0.0
  %1815 = vmatprep.subr.mxu0 0.0
  %1816 = vmatpush1.msra.mxu0 0.0
  %1817 = vmatprep.subr.mxu0 0.0
  %1818 = vmatpush1.msra.mxu0 0.0
  %1819 = vmatprep.subr.mxu0 0.0
  %1820 = vmatpush1.msra.mxu0 0.0
  %1821 = vmatprep.subr.mxu0 0.0
  %1822 = vmatpush1.msra.mxu0 0.0
  %1823 = vmatprep.subr.mxu0 0.0
  %1824 = vmatpush1.msra.mxu0 0.0
  %1825 = vmatprep.subr.mxu0 0.0
  %1826 = vmatpush1.msra.mxu0 0.0
  %1827 = vmatprep.subr.mxu0 0.0
  %1828 = vmatpush1.msra.mxu0 0.0
  %1829 = vmatprep.subr.mxu0 0.0
  %1830 = vmatpush1.msra.mxu0 0.0
  %1831 = vmatprep.subr.mxu0 0.0
  %1832 = vmatpush1.msra.mxu0 0.0
  %1833 = vmatprep.subr.mxu0 0.0
  %1834 = vmatpush1.msra.mxu0 0.0
  %1835 = vmatprep.subr.mxu0 0.0
  %1836 = vmatpush1.msra.mxu0 0.0
  %1837 = vmatprep.subr.mxu0 0.0
  %1838 = vmatpush1.msra.mxu0 0.0
  %1839 = vmatprep.subr.mxu0 0.0
  %1840 = vmatpush1.msra.mxu0 0.0
  %1841 = vmatprep.subr.mxu0 0.0
  %1842 = vmatpush1.msra.mxu0 0.0
  %1843 = vmatprep.subr.mxu0 0.0
  %1844 = vmatpush1.msra.mxu0 0.0
  %1845 = vmatprep.subr.mxu0 0.0
  %1846 = vmatpush1.msra.mxu0 0.0
  %1847 = vmatprep.subr.mxu0 0.0
  %1848 = vmatpush1.msra.mxu0 0.0
  %1849 = vmatprep.subr.mxu0 0.0
  %1850 = vmatpush1.msra.mxu0 0.0
  %1851 = vmatprep.subr.mxu0 0.0
  %1852 = vmatpush1.msra.mxu0 0.0
  %1853 = vmatprep.mubr.f32.mxu0 0.0
  %v1854 = vand.u32 %v1512, 4294901760
  %v1855 = vsub.f32 %v1512, %v1854
  %1856 = vmatmul.mubr.f32.gmra.mrb[0].mxu0 %v1855
  %v1857 = vpop.f32.mrb[0].mxu0
  %v1858 = vadd.f32 %v1748, %v1857
  %v1859 = vpop.f32.mrb[0].mxu0
  %v1860 = vadd.f32 %v1750, %v1859
  %1861 = vmatprep.mubr.f32.mxu0 0.0
  %v1862 = vand.u32 %v1515, 4294901760
  %v1863 = vsub.f32 %v1515, %v1862
  %1864 = vmatmul.mubr.f32.gmra.mrb[0].mxu0 %v1863
  %v1865 = vpop.f32.mrb[0].mxu0
  %v1866 = vadd.f32 %v1755, %v1865
  %v1867 = vpop.f32.mrb[0].mxu0
  %v1868 = vadd.f32 %v1757, %v1867
  %1869 = vmatprep.mubr.f32.mxu0 0.0
  %v1870 = vand.u32 %v1518, 4294901760
  %v1871 = vsub.f32 %v1518, %v1870
  %1872 = vmatmul.mubr.f32.gmra.mrb[0].mxu0 %v1871
  %v1873 = vpop.f32.mrb[0].mxu0
  %v1874 = vadd.f32 %v1762, %v1873
  %v1875 = vpop.f32.mrb[0].mxu0
  %v1876 = vadd.f32 %v1764, %v1875
  %1877 = vmatprep.mubr.f32.mxu0 0.0
  %v1878 = vand.u32 %v1521, 4294901760
  %v1879 = vsub.f32 %v1521, %v1878
  %1880 = vmatmul.mubr.f32.gmra.mrb[0].mxu0 %v1879
  %v1881 = vpop.f32.mrb[0].mxu0
  %v1882 = vadd.f32 %v1769, %v1881
  %v1883 = vpop.f32.mrb[0].mxu0
  %v1884 = vadd.f32 %v1771, %v1883
  %1885 = vdwg.mxu0
  %v1886 = vand.u32 %v19, 4294901760
  %1887 = vmatprep.subr.mxu0 %v1886
  %v1888 = vand.u32 %v18, 4294901760
  %1889 = vmatpush1.msra.mxu0 %v1888
  %v1890 = vand.u32 %v21, 4294901760
  %1891 = vmatprep.subr.mxu0 %v1890
  %v1892 = vand.u32 %v20, 4294901760
  %1893 = vmatpush1.msra.mxu0 %v1892
  %v1894 = vand.u32 %v23, 4294901760
  %1895 = vmatprep.subr.mxu0 %v1894
  %v1896 = vand.u32 %v22, 4294901760
  %1897 = vmatpush1.msra.mxu0 %v1896
  %v1898 = vand.u32 %v25, 4294901760
  %1899 = vmatprep.subr.mxu0 %v1898
  %v1900 = vand.u32 %v24, 4294901760
  %1901 = vmatpush1.msra.mxu0 %v1900
  %1902 = vmatprep.subr.mxu0 0.0
  %1903 = vmatpush1.msra.mxu0 0.0
  %1904 = vmatprep.subr.mxu0 0.0
  %1905 = vmatpush1.msra.mxu0 0.0
  %1906 = vmatprep.subr.mxu0 0.0
  %1907 = vmatpush1.msra.mxu0 0.0
  %1908 = vmatprep.subr.mxu0 0.0
  %1909 = vmatpush1.msra.mxu0 0.0
  %1910 = vmatprep.subr.mxu0 0.0
  %1911 = vmatpush1.msra.mxu0 0.0
  %1912 = vmatprep.subr.mxu0 0.0
  %1913 = vmatpush1.msra.mxu0 0.0
  %1914 = vmatprep.subr.mxu0 0.0
  %1915 = vmatpush1.msra.mxu0 0.0
  %1916 = vmatprep.subr.mxu0 0.0
  %1917 = vmatpush1.msra.mxu0 0.0
  %1918 = vmatprep.subr.mxu0 0.0
  %1919 = vmatpush1.msra.mxu0 0.0
  %1920 = vmatprep.subr.mxu0 0.0
  %1921 = vmatpush1.msra.mxu0 0.0
  %1922 = vmatprep.subr.mxu0 0.0
  %1923 = vmatpush1.msra.mxu0 0.0
  %1924 = vmatprep.subr.mxu0 0.0
  %1925 = vmatpush1.msra.mxu0 0.0
  %1926 = vmatprep.subr.mxu0 0.0
  %1927 = vmatpush1.msra.mxu0 0.0
  %1928 = vmatprep.subr.mxu0 0.0
  %1929 = vmatpush1.msra.mxu0 0.0
  %1930 = vmatprep.subr.mxu0 0.0
  %1931 = vmatpush1.msra.mxu0 0.0
  %1932 = vmatprep.subr.mxu0 0.0
  %1933 = vmatpush1.msra.mxu0 0.0
  %1934 = vmatprep.subr.mxu0 0.0
  %1935 = vmatpush1.msra.mxu0 0.0
  %1936 = vmatprep.subr.mxu0 0.0
  %1937 = vmatpush1.msra.mxu0 0.0
  %1938 = vmatprep.subr.mxu0 0.0
  %1939 = vmatpush1.msra.mxu0 0.0
  %1940 = vmatprep.subr.mxu0 0.0
  %1941 = vmatpush1.msra.mxu0 0.0
  %1942 = vmatprep.subr.mxu0 0.0
  %1943 = vmatpush1.msra.mxu0 0.0
  %1944 = vmatprep.subr.mxu0 0.0
  %1945 = vmatpush1.msra.mxu0 0.0
  %1946 = vmatprep.subr.mxu0 0.0
  %1947 = vmatpush1.msra.mxu0 0.0
  %1948 = vmatprep.subr.mxu0 0.0
  %1949 = vmatpush1.msra.mxu0 0.0
  %1950 = vmatprep.subr.mxu0 0.0
  %1951 = vmatpush1.msra.mxu0 0.0
  %1952 = vmatprep.subr.mxu0 0.0
  %1953 = vmatpush1.msra.mxu0 0.0
  %1954 = vmatprep.subr.mxu0 0.0
  %1955 = vmatpush1.msra.mxu0 0.0
  %1956 = vmatprep.subr.mxu0 0.0
  %1957 = vmatpush1.msra.mxu0 0.0
  %1958 = vmatprep.mubr.f32.mxu0 0.0
  %v1959 = vand.u32 %v1512, 4294901760
  %v1960 = vsub.f32 %v1512, %v1959
  %v1961 = vand.u32 %v1960, 4294901760
  %1962 = vmatmul.mubr.f32.gmra.mrb[0].mxu0 %v1961
  %v1963 = vpop.f32.mrb[0].mxu0
  %v1964 = vadd.f32 %v1858, %v1963
  %v1965 = vpop.f32.mrb[0].mxu0
  %v1966 = vadd.f32 %v1860, %v1965
  %1967 = vmatprep.mubr.f32.mxu0 0.0
  %v1968 = vand.u32 %v1515, 4294901760
  %v1969 = vsub.f32 %v1515, %v1968
  %v1970 = vand.u32 %v1969, 4294901760
  %1971 = vmatmul.mubr.f32.gmra.mrb[0].mxu0 %v1970
  %v1972 = vpop.f32.mrb[0].mxu0
  %v1973 = vadd.f32 %v1866, %v1972
  %v1974 = vpop.f32.mrb[0].mxu0
  %v1975 = vadd.f32 %v1868, %v1974
  %1976 = vmatprep.mubr.f32.mxu0 0.0
  %v1977 = vand.u32 %v1518, 4294901760
  %v1978 = vsub.f32 %v1518, %v1977
  %v1979 = vand.u32 %v1978, 4294901760
  %1980 = vmatmul.mubr.f32.gmra.mrb[0].mxu0 %v1979
  %v1981 = vpop.f32.mrb[0].mxu0
  %v1982 = vadd.f32 %v1874, %v1981
  %v1983 = vpop.f32.mrb[0].mxu0
  %v1984 = vadd.f32 %v1876, %v1983
  %1985 = vmatprep.mubr.f32.mxu0 0.0
  %v1986 = vand.u32 %v1521, 4294901760
  %v1987 = vsub.f32 %v1521, %v1986
  %v1988 = vand.u32 %v1987, 4294901760
  %1989 = vmatmul.mubr.f32.gmra.mrb[0].mxu0 %v1988
  %v1990 = vpop.f32.mrb[0].mxu0
  %v1991 = vadd.f32 %v1882, %v1990
  %v1992 = vpop.f32.mrb[0].mxu0
  %v1993 = vadd.f32 %v1884, %v1992
  %1994 = vdwg.mxu0
  %v1995 = vand.u32 %v19, 4294901760
  %v1996 = vsub.f32 %v19, %v1995
  %v1997 = vand.u32 %v1996, 4294901760
  %1998 = vmatprep.subr.mxu0 %v1997
  %v1999 = vand.u32 %v18, 4294901760
  %v2000 = vsub.f32 %v18, %v1999
  %v2001 = vand.u32 %v2000, 4294901760
  %2002 = vmatpush1.msra.mxu0 %v2001
  %v2003 = vand.u32 %v21, 4294901760
  %v2004 = vsub.f32 %v21, %v2003
  %v2005 = vand.u32 %v2004, 4294901760
  %2006 = vmatprep.subr.mxu0 %v2005
  %v2007 = vand.u32 %v20, 4294901760
  %v2008 = vsub.f32 %v20, %v2007
  %v2009 = vand.u32 %v2008, 4294901760
  %2010 = vmatpush1.msra.mxu0 %v2009
  %v2011 = vand.u32 %v23, 4294901760
  %v2012 = vsub.f32 %v23, %v2011
  %v2013 = vand.u32 %v2012, 4294901760
  %2014 = vmatprep.subr.mxu0 %v2013
  %v2015 = vand.u32 %v22, 4294901760
  %v2016 = vsub.f32 %v22, %v2015
  %v2017 = vand.u32 %v2016, 4294901760
  %2018 = vmatpush1.msra.mxu0 %v2017
  %v2019 = vand.u32 %v25, 4294901760
  %v2020 = vsub.f32 %v25, %v2019
  %v2021 = vand.u32 %v2020, 4294901760
  %2022 = vmatprep.subr.mxu0 %v2021
  %v2023 = vand.u32 %v24, 4294901760
  %v2024 = vsub.f32 %v24, %v2023
  %v2025 = vand.u32 %v2024, 4294901760
  %2026 = vmatpush1.msra.mxu0 %v2025
  %2027 = vmatprep.subr.mxu0 0.0
  %2028 = vmatpush1.msra.mxu0 0.0
  %2029 = vmatprep.subr.mxu0 0.0
  %2030 = vmatpush1.msra.mxu0 0.0
  %2031 = vmatprep.subr.mxu0 0.0
  %2032 = vmatpush1.msra.mxu0 0.0
  %2033 = vmatprep.subr.mxu0 0.0
  %2034 = vmatpush1.msra.mxu0 0.0
  %2035 = vmatprep.subr.mxu0 0.0
  %2036 = vmatpush1.msra.mxu0 0.0
  %2037 = vmatprep.subr.mxu0 0.0
  %2038 = vmatpush1.msra.mxu0 0.0
  %2039 = vmatprep.subr.mxu0 0.0
  %2040 = vmatpush1.msra.mxu0 0.0
  %2041 = vmatprep.subr.mxu0 0.0
  %2042 = vmatpush1.msra.mxu0 0.0
  %2043 = vmatprep.subr.mxu0 0.0
  %2044 = vmatpush1.msra.mxu0 0.0
  %2045 = vmatprep.subr.mxu0 0.0
  %2046 = vmatpush1.msra.mxu0 0.0
  %2047 = vmatprep.subr.mxu0 0.0
  %2048 = vmatpush1.msra.mxu0 0.0
  %2049 = vmatprep.subr.mxu0 0.0
  %2050 = vmatpush1.msra.mxu0 0.0
  %2051 = vmatprep.subr.mxu0 0.0
  %2052 = vmatpush1.msra.mxu0 0.0
  %2053 = vmatprep.subr.mxu0 0.0
  %2054 = vmatpush1.msra.mxu0 0.0
  %2055 = vmatprep.subr.mxu0 0.0
  %2056 = vmatpush1.msra.mxu0 0.0
  %2057 = vmatprep.subr.mxu0 0.0
  %2058 = vmatpush1.msra.mxu0 0.0
  %2059 = vmatprep.subr.mxu0 0.0
  %2060 = vmatpush1.msra.mxu0 0.0
  %2061 = vmatprep.subr.mxu0 0.0
  %2062 = vmatpush1.msra.mxu0 0.0
  %2063 = vmatprep.subr.mxu0 0.0
  %2064 = vmatpush1.msra.mxu0 0.0
  %2065 = vmatprep.subr.mxu0 0.0
  %2066 = vmatpush1.msra.mxu0 0.0
  %2067 = vmatprep.subr.mxu0 0.0
  %2068 = vmatpush1.msra.mxu0 0.0
  %2069 = vmatprep.subr.mxu0 0.0
  %2070 = vmatpush1.msra.mxu0 0.0
  %2071 = vmatprep.subr.mxu0 0.0
  %2072 = vmatpush1.msra.mxu0 0.0
  %2073 = vmatprep.subr.mxu0 0.0
  %2074 = vmatpush1.msra.mxu0 0.0
  %2075 = vmatprep.subr.mxu0 0.0
  %2076 = vmatpush1.msra.mxu0 0.0
  %2077 = vmatprep.subr.mxu0 0.0
  %2078 = vmatpush1.msra.mxu0 0.0
  %2079 = vmatprep.subr.mxu0 0.0
  %2080 = vmatpush1.msra.mxu0 0.0
  %2081 = vmatprep.subr.mxu0 0.0
  %2082 = vmatpush1.msra.mxu0 0.0
  %2083 = vmatprep.mubr.f32.mxu0 0.0
  %v2084 = vand.u32 %v1512, 4294901760
  %2085 = vmatmul.mubr.f32.gmra.mrb[0].mxu0 %v2084
  %v2086 = vpop.f32.mrb[0].mxu0
  %v2087 = vadd.f32 %v1964, %v2086
  %v2088 = vpop.f32.mrb[0].mxu0
  %v2089 = vadd.f32 %v1966, %v2088
  %2090 = vmatprep.mubr.f32.mxu0 0.0
  %v2091 = vand.u32 %v1515, 4294901760
  %2092 = vmatmul.mubr.f32.gmra.mrb[0].mxu0 %v2091
  %v2093 = vpop.f32.mrb[0].mxu0
  %v2094 = vadd.f32 %v1973, %v2093
  %v2095 = vpop.f32.mrb[0].mxu0
  %v2096 = vadd.f32 %v1975, %v2095
  %2097 = vmatprep.mubr.f32.mxu0 0.0
  %v2098 = vand.u32 %v1518, 4294901760
  %2099 = vmatmul.mubr.f32.gmra.mrb[0].mxu0 %v2098
  %v2100 = vpop.f32.mrb[0].mxu0
  %v2101 = vadd.f32 %v1982, %v2100
  %v2102 = vpop.f32.mrb[0].mxu0
  %v2103 = vadd.f32 %v1984, %v2102
  %2104 = vmatprep.mubr.f32.mxu0 0.0
  %v2105 = vand.u32 %v1521, 4294901760
  %2106 = vmatmul.mubr.f32.gmra.mrb[0].mxu0 %v2105
  %v2107 = vpop.f32.mrb[0].mxu0
  %v2108 = vadd.f32 %v1991, %v2107
  %v2109 = vpop.f32.mrb[0].mxu0
  %v2110 = vadd.f32 %v1993, %v2109
  %2111 = vdwg.mxu0
  %v2112 = vand.u32 %v19, 4294901760
  %2113 = vmatprep.subr.mxu0 %v2112
  %v2114 = vand.u32 %v18, 4294901760
  %2115 = vmatpush1.msra.mxu0 %v2114
  %v2116 = vand.u32 %v21, 4294901760
  %2117 = vmatprep.subr.mxu0 %v2116
  %v2118 = vand.u32 %v20, 4294901760
  %2119 = vmatpush1.msra.mxu0 %v2118
  %v2120 = vand.u32 %v23, 4294901760
  %2121 = vmatprep.subr.mxu0 %v2120
  %v2122 = vand.u32 %v22, 4294901760
  %2123 = vmatpush1.msra.mxu0 %v2122
  %v2124 = vand.u32 %v25, 4294901760
  %2125 = vmatprep.subr.mxu0 %v2124
  %v2126 = vand.u32 %v24, 4294901760
  %2127 = vmatpush1.msra.mxu0 %v2126
  %2128 = vmatprep.subr.mxu0 0.0
  %2129 = vmatpush1.msra.mxu0 0.0
  %2130 = vmatprep.subr.mxu0 0.0
  %2131 = vmatpush1.msra.mxu0 0.0
  %2132 = vmatprep.subr.mxu0 0.0
  %2133 = vmatpush1.msra.mxu0 0.0
  %2134 = vmatprep.subr.mxu0 0.0
  %2135 = vmatpush1.msra.mxu0 0.0
  %2136 = vmatprep.subr.mxu0 0.0
  %2137 = vmatpush1.msra.mxu0 0.0
  %2138 = vmatprep.subr.mxu0 0.0
  %2139 = vmatpush1.msra.mxu0 0.0
  %2140 = vmatprep.subr.mxu0 0.0
  %2141 = vmatpush1.msra.mxu0 0.0
  %2142 = vmatprep.subr.mxu0 0.0
  %2143 = vmatpush1.msra.mxu0 0.0
  %2144 = vmatprep.subr.mxu0 0.0
  %2145 = vmatpush1.msra.mxu0 0.0
  %2146 = vmatprep.subr.mxu0 0.0
  %2147 = vmatpush1.msra.mxu0 0.0
  %2148 = vmatprep.subr.mxu0 0.0
  %2149 = vmatpush1.msra.mxu0 0.0
  %2150 = vmatprep.subr.mxu0 0.0
  %2151 = vmatpush1.msra.mxu0 0.0
  %2152 = vmatprep.subr.mxu0 0.0
  %2153 = vmatpush1.msra.mxu0 0.0
  %2154 = vmatprep.subr.mxu0 0.0
  %2155 = vmatpush1.msra.mxu0 0.0
  %2156 = vmatprep.subr.mxu0 0.0
  %2157 = vmatpush1.msra.mxu0 0.0
  %2158 = vmatprep.subr.mxu0 0.0
  %2159 = vmatpush1.msra.mxu0 0.0
  %2160 = vmatprep.subr.mxu0 0.0
  %2161 = vmatpush1.msra.mxu0 0.0
  %2162 = vmatprep.subr.mxu0 0.0
  %2163 = vmatpush1.msra.mxu0 0.0
  %2164 = vmatprep.subr.mxu0 0.0
  %2165 = vmatpush1.msra.mxu0 0.0
  %2166 = vmatprep.subr.mxu0 0.0
  %2167 = vmatpush1.msra.mxu0 0.0
  %2168 = vmatprep.subr.mxu0 0.0
  %2169 = vmatpush1.msra.mxu0 0.0
  %2170 = vmatprep.subr.mxu0 0.0
  %2171 = vmatpush1.msra.mxu0 0.0
  %2172 = vmatprep.subr.mxu0 0.0
  %2173 = vmatpush1.msra.mxu0 0.0
  %2174 = vmatprep.subr.mxu0 0.0
  %2175 = vmatpush1.msra.mxu0 0.0
  %2176 = vmatprep.subr.mxu0 0.0
  %2177 = vmatpush1.msra.mxu0 0.0
  %2178 = vmatprep.subr.mxu0 0.0
  %2179 = vmatpush1.msra.mxu0 0.0
  %2180 = vmatprep.subr.mxu0 0.0
  %2181 = vmatpush1.msra.mxu0 0.0
  %2182 = vmatprep.subr.mxu0 0.0
  %2183 = vmatpush1.msra.mxu0 0.0
  %2184 = vmatprep.mubr.f32.mxu0 0.0
  %v2185 = vand.u32 %v1512, 4294901760
  %2186 = vmatmul.mubr.f32.gmra.mrb[0].mxu0 %v2185
  %v2187 = vpop.f32.mrb[0].mxu0
  %v2188 = vadd.f32 %v2087, %v2187
  %v2189 = vpop.f32.mrb[0].mxu0
  %v2190 = vadd.f32 %v2089, %v2189
  %2191 = vmatprep.mubr.f32.mxu0 0.0
  %v2192 = vand.u32 %v1515, 4294901760
  %2193 = vmatmul.mubr.f32.gmra.mrb[0].mxu0 %v2192
  %v2194 = vpop.f32.mrb[0].mxu0
  %v2195 = vadd.f32 %v2094, %v2194
  %v2196 = vpop.f32.mrb[0].mxu0
  %v2197 = vadd.f32 %v2096, %v2196
  %2198 = vmatprep.mubr.f32.mxu0 0.0
  %v2199 = vand.u32 %v1518, 4294901760
  %2200 = vmatmul.mubr.f32.gmra.mrb[0].mxu0 %v2199
  %v2201 = vpop.f32.mrb[0].mxu0
  %v2202 = vadd.f32 %v2101, %v2201
  %v2203 = vpop.f32.mrb[0].mxu0
  %v2204 = vadd.f32 %v2103, %v2203
  %2205 = vmatprep.mubr.f32.mxu0 0.0
  %v2206 = vand.u32 %v1521, 4294901760
  %2207 = vmatmul.mubr.f32.gmra.mrb[0].mxu0 %v2206
  %v2208 = vpop.f32.mrb[0].mxu0
  %v2209 = vadd.f32 %v2108, %v2208
  %v2210 = vpop.f32.mrb[0].mxu0
  %v2211 = vadd.f32 %v2110, %v2210
  %2212 = vdwg.mxu0
  %v2213 = vsel %vm31, %v2188, %v2190
  %v2214 = vsel %vm32, %v2195, %v2197
  %v2215 = vsel %vm33, %v2202, %v2204
  %v2216 = vsel %vm34, %v2209, %v2211
  %s2217 = scalar_lea.vmem %s0, 32
  %v2218 = vld [vmem:[%s2217] sm:$0xff]
  %v2219 = vld [vmem:[%s2217 + $0x8] sm:$0xff]
  %v2220 = vld [vmem:[%s2217 + $0x10] sm:$0xff]
  %v2221 = vld [vmem:[%s2217 + $0x18] sm:$0xff]
  %v2222 = vadd.f32 %v2213, %v2218
  %v2223 = vadd.f32 %v2214, %v2219
  %v2224 = vadd.f32 %v2215, %v2220
  %v2225 = vadd.f32 %v2216, %v2221
  %2230 = vrot.lane.b32.xlu0 %v2213, 32
  %v2231 = vpop.permute.xlu0 %2230
  %2232 = vrot.lane.b32.xlu0 %v2214, 32
  %v2233 = vpop.permute.xlu0 %2232
  %2234 = vrot.lane.b32.xlu0 %v2215, 32
  %v2235 = vpop.permute.xlu0 %2234
  %2236 = vrot.lane.b32.xlu0 %v2216, 32
  %v2237 = vpop.permute.xlu0 %2236
  %2246 = vrot.lane.b32.xlu0 %v2218, 32
  %v2247 = vpop.permute.xlu0 %2246
  %2248 = vrot.lane.b32.xlu0 %v2219, 32
  %v2249 = vpop.permute.xlu0 %2248
  %2250 = vrot.lane.b32.xlu0 %v2220, 32
  %v2251 = vpop.permute.xlu0 %2250
  %2252 = vrot.lane.b32.xlu0 %v2221, 32
  %v2253 = vpop.permute.xlu0 %2252
  %2258 = vmatprep.subr.mxu0 0.0
  %v2259 = vand.u32 %v2231, 4294901760
  %2260 = vmatpush1.msra.mxu0 %v2259
  %2261 = vmatprep.subr.mxu0 0.0
  %v2262 = vand.u32 %v2233, 4294901760
  %2263 = vmatpush1.msra.mxu0 %v2262
  %2264 = vmatprep.subr.mxu0 0.0
  %v2265 = vand.u32 %v2235, 4294901760
  %2266 = vmatpush1.msra.mxu0 %v2265
  %2267 = vmatprep.subr.mxu0 0.0
  %v2268 = vand.u32 %v2237, 4294901760
  %2269 = vmatpush1.msra.mxu0 %v2268
  %2270 = vmatprep.subr.mxu0 0.0
  %2271 = vmatpush1.msra.mxu0 0.0
  %2272 = vmatprep.subr.mxu0 0.0
  %2273 = vmatpush1.msra.mxu0 0.0
  %2274 = vmatprep.subr.mxu0 0.0
  %2275 = vmatpush1.msra.mxu0 0.0
  %2276 = vmatprep.subr.mxu0 0.0
  %2277 = vmatpush1.msra.mxu0 0.0
  %2278 = vmatprep.subr.mxu0 0.0
  %2279 = vmatpush1.msra.mxu0 0.0
  %2280 = vmatprep.subr.mxu0 0.0
  %2281 = vmatpush1.msra.mxu0 0.0
  %2282 = vmatprep.subr.mxu0 0.0
  %2283 = vmatpush1.msra.mxu0 0.0
  %2284 = vmatprep.subr.mxu0 0.0
  %2285 = vmatpush1.msra.mxu0 0.0
  %2286 = vmatprep.subr.mxu0 0.0
  %2287 = vmatpush1.msra.mxu0 0.0
  %2288 = vmatprep.subr.mxu0 0.0
  %2289 = vmatpush1.msra.mxu0 0.0
  %2290 = vmatprep.subr.mxu0 0.0
  %2291 = vmatpush1.msra.mxu0 0.0
  %2292 = vmatprep.subr.mxu0 0.0
  %2293 = vmatpush1.msra.mxu0 0.0
  %2294 = vmatprep.subr.mxu0 0.0
  %2295 = vmatpush1.msra.mxu0 0.0
  %2296 = vmatprep.subr.mxu0 0.0
  %2297 = vmatpush1.msra.mxu0 0.0
  %2298 = vmatprep.subr.mxu0 0.0
  %2299 = vmatpush1.msra.mxu0 0.0
  %2300 = vmatprep.subr.mxu0 0.0
  %2301 = vmatpush1.msra.mxu0 0.0
  %2302 = vmatprep.subr.mxu0 0.0
  %2303 = vmatpush1.msra.mxu0 0.0
  %2304 = vmatprep.subr.mxu0 0.0
  %2305 = vmatpush1.msra.mxu0 0.0
  %2306 = vmatprep.subr.mxu0 0.0
  %2307 = vmatpush1.msra.mxu0 0.0
  %2308 = vmatprep.subr.mxu0 0.0
  %2309 = vmatpush1.msra.mxu0 0.0
  %2310 = vmatprep.subr.mxu0 0.0
  %2311 = vmatpush1.msra.mxu0 0.0
  %2312 = vmatprep.subr.mxu0 0.0
  %2313 = vmatpush1.msra.mxu0 0.0
  %2314 = vmatprep.subr.mxu0 0.0
  %2315 = vmatpush1.msra.mxu0 0.0
  %2316 = vmatprep.subr.mxu0 0.0
  %2317 = vmatpush1.msra.mxu0 0.0
  %2318 = vmatprep.subr.mxu0 0.0
  %2319 = vmatpush1.msra.mxu0 0.0
  %2320 = vmatprep.subr.mxu0 0.0
  %2321 = vmatpush1.msra.mxu0 0.0
  %2322 = vmatprep.subr.mxu0 0.0
  %2323 = vmatpush1.msra.mxu0 0.0
  %2324 = vmatprep.subr.mxu0 0.0
  %2325 = vmatpush1.msra.mxu0 0.0
  %2326 = vmatprep.mubr.f32.mxu0 0.0
  %v2327 = vand.u32 %v774, 4294901760
  %v2328 = vsub.f32 %v774, %v2327
  %v2329 = vand.u32 %v2328, 4294901760
  %v2330 = vsub.f32 %v2328, %v2329
  %v2331 = vand.u32 %v2330, 4294901760
  %2332 = vmatmul.mubr.f32.gmra.mrb[0].mxu0 %v2331
  %v2333 = vpop.f32.mrb[0].mxu0
  %v2334 = vadd.f32 %v2247, %v2333
  %v2335 = vpop.f32.mrb[0].mxu0
  %2336 = vmatprep.mubr.f32.mxu0 0.0
  %v2337 = vand.u32 %v777, 4294901760
  %v2338 = vsub.f32 %v777, %v2337
  %v2339 = vand.u32 %v2338, 4294901760
  %v2340 = vsub.f32 %v2338, %v2339
  %v2341 = vand.u32 %v2340, 4294901760
  %2342 = vmatmul.mubr.f32.gmra.mrb[0].mxu0 %v2341
  %v2343 = vpop.f32.mrb[0].mxu0
  %v2344 = vadd.f32 %v2249, %v2343
  %v2345 = vpop.f32.mrb[0].mxu0
  %2346 = vmatprep.mubr.f32.mxu0 0.0
  %v2347 = vand.u32 %v780, 4294901760
  %v2348 = vsub.f32 %v780, %v2347
  %v2349 = vand.u32 %v2348, 4294901760
  %v2350 = vsub.f32 %v2348, %v2349
  %v2351 = vand.u32 %v2350, 4294901760
  %2352 = vmatmul.mubr.f32.gmra.mrb[0].mxu0 %v2351
  %v2353 = vpop.f32.mrb[0].mxu0
  %v2354 = vadd.f32 %v2251, %v2353
  %v2355 = vpop.f32.mrb[0].mxu0
  %2356 = vmatprep.mubr.f32.mxu0 0.0
  %v2357 = vand.u32 %v783, 4294901760
  %v2358 = vsub.f32 %v783, %v2357
  %v2359 = vand.u32 %v2358, 4294901760
  %v2360 = vsub.f32 %v2358, %v2359
  %v2361 = vand.u32 %v2360, 4294901760
  %2362 = vmatmul.mubr.f32.gmra.mrb[0].mxu0 %v2361
  %v2363 = vpop.f32.mrb[0].mxu0
  %v2364 = vadd.f32 %v2253, %v2363
  %v2365 = vpop.f32.mrb[0].mxu0
  %2366 = vdwg.mxu0
  %2367 = vmatprep.subr.mxu0 0.0
  %v2368 = vand.u32 %v2231, 4294901760
  %v2369 = vsub.f32 %v2231, %v2368
  %v2370 = vand.u32 %v2369, 4294901760
  %v2371 = vsub.f32 %v2369, %v2370
  %v2372 = vand.u32 %v2371, 4294901760
  %2373 = vmatpush1.msra.mxu0 %v2372
  %2374 = vmatprep.subr.mxu0 0.0
  %v2375 = vand.u32 %v2233, 4294901760
  %v2376 = vsub.f32 %v2233, %v2375
  %v2377 = vand.u32 %v2376, 4294901760
  %v2378 = vsub.f32 %v2376, %v2377
  %v2379 = vand.u32 %v2378, 4294901760
  %2380 = vmatpush1.msra.mxu0 %v2379
  %2381 = vmatprep.subr.mxu0 0.0
  %v2382 = vand.u32 %v2235, 4294901760
  %v2383 = vsub.f32 %v2235, %v2382
  %v2384 = vand.u32 %v2383, 4294901760
  %v2385 = vsub.f32 %v2383, %v2384
  %v2386 = vand.u32 %v2385, 4294901760
  %2387 = vmatpush1.msra.mxu0 %v2386
  %2388 = vmatprep.subr.mxu0 0.0
  %v2389 = vand.u32 %v2237, 4294901760
  %v2390 = vsub.f32 %v2237, %v2389
  %v2391 = vand.u32 %v2390, 4294901760
  %v2392 = vsub.f32 %v2390, %v2391
  %v2393 = vand.u32 %v2392, 4294901760
  %2394 = vmatpush1.msra.mxu0 %v2393
  %2395 = vmatprep.subr.mxu0 0.0
  %2396 = vmatpush1.msra.mxu0 0.0
  %2397 = vmatprep.subr.mxu0 0.0
  %2398 = vmatpush1.msra.mxu0 0.0
  %2399 = vmatprep.subr.mxu0 0.0
  %2400 = vmatpush1.msra.mxu0 0.0
  %2401 = vmatprep.subr.mxu0 0.0
  %2402 = vmatpush1.msra.mxu0 0.0
  %2403 = vmatprep.subr.mxu0 0.0
  %2404 = vmatpush1.msra.mxu0 0.0
  %2405 = vmatprep.subr.mxu0 0.0
  %2406 = vmatpush1.msra.mxu0 0.0
  %2407 = vmatprep.subr.mxu0 0.0
  %2408 = vmatpush1.msra.mxu0 0.0
  %2409 = vmatprep.subr.mxu0 0.0
  %2410 = vmatpush1.msra.mxu0 0.0
  %2411 = vmatprep.subr.mxu0 0.0
  %2412 = vmatpush1.msra.mxu0 0.0
  %2413 = vmatprep.subr.mxu0 0.0
  %2414 = vmatpush1.msra.mxu0 0.0
  %2415 = vmatprep.subr.mxu0 0.0
  %2416 = vmatpush1.msra.mxu0 0.0
  %2417 = vmatprep.subr.mxu0 0.0
  %2418 = vmatpush1.msra.mxu0 0.0
  %2419 = vmatprep.subr.mxu0 0.0
  %2420 = vmatpush1.msra.mxu0 0.0
  %2421 = vmatprep.subr.mxu0 0.0
  %2422 = vmatpush1.msra.mxu0 0.0
  %2423 = vmatprep.subr.mxu0 0.0
  %2424 = vmatpush1.msra.mxu0 0.0
  %2425 = vmatprep.subr.mxu0 0.0
  %2426 = vmatpush1.msra.mxu0 0.0
  %2427 = vmatprep.subr.mxu0 0.0
  %2428 = vmatpush1.msra.mxu0 0.0
  %2429 = vmatprep.subr.mxu0 0.0
  %2430 = vmatpush1.msra.mxu0 0.0
  %2431 = vmatprep.subr.mxu0 0.0
  %2432 = vmatpush1.msra.mxu0 0.0
  %2433 = vmatprep.subr.mxu0 0.0
  %2434 = vmatpush1.msra.mxu0 0.0
  %2435 = vmatprep.subr.mxu0 0.0
  %2436 = vmatpush1.msra.mxu0 0.0
  %2437 = vmatprep.subr.mxu0 0.0
  %2438 = vmatpush1.msra.mxu0 0.0
  %2439 = vmatprep.subr.mxu0 0.0
  %2440 = vmatpush1.msra.mxu0 0.0
  %2441 = vmatprep.subr.mxu0 0.0
  %2442 = vmatpush1.msra.mxu0 0.0
  %2443 = vmatprep.subr.mxu0 0.0
  %2444 = vmatpush1.msra.mxu0 0.0
  %2445 = vmatprep.subr.mxu0 0.0
  %2446 = vmatpush1.msra.mxu0 0.0
  %2447 = vmatprep.subr.mxu0 0.0
  %2448 = vmatpush1.msra.mxu0 0.0
  %2449 = vmatprep.subr.mxu0 0.0
  %2450 = vmatpush1.msra.mxu0 0.0
  %2451 = vmatprep.mubr.f32.mxu0 0.0
  %v2452 = vand.u32 %v774, 4294901760
  %2453 = vmatmul.mubr.f32.gmra.mrb[0].mxu0 %v2452
  %v2454 = vpop.f32.mrb[0].mxu0
  %v2455 = vadd.f32 %v2334, %v2454
  %v2456 = vpop.f32.mrb[0].mxu0
  %2457 = vmatprep.mubr.f32.mxu0 0.0
  %v2458 = vand.u32 %v777, 4294901760
  %2459 = vmatmul.mubr.f32.gmra.mrb[0].mxu0 %v2458
  %v2460 = vpop.f32.mrb[0].mxu0
  %v2461 = vadd.f32 %v2344, %v2460
  %v2462 = vpop.f32.mrb[0].mxu0
  %2463 = vmatprep.mubr.f32.mxu0 0.0
  %v2464 = vand.u32 %v780, 4294901760
  %2465 = vmatmul.mubr.f32.gmra.mrb[0].mxu0 %v2464
  %v2466 = vpop.f32.mrb[0].mxu0
  %v2467 = vadd.f32 %v2354, %v2466
  %v2468 = vpop.f32.mrb[0].mxu0
  %2469 = vmatprep.mubr.f32.mxu0 0.0
  %v2470 = vand.u32 %v783, 4294901760
  %2471 = vmatmul.mubr.f32.gmra.mrb[0].mxu0 %v2470
  %v2472 = vpop.f32.mrb[0].mxu0
  %v2473 = vadd.f32 %v2364, %v2472
  %v2474 = vpop.f32.mrb[0].mxu0
  %2475 = vdwg.mxu0
  %2476 = vmatprep.subr.mxu0 0.0
  %v2477 = vand.u32 %v2231, 4294901760
  %v2478 = vsub.f32 %v2231, %v2477
  %2479 = vmatpush1.msra.mxu0 %v2478
  %2480 = vmatprep.subr.mxu0 0.0
  %v2481 = vand.u32 %v2233, 4294901760
  %v2482 = vsub.f32 %v2233, %v2481
  %2483 = vmatpush1.msra.mxu0 %v2482
  %2484 = vmatprep.subr.mxu0 0.0
  %v2485 = vand.u32 %v2235, 4294901760
  %v2486 = vsub.f32 %v2235, %v2485
  %2487 = vmatpush1.msra.mxu0 %v2486
  %2488 = vmatprep.subr.mxu0 0.0
  %v2489 = vand.u32 %v2237, 4294901760
  %v2490 = vsub.f32 %v2237, %v2489
  %2491 = vmatpush1.msra.mxu0 %v2490
  %2492 = vmatprep.subr.mxu0 0.0
  %2493 = vmatpush1.msra.mxu0 0.0
  %2494 = vmatprep.subr.mxu0 0.0
  %2495 = vmatpush1.msra.mxu0 0.0
  %2496 = vmatprep.subr.mxu0 0.0
  %2497 = vmatpush1.msra.mxu0 0.0
  %2498 = vmatprep.subr.mxu0 0.0
  %2499 = vmatpush1.msra.mxu0 0.0
  %2500 = vmatprep.subr.mxu0 0.0
  %2501 = vmatpush1.msra.mxu0 0.0
  %2502 = vmatprep.subr.mxu0 0.0
  %2503 = vmatpush1.msra.mxu0 0.0
  %2504 = vmatprep.subr.mxu0 0.0
  %2505 = vmatpush1.msra.mxu0 0.0
  %2506 = vmatprep.subr.mxu0 0.0
  %2507 = vmatpush1.msra.mxu0 0.0
  %2508 = vmatprep.subr.mxu0 0.0
  %2509 = vmatpush1.msra.mxu0 0.0
  %2510 = vmatprep.subr.mxu0 0.0
  %2511 = vmatpush1.msra.mxu0 0.0
  %2512 = vmatprep.subr.mxu0 0.0
  %2513 = vmatpush1.msra.mxu0 0.0
  %2514 = vmatprep.subr.mxu0 0.0
  %2515 = vmatpush1.msra.mxu0 0.0
  %2516 = vmatprep.subr.mxu0 0.0
  %2517 = vmatpush1.msra.mxu0 0.0
  %2518 = vmatprep.subr.mxu0 0.0
  %2519 = vmatpush1.msra.mxu0 0.0
  %2520 = vmatprep.subr.mxu0 0.0
  %2521 = vmatpush1.msra.mxu0 0.0
  %2522 = vmatprep.subr.mxu0 0.0
  %2523 = vmatpush1.msra.mxu0 0.0
  %2524 = vmatprep.subr.mxu0 0.0
  %2525 = vmatpush1.msra.mxu0 0.0
  %2526 = vmatprep.subr.mxu0 0.0
  %2527 = vmatpush1.msra.mxu0 0.0
  %2528 = vmatprep.subr.mxu0 0.0
  %2529 = vmatpush1.msra.mxu0 0.0
  %2530 = vmatprep.subr.mxu0 0.0
  %2531 = vmatpush1.msra.mxu0 0.0
  %2532 = vmatprep.subr.mxu0 0.0
  %2533 = vmatpush1.msra.mxu0 0.0
  %2534 = vmatprep.subr.mxu0 0.0
  %2535 = vmatpush1.msra.mxu0 0.0
  %2536 = vmatprep.subr.mxu0 0.0
  %2537 = vmatpush1.msra.mxu0 0.0
  %2538 = vmatprep.subr.mxu0 0.0
  %2539 = vmatpush1.msra.mxu0 0.0
  %2540 = vmatprep.subr.mxu0 0.0
  %2541 = vmatpush1.msra.mxu0 0.0
  %2542 = vmatprep.subr.mxu0 0.0
  %2543 = vmatpush1.msra.mxu0 0.0
  %2544 = vmatprep.subr.mxu0 0.0
  %2545 = vmatpush1.msra.mxu0 0.0
  %2546 = vmatprep.subr.mxu0 0.0
  %2547 = vmatpush1.msra.mxu0 0.0
  %2548 = vmatprep.mubr.f32.mxu0 0.0
  %v2549 = vand.u32 %v774, 4294901760
  %v2550 = vsub.f32 %v774, %v2549
  %2551 = vmatmul.mubr.f32.gmra.mrb[0].mxu0 %v2550
  %v2552 = vpop.f32.mrb[0].mxu0
  %v2553 = vadd.f32 %v2455, %v2552
  %v2554 = vpop.f32.mrb[0].mxu0
  %2555 = vmatprep.mubr.f32.mxu0 0.0
  %v2556 = vand.u32 %v777, 4294901760
  %v2557 = vsub.f32 %v777, %v2556
  %2558 = vmatmul.mubr.f32.gmra.mrb[0].mxu0 %v2557
  %v2559 = vpop.f32.mrb[0].mxu0
  %v2560 = vadd.f32 %v2461, %v2559
  %v2561 = vpop.f32.mrb[0].mxu0
  %2562 = vmatprep.mubr.f32.mxu0 0.0
  %v2563 = vand.u32 %v780, 4294901760
  %v2564 = vsub.f32 %v780, %v2563
  %2565 = vmatmul.mubr.f32.gmra.mrb[0].mxu0 %v2564
  %v2566 = vpop.f32.mrb[0].mxu0
  %v2567 = vadd.f32 %v2467, %v2566
  %v2568 = vpop.f32.mrb[0].mxu0
  %2569 = vmatprep.mubr.f32.mxu0 0.0
  %v2570 = vand.u32 %v783, 4294901760
  %v2571 = vsub.f32 %v783, %v2570
  %2572 = vmatmul.mubr.f32.gmra.mrb[0].mxu0 %v2571
  %v2573 = vpop.f32.mrb[0].mxu0
  %v2574 = vadd.f32 %v2473, %v2573
  %v2575 = vpop.f32.mrb[0].mxu0
  %2576 = vdwg.mxu0
  %2577 = vmatprep.subr.mxu0 0.0
  %v2578 = vand.u32 %v2231, 4294901760
  %2579 = vmatpush1.msra.mxu0 %v2578
  %2580 = vmatprep.subr.mxu0 0.0
  %v2581 = vand.u32 %v2233, 4294901760
  %2582 = vmatpush1.msra.mxu0 %v2581
  %2583 = vmatprep.subr.mxu0 0.0
  %v2584 = vand.u32 %v2235, 4294901760
  %2585 = vmatpush1.msra.mxu0 %v2584
  %2586 = vmatprep.subr.mxu0 0.0
  %v2587 = vand.u32 %v2237, 4294901760
  %2588 = vmatpush1.msra.mxu0 %v2587
  %2589 = vmatprep.subr.mxu0 0.0
  %2590 = vmatpush1.msra.mxu0 0.0
  %2591 = vmatprep.subr.mxu0 0.0
  %2592 = vmatpush1.msra.mxu0 0.0
  %2593 = vmatprep.subr.mxu0 0.0
  %2594 = vmatpush1.msra.mxu0 0.0
  %2595 = vmatprep.subr.mxu0 0.0
  %2596 = vmatpush1.msra.mxu0 0.0
  %2597 = vmatprep.subr.mxu0 0.0
  %2598 = vmatpush1.msra.mxu0 0.0
  %2599 = vmatprep.subr.mxu0 0.0
  %2600 = vmatpush1.msra.mxu0 0.0
  %2601 = vmatprep.subr.mxu0 0.0
  %2602 = vmatpush1.msra.mxu0 0.0
  %2603 = vmatprep.subr.mxu0 0.0
  %2604 = vmatpush1.msra.mxu0 0.0
  %2605 = vmatprep.subr.mxu0 0.0
  %2606 = vmatpush1.msra.mxu0 0.0
  %2607 = vmatprep.subr.mxu0 0.0
  %2608 = vmatpush1.msra.mxu0 0.0
  %2609 = vmatprep.subr.mxu0 0.0
  %2610 = vmatpush1.msra.mxu0 0.0
  %2611 = vmatprep.subr.mxu0 0.0
  %2612 = vmatpush1.msra.mxu0 0.0
  %2613 = vmatprep.subr.mxu0 0.0
  %2614 = vmatpush1.msra.mxu0 0.0
  %2615 = vmatprep.subr.mxu0 0.0
  %2616 = vmatpush1.msra.mxu0 0.0
  %2617 = vmatprep.subr.mxu0 0.0
  %2618 = vmatpush1.msra.mxu0 0.0
  %2619 = vmatprep.subr.mxu0 0.0
  %2620 = vmatpush1.msra.mxu0 0.0
  %2621 = vmatprep.subr.mxu0 0.0
  %2622 = vmatpush1.msra.mxu0 0.0
  %2623 = vmatprep.subr.mxu0 0.0
  %2624 = vmatpush1.msra.mxu0 0.0
  %2625 = vmatprep.subr.mxu0 0.0
  %2626 = vmatpush1.msra.mxu0 0.0
  %2627 = vmatprep.subr.mxu0 0.0
  %2628 = vmatpush1.msra.mxu0 0.0
  %2629 = vmatprep.subr.mxu0 0.0
  %2630 = vmatpush1.msra.mxu0 0.0
  %2631 = vmatprep.subr.mxu0 0.0
  %2632 = vmatpush1.msra.mxu0 0.0
  %2633 = vmatprep.subr.mxu0 0.0
  %2634 = vmatpush1.msra.mxu0 0.0
  %2635 = vmatprep.subr.mxu0 0.0
  %2636 = vmatpush1.msra.mxu0 0.0
  %2637 = vmatprep.subr.mxu0 0.0
  %2638 = vmatpush1.msra.mxu0 0.0
  %2639 = vmatprep.subr.mxu0 0.0
  %2640 = vmatpush1.msra.mxu0 0.0
  %2641 = vmatprep.subr.mxu0 0.0
  %2642 = vmatpush1.msra.mxu0 0.0
  %2643 = vmatprep.subr.mxu0 0.0
  %2644 = vmatpush1.msra.mxu0 0.0
  %2645 = vmatprep.mubr.f32.mxu0 0.0
  %v2646 = vand.u32 %v774, 4294901760
  %v2647 = vsub.f32 %v774, %v2646
  %v2648 = vand.u32 %v2647, 4294901760
  %2649 = vmatmul.mubr.f32.gmra.mrb[0].mxu0 %v2648
  %v2650 = vpop.f32.mrb[0].mxu0
  %v2651 = vadd.f32 %v2553, %v2650
  %v2652 = vpop.f32.mrb[0].mxu0
  %2653 = vmatprep.mubr.f32.mxu0 0.0
  %v2654 = vand.u32 %v777, 4294901760
  %v2655 = vsub.f32 %v777, %v2654
  %v2656 = vand.u32 %v2655, 4294901760
  %2657 = vmatmul.mubr.f32.gmra.mrb[0].mxu0 %v2656
  %v2658 = vpop.f32.mrb[0].mxu0
  %v2659 = vadd.f32 %v2560, %v2658
  %v2660 = vpop.f32.mrb[0].mxu0
  %2661 = vmatprep.mubr.f32.mxu0 0.0
  %v2662 = vand.u32 %v780, 4294901760
  %v2663 = vsub.f32 %v780, %v2662
  %v2664 = vand.u32 %v2663, 4294901760
  %2665 = vmatmul.mubr.f32.gmra.mrb[0].mxu0 %v2664
  %v2666 = vpop.f32.mrb[0].mxu0
  %v2667 = vadd.f32 %v2567, %v2666
  %v2668 = vpop.f32.mrb[0].mxu0
  %2669 = vmatprep.mubr.f32.mxu0 0.0
  %v2670 = vand.u32 %v783, 4294901760
  %v2671 = vsub.f32 %v783, %v2670
  %v2672 = vand.u32 %v2671, 4294901760
  %2673 = vmatmul.mubr.f32.gmra.mrb[0].mxu0 %v2672
  %v2674 = vpop.f32.mrb[0].mxu0
  %v2675 = vadd.f32 %v2574, %v2674
  %v2676 = vpop.f32.mrb[0].mxu0
  %2677 = vdwg.mxu0
  %2678 = vmatprep.subr.mxu0 0.0
  %v2679 = vand.u32 %v2231, 4294901760
  %v2680 = vsub.f32 %v2231, %v2679
  %v2681 = vand.u32 %v2680, 4294901760
  %2682 = vmatpush1.msra.mxu0 %v2681
  %2683 = vmatprep.subr.mxu0 0.0
  %v2684 = vand.u32 %v2233, 4294901760
  %v2685 = vsub.f32 %v2233, %v2684
  %v2686 = vand.u32 %v2685, 4294901760
  %2687 = vmatpush1.msra.mxu0 %v2686
  %2688 = vmatprep.subr.mxu0 0.0
  %v2689 = vand.u32 %v2235, 4294901760
  %v2690 = vsub.f32 %v2235, %v2689
  %v2691 = vand.u32 %v2690, 4294901760
  %2692 = vmatpush1.msra.mxu0 %v2691
  %2693 = vmatprep.subr.mxu0 0.0
  %v2694 = vand.u32 %v2237, 4294901760
  %v2695 = vsub.f32 %v2237, %v2694
  %v2696 = vand.u32 %v2695, 4294901760
  %2697 = vmatpush1.msra.mxu0 %v2696
  %2698 = vmatprep.subr.mxu0 0.0
  %2699 = vmatpush1.msra.mxu0 0.0
  %2700 = vmatprep.subr.mxu0 0.0
  %2701 = vmatpush1.msra.mxu0 0.0
  %2702 = vmatprep.subr.mxu0 0.0
  %2703 = vmatpush1.msra.mxu0 0.0
  %2704 = vmatprep.subr.mxu0 0.0
  %2705 = vmatpush1.msra.mxu0 0.0
  %2706 = vmatprep.subr.mxu0 0.0
  %2707 = vmatpush1.msra.mxu0 0.0
  %2708 = vmatprep.subr.mxu0 0.0
  %2709 = vmatpush1.msra.mxu0 0.0
  %2710 = vmatprep.subr.mxu0 0.0
  %2711 = vmatpush1.msra.mxu0 0.0
  %2712 = vmatprep.subr.mxu0 0.0
  %2713 = vmatpush1.msra.mxu0 0.0
  %2714 = vmatprep.subr.mxu0 0.0
  %2715 = vmatpush1.msra.mxu0 0.0
  %2716 = vmatprep.subr.mxu0 0.0
  %2717 = vmatpush1.msra.mxu0 0.0
  %2718 = vmatprep.subr.mxu0 0.0
  %2719 = vmatpush1.msra.mxu0 0.0
  %2720 = vmatprep.subr.mxu0 0.0
  %2721 = vmatpush1.msra.mxu0 0.0
  %2722 = vmatprep.subr.mxu0 0.0
  %2723 = vmatpush1.msra.mxu0 0.0
  %2724 = vmatprep.subr.mxu0 0.0
  %2725 = vmatpush1.msra.mxu0 0.0
  %2726 = vmatprep.subr.mxu0 0.0
  %2727 = vmatpush1.msra.mxu0 0.0
  %2728 = vmatprep.subr.mxu0 0.0
  %2729 = vmatpush1.msra.mxu0 0.0
  %2730 = vmatprep.subr.mxu0 0.0
  %2731 = vmatpush1.msra.mxu0 0.0
  %2732 = vmatprep.subr.mxu0 0.0
  %2733 = vmatpush1.msra.mxu0 0.0
  %2734 = vmatprep.subr.mxu0 0.0
  %2735 = vmatpush1.msra.mxu0 0.0
  %2736 = vmatprep.subr.mxu0 0.0
  %2737 = vmatpush1.msra.mxu0 0.0
  %2738 = vmatprep.subr.mxu0 0.0
  %2739 = vmatpush1.msra.mxu0 0.0
  %2740 = vmatprep.subr.mxu0 0.0
  %2741 = vmatpush1.msra.mxu0 0.0
  %2742 = vmatprep.subr.mxu0 0.0
  %2743 = vmatpush1.msra.mxu0 0.0
  %2744 = vmatprep.subr.mxu0 0.0
  %2745 = vmatpush1.msra.mxu0 0.0
  %2746 = vmatprep.subr.mxu0 0.0
  %2747 = vmatpush1.msra.mxu0 0.0
  %2748 = vmatprep.subr.mxu0 0.0
  %2749 = vmatpush1.msra.mxu0 0.0
  %2750 = vmatprep.subr.mxu0 0.0
  %2751 = vmatpush1.msra.mxu0 0.0
  %2752 = vmatprep.subr.mxu0 0.0
  %2753 = vmatpush1.msra.mxu0 0.0
  %2754 = vmatprep.mubr.f32.mxu0 0.0
  %v2755 = vand.u32 %v774, 4294901760
  %2756 = vmatmul.mubr.f32.gmra.mrb[0].mxu0 %v2755
  %v2757 = vpop.f32.mrb[0].mxu0
  %v2758 = vadd.f32 %v2651, %v2757
  %v2759 = vpop.f32.mrb[0].mxu0
  %2760 = vmatprep.mubr.f32.mxu0 0.0
  %v2761 = vand.u32 %v777, 4294901760
  %2762 = vmatmul.mubr.f32.gmra.mrb[0].mxu0 %v2761
  %v2763 = vpop.f32.mrb[0].mxu0
  %v2764 = vadd.f32 %v2659, %v2763
  %v2765 = vpop.f32.mrb[0].mxu0
  %2766 = vmatprep.mubr.f32.mxu0 0.0
  %v2767 = vand.u32 %v780, 4294901760
  %2768 = vmatmul.mubr.f32.gmra.mrb[0].mxu0 %v2767
  %v2769 = vpop.f32.mrb[0].mxu0
  %v2770 = vadd.f32 %v2667, %v2769
  %v2771 = vpop.f32.mrb[0].mxu0
  %2772 = vmatprep.mubr.f32.mxu0 0.0
  %v2773 = vand.u32 %v783, 4294901760
  %2774 = vmatmul.mubr.f32.gmra.mrb[0].mxu0 %v2773
  %v2775 = vpop.f32.mrb[0].mxu0
  %v2776 = vadd.f32 %v2675, %v2775
  %v2777 = vpop.f32.mrb[0].mxu0
  %2778 = vdwg.mxu0
  %2779 = vmatprep.subr.mxu0 0.0
  %v2780 = vand.u32 %v2231, 4294901760
  %2781 = vmatpush1.msra.mxu0 %v2780
  %2782 = vmatprep.subr.mxu0 0.0
  %v2783 = vand.u32 %v2233, 4294901760
  %2784 = vmatpush1.msra.mxu0 %v2783
  %2785 = vmatprep.subr.mxu0 0.0
  %v2786 = vand.u32 %v2235, 4294901760
  %2787 = vmatpush1.msra.mxu0 %v2786
  %2788 = vmatprep.subr.mxu0 0.0
  %v2789 = vand.u32 %v2237, 4294901760
  %2790 = vmatpush1.msra.mxu0 %v2789
  %2791 = vmatprep.subr.mxu0 0.0
  %2792 = vmatpush1.msra.mxu0 0.0
  %2793 = vmatprep.subr.mxu0 0.0
  %2794 = vmatpush1.msra.mxu0 0.0
  %2795 = vmatprep.subr.mxu0 0.0
  %2796 = vmatpush1.msra.mxu0 0.0
  %2797 = vmatprep.subr.mxu0 0.0
  %2798 = vmatpush1.msra.mxu0 0.0
  %2799 = vmatprep.subr.mxu0 0.0
  %2800 = vmatpush1.msra.mxu0 0.0
  %2801 = vmatprep.subr.mxu0 0.0
  %2802 = vmatpush1.msra.mxu0 0.0
  %2803 = vmatprep.subr.mxu0 0.0
  %2804 = vmatpush1.msra.mxu0 0.0
  %2805 = vmatprep.subr.mxu0 0.0
  %2806 = vmatpush1.msra.mxu0 0.0
  %2807 = vmatprep.subr.mxu0 0.0
  %2808 = vmatpush1.msra.mxu0 0.0
  %2809 = vmatprep.subr.mxu0 0.0
  %2810 = vmatpush1.msra.mxu0 0.0
  %2811 = vmatprep.subr.mxu0 0.0
  %2812 = vmatpush1.msra.mxu0 0.0
  %2813 = vmatprep.subr.mxu0 0.0
  %2814 = vmatpush1.msra.mxu0 0.0
  %2815 = vmatprep.subr.mxu0 0.0
  %2816 = vmatpush1.msra.mxu0 0.0
  %2817 = vmatprep.subr.mxu0 0.0
  %2818 = vmatpush1.msra.mxu0 0.0
  %2819 = vmatprep.subr.mxu0 0.0
  %2820 = vmatpush1.msra.mxu0 0.0
  %2821 = vmatprep.subr.mxu0 0.0
  %2822 = vmatpush1.msra.mxu0 0.0
  %2823 = vmatprep.subr.mxu0 0.0
  %2824 = vmatpush1.msra.mxu0 0.0
  %2825 = vmatprep.subr.mxu0 0.0
  %2826 = vmatpush1.msra.mxu0 0.0
  %2827 = vmatprep.subr.mxu0 0.0
  %2828 = vmatpush1.msra.mxu0 0.0
  %2829 = vmatprep.subr.mxu0 0.0
  %2830 = vmatpush1.msra.mxu0 0.0
  %2831 = vmatprep.subr.mxu0 0.0
  %2832 = vmatpush1.msra.mxu0 0.0
  %2833 = vmatprep.subr.mxu0 0.0
  %2834 = vmatpush1.msra.mxu0 0.0
  %2835 = vmatprep.subr.mxu0 0.0
  %2836 = vmatpush1.msra.mxu0 0.0
  %2837 = vmatprep.subr.mxu0 0.0
  %2838 = vmatpush1.msra.mxu0 0.0
  %2839 = vmatprep.subr.mxu0 0.0
  %2840 = vmatpush1.msra.mxu0 0.0
  %2841 = vmatprep.subr.mxu0 0.0
  %2842 = vmatpush1.msra.mxu0 0.0
  %2843 = vmatprep.subr.mxu0 0.0
  %2844 = vmatpush1.msra.mxu0 0.0
  %2845 = vmatprep.subr.mxu0 0.0
  %2846 = vmatpush1.msra.mxu0 0.0
  %2847 = vmatprep.mubr.f32.mxu0 0.0
  %v2848 = vand.u32 %v774, 4294901760
  %2849 = vmatmul.mubr.f32.gmra.mrb[0].mxu0 %v2848
  %v2850 = vpop.f32.mrb[0].mxu0
  %v2851 = vadd.f32 %v2758, %v2850
  %v2852 = vpop.f32.mrb[0].mxu0
  %2853 = vmatprep.mubr.f32.mxu0 0.0
  %v2854 = vand.u32 %v777, 4294901760
  %2855 = vmatmul.mubr.f32.gmra.mrb[0].mxu0 %v2854
  %v2856 = vpop.f32.mrb[0].mxu0
  %v2857 = vadd.f32 %v2764, %v2856
  %v2858 = vpop.f32.mrb[0].mxu0
  %2859 = vmatprep.mubr.f32.mxu0 0.0
  %v2860 = vand.u32 %v780, 4294901760
  %2861 = vmatmul.mubr.f32.gmra.mrb[0].mxu0 %v2860
  %v2862 = vpop.f32.mrb[0].mxu0
  %v2863 = vadd.f32 %v2770, %v2862
  %v2864 = vpop.f32.mrb[0].mxu0
  %2865 = vmatprep.mubr.f32.mxu0 0.0
  %v2866 = vand.u32 %v783, 4294901760
  %2867 = vmatmul.mubr.f32.gmra.mrb[0].mxu0 %v2866
  %v2868 = vpop.f32.mrb[0].mxu0
  %v2869 = vadd.f32 %v2776, %v2868
  %v2870 = vpop.f32.mrb[0].mxu0
  %2871 = vdwg.mxu0
  %v2872 = vadd.f32 %v2851, %v2222
  %v2873 = vadd.f32 %v2857, %v2223
  %v2874 = vadd.f32 %v2863, %v2224
  %v2875 = vadd.f32 %v2869, %v2225
  %v2876 = vxor.u32 %v2872, 2147483648
  %v2877 = vxor.u32 %v2873, 2147483648
  %v2878 = vxor.u32 %v2874, 2147483648
  %v2879 = vxor.u32 %v2875, 2147483648
  %v2880 = vmul.f32 %v2876, 1.442695
  %v2881 = vpow.pop %v2880
  %v2882 = vmul.f32 %v2877, 1.442695
  %v2883 = vpow.pop %v2882
  %v2884 = vmul.f32 %v2878, 1.442695
  %v2885 = vpow.pop %v2884
  %v2886 = vmul.f32 %v2879, 1.442695
  %v2887 = vpow.pop %v2886
  %v2888 = vadd.f32 %v2881, 1.0
  %v2889 = vadd.f32 %v2883, 1.0
  %v2890 = vadd.f32 %v2885, 1.0
  %v2891 = vadd.f32 %v2887, 1.0
  %v2892 = vrcp.pop %v2888
  %v2893 = vmul.f32 1.0, %v2892
  %v2894 = vrcp.pop %v2889
  %v2895 = vmul.f32 1.0, %v2894
  %v2896 = vrcp.pop %v2890
  %v2897 = vmul.f32 1.0, %v2896
  %v2898 = vrcp.pop %v2891
  %v2899 = vmul.f32 1.0, %v2898
  %2904 = vrot.lane.b32.xlu0 %v2222, 96
  %v2905 = vpop.permute.xlu0 %2904
  %2906 = vrot.lane.b32.xlu0 %v2223, 96
  %v2907 = vpop.permute.xlu0 %2906
  %2908 = vrot.lane.b32.xlu0 %v2224, 96
  %v2909 = vpop.permute.xlu0 %2908
  %2910 = vrot.lane.b32.xlu0 %v2225, 96
  %v2911 = vpop.permute.xlu0 %2910
  %v2916 = vadd.f32 %v2851, %v2905
  %v2917 = vadd.f32 %v2857, %v2907
  %v2918 = vadd.f32 %v2863, %v2909
  %v2919 = vadd.f32 %v2869, %v2911
  %v2920 = vxor.u32 %v2916, 2147483648
  %v2921 = vxor.u32 %v2917, 2147483648
  %v2922 = vxor.u32 %v2918, 2147483648
  %v2923 = vxor.u32 %v2919, 2147483648
  %v2924 = vmul.f32 %v2920, 1.442695
  %v2925 = vpow.pop %v2924
  %v2926 = vmul.f32 %v2921, 1.442695
  %v2927 = vpow.pop %v2926
  %v2928 = vmul.f32 %v2922, 1.442695
  %v2929 = vpow.pop %v2928
  %v2930 = vmul.f32 %v2923, 1.442695
  %v2931 = vpow.pop %v2930
  %v2932 = vadd.f32 %v2925, 1.0
  %v2933 = vadd.f32 %v2927, 1.0
  %v2934 = vadd.f32 %v2929, 1.0
  %v2935 = vadd.f32 %v2931, 1.0
  %v2936 = vrcp.pop %v2932
  %v2937 = vmul.f32 1.0, %v2936
  %v2938 = vrcp.pop %v2933
  %v2939 = vmul.f32 1.0, %v2938
  %v2940 = vrcp.pop %v2934
  %v2941 = vmul.f32 1.0, %v2940
  %v2942 = vrcp.pop %v2935
  %v2943 = vmul.f32 1.0, %v2942
  %2944 = vrot.lane.b32.xlu0 %v2222, 64
  %v2945 = vpop.permute.xlu0 %2944
  %2946 = vrot.lane.b32.xlu0 %v2223, 64
  %v2947 = vpop.permute.xlu0 %2946
  %2948 = vrot.lane.b32.xlu0 %v2224, 64
  %v2949 = vpop.permute.xlu0 %2948
  %2950 = vrot.lane.b32.xlu0 %v2225, 64
  %v2951 = vpop.permute.xlu0 %2950
  %v2956 = vmul.f32 %v2893, %v2945
  %v2957 = vmul.f32 %v2895, %v2947
  %v2958 = vmul.f32 %v2897, %v2949
  %v2959 = vmul.f32 %v2899, %v2951
  %v2960 = vadd.f32 %v2851, %v2956
  %v2961 = vadd.f32 %v2857, %v2957
  %v2962 = vadd.f32 %v2863, %v2958
  %v2963 = vadd.f32 %v2869, %v2959
  %v2964 = vtanh.pop %v2960
  %v2965 = vtanh.pop %v2961
  %v2966 = vtanh.pop %v2962
  %v2967 = vtanh.pop %v2963
  %v2968 = vsub.f32 1.0, %v2937
  %v2969 = vsub.f32 1.0, %v2939
  %v2970 = vsub.f32 1.0, %v2941
  %v2971 = vsub.f32 1.0, %v2943
  %v2972 = vmul.f32 %v2968, %v2964
  %v2973 = vmul.f32 %v2969, %v2965
  %v2974 = vmul.f32 %v2970, %v2966
  %v2975 = vmul.f32 %v2971, %v2967
  %v2976 = vmul.f32 %v2937, %v1507
  %v2977 = vmul.f32 %v2939, %v1508
  %v2978 = vmul.f32 %v2941, %v1509
  %v2979 = vmul.f32 %v2943, %v1510
  %v2980 = vadd.f32 %v2972, %v2976
  %v2981 = vadd.f32 %v2973, %v2977
  %v2982 = vadd.f32 %v2974, %v2978
  %v2983 = vadd.f32 %v2975, %v2979
  %v2985 = vsel %vm35, %v2980, 0
  %v2988 = vsel %vm35, %v2981, 0
  %v2991 = vsel %vm35, %v2982, 0
  %v2994 = vsel %vm35, %v2983, 0
  %v2996 = vand.u32 %v19, 4294901760
  %2997 = vmatprep.subr.mxu0 %v2996
  %v2998 = vand.u32 %v18, 4294901760
  %2999 = vmatpush1.msra.mxu0 %v2998
  %v3000 = vand.u32 %v21, 4294901760
  %3001 = vmatprep.subr.mxu0 %v3000
  %v3002 = vand.u32 %v20, 4294901760
  %3003 = vmatpush1.msra.mxu0 %v3002
  %v3004 = vand.u32 %v23, 4294901760
  %3005 = vmatprep.subr.mxu0 %v3004
  %v3006 = vand.u32 %v22, 4294901760
  %3007 = vmatpush1.msra.mxu0 %v3006
  %v3008 = vand.u32 %v25, 4294901760
  %3009 = vmatprep.subr.mxu0 %v3008
  %v3010 = vand.u32 %v24, 4294901760
  %3011 = vmatpush1.msra.mxu0 %v3010
  %3012 = vmatprep.subr.mxu0 0.0
  %3013 = vmatpush1.msra.mxu0 0.0
  %3014 = vmatprep.subr.mxu0 0.0
  %3015 = vmatpush1.msra.mxu0 0.0
  %3016 = vmatprep.subr.mxu0 0.0
  %3017 = vmatpush1.msra.mxu0 0.0
  %3018 = vmatprep.subr.mxu0 0.0
  %3019 = vmatpush1.msra.mxu0 0.0
  %3020 = vmatprep.subr.mxu0 0.0
  %3021 = vmatpush1.msra.mxu0 0.0
  %3022 = vmatprep.subr.mxu0 0.0
  %3023 = vmatpush1.msra.mxu0 0.0
  %3024 = vmatprep.subr.mxu0 0.0
  %3025 = vmatpush1.msra.mxu0 0.0
  %3026 = vmatprep.subr.mxu0 0.0
  %3027 = vmatpush1.msra.mxu0 0.0
  %3028 = vmatprep.subr.mxu0 0.0
  %3029 = vmatpush1.msra.mxu0 0.0
  %3030 = vmatprep.subr.mxu0 0.0
  %3031 = vmatpush1.msra.mxu0 0.0
  %3032 = vmatprep.subr.mxu0 0.0
  %3033 = vmatpush1.msra.mxu0 0.0
  %3034 = vmatprep.subr.mxu0 0.0
  %3035 = vmatpush1.msra.mxu0 0.0
  %3036 = vmatprep.subr.mxu0 0.0
  %3037 = vmatpush1.msra.mxu0 0.0
  %3038 = vmatprep.subr.mxu0 0.0
  %3039 = vmatpush1.msra.mxu0 0.0
  %3040 = vmatprep.subr.mxu0 0.0
  %3041 = vmatpush1.msra.mxu0 0.0
  %3042 = vmatprep.subr.mxu0 0.0
  %3043 = vmatpush1.msra.mxu0 0.0
  %3044 = vmatprep.subr.mxu0 0.0
  %3045 = vmatpush1.msra.mxu0 0.0
  %3046 = vmatprep.subr.mxu0 0.0
  %3047 = vmatpush1.msra.mxu0 0.0
  %3048 = vmatprep.subr.mxu0 0.0
  %3049 = vmatpush1.msra.mxu0 0.0
  %3050 = vmatprep.subr.mxu0 0.0
  %3051 = vmatpush1.msra.mxu0 0.0
  %3052 = vmatprep.subr.mxu0 0.0
  %3053 = vmatpush1.msra.mxu0 0.0
  %3054 = vmatprep.subr.mxu0 0.0
  %3055 = vmatpush1.msra.mxu0 0.0
  %3056 = vmatprep.subr.mxu0 0.0
  %3057 = vmatpush1.msra.mxu0 0.0
  %3058 = vmatprep.subr.mxu0 0.0
  %3059 = vmatpush1.msra.mxu0 0.0
  %3060 = vmatprep.subr.mxu0 0.0
  %3061 = vmatpush1.msra.mxu0 0.0
  %3062 = vmatprep.subr.mxu0 0.0
  %3063 = vmatpush1.msra.mxu0 0.0
  %3064 = vmatprep.subr.mxu0 0.0
  %3065 = vmatpush1.msra.mxu0 0.0
  %3066 = vmatprep.subr.mxu0 0.0
  %3067 = vmatpush1.msra.mxu0 0.0
  %3068 = vmatprep.mubr.f32.mxu0 0.0
  %v3069 = vand.u32 %v2985, 4294901760
  %v3070 = vsub.f32 %v2985, %v3069
  %v3071 = vand.u32 %v3070, 4294901760
  %v3072 = vsub.f32 %v3070, %v3071
  %v3073 = vand.u32 %v3072, 4294901760
  %3074 = vmatmul.mubr.f32.gmra.mrb[0].mxu0 %v3073
  %v3075 = vpop.f32.mrb[0].mxu0
  %v3076 = vadd.f32 0.0, %v3075
  %v3077 = vpop.f32.mrb[0].mxu0
  %v3078 = vadd.f32 0.0, %v3077
  %3079 = vmatprep.mubr.f32.mxu0 0.0
  %v3080 = vand.u32 %v2988, 4294901760
  %v3081 = vsub.f32 %v2988, %v3080
  %v3082 = vand.u32 %v3081, 4294901760
  %v3083 = vsub.f32 %v3081, %v3082
  %v3084 = vand.u32 %v3083, 4294901760
  %3085 = vmatmul.mubr.f32.gmra.mrb[0].mxu0 %v3084
  %v3086 = vpop.f32.mrb[0].mxu0
  %v3087 = vadd.f32 0.0, %v3086
  %v3088 = vpop.f32.mrb[0].mxu0
  %v3089 = vadd.f32 0.0, %v3088
  %3090 = vmatprep.mubr.f32.mxu0 0.0
  %v3091 = vand.u32 %v2991, 4294901760
  %v3092 = vsub.f32 %v2991, %v3091
  %v3093 = vand.u32 %v3092, 4294901760
  %v3094 = vsub.f32 %v3092, %v3093
  %v3095 = vand.u32 %v3094, 4294901760
  %3096 = vmatmul.mubr.f32.gmra.mrb[0].mxu0 %v3095
  %v3097 = vpop.f32.mrb[0].mxu0
  %v3098 = vadd.f32 0.0, %v3097
  %v3099 = vpop.f32.mrb[0].mxu0
  %v3100 = vadd.f32 0.0, %v3099
  %3101 = vmatprep.mubr.f32.mxu0 0.0
  %v3102 = vand.u32 %v2994, 4294901760
  %v3103 = vsub.f32 %v2994, %v3102
  %v3104 = vand.u32 %v3103, 4294901760
  %v3105 = vsub.f32 %v3103, %v3104
  %v3106 = vand.u32 %v3105, 4294901760
  %3107 = vmatmul.mubr.f32.gmra.mrb[0].mxu0 %v3106
  %v3108 = vpop.f32.mrb[0].mxu0
  %v3109 = vadd.f32 0.0, %v3108
  %v3110 = vpop.f32.mrb[0].mxu0
  %v3111 = vadd.f32 0.0, %v3110
  %3112 = vdwg.mxu0
  %v3113 = vand.u32 %v19, 4294901760
  %v3114 = vsub.f32 %v19, %v3113
  %v3115 = vand.u32 %v3114, 4294901760
  %v3116 = vsub.f32 %v3114, %v3115
  %v3117 = vand.u32 %v3116, 4294901760
  %3118 = vmatprep.subr.mxu0 %v3117
  %v3119 = vand.u32 %v18, 4294901760
  %v3120 = vsub.f32 %v18, %v3119
  %v3121 = vand.u32 %v3120, 4294901760
  %v3122 = vsub.f32 %v3120, %v3121
  %v3123 = vand.u32 %v3122, 4294901760
  %3124 = vmatpush1.msra.mxu0 %v3123
  %v3125 = vand.u32 %v21, 4294901760
  %v3126 = vsub.f32 %v21, %v3125
  %v3127 = vand.u32 %v3126, 4294901760
  %v3128 = vsub.f32 %v3126, %v3127
  %v3129 = vand.u32 %v3128, 4294901760
  %3130 = vmatprep.subr.mxu0 %v3129
  %v3131 = vand.u32 %v20, 4294901760
  %v3132 = vsub.f32 %v20, %v3131
  %v3133 = vand.u32 %v3132, 4294901760
  %v3134 = vsub.f32 %v3132, %v3133
  %v3135 = vand.u32 %v3134, 4294901760
  %3136 = vmatpush1.msra.mxu0 %v3135
  %v3137 = vand.u32 %v23, 4294901760
  %v3138 = vsub.f32 %v23, %v3137
  %v3139 = vand.u32 %v3138, 4294901760
  %v3140 = vsub.f32 %v3138, %v3139
  %v3141 = vand.u32 %v3140, 4294901760
  %3142 = vmatprep.subr.mxu0 %v3141
  %v3143 = vand.u32 %v22, 4294901760
  %v3144 = vsub.f32 %v22, %v3143
  %v3145 = vand.u32 %v3144, 4294901760
  %v3146 = vsub.f32 %v3144, %v3145
  %v3147 = vand.u32 %v3146, 4294901760
  %3148 = vmatpush1.msra.mxu0 %v3147
  %v3149 = vand.u32 %v25, 4294901760
  %v3150 = vsub.f32 %v25, %v3149
  %v3151 = vand.u32 %v3150, 4294901760
  %v3152 = vsub.f32 %v3150, %v3151
  %v3153 = vand.u32 %v3152, 4294901760
  %3154 = vmatprep.subr.mxu0 %v3153
  %v3155 = vand.u32 %v24, 4294901760
  %v3156 = vsub.f32 %v24, %v3155
  %v3157 = vand.u32 %v3156, 4294901760
  %v3158 = vsub.f32 %v3156, %v3157
  %v3159 = vand.u32 %v3158, 4294901760
  %3160 = vmatpush1.msra.mxu0 %v3159
  %3161 = vmatprep.subr.mxu0 0.0
  %3162 = vmatpush1.msra.mxu0 0.0
  %3163 = vmatprep.subr.mxu0 0.0
  %3164 = vmatpush1.msra.mxu0 0.0
  %3165 = vmatprep.subr.mxu0 0.0
  %3166 = vmatpush1.msra.mxu0 0.0
  %3167 = vmatprep.subr.mxu0 0.0
  %3168 = vmatpush1.msra.mxu0 0.0
  %3169 = vmatprep.subr.mxu0 0.0
  %3170 = vmatpush1.msra.mxu0 0.0
  %3171 = vmatprep.subr.mxu0 0.0
  %3172 = vmatpush1.msra.mxu0 0.0
  %3173 = vmatprep.subr.mxu0 0.0
  %3174 = vmatpush1.msra.mxu0 0.0
  %3175 = vmatprep.subr.mxu0 0.0
  %3176 = vmatpush1.msra.mxu0 0.0
  %3177 = vmatprep.subr.mxu0 0.0
  %3178 = vmatpush1.msra.mxu0 0.0
  %3179 = vmatprep.subr.mxu0 0.0
  %3180 = vmatpush1.msra.mxu0 0.0
  %3181 = vmatprep.subr.mxu0 0.0
  %3182 = vmatpush1.msra.mxu0 0.0
  %3183 = vmatprep.subr.mxu0 0.0
  %3184 = vmatpush1.msra.mxu0 0.0
  %3185 = vmatprep.subr.mxu0 0.0
  %3186 = vmatpush1.msra.mxu0 0.0
  %3187 = vmatprep.subr.mxu0 0.0
  %3188 = vmatpush1.msra.mxu0 0.0
  %3189 = vmatprep.subr.mxu0 0.0
  %3190 = vmatpush1.msra.mxu0 0.0
  %3191 = vmatprep.subr.mxu0 0.0
  %3192 = vmatpush1.msra.mxu0 0.0
  %3193 = vmatprep.subr.mxu0 0.0
  %3194 = vmatpush1.msra.mxu0 0.0
  %3195 = vmatprep.subr.mxu0 0.0
  %3196 = vmatpush1.msra.mxu0 0.0
  %3197 = vmatprep.subr.mxu0 0.0
  %3198 = vmatpush1.msra.mxu0 0.0
  %3199 = vmatprep.subr.mxu0 0.0
  %3200 = vmatpush1.msra.mxu0 0.0
  %3201 = vmatprep.subr.mxu0 0.0
  %3202 = vmatpush1.msra.mxu0 0.0
  %3203 = vmatprep.subr.mxu0 0.0
  %3204 = vmatpush1.msra.mxu0 0.0
  %3205 = vmatprep.subr.mxu0 0.0
  %3206 = vmatpush1.msra.mxu0 0.0
  %3207 = vmatprep.subr.mxu0 0.0
  %3208 = vmatpush1.msra.mxu0 0.0
  %3209 = vmatprep.subr.mxu0 0.0
  %3210 = vmatpush1.msra.mxu0 0.0
  %3211 = vmatprep.subr.mxu0 0.0
  %3212 = vmatpush1.msra.mxu0 0.0
  %3213 = vmatprep.subr.mxu0 0.0
  %3214 = vmatpush1.msra.mxu0 0.0
  %3215 = vmatprep.subr.mxu0 0.0
  %3216 = vmatpush1.msra.mxu0 0.0
  %3217 = vmatprep.mubr.f32.mxu0 0.0
  %v3218 = vand.u32 %v2985, 4294901760
  %3219 = vmatmul.mubr.f32.gmra.mrb[0].mxu0 %v3218
  %v3220 = vpop.f32.mrb[0].mxu0
  %v3221 = vadd.f32 %v3076, %v3220
  %v3222 = vpop.f32.mrb[0].mxu0
  %v3223 = vadd.f32 %v3078, %v3222
  %3224 = vmatprep.mubr.f32.mxu0 0.0
  %v3225 = vand.u32 %v2988, 4294901760
  %3226 = vmatmul.mubr.f32.gmra.mrb[0].mxu0 %v3225
  %v3227 = vpop.f32.mrb[0].mxu0
  %v3228 = vadd.f32 %v3087, %v3227
  %v3229 = vpop.f32.mrb[0].mxu0
  %v3230 = vadd.f32 %v3089, %v3229
  %3231 = vmatprep.mubr.f32.mxu0 0.0
  %v3232 = vand.u32 %v2991, 4294901760
  %3233 = vmatmul.mubr.f32.gmra.mrb[0].mxu0 %v3232
  %v3234 = vpop.f32.mrb[0].mxu0
  %v3235 = vadd.f32 %v3098, %v3234
  %v3236 = vpop.f32.mrb[0].mxu0
  %v3237 = vadd.f32 %v3100, %v3236
  %3238 = vmatprep.mubr.f32.mxu0 0.0
  %v3239 = vand.u32 %v2994, 4294901760
  %3240 = vmatmul.mubr.f32.gmra.mrb[0].mxu0 %v3239
  %v3241 = vpop.f32.mrb[0].mxu0
  %v3242 = vadd.f32 %v3109, %v3241
  %v3243 = vpop.f32.mrb[0].mxu0
  %v3244 = vadd.f32 %v3111, %v3243
  %3245 = vdwg.mxu0
  %v3246 = vand.u32 %v19, 4294901760
  %v3247 = vsub.f32 %v19, %v3246
  %3248 = vmatprep.subr.mxu0 %v3247
  %v3249 = vand.u32 %v18, 4294901760
  %v3250 = vsub.f32 %v18, %v3249
  %3251 = vmatpush1.msra.mxu0 %v3250
  %v3252 = vand.u32 %v21, 4294901760
  %v3253 = vsub.f32 %v21, %v3252
  %3254 = vmatprep.subr.mxu0 %v3253
  %v3255 = vand.u32 %v20, 4294901760
  %v3256 = vsub.f32 %v20, %v3255
  %3257 = vmatpush1.msra.mxu0 %v3256
  %v3258 = vand.u32 %v23, 4294901760
  %v3259 = vsub.f32 %v23, %v3258
  %3260 = vmatprep.subr.mxu0 %v3259
  %v3261 = vand.u32 %v22, 4294901760
  %v3262 = vsub.f32 %v22, %v3261
  %3263 = vmatpush1.msra.mxu0 %v3262
  %v3264 = vand.u32 %v25, 4294901760
  %v3265 = vsub.f32 %v25, %v3264
  %3266 = vmatprep.subr.mxu0 %v3265
  %v3267 = vand.u32 %v24, 4294901760
  %v3268 = vsub.f32 %v24, %v3267
  %3269 = vmatpush1.msra.mxu0 %v3268
  %3270 = vmatprep.subr.mxu0 0.0
  %3271 = vmatpush1.msra.mxu0 0.0
  %3272 = vmatprep.subr.mxu0 0.0
  %3273 = vmatpush1.msra.mxu0 0.0
  %3274 = vmatprep.subr.mxu0 0.0
  %3275 = vmatpush1.msra.mxu0 0.0
  %3276 = vmatprep.subr.mxu0 0.0
  %3277 = vmatpush1.msra.mxu0 0.0
  %3278 = vmatprep.subr.mxu0 0.0
  %3279 = vmatpush1.msra.mxu0 0.0
  %3280 = vmatprep.subr.mxu0 0.0
  %3281 = vmatpush1.msra.mxu0 0.0
  %3282 = vmatprep.subr.mxu0 0.0
  %3283 = vmatpush1.msra.mxu0 0.0
  %3284 = vmatprep.subr.mxu0 0.0
  %3285 = vmatpush1.msra.mxu0 0.0
  %3286 = vmatprep.subr.mxu0 0.0
  %3287 = vmatpush1.msra.mxu0 0.0
  %3288 = vmatprep.subr.mxu0 0.0
  %3289 = vmatpush1.msra.mxu0 0.0
  %3290 = vmatprep.subr.mxu0 0.0
  %3291 = vmatpush1.msra.mxu0 0.0
  %3292 = vmatprep.subr.mxu0 0.0
  %3293 = vmatpush1.msra.mxu0 0.0
  %3294 = vmatprep.subr.mxu0 0.0
  %3295 = vmatpush1.msra.mxu0 0.0
  %3296 = vmatprep.subr.mxu0 0.0
  %3297 = vmatpush1.msra.mxu0 0.0
  %3298 = vmatprep.subr.mxu0 0.0
  %3299 = vmatpush1.msra.mxu0 0.0
  %3300 = vmatprep.subr.mxu0 0.0
  %3301 = vmatpush1.msra.mxu0 0.0
  %3302 = vmatprep.subr.mxu0 0.0
  %3303 = vmatpush1.msra.mxu0 0.0
  %3304 = vmatprep.subr.mxu0 0.0
  %3305 = vmatpush1.msra.mxu0 0.0
  %3306 = vmatprep.subr.mxu0 0.0
  %3307 = vmatpush1.msra.mxu0 0.0
  %3308 = vmatprep.subr.mxu0 0.0
  %3309 = vmatpush1.msra.mxu0 0.0
  %3310 = vmatprep.subr.mxu0 0.0
  %3311 = vmatpush1.msra.mxu0 0.0
  %3312 = vmatprep.subr.mxu0 0.0
  %3313 = vmatpush1.msra.mxu0 0.0
  %3314 = vmatprep.subr.mxu0 0.0
  %3315 = vmatpush1.msra.mxu0 0.0
  %3316 = vmatprep.subr.mxu0 0.0
  %3317 = vmatpush1.msra.mxu0 0.0
  %3318 = vmatprep.subr.mxu0 0.0
  %3319 = vmatpush1.msra.mxu0 0.0
  %3320 = vmatprep.subr.mxu0 0.0
  %3321 = vmatpush1.msra.mxu0 0.0
  %3322 = vmatprep.subr.mxu0 0.0
  %3323 = vmatpush1.msra.mxu0 0.0
  %3324 = vmatprep.subr.mxu0 0.0
  %3325 = vmatpush1.msra.mxu0 0.0
  %3326 = vmatprep.mubr.f32.mxu0 0.0
  %v3327 = vand.u32 %v2985, 4294901760
  %v3328 = vsub.f32 %v2985, %v3327
  %3329 = vmatmul.mubr.f32.gmra.mrb[0].mxu0 %v3328
  %v3330 = vpop.f32.mrb[0].mxu0
  %v3331 = vadd.f32 %v3221, %v3330
  %v3332 = vpop.f32.mrb[0].mxu0
  %v3333 = vadd.f32 %v3223, %v3332
  %3334 = vmatprep.mubr.f32.mxu0 0.0
  %v3335 = vand.u32 %v2988, 4294901760
  %v3336 = vsub.f32 %v2988, %v3335
  %3337 = vmatmul.mubr.f32.gmra.mrb[0].mxu0 %v3336
  %v3338 = vpop.f32.mrb[0].mxu0
  %v3339 = vadd.f32 %v3228, %v3338
  %v3340 = vpop.f32.mrb[0].mxu0
  %v3341 = vadd.f32 %v3230, %v3340
  %3342 = vmatprep.mubr.f32.mxu0 0.0
  %v3343 = vand.u32 %v2991, 4294901760
  %v3344 = vsub.f32 %v2991, %v3343
  %3345 = vmatmul.mubr.f32.gmra.mrb[0].mxu0 %v3344
  %v3346 = vpop.f32.mrb[0].mxu0
  %v3347 = vadd.f32 %v3235, %v3346
  %v3348 = vpop.f32.mrb[0].mxu0
  %v3349 = vadd.f32 %v3237, %v3348
  %3350 = vmatprep.mubr.f32.mxu0 0.0
  %v3351 = vand.u32 %v2994, 4294901760
  %v3352 = vsub.f32 %v2994, %v3351
  %3353 = vmatmul.mubr.f32.gmra.mrb[0].mxu0 %v3352
  %v3354 = vpop.f32.mrb[0].mxu0
  %v3355 = vadd.f32 %v3242, %v3354
  %v3356 = vpop.f32.mrb[0].mxu0
  %v3357 = vadd.f32 %v3244, %v3356
  %3358 = vdwg.mxu0
  %v3359 = vand.u32 %v19, 4294901760
  %3360 = vmatprep.subr.mxu0 %v3359
  %v3361 = vand.u32 %v18, 4294901760
  %3362 = vmatpush1.msra.mxu0 %v3361
  %v3363 = vand.u32 %v21, 4294901760
  %3364 = vmatprep.subr.mxu0 %v3363
  %v3365 = vand.u32 %v20, 4294901760
  %3366 = vmatpush1.msra.mxu0 %v3365
  %v3367 = vand.u32 %v23, 4294901760
  %3368 = vmatprep.subr.mxu0 %v3367
  %v3369 = vand.u32 %v22, 4294901760
  %3370 = vmatpush1.msra.mxu0 %v3369
  %v3371 = vand.u32 %v25, 4294901760
  %3372 = vmatprep.subr.mxu0 %v3371
  %v3373 = vand.u32 %v24, 4294901760
  %3374 = vmatpush1.msra.mxu0 %v3373
  %3375 = vmatprep.subr.mxu0 0.0
  %3376 = vmatpush1.msra.mxu0 0.0
  %3377 = vmatprep.subr.mxu0 0.0
  %3378 = vmatpush1.msra.mxu0 0.0
  %3379 = vmatprep.subr.mxu0 0.0
  %3380 = vmatpush1.msra.mxu0 0.0
  %3381 = vmatprep.subr.mxu0 0.0
  %3382 = vmatpush1.msra.mxu0 0.0
  %3383 = vmatprep.subr.mxu0 0.0
  %3384 = vmatpush1.msra.mxu0 0.0
  %3385 = vmatprep.subr.mxu0 0.0
  %3386 = vmatpush1.msra.mxu0 0.0
  %3387 = vmatprep.subr.mxu0 0.0
  %3388 = vmatpush1.msra.mxu0 0.0
  %3389 = vmatprep.subr.mxu0 0.0
  %3390 = vmatpush1.msra.mxu0 0.0
  %3391 = vmatprep.subr.mxu0 0.0
  %3392 = vmatpush1.msra.mxu0 0.0
  %3393 = vmatprep.subr.mxu0 0.0
  %3394 = vmatpush1.msra.mxu0 0.0
  %3395 = vmatprep.subr.mxu0 0.0
  %3396 = vmatpush1.msra.mxu0 0.0
  %3397 = vmatprep.subr.mxu0 0.0
  %3398 = vmatpush1.msra.mxu0 0.0
  %3399 = vmatprep.subr.mxu0 0.0
  %3400 = vmatpush1.msra.mxu0 0.0
  %3401 = vmatprep.subr.mxu0 0.0
  %3402 = vmatpush1.msra.mxu0 0.0
  %3403 = vmatprep.subr.mxu0 0.0
  %3404 = vmatpush1.msra.mxu0 0.0
  %3405 = vmatprep.subr.mxu0 0.0
  %3406 = vmatpush1.msra.mxu0 0.0
  %3407 = vmatprep.subr.mxu0 0.0
  %3408 = vmatpush1.msra.mxu0 0.0
  %3409 = vmatprep.subr.mxu0 0.0
  %3410 = vmatpush1.msra.mxu0 0.0
  %3411 = vmatprep.subr.mxu0 0.0
  %3412 = vmatpush1.msra.mxu0 0.0
  %3413 = vmatprep.subr.mxu0 0.0
  %3414 = vmatpush1.msra.mxu0 0.0
  %3415 = vmatprep.subr.mxu0 0.0
  %3416 = vmatpush1.msra.mxu0 0.0
  %3417 = vmatprep.subr.mxu0 0.0
  %3418 = vmatpush1.msra.mxu0 0.0
  %3419 = vmatprep.subr.mxu0 0.0
  %3420 = vmatpush1.msra.mxu0 0.0
  %3421 = vmatprep.subr.mxu0 0.0
  %3422 = vmatpush1.msra.mxu0 0.0
  %3423 = vmatprep.subr.mxu0 0.0
  %3424 = vmatpush1.msra.mxu0 0.0
  %3425 = vmatprep.subr.mxu0 0.0
  %3426 = vmatpush1.msra.mxu0 0.0
  %3427 = vmatprep.subr.mxu0 0.0
  %3428 = vmatpush1.msra.mxu0 0.0
  %3429 = vmatprep.subr.mxu0 0.0
  %3430 = vmatpush1.msra.mxu0 0.0
  %3431 = vmatprep.mubr.f32.mxu0 0.0
  %v3432 = vand.u32 %v2985, 4294901760
  %v3433 = vsub.f32 %v2985, %v3432
  %v3434 = vand.u32 %v3433, 4294901760
  %3435 = vmatmul.mubr.f32.gmra.mrb[0].mxu0 %v3434
  %v3436 = vpop.f32.mrb[0].mxu0
  %v3437 = vadd.f32 %v3331, %v3436
  %v3438 = vpop.f32.mrb[0].mxu0
  %v3439 = vadd.f32 %v3333, %v3438
  %3440 = vmatprep.mubr.f32.mxu0 0.0
  %v3441 = vand.u32 %v2988, 4294901760
  %v3442 = vsub.f32 %v2988, %v3441
  %v3443 = vand.u32 %v3442, 4294901760
  %3444 = vmatmul.mubr.f32.gmra.mrb[0].mxu0 %v3443
  %v3445 = vpop.f32.mrb[0].mxu0
  %v3446 = vadd.f32 %v3339, %v3445
  %v3447 = vpop.f32.mrb[0].mxu0
  %v3448 = vadd.f32 %v3341, %v3447
  %3449 = vmatprep.mubr.f32.mxu0 0.0
  %v3450 = vand.u32 %v2991, 4294901760
  %v3451 = vsub.f32 %v2991, %v3450
  %v3452 = vand.u32 %v3451, 4294901760
  %3453 = vmatmul.mubr.f32.gmra.mrb[0].mxu0 %v3452
  %v3454 = vpop.f32.mrb[0].mxu0
  %v3455 = vadd.f32 %v3347, %v3454
  %v3456 = vpop.f32.mrb[0].mxu0
  %v3457 = vadd.f32 %v3349, %v3456
  %3458 = vmatprep.mubr.f32.mxu0 0.0
  %v3459 = vand.u32 %v2994, 4294901760
  %v3460 = vsub.f32 %v2994, %v3459
  %v3461 = vand.u32 %v3460, 4294901760
  %3462 = vmatmul.mubr.f32.gmra.mrb[0].mxu0 %v3461
  %v3463 = vpop.f32.mrb[0].mxu0
  %v3464 = vadd.f32 %v3355, %v3463
  %v3465 = vpop.f32.mrb[0].mxu0
  %v3466 = vadd.f32 %v3357, %v3465
  %3467 = vdwg.mxu0
  %v3468 = vand.u32 %v19, 4294901760
  %v3469 = vsub.f32 %v19, %v3468
  %v3470 = vand.u32 %v3469, 4294901760
  %3471 = vmatprep.subr.mxu0 %v3470
  %v3472 = vand.u32 %v18, 4294901760
  %v3473 = vsub.f32 %v18, %v3472
  %v3474 = vand.u32 %v3473, 4294901760
  %3475 = vmatpush1.msra.mxu0 %v3474
  %v3476 = vand.u32 %v21, 4294901760
  %v3477 = vsub.f32 %v21, %v3476
  %v3478 = vand.u32 %v3477, 4294901760
  %3479 = vmatprep.subr.mxu0 %v3478
  %v3480 = vand.u32 %v20, 4294901760
  %v3481 = vsub.f32 %v20, %v3480
  %v3482 = vand.u32 %v3481, 4294901760
  %3483 = vmatpush1.msra.mxu0 %v3482
  %v3484 = vand.u32 %v23, 4294901760
  %v3485 = vsub.f32 %v23, %v3484
  %v3486 = vand.u32 %v3485, 4294901760
  %3487 = vmatprep.subr.mxu0 %v3486
  %v3488 = vand.u32 %v22, 4294901760
  %v3489 = vsub.f32 %v22, %v3488
  %v3490 = vand.u32 %v3489, 4294901760
  %3491 = vmatpush1.msra.mxu0 %v3490
  %v3492 = vand.u32 %v25, 4294901760
  %v3493 = vsub.f32 %v25, %v3492
  %v3494 = vand.u32 %v3493, 4294901760
  %3495 = vmatprep.subr.mxu0 %v3494
  %v3496 = vand.u32 %v24, 4294901760
  %v3497 = vsub.f32 %v24, %v3496
  %v3498 = vand.u32 %v3497, 4294901760
  %3499 = vmatpush1.msra.mxu0 %v3498
  %3500 = vmatprep.subr.mxu0 0.0
  %3501 = vmatpush1.msra.mxu0 0.0
  %3502 = vmatprep.subr.mxu0 0.0
  %3503 = vmatpush1.msra.mxu0 0.0
  %3504 = vmatprep.subr.mxu0 0.0
  %3505 = vmatpush1.msra.mxu0 0.0
  %3506 = vmatprep.subr.mxu0 0.0
  %3507 = vmatpush1.msra.mxu0 0.0
  %3508 = vmatprep.subr.mxu0 0.0
  %3509 = vmatpush1.msra.mxu0 0.0
  %3510 = vmatprep.subr.mxu0 0.0
  %3511 = vmatpush1.msra.mxu0 0.0
  %3512 = vmatprep.subr.mxu0 0.0
  %3513 = vmatpush1.msra.mxu0 0.0
  %3514 = vmatprep.subr.mxu0 0.0
  %3515 = vmatpush1.msra.mxu0 0.0
  %3516 = vmatprep.subr.mxu0 0.0
  %3517 = vmatpush1.msra.mxu0 0.0
  %3518 = vmatprep.subr.mxu0 0.0
  %3519 = vmatpush1.msra.mxu0 0.0
  %3520 = vmatprep.subr.mxu0 0.0
  %3521 = vmatpush1.msra.mxu0 0.0
  %3522 = vmatprep.subr.mxu0 0.0
  %3523 = vmatpush1.msra.mxu0 0.0
  %3524 = vmatprep.subr.mxu0 0.0
  %3525 = vmatpush1.msra.mxu0 0.0
  %3526 = vmatprep.subr.mxu0 0.0
  %3527 = vmatpush1.msra.mxu0 0.0
  %3528 = vmatprep.subr.mxu0 0.0
  %3529 = vmatpush1.msra.mxu0 0.0
  %3530 = vmatprep.subr.mxu0 0.0
  %3531 = vmatpush1.msra.mxu0 0.0
  %3532 = vmatprep.subr.mxu0 0.0
  %3533 = vmatpush1.msra.mxu0 0.0
  %3534 = vmatprep.subr.mxu0 0.0
  %3535 = vmatpush1.msra.mxu0 0.0
  %3536 = vmatprep.subr.mxu0 0.0
  %3537 = vmatpush1.msra.mxu0 0.0
  %3538 = vmatprep.subr.mxu0 0.0
  %3539 = vmatpush1.msra.mxu0 0.0
  %3540 = vmatprep.subr.mxu0 0.0
  %3541 = vmatpush1.msra.mxu0 0.0
  %3542 = vmatprep.subr.mxu0 0.0
  %3543 = vmatpush1.msra.mxu0 0.0
  %3544 = vmatprep.subr.mxu0 0.0
  %3545 = vmatpush1.msra.mxu0 0.0
  %3546 = vmatprep.subr.mxu0 0.0
  %3547 = vmatpush1.msra.mxu0 0.0
  %3548 = vmatprep.subr.mxu0 0.0
  %3549 = vmatpush1.msra.mxu0 0.0
  %3550 = vmatprep.subr.mxu0 0.0
  %3551 = vmatpush1.msra.mxu0 0.0
  %3552 = vmatprep.subr.mxu0 0.0
  %3553 = vmatpush1.msra.mxu0 0.0
  %3554 = vmatprep.subr.mxu0 0.0
  %3555 = vmatpush1.msra.mxu0 0.0
  %3556 = vmatprep.mubr.f32.mxu0 0.0
  %v3557 = vand.u32 %v2985, 4294901760
  %3558 = vmatmul.mubr.f32.gmra.mrb[0].mxu0 %v3557
  %v3559 = vpop.f32.mrb[0].mxu0
  %v3560 = vadd.f32 %v3437, %v3559
  %v3561 = vpop.f32.mrb[0].mxu0
  %v3562 = vadd.f32 %v3439, %v3561
  %3563 = vmatprep.mubr.f32.mxu0 0.0
  %v3564 = vand.u32 %v2988, 4294901760
  %3565 = vmatmul.mubr.f32.gmra.mrb[0].mxu0 %v3564
  %v3566 = vpop.f32.mrb[0].mxu0
  %v3567 = vadd.f32 %v3446, %v3566
  %v3568 = vpop.f32.mrb[0].mxu0
  %v3569 = vadd.f32 %v3448, %v3568
  %3570 = vmatprep.mubr.f32.mxu0 0.0
  %v3571 = vand.u32 %v2991, 4294901760
  %3572 = vmatmul.mubr.f32.gmra.mrb[0].mxu0 %v3571
  %v3573 = vpop.f32.mrb[0].mxu0
  %v3574 = vadd.f32 %v3455, %v3573
  %v3575 = vpop.f32.mrb[0].mxu0
  %v3576 = vadd.f32 %v3457, %v3575
  %3577 = vmatprep.mubr.f32.mxu0 0.0
  %v3578 = vand.u32 %v2994, 4294901760
  %3579 = vmatmul.mubr.f32.gmra.mrb[0].mxu0 %v3578
  %v3580 = vpop.f32.mrb[0].mxu0
  %v3581 = vadd.f32 %v3464, %v3580
  %v3582 = vpop.f32.mrb[0].mxu0
  %v3583 = vadd.f32 %v3466, %v3582
  %3584 = vdwg.mxu0
  %v3585 = vand.u32 %v19, 4294901760
  %3586 = vmatprep.subr.mxu0 %v3585
  %v3587 = vand.u32 %v18, 4294901760
  %3588 = vmatpush1.msra.mxu0 %v3587
  %v3589 = vand.u32 %v21, 4294901760
  %3590 = vmatprep.subr.mxu0 %v3589
  %v3591 = vand.u32 %v20, 4294901760
  %3592 = vmatpush1.msra.mxu0 %v3591
  %v3593 = vand.u32 %v23, 4294901760
  %3594 = vmatprep.subr.mxu0 %v3593
  %v3595 = vand.u32 %v22, 4294901760
  %3596 = vmatpush1.msra.mxu0 %v3595
  %v3597 = vand.u32 %v25, 4294901760
  %3598 = vmatprep.subr.mxu0 %v3597
  %v3599 = vand.u32 %v24, 4294901760
  %3600 = vmatpush1.msra.mxu0 %v3599
  %3601 = vmatprep.subr.mxu0 0.0
  %3602 = vmatpush1.msra.mxu0 0.0
  %3603 = vmatprep.subr.mxu0 0.0
  %3604 = vmatpush1.msra.mxu0 0.0
  %3605 = vmatprep.subr.mxu0 0.0
  %3606 = vmatpush1.msra.mxu0 0.0
  %3607 = vmatprep.subr.mxu0 0.0
  %3608 = vmatpush1.msra.mxu0 0.0
  %3609 = vmatprep.subr.mxu0 0.0
  %3610 = vmatpush1.msra.mxu0 0.0
  %3611 = vmatprep.subr.mxu0 0.0
  %3612 = vmatpush1.msra.mxu0 0.0
  %3613 = vmatprep.subr.mxu0 0.0
  %3614 = vmatpush1.msra.mxu0 0.0
  %3615 = vmatprep.subr.mxu0 0.0
  %3616 = vmatpush1.msra.mxu0 0.0
  %3617 = vmatprep.subr.mxu0 0.0
  %3618 = vmatpush1.msra.mxu0 0.0
  %3619 = vmatprep.subr.mxu0 0.0
  %3620 = vmatpush1.msra.mxu0 0.0
  %3621 = vmatprep.subr.mxu0 0.0
  %3622 = vmatpush1.msra.mxu0 0.0
  %3623 = vmatprep.subr.mxu0 0.0
  %3624 = vmatpush1.msra.mxu0 0.0
  %3625 = vmatprep.subr.mxu0 0.0
  %3626 = vmatpush1.msra.mxu0 0.0
  %3627 = vmatprep.subr.mxu0 0.0
  %3628 = vmatpush1.msra.mxu0 0.0
  %3629 = vmatprep.subr.mxu0 0.0
  %3630 = vmatpush1.msra.mxu0 0.0
  %3631 = vmatprep.subr.mxu0 0.0
  %3632 = vmatpush1.msra.mxu0 0.0
  %3633 = vmatprep.subr.mxu0 0.0
  %3634 = vmatpush1.msra.mxu0 0.0
  %3635 = vmatprep.subr.mxu0 0.0
  %3636 = vmatpush1.msra.mxu0 0.0
  %3637 = vmatprep.subr.mxu0 0.0
  %3638 = vmatpush1.msra.mxu0 0.0
  %3639 = vmatprep.subr.mxu0 0.0
  %3640 = vmatpush1.msra.mxu0 0.0
  %3641 = vmatprep.subr.mxu0 0.0
  %3642 = vmatpush1.msra.mxu0 0.0
  %3643 = vmatprep.subr.mxu0 0.0
  %3644 = vmatpush1.msra.mxu0 0.0
  %3645 = vmatprep.subr.mxu0 0.0
  %3646 = vmatpush1.msra.mxu0 0.0
  %3647 = vmatprep.subr.mxu0 0.0
  %3648 = vmatpush1.msra.mxu0 0.0
  %3649 = vmatprep.subr.mxu0 0.0
  %3650 = vmatpush1.msra.mxu0 0.0
  %3651 = vmatprep.subr.mxu0 0.0
  %3652 = vmatpush1.msra.mxu0 0.0
  %3653 = vmatprep.subr.mxu0 0.0
  %3654 = vmatpush1.msra.mxu0 0.0
  %3655 = vmatprep.subr.mxu0 0.0
  %3656 = vmatpush1.msra.mxu0 0.0
  %3657 = vmatprep.mubr.f32.mxu0 0.0
  %v3658 = vand.u32 %v2985, 4294901760
  %3659 = vmatmul.mubr.f32.gmra.mrb[0].mxu0 %v3658
  %v3660 = vpop.f32.mrb[0].mxu0
  %v3661 = vadd.f32 %v3560, %v3660
  %v3662 = vpop.f32.mrb[0].mxu0
  %v3663 = vadd.f32 %v3562, %v3662
  %3664 = vmatprep.mubr.f32.mxu0 0.0
  %v3665 = vand.u32 %v2988, 4294901760
  %3666 = vmatmul.mubr.f32.gmra.mrb[0].mxu0 %v3665
  %v3667 = vpop.f32.mrb[0].mxu0
  %v3668 = vadd.f32 %v3567, %v3667
  %v3669 = vpop.f32.mrb[0].mxu0
  %v3670 = vadd.f32 %v3569, %v3669
  %3671 = vmatprep.mubr.f32.mxu0 0.0
  %v3672 = vand.u32 %v2991, 4294901760
  %3673 = vmatmul.mubr.f32.gmra.mrb[0].mxu0 %v3672
  %v3674 = vpop.f32.mrb[0].mxu0
  %v3675 = vadd.f32 %v3574, %v3674
  %v3676 = vpop.f32.mrb[0].mxu0
  %v3677 = vadd.f32 %v3576, %v3676
  %3678 = vmatprep.mubr.f32.mxu0 0.0
  %v3679 = vand.u32 %v2994, 4294901760
  %3680 = vmatmul.mubr.f32.gmra.mrb[0].mxu0 %v3679
  %v3681 = vpop.f32.mrb[0].mxu0
  %v3682 = vadd.f32 %v3581, %v3681
  %v3683 = vpop.f32.mrb[0].mxu0
  %v3684 = vadd.f32 %v3583, %v3683
  %3685 = vdwg.mxu0
  %v3686 = vsel %vm31, %v3661, %v3663
  %v3687 = vsel %vm32, %v3668, %v3670
  %v3688 = vsel %vm33, %v3675, %v3677
  %v3689 = vsel %vm34, %v3682, %v3684
  %s3690 = scalar_lea.vmem %s0, 64
  %v3691 = vld [vmem:[%s3690] sm:$0xff]
  %v3692 = vld [vmem:[%s3690 + $0x8] sm:$0xff]
  %v3693 = vld [vmem:[%s3690 + $0x10] sm:$0xff]
  %v3694 = vld [vmem:[%s3690 + $0x18] sm:$0xff]
  %v3695 = vadd.f32 %v3686, %v3691
  %v3696 = vadd.f32 %v3687, %v3692
  %v3697 = vadd.f32 %v3688, %v3693
  %v3698 = vadd.f32 %v3689, %v3694
  %3703 = vrot.lane.b32.xlu0 %v3686, 32
  %v3704 = vpop.permute.xlu0 %3703
  %3705 = vrot.lane.b32.xlu0 %v3687, 32
  %v3706 = vpop.permute.xlu0 %3705
  %3707 = vrot.lane.b32.xlu0 %v3688, 32
  %v3708 = vpop.permute.xlu0 %3707
  %3709 = vrot.lane.b32.xlu0 %v3689, 32
  %v3710 = vpop.permute.xlu0 %3709
  %3719 = vrot.lane.b32.xlu0 %v3691, 32
  %v3720 = vpop.permute.xlu0 %3719
  %3721 = vrot.lane.b32.xlu0 %v3692, 32
  %v3722 = vpop.permute.xlu0 %3721
  %3723 = vrot.lane.b32.xlu0 %v3693, 32
  %v3724 = vpop.permute.xlu0 %3723
  %3725 = vrot.lane.b32.xlu0 %v3694, 32
  %v3726 = vpop.permute.xlu0 %3725
  %3731 = vmatprep.subr.mxu0 0.0
  %v3732 = vand.u32 %v3704, 4294901760
  %3733 = vmatpush1.msra.mxu0 %v3732
  %3734 = vmatprep.subr.mxu0 0.0
  %v3735 = vand.u32 %v3706, 4294901760
  %3736 = vmatpush1.msra.mxu0 %v3735
  %3737 = vmatprep.subr.mxu0 0.0
  %v3738 = vand.u32 %v3708, 4294901760
  %3739 = vmatpush1.msra.mxu0 %v3738
  %3740 = vmatprep.subr.mxu0 0.0
  %v3741 = vand.u32 %v3710, 4294901760
  %3742 = vmatpush1.msra.mxu0 %v3741
  %3743 = vmatprep.subr.mxu0 0.0
  %3744 = vmatpush1.msra.mxu0 0.0
  %3745 = vmatprep.subr.mxu0 0.0
  %3746 = vmatpush1.msra.mxu0 0.0
  %3747 = vmatprep.subr.mxu0 0.0
  %3748 = vmatpush1.msra.mxu0 0.0
  %3749 = vmatprep.subr.mxu0 0.0
  %3750 = vmatpush1.msra.mxu0 0.0
  %3751 = vmatprep.subr.mxu0 0.0
  %3752 = vmatpush1.msra.mxu0 0.0
  %3753 = vmatprep.subr.mxu0 0.0
  %3754 = vmatpush1.msra.mxu0 0.0
  %3755 = vmatprep.subr.mxu0 0.0
  %3756 = vmatpush1.msra.mxu0 0.0
  %3757 = vmatprep.subr.mxu0 0.0
  %3758 = vmatpush1.msra.mxu0 0.0
  %3759 = vmatprep.subr.mxu0 0.0
  %3760 = vmatpush1.msra.mxu0 0.0
  %3761 = vmatprep.subr.mxu0 0.0
  %3762 = vmatpush1.msra.mxu0 0.0
  %3763 = vmatprep.subr.mxu0 0.0
  %3764 = vmatpush1.msra.mxu0 0.0
  %3765 = vmatprep.subr.mxu0 0.0
  %3766 = vmatpush1.msra.mxu0 0.0
  %3767 = vmatprep.subr.mxu0 0.0
  %3768 = vmatpush1.msra.mxu0 0.0
  %3769 = vmatprep.subr.mxu0 0.0
  %3770 = vmatpush1.msra.mxu0 0.0
  %3771 = vmatprep.subr.mxu0 0.0
  %3772 = vmatpush1.msra.mxu0 0.0
  %3773 = vmatprep.subr.mxu0 0.0
  %3774 = vmatpush1.msra.mxu0 0.0
  %3775 = vmatprep.subr.mxu0 0.0
  %3776 = vmatpush1.msra.mxu0 0.0
  %3777 = vmatprep.subr.mxu0 0.0
  %3778 = vmatpush1.msra.mxu0 0.0
  %3779 = vmatprep.subr.mxu0 0.0
  %3780 = vmatpush1.msra.mxu0 0.0
  %3781 = vmatprep.subr.mxu0 0.0
  %3782 = vmatpush1.msra.mxu0 0.0
  %3783 = vmatprep.subr.mxu0 0.0
  %3784 = vmatpush1.msra.mxu0 0.0
  %3785 = vmatprep.subr.mxu0 0.0
  %3786 = vmatpush1.msra.mxu0 0.0
  %3787 = vmatprep.subr.mxu0 0.0
  %3788 = vmatpush1.msra.mxu0 0.0
  %3789 = vmatprep.subr.mxu0 0.0
  %3790 = vmatpush1.msra.mxu0 0.0
  %3791 = vmatprep.subr.mxu0 0.0
  %3792 = vmatpush1.msra.mxu0 0.0
  %3793 = vmatprep.subr.mxu0 0.0
  %3794 = vmatpush1.msra.mxu0 0.0
  %3795 = vmatprep.subr.mxu0 0.0
  %3796 = vmatpush1.msra.mxu0 0.0
  %3797 = vmatprep.subr.mxu0 0.0
  %3798 = vmatpush1.msra.mxu0 0.0
  %3799 = vmatprep.mubr.f32.mxu0 0.0
  %v3800 = vand.u32 %v774, 4294901760
  %v3801 = vsub.f32 %v774, %v3800
  %v3802 = vand.u32 %v3801, 4294901760
  %v3803 = vsub.f32 %v3801, %v3802
  %v3804 = vand.u32 %v3803, 4294901760
  %3805 = vmatmul.mubr.f32.gmra.mrb[0].mxu0 %v3804
  %v3806 = vpop.f32.mrb[0].mxu0
  %v3807 = vadd.f32 %v3720, %v3806
  %v3808 = vpop.f32.mrb[0].mxu0
  %3809 = vmatprep.mubr.f32.mxu0 0.0
  %v3810 = vand.u32 %v777, 4294901760
  %v3811 = vsub.f32 %v777, %v3810
  %v3812 = vand.u32 %v3811, 4294901760
  %v3813 = vsub.f32 %v3811, %v3812
  %v3814 = vand.u32 %v3813, 4294901760
  %3815 = vmatmul.mubr.f32.gmra.mrb[0].mxu0 %v3814
  %v3816 = vpop.f32.mrb[0].mxu0
  %v3817 = vadd.f32 %v3722, %v3816
  %v3818 = vpop.f32.mrb[0].mxu0
  %3819 = vmatprep.mubr.f32.mxu0 0.0
  %v3820 = vand.u32 %v780, 4294901760
  %v3821 = vsub.f32 %v780, %v3820
  %v3822 = vand.u32 %v3821, 4294901760
  %v3823 = vsub.f32 %v3821, %v3822
  %v3824 = vand.u32 %v3823, 4294901760
  %3825 = vmatmul.mubr.f32.gmra.mrb[0].mxu0 %v3824
  %v3826 = vpop.f32.mrb[0].mxu0
  %v3827 = vadd.f32 %v3724, %v3826
  %v3828 = vpop.f32.mrb[0].mxu0
  %3829 = vmatprep.mubr.f32.mxu0 0.0
  %v3830 = vand.u32 %v783, 4294901760
  %v3831 = vsub.f32 %v783, %v3830
  %v3832 = vand.u32 %v3831, 4294901760
  %v3833 = vsub.f32 %v3831, %v3832
  %v3834 = vand.u32 %v3833, 4294901760
  %3835 = vmatmul.mubr.f32.gmra.mrb[0].mxu0 %v3834
  %v3836 = vpop.f32.mrb[0].mxu0
  %v3837 = vadd.f32 %v3726, %v3836
  %v3838 = vpop.f32.mrb[0].mxu0
  %3839 = vdwg.mxu0
  %3840 = vmatprep.subr.mxu0 0.0
  %v3841 = vand.u32 %v3704, 4294901760
  %v3842 = vsub.f32 %v3704, %v3841
  %v3843 = vand.u32 %v3842, 4294901760
  %v3844 = vsub.f32 %v3842, %v3843
  %v3845 = vand.u32 %v3844, 4294901760
  %3846 = vmatpush1.msra.mxu0 %v3845
  %3847 = vmatprep.subr.mxu0 0.0
  %v3848 = vand.u32 %v3706, 4294901760
  %v3849 = vsub.f32 %v3706, %v3848
  %v3850 = vand.u32 %v3849, 4294901760
  %v3851 = vsub.f32 %v3849, %v3850
  %v3852 = vand.u32 %v3851, 4294901760
  %3853 = vmatpush1.msra.mxu0 %v3852
  %3854 = vmatprep.subr.mxu0 0.0
  %v3855 = vand.u32 %v3708, 4294901760
  %v3856 = vsub.f32 %v3708, %v3855
  %v3857 = vand.u32 %v3856, 4294901760
  %v3858 = vsub.f32 %v3856, %v3857
  %v3859 = vand.u32 %v3858, 4294901760
  %3860 = vmatpush1.msra.mxu0 %v3859
  %3861 = vmatprep.subr.mxu0 0.0
  %v3862 = vand.u32 %v3710, 4294901760
  %v3863 = vsub.f32 %v3710, %v3862
  %v3864 = vand.u32 %v3863, 4294901760
  %v3865 = vsub.f32 %v3863, %v3864
  %v3866 = vand.u32 %v3865, 4294901760
  %3867 = vmatpush1.msra.mxu0 %v3866
  %3868 = vmatprep.subr.mxu0 0.0
  %3869 = vmatpush1.msra.mxu0 0.0
  %3870 = vmatprep.subr.mxu0 0.0
  %3871 = vmatpush1.msra.mxu0 0.0
  %3872 = vmatprep.subr.mxu0 0.0
  %3873 = vmatpush1.msra.mxu0 0.0
  %3874 = vmatprep.subr.mxu0 0.0
  %3875 = vmatpush1.msra.mxu0 0.0
  %3876 = vmatprep.subr.mxu0 0.0
  %3877 = vmatpush1.msra.mxu0 0.0
  %3878 = vmatprep.subr.mxu0 0.0
  %3879 = vmatpush1.msra.mxu0 0.0
  %3880 = vmatprep.subr.mxu0 0.0
  %3881 = vmatpush1.msra.mxu0 0.0
  %3882 = vmatprep.subr.mxu0 0.0
  %3883 = vmatpush1.msra.mxu0 0.0
  %3884 = vmatprep.subr.mxu0 0.0
  %3885 = vmatpush1.msra.mxu0 0.0
  %3886 = vmatprep.subr.mxu0 0.0
  %3887 = vmatpush1.msra.mxu0 0.0
  %3888 = vmatprep.subr.mxu0 0.0
  %3889 = vmatpush1.msra.mxu0 0.0
  %3890 = vmatprep.subr.mxu0 0.0
  %3891 = vmatpush1.msra.mxu0 0.0
  %3892 = vmatprep.subr.mxu0 0.0
  %3893 = vmatpush1.msra.mxu0 0.0
  %3894 = vmatprep.subr.mxu0 0.0
  %3895 = vmatpush1.msra.mxu0 0.0
  %3896 = vmatprep.subr.mxu0 0.0
  %3897 = vmatpush1.msra.mxu0 0.0
  %3898 = vmatprep.subr.mxu0 0.0
  %3899 = vmatpush1.msra.mxu0 0.0
  %3900 = vmatprep.subr.mxu0 0.0
  %3901 = vmatpush1.msra.mxu0 0.0
  %3902 = vmatprep.subr.mxu0 0.0
  %3903 = vmatpush1.msra.mxu0 0.0
  %3904 = vmatprep.subr.mxu0 0.0
  %3905 = vmatpush1.msra.mxu0 0.0
  %3906 = vmatprep.subr.mxu0 0.0
  %3907 = vmatpush1.msra.mxu0 0.0
  %3908 = vmatprep.subr.mxu0 0.0
  %3909 = vmatpush1.msra.mxu0 0.0
  %3910 = vmatprep.subr.mxu0 0.0
  %3911 = vmatpush1.msra.mxu0 0.0
  %3912 = vmatprep.subr.mxu0 0.0
  %3913 = vmatpush1.msra.mxu0 0.0
  %3914 = vmatprep.subr.mxu0 0.0
  %3915 = vmatpush1.msra.mxu0 0.0
  %3916 = vmatprep.subr.mxu0 0.0
  %3917 = vmatpush1.msra.mxu0 0.0
  %3918 = vmatprep.subr.mxu0 0.0
  %3919 = vmatpush1.msra.mxu0 0.0
  %3920 = vmatprep.subr.mxu0 0.0
  %3921 = vmatpush1.msra.mxu0 0.0
  %3922 = vmatprep.subr.mxu0 0.0
  %3923 = vmatpush1.msra.mxu0 0.0
  %3924 = vmatprep.mubr.f32.mxu0 0.0
  %v3925 = vand.u32 %v774, 4294901760
  %3926 = vmatmul.mubr.f32.gmra.mrb[0].mxu0 %v3925
  %v3927 = vpop.f32.mrb[0].mxu0
  %v3928 = vadd.f32 %v3807, %v3927
  %v3929 = vpop.f32.mrb[0].mxu0
  %3930 = vmatprep.mubr.f32.mxu0 0.0
  %v3931 = vand.u32 %v777, 4294901760
  %3932 = vmatmul.mubr.f32.gmra.mrb[0].mxu0 %v3931
  %v3933 = vpop.f32.mrb[0].mxu0
  %v3934 = vadd.f32 %v3817, %v3933
  %v3935 = vpop.f32.mrb[0].mxu0
  %3936 = vmatprep.mubr.f32.mxu0 0.0
  %v3937 = vand.u32 %v780, 4294901760
  %3938 = vmatmul.mubr.f32.gmra.mrb[0].mxu0 %v3937
  %v3939 = vpop.f32.mrb[0].mxu0
  %v3940 = vadd.f32 %v3827, %v3939
  %v3941 = vpop.f32.mrb[0].mxu0
  %3942 = vmatprep.mubr.f32.mxu0 0.0
  %v3943 = vand.u32 %v783, 4294901760
  %3944 = vmatmul.mubr.f32.gmra.mrb[0].mxu0 %v3943
  %v3945 = vpop.f32.mrb[0].mxu0
  %v3946 = vadd.f32 %v3837, %v3945
  %v3947 = vpop.f32.mrb[0].mxu0
  %3948 = vdwg.mxu0
  %3949 = vmatprep.subr.mxu0 0.0
  %v3950 = vand.u32 %v3704, 4294901760
  %v3951 = vsub.f32 %v3704, %v3950
  %3952 = vmatpush1.msra.mxu0 %v3951
  %3953 = vmatprep.subr.mxu0 0.0
  %v3954 = vand.u32 %v3706, 4294901760
  %v3955 = vsub.f32 %v3706, %v3954
  %3956 = vmatpush1.msra.mxu0 %v3955
  %3957 = vmatprep.subr.mxu0 0.0
  %v3958 = vand.u32 %v3708, 4294901760
  %v3959 = vsub.f32 %v3708, %v3958
  %3960 = vmatpush1.msra.mxu0 %v3959
  %3961 = vmatprep.subr.mxu0 0.0
  %v3962 = vand.u32 %v3710, 4294901760
  %v3963 = vsub.f32 %v3710, %v3962
  %3964 = vmatpush1.msra.mxu0 %v3963
  %3965 = vmatprep.subr.mxu0 0.0
  %3966 = vmatpush1.msra.mxu0 0.0
  %3967 = vmatprep.subr.mxu0 0.0
  %3968 = vmatpush1.msra.mxu0 0.0
  %3969 = vmatprep.subr.mxu0 0.0
  %3970 = vmatpush1.msra.mxu0 0.0
  %3971 = vmatprep.subr.mxu0 0.0
  %3972 = vmatpush1.msra.mxu0 0.0
  %3973 = vmatprep.subr.mxu0 0.0
  %3974 = vmatpush1.msra.mxu0 0.0
  %3975 = vmatprep.subr.mxu0 0.0
  %3976 = vmatpush1.msra.mxu0 0.0
  %3977 = vmatprep.subr.mxu0 0.0
  %3978 = vmatpush1.msra.mxu0 0.0
  %3979 = vmatprep.subr.mxu0 0.0
  %3980 = vmatpush1.msra.mxu0 0.0
  %3981 = vmatprep.subr.mxu0 0.0
  %3982 = vmatpush1.msra.mxu0 0.0
  %3983 = vmatprep.subr.mxu0 0.0
  %3984 = vmatpush1.msra.mxu0 0.0
  %3985 = vmatprep.subr.mxu0 0.0
  %3986 = vmatpush1.msra.mxu0 0.0
  %3987 = vmatprep.subr.mxu0 0.0
  %3988 = vmatpush1.msra.mxu0 0.0
  %3989 = vmatprep.subr.mxu0 0.0
  %3990 = vmatpush1.msra.mxu0 0.0
  %3991 = vmatprep.subr.mxu0 0.0
  %3992 = vmatpush1.msra.mxu0 0.0
  %3993 = vmatprep.subr.mxu0 0.0
  %3994 = vmatpush1.msra.mxu0 0.0
  %3995 = vmatprep.subr.mxu0 0.0
  %3996 = vmatpush1.msra.mxu0 0.0
  %3997 = vmatprep.subr.mxu0 0.0
  %3998 = vmatpush1.msra.mxu0 0.0
  %3999 = vmatprep.subr.mxu0 0.0
  %4000 = vmatpush1.msra.mxu0 0.0
  %4001 = vmatprep.subr.mxu0 0.0
  %4002 = vmatpush1.msra.mxu0 0.0
  %4003 = vmatprep.subr.mxu0 0.0
  %4004 = vmatpush1.msra.mxu0 0.0
  %4005 = vmatprep.subr.mxu0 0.0
  %4006 = vmatpush1.msra.mxu0 0.0
  %4007 = vmatprep.subr.mxu0 0.0
  %4008 = vmatpush1.msra.mxu0 0.0
  %4009 = vmatprep.subr.mxu0 0.0
  %4010 = vmatpush1.msra.mxu0 0.0
  %4011 = vmatprep.subr.mxu0 0.0
  %4012 = vmatpush1.msra.mxu0 0.0
  %4013 = vmatprep.subr.mxu0 0.0
  %4014 = vmatpush1.msra.mxu0 0.0
  %4015 = vmatprep.subr.mxu0 0.0
  %4016 = vmatpush1.msra.mxu0 0.0
  %4017 = vmatprep.subr.mxu0 0.0
  %4018 = vmatpush1.msra.mxu0 0.0
  %4019 = vmatprep.subr.mxu0 0.0
  %4020 = vmatpush1.msra.mxu0 0.0
  %4021 = vmatprep.mubr.f32.mxu0 0.0
  %v4022 = vand.u32 %v774, 4294901760
  %v4023 = vsub.f32 %v774, %v4022
  %4024 = vmatmul.mubr.f32.gmra.mrb[0].mxu0 %v4023
  %v4025 = vpop.f32.mrb[0].mxu0
  %v4026 = vadd.f32 %v3928, %v4025
  %v4027 = vpop.f32.mrb[0].mxu0
  %4028 = vmatprep.mubr.f32.mxu0 0.0
  %v4029 = vand.u32 %v777, 4294901760
  %v4030 = vsub.f32 %v777, %v4029
  %4031 = vmatmul.mubr.f32.gmra.mrb[0].mxu0 %v4030
  %v4032 = vpop.f32.mrb[0].mxu0
  %v4033 = vadd.f32 %v3934, %v4032
  %v4034 = vpop.f32.mrb[0].mxu0
  %4035 = vmatprep.mubr.f32.mxu0 0.0
  %v4036 = vand.u32 %v780, 4294901760
  %v4037 = vsub.f32 %v780, %v4036
  %4038 = vmatmul.mubr.f32.gmra.mrb[0].mxu0 %v4037
  %v4039 = vpop.f32.mrb[0].mxu0
  %v4040 = vadd.f32 %v3940, %v4039
  %v4041 = vpop.f32.mrb[0].mxu0
  %4042 = vmatprep.mubr.f32.mxu0 0.0
  %v4043 = vand.u32 %v783, 4294901760
  %v4044 = vsub.f32 %v783, %v4043
  %4045 = vmatmul.mubr.f32.gmra.mrb[0].mxu0 %v4044
  %v4046 = vpop.f32.mrb[0].mxu0
  %v4047 = vadd.f32 %v3946, %v4046
  %v4048 = vpop.f32.mrb[0].mxu0
  %4049 = vdwg.mxu0
  %4050 = vmatprep.subr.mxu0 0.0
  %v4051 = vand.u32 %v3704, 4294901760
  %4052 = vmatpush1.msra.mxu0 %v4051
  %4053 = vmatprep.subr.mxu0 0.0
  %v4054 = vand.u32 %v3706, 4294901760
  %4055 = vmatpush1.msra.mxu0 %v4054
  %4056 = vmatprep.subr.mxu0 0.0
  %v4057 = vand.u32 %v3708, 4294901760
  %4058 = vmatpush1.msra.mxu0 %v4057
  %4059 = vmatprep.subr.mxu0 0.0
  %v4060 = vand.u32 %v3710, 4294901760
  %4061 = vmatpush1.msra.mxu0 %v4060
  %4062 = vmatprep.subr.mxu0 0.0
  %4063 = vmatpush1.msra.mxu0 0.0
  %4064 = vmatprep.subr.mxu0 0.0
  %4065 = vmatpush1.msra.mxu0 0.0
  %4066 = vmatprep.subr.mxu0 0.0
  %4067 = vmatpush1.msra.mxu0 0.0
  %4068 = vmatprep.subr.mxu0 0.0
  %4069 = vmatpush1.msra.mxu0 0.0
  %4070 = vmatprep.subr.mxu0 0.0
  %4071 = vmatpush1.msra.mxu0 0.0
  %4072 = vmatprep.subr.mxu0 0.0
  %4073 = vmatpush1.msra.mxu0 0.0
  %4074 = vmatprep.subr.mxu0 0.0
  %4075 = vmatpush1.msra.mxu0 0.0
  %4076 = vmatprep.subr.mxu0 0.0
  %4077 = vmatpush1.msra.mxu0 0.0
  %4078 = vmatprep.subr.mxu0 0.0
  %4079 = vmatpush1.msra.mxu0 0.0
  %4080 = vmatprep.subr.mxu0 0.0
  %4081 = vmatpush1.msra.mxu0 0.0
  %4082 = vmatprep.subr.mxu0 0.0
  %4083 = vmatpush1.msra.mxu0 0.0
  %4084 = vmatprep.subr.mxu0 0.0
  %4085 = vmatpush1.msra.mxu0 0.0
  %4086 = vmatprep.subr.mxu0 0.0
  %4087 = vmatpush1.msra.mxu0 0.0
  %4088 = vmatprep.subr.mxu0 0.0
  %4089 = vmatpush1.msra.mxu0 0.0
  %4090 = vmatprep.subr.mxu0 0.0
  %4091 = vmatpush1.msra.mxu0 0.0
  %4092 = vmatprep.subr.mxu0 0.0
  %4093 = vmatpush1.msra.mxu0 0.0
  %4094 = vmatprep.subr.mxu0 0.0
  %4095 = vmatpush1.msra.mxu0 0.0
  %4096 = vmatprep.subr.mxu0 0.0
  %4097 = vmatpush1.msra.mxu0 0.0
  %4098 = vmatprep.subr.mxu0 0.0
  %4099 = vmatpush1.msra.mxu0 0.0
  %4100 = vmatprep.subr.mxu0 0.0
  %4101 = vmatpush1.msra.mxu0 0.0
  %4102 = vmatprep.subr.mxu0 0.0
  %4103 = vmatpush1.msra.mxu0 0.0
  %4104 = vmatprep.subr.mxu0 0.0
  %4105 = vmatpush1.msra.mxu0 0.0
  %4106 = vmatprep.subr.mxu0 0.0
  %4107 = vmatpush1.msra.mxu0 0.0
  %4108 = vmatprep.subr.mxu0 0.0
  %4109 = vmatpush1.msra.mxu0 0.0
  %4110 = vmatprep.subr.mxu0 0.0
  %4111 = vmatpush1.msra.mxu0 0.0
  %4112 = vmatprep.subr.mxu0 0.0
  %4113 = vmatpush1.msra.mxu0 0.0
  %4114 = vmatprep.subr.mxu0 0.0
  %4115 = vmatpush1.msra.mxu0 0.0
  %4116 = vmatprep.subr.mxu0 0.0
  %4117 = vmatpush1.msra.mxu0 0.0
  %4118 = vmatprep.mubr.f32.mxu0 0.0
  %v4119 = vand.u32 %v774, 4294901760
  %v4120 = vsub.f32 %v774, %v4119
  %v4121 = vand.u32 %v4120, 4294901760
  %4122 = vmatmul.mubr.f32.gmra.mrb[0].mxu0 %v4121
  %v4123 = vpop.f32.mrb[0].mxu0
  %v4124 = vadd.f32 %v4026, %v4123
  %v4125 = vpop.f32.mrb[0].mxu0
  %4126 = vmatprep.mubr.f32.mxu0 0.0
  %v4127 = vand.u32 %v777, 4294901760
  %v4128 = vsub.f32 %v777, %v4127
  %v4129 = vand.u32 %v4128, 4294901760
  %4130 = vmatmul.mubr.f32.gmra.mrb[0].mxu0 %v4129
  %v4131 = vpop.f32.mrb[0].mxu0
  %v4132 = vadd.f32 %v4033, %v4131
  %v4133 = vpop.f32.mrb[0].mxu0
  %4134 = vmatprep.mubr.f32.mxu0 0.0
  %v4135 = vand.u32 %v780, 4294901760
  %v4136 = vsub.f32 %v780, %v4135
  %v4137 = vand.u32 %v4136, 4294901760
  %4138 = vmatmul.mubr.f32.gmra.mrb[0].mxu0 %v4137
  %v4139 = vpop.f32.mrb[0].mxu0
  %v4140 = vadd.f32 %v4040, %v4139
  %v4141 = vpop.f32.mrb[0].mxu0
  %4142 = vmatprep.mubr.f32.mxu0 0.0
  %v4143 = vand.u32 %v783, 4294901760
  %v4144 = vsub.f32 %v783, %v4143
  %v4145 = vand.u32 %v4144, 4294901760
  %4146 = vmatmul.mubr.f32.gmra.mrb[0].mxu0 %v4145
  %v4147 = vpop.f32.mrb[0].mxu0
  %v4148 = vadd.f32 %v4047, %v4147
  %v4149 = vpop.f32.mrb[0].mxu0
  %4150 = vdwg.mxu0
  %4151 = vmatprep.subr.mxu0 0.0
  %v4152 = vand.u32 %v3704, 4294901760
  %v4153 = vsub.f32 %v3704, %v4152
  %v4154 = vand.u32 %v4153, 4294901760
  %4155 = vmatpush1.msra.mxu0 %v4154
  %4156 = vmatprep.subr.mxu0 0.0
  %v4157 = vand.u32 %v3706, 4294901760
  %v4158 = vsub.f32 %v3706, %v4157
  %v4159 = vand.u32 %v4158, 4294901760
  %4160 = vmatpush1.msra.mxu0 %v4159
  %4161 = vmatprep.subr.mxu0 0.0
  %v4162 = vand.u32 %v3708, 4294901760
  %v4163 = vsub.f32 %v3708, %v4162
  %v4164 = vand.u32 %v4163, 4294901760
  %4165 = vmatpush1.msra.mxu0 %v4164
  %4166 = vmatprep.subr.mxu0 0.0
  %v4167 = vand.u32 %v3710, 4294901760
  %v4168 = vsub.f32 %v3710, %v4167
  %v4169 = vand.u32 %v4168, 4294901760
  %4170 = vmatpush1.msra.mxu0 %v4169
  %4171 = vmatprep.subr.mxu0 0.0
  %4172 = vmatpush1.msra.mxu0 0.0
  %4173 = vmatprep.subr.mxu0 0.0
  %4174 = vmatpush1.msra.mxu0 0.0
  %4175 = vmatprep.subr.mxu0 0.0
  %4176 = vmatpush1.msra.mxu0 0.0
  %4177 = vmatprep.subr.mxu0 0.0
  %4178 = vmatpush1.msra.mxu0 0.0
  %4179 = vmatprep.subr.mxu0 0.0
  %4180 = vmatpush1.msra.mxu0 0.0
  %4181 = vmatprep.subr.mxu0 0.0
  %4182 = vmatpush1.msra.mxu0 0.0
  %4183 = vmatprep.subr.mxu0 0.0
  %4184 = vmatpush1.msra.mxu0 0.0
  %4185 = vmatprep.subr.mxu0 0.0
  %4186 = vmatpush1.msra.mxu0 0.0
  %4187 = vmatprep.subr.mxu0 0.0
  %4188 = vmatpush1.msra.mxu0 0.0
  %4189 = vmatprep.subr.mxu0 0.0
  %4190 = vmatpush1.msra.mxu0 0.0
  %4191 = vmatprep.subr.mxu0 0.0
  %4192 = vmatpush1.msra.mxu0 0.0
  %4193 = vmatprep.subr.mxu0 0.0
  %4194 = vmatpush1.msra.mxu0 0.0
  %4195 = vmatprep.subr.mxu0 0.0
  %4196 = vmatpush1.msra.mxu0 0.0
  %4197 = vmatprep.subr.mxu0 0.0
  %4198 = vmatpush1.msra.mxu0 0.0
  %4199 = vmatprep.subr.mxu0 0.0
  %4200 = vmatpush1.msra.mxu0 0.0
  %4201 = vmatprep.subr.mxu0 0.0
  %4202 = vmatpush1.msra.mxu0 0.0
  %4203 = vmatprep.subr.mxu0 0.0
  %4204 = vmatpush1.msra.mxu0 0.0
  %4205 = vmatprep.subr.mxu0 0.0
  %4206 = vmatpush1.msra.mxu0 0.0
  %4207 = vmatprep.subr.mxu0 0.0
  %4208 = vmatpush1.msra.mxu0 0.0
  %4209 = vmatprep.subr.mxu0 0.0
  %4210 = vmatpush1.msra.mxu0 0.0
  %4211 = vmatprep.subr.mxu0 0.0
  %4212 = vmatpush1.msra.mxu0 0.0
  %4213 = vmatprep.subr.mxu0 0.0
  %4214 = vmatpush1.msra.mxu0 0.0
  %4215 = vmatprep.subr.mxu0 0.0
  %4216 = vmatpush1.msra.mxu0 0.0
  %4217 = vmatprep.subr.mxu0 0.0
  %4218 = vmatpush1.msra.mxu0 0.0
  %4219 = vmatprep.subr.mxu0 0.0
  %4220 = vmatpush1.msra.mxu0 0.0
  %4221 = vmatprep.subr.mxu0 0.0
  %4222 = vmatpush1.msra.mxu0 0.0
  %4223 = vmatprep.subr.mxu0 0.0
  %4224 = vmatpush1.msra.mxu0 0.0
  %4225 = vmatprep.subr.mxu0 0.0
  %4226 = vmatpush1.msra.mxu0 0.0
  %4227 = vmatprep.mubr.f32.mxu0 0.0
  %v4228 = vand.u32 %v774, 4294901760
  %4229 = vmatmul.mubr.f32.gmra.mrb[0].mxu0 %v4228
  %v4230 = vpop.f32.mrb[0].mxu0
  %v4231 = vadd.f32 %v4124, %v4230
  %v4232 = vpop.f32.mrb[0].mxu0
  %4233 = vmatprep.mubr.f32.mxu0 0.0
  %v4234 = vand.u32 %v777, 4294901760
  %4235 = vmatmul.mubr.f32.gmra.mrb[0].mxu0 %v4234
  %v4236 = vpop.f32.mrb[0].mxu0
  %v4237 = vadd.f32 %v4132, %v4236
  %v4238 = vpop.f32.mrb[0].mxu0
  %4239 = vmatprep.mubr.f32.mxu0 0.0
  %v4240 = vand.u32 %v780, 4294901760
  %4241 = vmatmul.mubr.f32.gmra.mrb[0].mxu0 %v4240
  %v4242 = vpop.f32.mrb[0].mxu0
  %v4243 = vadd.f32 %v4140, %v4242
  %v4244 = vpop.f32.mrb[0].mxu0
  %4245 = vmatprep.mubr.f32.mxu0 0.0
  %v4246 = vand.u32 %v783, 4294901760
  %4247 = vmatmul.mubr.f32.gmra.mrb[0].mxu0 %v4246
  %v4248 = vpop.f32.mrb[0].mxu0
  %v4249 = vadd.f32 %v4148, %v4248
  %v4250 = vpop.f32.mrb[0].mxu0
  %4251 = vdwg.mxu0
  %4252 = vmatprep.subr.mxu0 0.0
  %v4253 = vand.u32 %v3704, 4294901760
  %4254 = vmatpush1.msra.mxu0 %v4253
  %4255 = vmatprep.subr.mxu0 0.0
  %v4256 = vand.u32 %v3706, 4294901760
  %4257 = vmatpush1.msra.mxu0 %v4256
  %4258 = vmatprep.subr.mxu0 0.0
  %v4259 = vand.u32 %v3708, 4294901760
  %4260 = vmatpush1.msra.mxu0 %v4259
  %4261 = vmatprep.subr.mxu0 0.0
  %v4262 = vand.u32 %v3710, 4294901760
  %4263 = vmatpush1.msra.mxu0 %v4262
  %4264 = vmatprep.subr.mxu0 0.0
  %4265 = vmatpush1.msra.mxu0 0.0
  %4266 = vmatprep.subr.mxu0 0.0
  %4267 = vmatpush1.msra.mxu0 0.0
  %4268 = vmatprep.subr.mxu0 0.0
  %4269 = vmatpush1.msra.mxu0 0.0
  %4270 = vmatprep.subr.mxu0 0.0
  %4271 = vmatpush1.msra.mxu0 0.0
  %4272 = vmatprep.subr.mxu0 0.0
  %4273 = vmatpush1.msra.mxu0 0.0
  %4274 = vmatprep.subr.mxu0 0.0
  %4275 = vmatpush1.msra.mxu0 0.0
  %4276 = vmatprep.subr.mxu0 0.0
  %4277 = vmatpush1.msra.mxu0 0.0
  %4278 = vmatprep.subr.mxu0 0.0
  %4279 = vmatpush1.msra.mxu0 0.0
  %4280 = vmatprep.subr.mxu0 0.0
  %4281 = vmatpush1.msra.mxu0 0.0
  %4282 = vmatprep.subr.mxu0 0.0
  %4283 = vmatpush1.msra.mxu0 0.0
  %4284 = vmatprep.subr.mxu0 0.0
  %4285 = vmatpush1.msra.mxu0 0.0
  %4286 = vmatprep.subr.mxu0 0.0
  %4287 = vmatpush1.msra.mxu0 0.0
  %4288 = vmatprep.subr.mxu0 0.0
  %4289 = vmatpush1.msra.mxu0 0.0
  %4290 = vmatprep.subr.mxu0 0.0
  %4291 = vmatpush1.msra.mxu0 0.0
  %4292 = vmatprep.subr.mxu0 0.0
  %4293 = vmatpush1.msra.mxu0 0.0
  %4294 = vmatprep.subr.mxu0 0.0
  %4295 = vmatpush1.msra.mxu0 0.0
  %4296 = vmatprep.subr.mxu0 0.0
  %4297 = vmatpush1.msra.mxu0 0.0
  %4298 = vmatprep.subr.mxu0 0.0
  %4299 = vmatpush1.msra.mxu0 0.0
  %4300 = vmatprep.subr.mxu0 0.0
  %4301 = vmatpush1.msra.mxu0 0.0
  %4302 = vmatprep.subr.mxu0 0.0
  %4303 = vmatpush1.msra.mxu0 0.0
  %4304 = vmatprep.subr.mxu0 0.0
  %4305 = vmatpush1.msra.mxu0 0.0
  %4306 = vmatprep.subr.mxu0 0.0
  %4307 = vmatpush1.msra.mxu0 0.0
  %4308 = vmatprep.subr.mxu0 0.0
  %4309 = vmatpush1.msra.mxu0 0.0
  %4310 = vmatprep.subr.mxu0 0.0
  %4311 = vmatpush1.msra.mxu0 0.0
  %4312 = vmatprep.subr.mxu0 0.0
  %4313 = vmatpush1.msra.mxu0 0.0
  %4314 = vmatprep.subr.mxu0 0.0
  %4315 = vmatpush1.msra.mxu0 0.0
  %4316 = vmatprep.subr.mxu0 0.0
  %4317 = vmatpush1.msra.mxu0 0.0
  %4318 = vmatprep.subr.mxu0 0.0
  %4319 = vmatpush1.msra.mxu0 0.0
  %4320 = vmatprep.mubr.f32.mxu0 0.0
  %v4321 = vand.u32 %v774, 4294901760
  %4322 = vmatmul.mubr.f32.gmra.mrb[0].mxu0 %v4321
  %v4323 = vpop.f32.mrb[0].mxu0
  %v4324 = vadd.f32 %v4231, %v4323
  %v4325 = vpop.f32.mrb[0].mxu0
  %4326 = vmatprep.mubr.f32.mxu0 0.0
  %v4327 = vand.u32 %v777, 4294901760
  %4328 = vmatmul.mubr.f32.gmra.mrb[0].mxu0 %v4327
  %v4329 = vpop.f32.mrb[0].mxu0
  %v4330 = vadd.f32 %v4237, %v4329
  %v4331 = vpop.f32.mrb[0].mxu0
  %4332 = vmatprep.mubr.f32.mxu0 0.0
  %v4333 = vand.u32 %v780, 4294901760
  %4334 = vmatmul.mubr.f32.gmra.mrb[0].mxu0 %v4333
  %v4335 = vpop.f32.mrb[0].mxu0
  %v4336 = vadd.f32 %v4243, %v4335
  %v4337 = vpop.f32.mrb[0].mxu0
  %4338 = vmatprep.mubr.f32.mxu0 0.0
  %v4339 = vand.u32 %v783, 4294901760
  %4340 = vmatmul.mubr.f32.gmra.mrb[0].mxu0 %v4339
  %v4341 = vpop.f32.mrb[0].mxu0
  %v4342 = vadd.f32 %v4249, %v4341
  %v4343 = vpop.f32.mrb[0].mxu0
  %4344 = vdwg.mxu0
  %v4345 = vadd.f32 %v4324, %v3695
  %v4346 = vadd.f32 %v4330, %v3696
  %v4347 = vadd.f32 %v4336, %v3697
  %v4348 = vadd.f32 %v4342, %v3698
  %v4349 = vxor.u32 %v4345, 2147483648
  %v4350 = vxor.u32 %v4346, 2147483648
  %v4351 = vxor.u32 %v4347, 2147483648
  %v4352 = vxor.u32 %v4348, 2147483648
  %v4353 = vmul.f32 %v4349, 1.442695
  %v4354 = vpow.pop %v4353
  %v4355 = vmul.f32 %v4350, 1.442695
  %v4356 = vpow.pop %v4355
  %v4357 = vmul.f32 %v4351, 1.442695
  %v4358 = vpow.pop %v4357
  %v4359 = vmul.f32 %v4352, 1.442695
  %v4360 = vpow.pop %v4359
  %v4361 = vadd.f32 %v4354, 1.0
  %v4362 = vadd.f32 %v4356, 1.0
  %v4363 = vadd.f32 %v4358, 1.0
  %v4364 = vadd.f32 %v4360, 1.0
  %v4365 = vrcp.pop %v4361
  %v4366 = vmul.f32 1.0, %v4365
  %v4367 = vrcp.pop %v4362
  %v4368 = vmul.f32 1.0, %v4367
  %v4369 = vrcp.pop %v4363
  %v4370 = vmul.f32 1.0, %v4369
  %v4371 = vrcp.pop %v4364
  %v4372 = vmul.f32 1.0, %v4371
  %4377 = vrot.lane.b32.xlu0 %v3695, 96
  %v4378 = vpop.permute.xlu0 %4377
  %4379 = vrot.lane.b32.xlu0 %v3696, 96
  %v4380 = vpop.permute.xlu0 %4379
  %4381 = vrot.lane.b32.xlu0 %v3697, 96
  %v4382 = vpop.permute.xlu0 %4381
  %4383 = vrot.lane.b32.xlu0 %v3698, 96
  %v4384 = vpop.permute.xlu0 %4383
  %v4389 = vadd.f32 %v4324, %v4378
  %v4390 = vadd.f32 %v4330, %v4380
  %v4391 = vadd.f32 %v4336, %v4382
  %v4392 = vadd.f32 %v4342, %v4384
  %v4393 = vxor.u32 %v4389, 2147483648
  %v4394 = vxor.u32 %v4390, 2147483648
  %v4395 = vxor.u32 %v4391, 2147483648
  %v4396 = vxor.u32 %v4392, 2147483648
  %v4397 = vmul.f32 %v4393, 1.442695
  %v4398 = vpow.pop %v4397
  %v4399 = vmul.f32 %v4394, 1.442695
  %v4400 = vpow.pop %v4399
  %v4401 = vmul.f32 %v4395, 1.442695
  %v4402 = vpow.pop %v4401
  %v4403 = vmul.f32 %v4396, 1.442695
  %v4404 = vpow.pop %v4403
  %v4405 = vadd.f32 %v4398, 1.0
  %v4406 = vadd.f32 %v4400, 1.0
  %v4407 = vadd.f32 %v4402, 1.0
  %v4408 = vadd.f32 %v4404, 1.0
  %v4409 = vrcp.pop %v4405
  %v4410 = vmul.f32 1.0, %v4409
  %v4411 = vrcp.pop %v4406
  %v4412 = vmul.f32 1.0, %v4411
  %v4413 = vrcp.pop %v4407
  %v4414 = vmul.f32 1.0, %v4413
  %v4415 = vrcp.pop %v4408
  %v4416 = vmul.f32 1.0, %v4415
  %4417 = vrot.lane.b32.xlu0 %v3695, 64
  %v4418 = vpop.permute.xlu0 %4417
  %4419 = vrot.lane.b32.xlu0 %v3696, 64
  %v4420 = vpop.permute.xlu0 %4419
  %4421 = vrot.lane.b32.xlu0 %v3697, 64
  %v4422 = vpop.permute.xlu0 %4421
  %4423 = vrot.lane.b32.xlu0 %v3698, 64
  %v4424 = vpop.permute.xlu0 %4423
  %v4429 = vmul.f32 %v4366, %v4418
  %v4430 = vmul.f32 %v4368, %v4420
  %v4431 = vmul.f32 %v4370, %v4422
  %v4432 = vmul.f32 %v4372, %v4424
  %v4433 = vadd.f32 %v4324, %v4429
  %v4434 = vadd.f32 %v4330, %v4430
  %v4435 = vadd.f32 %v4336, %v4431
  %v4436 = vadd.f32 %v4342, %v4432
  %v4437 = vtanh.pop %v4433
  %v4438 = vtanh.pop %v4434
  %v4439 = vtanh.pop %v4435
  %v4440 = vtanh.pop %v4436
  %v4441 = vsub.f32 1.0, %v4410
  %v4442 = vsub.f32 1.0, %v4412
  %v4443 = vsub.f32 1.0, %v4414
  %v4444 = vsub.f32 1.0, %v4416
  %v4445 = vmul.f32 %v4441, %v4437
  %v4446 = vmul.f32 %v4442, %v4438
  %v4447 = vmul.f32 %v4443, %v4439
  %v4448 = vmul.f32 %v4444, %v4440
  %v4449 = vmul.f32 %v4410, %v2980
  %v4450 = vmul.f32 %v4412, %v2981
  %v4451 = vmul.f32 %v4414, %v2982
  %v4452 = vmul.f32 %v4416, %v2983
  %v4453 = vadd.f32 %v4445, %v4449
  %v4454 = vadd.f32 %v4446, %v4450
  %v4455 = vadd.f32 %v4447, %v4451
  %v4456 = vadd.f32 %v4448, %v4452
  %v4458 = vsel %vm35, %v4453, 0
  %v4461 = vsel %vm35, %v4454, 0
  %v4464 = vsel %vm35, %v4455, 0
  %v4467 = vsel %vm35, %v4456, 0
  %v4469 = vand.u32 %v19, 4294901760
  %4470 = vmatprep.subr.mxu0 %v4469
  %v4471 = vand.u32 %v18, 4294901760
  %4472 = vmatpush1.msra.mxu0 %v4471
  %v4473 = vand.u32 %v21, 4294901760
  %4474 = vmatprep.subr.mxu0 %v4473
  %v4475 = vand.u32 %v20, 4294901760
  %4476 = vmatpush1.msra.mxu0 %v4475
  %v4477 = vand.u32 %v23, 4294901760
  %4478 = vmatprep.subr.mxu0 %v4477
  %v4479 = vand.u32 %v22, 4294901760
  %4480 = vmatpush1.msra.mxu0 %v4479
  %v4481 = vand.u32 %v25, 4294901760
  %4482 = vmatprep.subr.mxu0 %v4481
  %v4483 = vand.u32 %v24, 4294901760
  %4484 = vmatpush1.msra.mxu0 %v4483
  %4485 = vmatprep.subr.mxu0 0.0
  %4486 = vmatpush1.msra.mxu0 0.0
  %4487 = vmatprep.subr.mxu0 0.0
  %4488 = vmatpush1.msra.mxu0 0.0
  %4489 = vmatprep.subr.mxu0 0.0
  %4490 = vmatpush1.msra.mxu0 0.0
  %4491 = vmatprep.subr.mxu0 0.0
  %4492 = vmatpush1.msra.mxu0 0.0
  %4493 = vmatprep.subr.mxu0 0.0
  %4494 = vmatpush1.msra.mxu0 0.0
  %4495 = vmatprep.subr.mxu0 0.0
  %4496 = vmatpush1.msra.mxu0 0.0
  %4497 = vmatprep.subr.mxu0 0.0
  %4498 = vmatpush1.msra.mxu0 0.0
  %4499 = vmatprep.subr.mxu0 0.0
  %4500 = vmatpush1.msra.mxu0 0.0
  %4501 = vmatprep.subr.mxu0 0.0
  %4502 = vmatpush1.msra.mxu0 0.0
  %4503 = vmatprep.subr.mxu0 0.0
  %4504 = vmatpush1.msra.mxu0 0.0
  %4505 = vmatprep.subr.mxu0 0.0
  %4506 = vmatpush1.msra.mxu0 0.0
  %4507 = vmatprep.subr.mxu0 0.0
  %4508 = vmatpush1.msra.mxu0 0.0
  %4509 = vmatprep.subr.mxu0 0.0
  %4510 = vmatpush1.msra.mxu0 0.0
  %4511 = vmatprep.subr.mxu0 0.0
  %4512 = vmatpush1.msra.mxu0 0.0
  %4513 = vmatprep.subr.mxu0 0.0
  %4514 = vmatpush1.msra.mxu0 0.0
  %4515 = vmatprep.subr.mxu0 0.0
  %4516 = vmatpush1.msra.mxu0 0.0
  %4517 = vmatprep.subr.mxu0 0.0
  %4518 = vmatpush1.msra.mxu0 0.0
  %4519 = vmatprep.subr.mxu0 0.0
  %4520 = vmatpush1.msra.mxu0 0.0
  %4521 = vmatprep.subr.mxu0 0.0
  %4522 = vmatpush1.msra.mxu0 0.0
  %4523 = vmatprep.subr.mxu0 0.0
  %4524 = vmatpush1.msra.mxu0 0.0
  %4525 = vmatprep.subr.mxu0 0.0
  %4526 = vmatpush1.msra.mxu0 0.0
  %4527 = vmatprep.subr.mxu0 0.0
  %4528 = vmatpush1.msra.mxu0 0.0
  %4529 = vmatprep.subr.mxu0 0.0
  %4530 = vmatpush1.msra.mxu0 0.0
  %4531 = vmatprep.subr.mxu0 0.0
  %4532 = vmatpush1.msra.mxu0 0.0
  %4533 = vmatprep.subr.mxu0 0.0
  %4534 = vmatpush1.msra.mxu0 0.0
  %4535 = vmatprep.subr.mxu0 0.0
  %4536 = vmatpush1.msra.mxu0 0.0
  %4537 = vmatprep.subr.mxu0 0.0
  %4538 = vmatpush1.msra.mxu0 0.0
  %4539 = vmatprep.subr.mxu0 0.0
  %4540 = vmatpush1.msra.mxu0 0.0
  %4541 = vmatprep.mubr.f32.mxu0 0.0
  %v4542 = vand.u32 %v4458, 4294901760
  %v4543 = vsub.f32 %v4458, %v4542
  %v4544 = vand.u32 %v4543, 4294901760
  %v4545 = vsub.f32 %v4543, %v4544
  %v4546 = vand.u32 %v4545, 4294901760
  %4547 = vmatmul.mubr.f32.gmra.mrb[0].mxu0 %v4546
  %v4548 = vpop.f32.mrb[0].mxu0
  %v4549 = vadd.f32 0.0, %v4548
  %v4550 = vpop.f32.mrb[0].mxu0
  %v4551 = vadd.f32 0.0, %v4550
  %4552 = vmatprep.mubr.f32.mxu0 0.0
  %v4553 = vand.u32 %v4461, 4294901760
  %v4554 = vsub.f32 %v4461, %v4553
  %v4555 = vand.u32 %v4554, 4294901760
  %v4556 = vsub.f32 %v4554, %v4555
  %v4557 = vand.u32 %v4556, 4294901760
  %4558 = vmatmul.mubr.f32.gmra.mrb[0].mxu0 %v4557
  %v4559 = vpop.f32.mrb[0].mxu0
  %v4560 = vadd.f32 0.0, %v4559
  %v4561 = vpop.f32.mrb[0].mxu0
  %v4562 = vadd.f32 0.0, %v4561
  %4563 = vmatprep.mubr.f32.mxu0 0.0
  %v4564 = vand.u32 %v4464, 4294901760
  %v4565 = vsub.f32 %v4464, %v4564
  %v4566 = vand.u32 %v4565, 4294901760
  %v4567 = vsub.f32 %v4565, %v4566
  %v4568 = vand.u32 %v4567, 4294901760
  %4569 = vmatmul.mubr.f32.gmra.mrb[0].mxu0 %v4568
  %v4570 = vpop.f32.mrb[0].mxu0
  %v4571 = vadd.f32 0.0, %v4570
  %v4572 = vpop.f32.mrb[0].mxu0
  %v4573 = vadd.f32 0.0, %v4572
  %4574 = vmatprep.mubr.f32.mxu0 0.0
  %v4575 = vand.u32 %v4467, 4294901760
  %v4576 = vsub.f32 %v4467, %v4575
  %v4577 = vand.u32 %v4576, 4294901760
  %v4578 = vsub.f32 %v4576, %v4577
  %v4579 = vand.u32 %v4578, 4294901760
  %4580 = vmatmul.mubr.f32.gmra.mrb[0].mxu0 %v4579
  %v4581 = vpop.f32.mrb[0].mxu0
  %v4582 = vadd.f32 0.0, %v4581
  %v4583 = vpop.f32.mrb[0].mxu0
  %v4584 = vadd.f32 0.0, %v4583
  %4585 = vdwg.mxu0
  %v4586 = vand.u32 %v19, 4294901760
  %v4587 = vsub.f32 %v19, %v4586
  %v4588 = vand.u32 %v4587, 4294901760
  %v4589 = vsub.f32 %v4587, %v4588
  %v4590 = vand.u32 %v4589, 4294901760
  %4591 = vmatprep.subr.mxu0 %v4590
  %v4592 = vand.u32 %v18, 4294901760
  %v4593 = vsub.f32 %v18, %v4592
  %v4594 = vand.u32 %v4593, 4294901760
  %v4595 = vsub.f32 %v4593, %v4594
  %v4596 = vand.u32 %v4595, 4294901760
  %4597 = vmatpush1.msra.mxu0 %v4596
  %v4598 = vand.u32 %v21, 4294901760
  %v4599 = vsub.f32 %v21, %v4598
  %v4600 = vand.u32 %v4599, 4294901760
  %v4601 = vsub.f32 %v4599, %v4600
  %v4602 = vand.u32 %v4601, 4294901760
  %4603 = vmatprep.subr.mxu0 %v4602
  %v4604 = vand.u32 %v20, 4294901760
  %v4605 = vsub.f32 %v20, %v4604
  %v4606 = vand.u32 %v4605, 4294901760
  %v4607 = vsub.f32 %v4605, %v4606
  %v4608 = vand.u32 %v4607, 4294901760
  %4609 = vmatpush1.msra.mxu0 %v4608
  %v4610 = vand.u32 %v23, 4294901760
  %v4611 = vsub.f32 %v23, %v4610
  %v4612 = vand.u32 %v4611, 4294901760
  %v4613 = vsub.f32 %v4611, %v4612
  %v4614 = vand.u32 %v4613, 4294901760
  %4615 = vmatprep.subr.mxu0 %v4614
  %v4616 = vand.u32 %v22, 4294901760
  %v4617 = vsub.f32 %v22, %v4616
  %v4618 = vand.u32 %v4617, 4294901760
  %v4619 = vsub.f32 %v4617, %v4618
  %v4620 = vand.u32 %v4619, 4294901760
  %4621 = vmatpush1.msra.mxu0 %v4620
  %v4622 = vand.u32 %v25, 4294901760
  %v4623 = vsub.f32 %v25, %v4622
  %v4624 = vand.u32 %v4623, 4294901760
  %v4625 = vsub.f32 %v4623, %v4624
  %v4626 = vand.u32 %v4625, 4294901760
  %4627 = vmatprep.subr.mxu0 %v4626
  %v4628 = vand.u32 %v24, 4294901760
  %v4629 = vsub.f32 %v24, %v4628
  %v4630 = vand.u32 %v4629, 4294901760
  %v4631 = vsub.f32 %v4629, %v4630
  %v4632 = vand.u32 %v4631, 4294901760
  %4633 = vmatpush1.msra.mxu0 %v4632
  %4634 = vmatprep.subr.mxu0 0.0
  %4635 = vmatpush1.msra.mxu0 0.0
  %4636 = vmatprep.subr.mxu0 0.0
  %4637 = vmatpush1.msra.mxu0 0.0
  %4638 = vmatprep.subr.mxu0 0.0
  %4639 = vmatpush1.msra.mxu0 0.0
  %4640 = vmatprep.subr.mxu0 0.0
  %4641 = vmatpush1.msra.mxu0 0.0
  %4642 = vmatprep.subr.mxu0 0.0
  %4643 = vmatpush1.msra.mxu0 0.0
  %4644 = vmatprep.subr.mxu0 0.0
  %4645 = vmatpush1.msra.mxu0 0.0
  %4646 = vmatprep.subr.mxu0 0.0
  %4647 = vmatpush1.msra.mxu0 0.0
  %4648 = vmatprep.subr.mxu0 0.0
  %4649 = vmatpush1.msra.mxu0 0.0
  %4650 = vmatprep.subr.mxu0 0.0
  %4651 = vmatpush1.msra.mxu0 0.0
  %4652 = vmatprep.subr.mxu0 0.0
  %4653 = vmatpush1.msra.mxu0 0.0
  %4654 = vmatprep.subr.mxu0 0.0
  %4655 = vmatpush1.msra.mxu0 0.0
  %4656 = vmatprep.subr.mxu0 0.0
  %4657 = vmatpush1.msra.mxu0 0.0
  %4658 = vmatprep.subr.mxu0 0.0
  %4659 = vmatpush1.msra.mxu0 0.0
  %4660 = vmatprep.subr.mxu0 0.0
  %4661 = vmatpush1.msra.mxu0 0.0
  %4662 = vmatprep.subr.mxu0 0.0
  %4663 = vmatpush1.msra.mxu0 0.0
  %4664 = vmatprep.subr.mxu0 0.0
  %4665 = vmatpush1.msra.mxu0 0.0
  %4666 = vmatprep.subr.mxu0 0.0
  %4667 = vmatpush1.msra.mxu0 0.0
  %4668 = vmatprep.subr.mxu0 0.0
  %4669 = vmatpush1.msra.mxu0 0.0
  %4670 = vmatprep.subr.mxu0 0.0
  %4671 = vmatpush1.msra.mxu0 0.0
  %4672 = vmatprep.subr.mxu0 0.0
  %4673 = vmatpush1.msra.mxu0 0.0
  %4674 = vmatprep.subr.mxu0 0.0
  %4675 = vmatpush1.msra.mxu0 0.0
  %4676 = vmatprep.subr.mxu0 0.0
  %4677 = vmatpush1.msra.mxu0 0.0
  %4678 = vmatprep.subr.mxu0 0.0
  %4679 = vmatpush1.msra.mxu0 0.0
  %4680 = vmatprep.subr.mxu0 0.0
  %4681 = vmatpush1.msra.mxu0 0.0
  %4682 = vmatprep.subr.mxu0 0.0
  %4683 = vmatpush1.msra.mxu0 0.0
  %4684 = vmatprep.subr.mxu0 0.0
  %4685 = vmatpush1.msra.mxu0 0.0
  %4686 = vmatprep.subr.mxu0 0.0
  %4687 = vmatpush1.msra.mxu0 0.0
  %4688 = vmatprep.subr.mxu0 0.0
  %4689 = vmatpush1.msra.mxu0 0.0
  %4690 = vmatprep.mubr.f32.mxu0 0.0
  %v4691 = vand.u32 %v4458, 4294901760
  %4692 = vmatmul.mubr.f32.gmra.mrb[0].mxu0 %v4691
  %v4693 = vpop.f32.mrb[0].mxu0
  %v4694 = vadd.f32 %v4549, %v4693
  %v4695 = vpop.f32.mrb[0].mxu0
  %v4696 = vadd.f32 %v4551, %v4695
  %4697 = vmatprep.mubr.f32.mxu0 0.0
  %v4698 = vand.u32 %v4461, 4294901760
  %4699 = vmatmul.mubr.f32.gmra.mrb[0].mxu0 %v4698
  %v4700 = vpop.f32.mrb[0].mxu0
  %v4701 = vadd.f32 %v4560, %v4700
  %v4702 = vpop.f32.mrb[0].mxu0
  %v4703 = vadd.f32 %v4562, %v4702
  %4704 = vmatprep.mubr.f32.mxu0 0.0
  %v4705 = vand.u32 %v4464, 4294901760
  %4706 = vmatmul.mubr.f32.gmra.mrb[0].mxu0 %v4705
  %v4707 = vpop.f32.mrb[0].mxu0
  %v4708 = vadd.f32 %v4571, %v4707
  %v4709 = vpop.f32.mrb[0].mxu0
  %v4710 = vadd.f32 %v4573, %v4709
  %4711 = vmatprep.mubr.f32.mxu0 0.0
  %v4712 = vand.u32 %v4467, 4294901760
  %4713 = vmatmul.mubr.f32.gmra.mrb[0].mxu0 %v4712
  %v4714 = vpop.f32.mrb[0].mxu0
  %v4715 = vadd.f32 %v4582, %v4714
  %v4716 = vpop.f32.mrb[0].mxu0
  %v4717 = vadd.f32 %v4584, %v4716
  %4718 = vdwg.mxu0
  %v4719 = vand.u32 %v19, 4294901760
  %v4720 = vsub.f32 %v19, %v4719
  %4721 = vmatprep.subr.mxu0 %v4720
  %v4722 = vand.u32 %v18, 4294901760
  %v4723 = vsub.f32 %v18, %v4722
  %4724 = vmatpush1.msra.mxu0 %v4723
  %v4725 = vand.u32 %v21, 4294901760
  %v4726 = vsub.f32 %v21, %v4725
  %4727 = vmatprep.subr.mxu0 %v4726
  %v4728 = vand.u32 %v20, 4294901760
  %v4729 = vsub.f32 %v20, %v4728
  %4730 = vmatpush1.msra.mxu0 %v4729
  %v4731 = vand.u32 %v23, 4294901760
  %v4732 = vsub.f32 %v23, %v4731
  %4733 = vmatprep.subr.mxu0 %v4732
  %v4734 = vand.u32 %v22, 4294901760
  %v4735 = vsub.f32 %v22, %v4734
  %4736 = vmatpush1.msra.mxu0 %v4735
  %v4737 = vand.u32 %v25, 4294901760
  %v4738 = vsub.f32 %v25, %v4737
  %4739 = vmatprep.subr.mxu0 %v4738
  %v4740 = vand.u32 %v24, 4294901760
  %v4741 = vsub.f32 %v24, %v4740
  %4742 = vmatpush1.msra.mxu0 %v4741
  %4743 = vmatprep.subr.mxu0 0.0
  %4744 = vmatpush1.msra.mxu0 0.0
  %4745 = vmatprep.subr.mxu0 0.0
  %4746 = vmatpush1.msra.mxu0 0.0
  %4747 = vmatprep.subr.mxu0 0.0
  %4748 = vmatpush1.msra.mxu0 0.0
  %4749 = vmatprep.subr.mxu0 0.0
  %4750 = vmatpush1.msra.mxu0 0.0
  %4751 = vmatprep.subr.mxu0 0.0
  %4752 = vmatpush1.msra.mxu0 0.0
  %4753 = vmatprep.subr.mxu0 0.0
  %4754 = vmatpush1.msra.mxu0 0.0
  %4755 = vmatprep.subr.mxu0 0.0
  %4756 = vmatpush1.msra.mxu0 0.0
  %4757 = vmatprep.subr.mxu0 0.0
  %4758 = vmatpush1.msra.mxu0 0.0
  %4759 = vmatprep.subr.mxu0 0.0
  %4760 = vmatpush1.msra.mxu0 0.0
  %4761 = vmatprep.subr.mxu0 0.0
  %4762 = vmatpush1.msra.mxu0 0.0
  %4763 = vmatprep.subr.mxu0 0.0
  %4764 = vmatpush1.msra.mxu0 0.0
  %4765 = vmatprep.subr.mxu0 0.0
  %4766 = vmatpush1.msra.mxu0 0.0
  %4767 = vmatprep.subr.mxu0 0.0
  %4768 = vmatpush1.msra.mxu0 0.0
  %4769 = vmatprep.subr.mxu0 0.0
  %4770 = vmatpush1.msra.mxu0 0.0
  %4771 = vmatprep.subr.mxu0 0.0
  %4772 = vmatpush1.msra.mxu0 0.0
  %4773 = vmatprep.subr.mxu0 0.0
  %4774 = vmatpush1.msra.mxu0 0.0
  %4775 = vmatprep.subr.mxu0 0.0
  %4776 = vmatpush1.msra.mxu0 0.0
  %4777 = vmatprep.subr.mxu0 0.0
  %4778 = vmatpush1.msra.mxu0 0.0
  %4779 = vmatprep.subr.mxu0 0.0
  %4780 = vmatpush1.msra.mxu0 0.0
  %4781 = vmatprep.subr.mxu0 0.0
  %4782 = vmatpush1.msra.mxu0 0.0
  %4783 = vmatprep.subr.mxu0 0.0
  %4784 = vmatpush1.msra.mxu0 0.0
  %4785 = vmatprep.subr.mxu0 0.0
  %4786 = vmatpush1.msra.mxu0 0.0
  %4787 = vmatprep.subr.mxu0 0.0
  %4788 = vmatpush1.msra.mxu0 0.0
  %4789 = vmatprep.subr.mxu0 0.0
  %4790 = vmatpush1.msra.mxu0 0.0
  %4791 = vmatprep.subr.mxu0 0.0
  %4792 = vmatpush1.msra.mxu0 0.0
  %4793 = vmatprep.subr.mxu0 0.0
  %4794 = vmatpush1.msra.mxu0 0.0
  %4795 = vmatprep.subr.mxu0 0.0
  %4796 = vmatpush1.msra.mxu0 0.0
  %4797 = vmatprep.subr.mxu0 0.0
  %4798 = vmatpush1.msra.mxu0 0.0
  %4799 = vmatprep.mubr.f32.mxu0 0.0
  %v4800 = vand.u32 %v4458, 4294901760
  %v4801 = vsub.f32 %v4458, %v4800
  %4802 = vmatmul.mubr.f32.gmra.mrb[0].mxu0 %v4801
  %v4803 = vpop.f32.mrb[0].mxu0
  %v4804 = vadd.f32 %v4694, %v4803
  %v4805 = vpop.f32.mrb[0].mxu0
  %v4806 = vadd.f32 %v4696, %v4805
  %4807 = vmatprep.mubr.f32.mxu0 0.0
  %v4808 = vand.u32 %v4461, 4294901760
  %v4809 = vsub.f32 %v4461, %v4808
  %4810 = vmatmul.mubr.f32.gmra.mrb[0].mxu0 %v4809
  %v4811 = vpop.f32.mrb[0].mxu0
  %v4812 = vadd.f32 %v4701, %v4811
  %v4813 = vpop.f32.mrb[0].mxu0
  %v4814 = vadd.f32 %v4703, %v4813
  %4815 = vmatprep.mubr.f32.mxu0 0.0
  %v4816 = vand.u32 %v4464, 4294901760
  %v4817 = vsub.f32 %v4464, %v4816
  %4818 = vmatmul.mubr.f32.gmra.mrb[0].mxu0 %v4817
  %v4819 = vpop.f32.mrb[0].mxu0
  %v4820 = vadd.f32 %v4708, %v4819
  %v4821 = vpop.f32.mrb[0].mxu0
  %v4822 = vadd.f32 %v4710, %v4821
  %4823 = vmatprep.mubr.f32.mxu0 0.0
  %v4824 = vand.u32 %v4467, 4294901760
  %v4825 = vsub.f32 %v4467, %v4824
  %4826 = vmatmul.mubr.f32.gmra.mrb[0].mxu0 %v4825
  %v4827 = vpop.f32.mrb[0].mxu0
  %v4828 = vadd.f32 %v4715, %v4827
  %v4829 = vpop.f32.mrb[0].mxu0
  %v4830 = vadd.f32 %v4717, %v4829
  %4831 = vdwg.mxu0
  %v4832 = vand.u32 %v19, 4294901760
  %4833 = vmatprep.subr.mxu0 %v4832
  %v4834 = vand.u32 %v18, 4294901760
  %4835 = vmatpush1.msra.mxu0 %v4834
  %v4836 = vand.u32 %v21, 4294901760
  %4837 = vmatprep.subr.mxu0 %v4836
  %v4838 = vand.u32 %v20, 4294901760
  %4839 = vmatpush1.msra.mxu0 %v4838
  %v4840 = vand.u32 %v23, 4294901760
  %4841 = vmatprep.subr.mxu0 %v4840
  %v4842 = vand.u32 %v22, 4294901760
  %4843 = vmatpush1.msra.mxu0 %v4842
  %v4844 = vand.u32 %v25, 4294901760
  %4845 = vmatprep.subr.mxu0 %v4844
  %v4846 = vand.u32 %v24, 4294901760
  %4847 = vmatpush1.msra.mxu0 %v4846
  %4848 = vmatprep.subr.mxu0 0.0
  %4849 = vmatpush1.msra.mxu0 0.0
  %4850 = vmatprep.subr.mxu0 0.0
  %4851 = vmatpush1.msra.mxu0 0.0
  %4852 = vmatprep.subr.mxu0 0.0
  %4853 = vmatpush1.msra.mxu0 0.0
  %4854 = vmatprep.subr.mxu0 0.0
  %4855 = vmatpush1.msra.mxu0 0.0
  %4856 = vmatprep.subr.mxu0 0.0
  %4857 = vmatpush1.msra.mxu0 0.0
  %4858 = vmatprep.subr.mxu0 0.0
  %4859 = vmatpush1.msra.mxu0 0.0
  %4860 = vmatprep.subr.mxu0 0.0
  %4861 = vmatpush1.msra.mxu0 0.0
  %4862 = vmatprep.subr.mxu0 0.0
  %4863 = vmatpush1.msra.mxu0 0.0
  %4864 = vmatprep.subr.mxu0 0.0
  %4865 = vmatpush1.msra.mxu0 0.0
  %4866 = vmatprep.subr.mxu0 0.0
  %4867 = vmatpush1.msra.mxu0 0.0
  %4868 = vmatprep.subr.mxu0 0.0
  %4869 = vmatpush1.msra.mxu0 0.0
  %4870 = vmatprep.subr.mxu0 0.0
  %4871 = vmatpush1.msra.mxu0 0.0
  %4872 = vmatprep.subr.mxu0 0.0
  %4873 = vmatpush1.msra.mxu0 0.0
  %4874 = vmatprep.subr.mxu0 0.0
  %4875 = vmatpush1.msra.mxu0 0.0
  %4876 = vmatprep.subr.mxu0 0.0
  %4877 = vmatpush1.msra.mxu0 0.0
  %4878 = vmatprep.subr.mxu0 0.0
  %4879 = vmatpush1.msra.mxu0 0.0
  %4880 = vmatprep.subr.mxu0 0.0
  %4881 = vmatpush1.msra.mxu0 0.0
  %4882 = vmatprep.subr.mxu0 0.0
  %4883 = vmatpush1.msra.mxu0 0.0
  %4884 = vmatprep.subr.mxu0 0.0
  %4885 = vmatpush1.msra.mxu0 0.0
  %4886 = vmatprep.subr.mxu0 0.0
  %4887 = vmatpush1.msra.mxu0 0.0
  %4888 = vmatprep.subr.mxu0 0.0
  %4889 = vmatpush1.msra.mxu0 0.0
  %4890 = vmatprep.subr.mxu0 0.0
  %4891 = vmatpush1.msra.mxu0 0.0
  %4892 = vmatprep.subr.mxu0 0.0
  %4893 = vmatpush1.msra.mxu0 0.0
  %4894 = vmatprep.subr.mxu0 0.0
  %4895 = vmatpush1.msra.mxu0 0.0
  %4896 = vmatprep.subr.mxu0 0.0
  %4897 = vmatpush1.msra.mxu0 0.0
  %4898 = vmatprep.subr.mxu0 0.0
  %4899 = vmatpush1.msra.mxu0 0.0
  %4900 = vmatprep.subr.mxu0 0.0
  %4901 = vmatpush1.msra.mxu0 0.0
  %4902 = vmatprep.subr.mxu0 0.0
  %4903 = vmatpush1.msra.mxu0 0.0
  %4904 = vmatprep.mubr.f32.mxu0 0.0
  %v4905 = vand.u32 %v4458, 4294901760
  %v4906 = vsub.f32 %v4458, %v4905
  %v4907 = vand.u32 %v4906, 4294901760
  %4908 = vmatmul.mubr.f32.gmra.mrb[0].mxu0 %v4907
  %v4909 = vpop.f32.mrb[0].mxu0
  %v4910 = vadd.f32 %v4804, %v4909
  %v4911 = vpop.f32.mrb[0].mxu0
  %v4912 = vadd.f32 %v4806, %v4911
  %4913 = vmatprep.mubr.f32.mxu0 0.0
  %v4914 = vand.u32 %v4461, 4294901760
  %v4915 = vsub.f32 %v4461, %v4914
  %v4916 = vand.u32 %v4915, 4294901760
  %4917 = vmatmul.mubr.f32.gmra.mrb[0].mxu0 %v4916
  %v4918 = vpop.f32.mrb[0].mxu0
  %v4919 = vadd.f32 %v4812, %v4918
  %v4920 = vpop.f32.mrb[0].mxu0
  %v4921 = vadd.f32 %v4814, %v4920
  %4922 = vmatprep.mubr.f32.mxu0 0.0
  %v4923 = vand.u32 %v4464, 4294901760
  %v4924 = vsub.f32 %v4464, %v4923
  %v4925 = vand.u32 %v4924, 4294901760
  %4926 = vmatmul.mubr.f32.gmra.mrb[0].mxu0 %v4925
  %v4927 = vpop.f32.mrb[0].mxu0
  %v4928 = vadd.f32 %v4820, %v4927
  %v4929 = vpop.f32.mrb[0].mxu0
  %v4930 = vadd.f32 %v4822, %v4929
  %4931 = vmatprep.mubr.f32.mxu0 0.0
  %v4932 = vand.u32 %v4467, 4294901760
  %v4933 = vsub.f32 %v4467, %v4932
  %v4934 = vand.u32 %v4933, 4294901760
  %4935 = vmatmul.mubr.f32.gmra.mrb[0].mxu0 %v4934
  %v4936 = vpop.f32.mrb[0].mxu0
  %v4937 = vadd.f32 %v4828, %v4936
  %v4938 = vpop.f32.mrb[0].mxu0
  %v4939 = vadd.f32 %v4830, %v4938
  %4940 = vdwg.mxu0
  %v4941 = vand.u32 %v19, 4294901760
  %v4942 = vsub.f32 %v19, %v4941
  %v4943 = vand.u32 %v4942, 4294901760
  %4944 = vmatprep.subr.mxu0 %v4943
  %v4945 = vand.u32 %v18, 4294901760
  %v4946 = vsub.f32 %v18, %v4945
  %v4947 = vand.u32 %v4946, 4294901760
  %4948 = vmatpush1.msra.mxu0 %v4947
  %v4949 = vand.u32 %v21, 4294901760
  %v4950 = vsub.f32 %v21, %v4949
  %v4951 = vand.u32 %v4950, 4294901760
  %4952 = vmatprep.subr.mxu0 %v4951
  %v4953 = vand.u32 %v20, 4294901760
  %v4954 = vsub.f32 %v20, %v4953
  %v4955 = vand.u32 %v4954, 4294901760
  %4956 = vmatpush1.msra.mxu0 %v4955
  %v4957 = vand.u32 %v23, 4294901760
  %v4958 = vsub.f32 %v23, %v4957
  %v4959 = vand.u32 %v4958, 4294901760
  %4960 = vmatprep.subr.mxu0 %v4959
  %v4961 = vand.u32 %v22, 4294901760
  %v4962 = vsub.f32 %v22, %v4961
  %v4963 = vand.u32 %v4962, 4294901760
  %4964 = vmatpush1.msra.mxu0 %v4963
  %v4965 = vand.u32 %v25, 4294901760
  %v4966 = vsub.f32 %v25, %v4965
  %v4967 = vand.u32 %v4966, 4294901760
  %4968 = vmatprep.subr.mxu0 %v4967
  %v4969 = vand.u32 %v24, 4294901760
  %v4970 = vsub.f32 %v24, %v4969
  %v4971 = vand.u32 %v4970, 4294901760
  %4972 = vmatpush1.msra.mxu0 %v4971
  %4973 = vmatprep.subr.mxu0 0.0
  %4974 = vmatpush1.msra.mxu0 0.0
  %4975 = vmatprep.subr.mxu0 0.0
  %4976 = vmatpush1.msra.mxu0 0.0
  %4977 = vmatprep.subr.mxu0 0.0
  %4978 = vmatpush1.msra.mxu0 0.0
  %4979 = vmatprep.subr.mxu0 0.0
  %4980 = vmatpush1.msra.mxu0 0.0
  %4981 = vmatprep.subr.mxu0 0.0
  %4982 = vmatpush1.msra.mxu0 0.0
  %4983 = vmatprep.subr.mxu0 0.0
  %4984 = vmatpush1.msra.mxu0 0.0
  %4985 = vmatprep.subr.mxu0 0.0
  %4986 = vmatpush1.msra.mxu0 0.0
  %4987 = vmatprep.subr.mxu0 0.0
  %4988 = vmatpush1.msra.mxu0 0.0
  %4989 = vmatprep.subr.mxu0 0.0
  %4990 = vmatpush1.msra.mxu0 0.0
  %4991 = vmatprep.subr.mxu0 0.0
  %4992 = vmatpush1.msra.mxu0 0.0
  %4993 = vmatprep.subr.mxu0 0.0
  %4994 = vmatpush1.msra.mxu0 0.0
  %4995 = vmatprep.subr.mxu0 0.0
  %4996 = vmatpush1.msra.mxu0 0.0
  %4997 = vmatprep.subr.mxu0 0.0
  %4998 = vmatpush1.msra.mxu0 0.0
  %4999 = vmatprep.subr.mxu0 0.0
  %5000 = vmatpush1.msra.mxu0 0.0
  %5001 = vmatprep.subr.mxu0 0.0
  %5002 = vmatpush1.msra.mxu0 0.0
  %5003 = vmatprep.subr.mxu0 0.0
  %5004 = vmatpush1.msra.mxu0 0.0
  %5005 = vmatprep.subr.mxu0 0.0
  %5006 = vmatpush1.msra.mxu0 0.0
  %5007 = vmatprep.subr.mxu0 0.0
  %5008 = vmatpush1.msra.mxu0 0.0
  %5009 = vmatprep.subr.mxu0 0.0
  %5010 = vmatpush1.msra.mxu0 0.0
  %5011 = vmatprep.subr.mxu0 0.0
  %5012 = vmatpush1.msra.mxu0 0.0
  %5013 = vmatprep.subr.mxu0 0.0
  %5014 = vmatpush1.msra.mxu0 0.0
  %5015 = vmatprep.subr.mxu0 0.0
  %5016 = vmatpush1.msra.mxu0 0.0
  %5017 = vmatprep.subr.mxu0 0.0
  %5018 = vmatpush1.msra.mxu0 0.0
  %5019 = vmatprep.subr.mxu0 0.0
  %5020 = vmatpush1.msra.mxu0 0.0
  %5021 = vmatprep.subr.mxu0 0.0
  %5022 = vmatpush1.msra.mxu0 0.0
  %5023 = vmatprep.subr.mxu0 0.0
  %5024 = vmatpush1.msra.mxu0 0.0
  %5025 = vmatprep.subr.mxu0 0.0
  %5026 = vmatpush1.msra.mxu0 0.0
  %5027 = vmatprep.subr.mxu0 0.0
  %5028 = vmatpush1.msra.mxu0 0.0
  %5029 = vmatprep.mubr.f32.mxu0 0.0
  %v5030 = vand.u32 %v4458, 4294901760
  %5031 = vmatmul.mubr.f32.gmra.mrb[0].mxu0 %v5030
  %v5032 = vpop.f32.mrb[0].mxu0
  %v5033 = vadd.f32 %v4910, %v5032
  %v5034 = vpop.f32.mrb[0].mxu0
  %v5035 = vadd.f32 %v4912, %v5034
  %5036 = vmatprep.mubr.f32.mxu0 0.0
  %v5037 = vand.u32 %v4461, 4294901760
  %5038 = vmatmul.mubr.f32.gmra.mrb[0].mxu0 %v5037
  %v5039 = vpop.f32.mrb[0].mxu0
  %v5040 = vadd.f32 %v4919, %v5039
  %v5041 = vpop.f32.mrb[0].mxu0
  %v5042 = vadd.f32 %v4921, %v5041
  %5043 = vmatprep.mubr.f32.mxu0 0.0
  %v5044 = vand.u32 %v4464, 4294901760
  %5045 = vmatmul.mubr.f32.gmra.mrb[0].mxu0 %v5044
  %v5046 = vpop.f32.mrb[0].mxu0
  %v5047 = vadd.f32 %v4928, %v5046
  %v5048 = vpop.f32.mrb[0].mxu0
  %v5049 = vadd.f32 %v4930, %v5048
  %5050 = vmatprep.mubr.f32.mxu0 0.0
  %v5051 = vand.u32 %v4467, 4294901760
  %5052 = vmatmul.mubr.f32.gmra.mrb[0].mxu0 %v5051
  %v5053 = vpop.f32.mrb[0].mxu0
  %v5054 = vadd.f32 %v4937, %v5053
  %v5055 = vpop.f32.mrb[0].mxu0
  %v5056 = vadd.f32 %v4939, %v5055
  %5057 = vdwg.mxu0
  %v5058 = vand.u32 %v19, 4294901760
  %5059 = vmatprep.subr.mxu0 %v5058
  %v5060 = vand.u32 %v18, 4294901760
  %5061 = vmatpush1.msra.mxu0 %v5060
  %v5062 = vand.u32 %v21, 4294901760
  %5063 = vmatprep.subr.mxu0 %v5062
  %v5064 = vand.u32 %v20, 4294901760
  %5065 = vmatpush1.msra.mxu0 %v5064
  %v5066 = vand.u32 %v23, 4294901760
  %5067 = vmatprep.subr.mxu0 %v5066
  %v5068 = vand.u32 %v22, 4294901760
  %5069 = vmatpush1.msra.mxu0 %v5068
  %v5070 = vand.u32 %v25, 4294901760
  %5071 = vmatprep.subr.mxu0 %v5070
  %v5072 = vand.u32 %v24, 4294901760
  %5073 = vmatpush1.msra.mxu0 %v5072
  %5074 = vmatprep.subr.mxu0 0.0
  %5075 = vmatpush1.msra.mxu0 0.0
  %5076 = vmatprep.subr.mxu0 0.0
  %5077 = vmatpush1.msra.mxu0 0.0
  %5078 = vmatprep.subr.mxu0 0.0
  %5079 = vmatpush1.msra.mxu0 0.0
  %5080 = vmatprep.subr.mxu0 0.0
  %5081 = vmatpush1.msra.mxu0 0.0
  %5082 = vmatprep.subr.mxu0 0.0
  %5083 = vmatpush1.msra.mxu0 0.0
  %5084 = vmatprep.subr.mxu0 0.0
  %5085 = vmatpush1.msra.mxu0 0.0
  %5086 = vmatprep.subr.mxu0 0.0
  %5087 = vmatpush1.msra.mxu0 0.0
  %5088 = vmatprep.subr.mxu0 0.0
  %5089 = vmatpush1.msra.mxu0 0.0
  %5090 = vmatprep.subr.mxu0 0.0
  %5091 = vmatpush1.msra.mxu0 0.0
  %5092 = vmatprep.subr.mxu0 0.0
  %5093 = vmatpush1.msra.mxu0 0.0
  %5094 = vmatprep.subr.mxu0 0.0
  %5095 = vmatpush1.msra.mxu0 0.0
  %5096 = vmatprep.subr.mxu0 0.0
  %5097 = vmatpush1.msra.mxu0 0.0
  %5098 = vmatprep.subr.mxu0 0.0
  %5099 = vmatpush1.msra.mxu0 0.0
  %5100 = vmatprep.subr.mxu0 0.0
  %5101 = vmatpush1.msra.mxu0 0.0
  %5102 = vmatprep.subr.mxu0 0.0
  %5103 = vmatpush1.msra.mxu0 0.0
  %5104 = vmatprep.subr.mxu0 0.0
  %5105 = vmatpush1.msra.mxu0 0.0
  %5106 = vmatprep.subr.mxu0 0.0
  %5107 = vmatpush1.msra.mxu0 0.0
  %5108 = vmatprep.subr.mxu0 0.0
  %5109 = vmatpush1.msra.mxu0 0.0
  %5110 = vmatprep.subr.mxu0 0.0
  %5111 = vmatpush1.msra.mxu0 0.0
  %5112 = vmatprep.subr.mxu0 0.0
  %5113 = vmatpush1.msra.mxu0 0.0
  %5114 = vmatprep.subr.mxu0 0.0
  %5115 = vmatpush1.msra.mxu0 0.0
  %5116 = vmatprep.subr.mxu0 0.0
  %5117 = vmatpush1.msra.mxu0 0.0
  %5118 = vmatprep.subr.mxu0 0.0
  %5119 = vmatpush1.msra.mxu0 0.0
  %5120 = vmatprep.subr.mxu0 0.0
  %5121 = vmatpush1.msra.mxu0 0.0
  %5122 = vmatprep.subr.mxu0 0.0
  %5123 = vmatpush1.msra.mxu0 0.0
  %5124 = vmatprep.subr.mxu0 0.0
  %5125 = vmatpush1.msra.mxu0 0.0
  %5126 = vmatprep.subr.mxu0 0.0
  %5127 = vmatpush1.msra.mxu0 0.0
  %5128 = vmatprep.subr.mxu0 0.0
  %5129 = vmatpush1.msra.mxu0 0.0
  %5130 = vmatprep.mubr.f32.mxu0 0.0
  %v5131 = vand.u32 %v4458, 4294901760
  %5132 = vmatmul.mubr.f32.gmra.mrb[0].mxu0 %v5131
  %v5133 = vpop.f32.mrb[0].mxu0
  %v5134 = vadd.f32 %v5033, %v5133
  %v5135 = vpop.f32.mrb[0].mxu0
  %v5136 = vadd.f32 %v5035, %v5135
  %5137 = vmatprep.mubr.f32.mxu0 0.0
  %v5138 = vand.u32 %v4461, 4294901760
  %5139 = vmatmul.mubr.f32.gmra.mrb[0].mxu0 %v5138
  %v5140 = vpop.f32.mrb[0].mxu0
  %v5141 = vadd.f32 %v5040, %v5140
  %v5142 = vpop.f32.mrb[0].mxu0
  %v5143 = vadd.f32 %v5042, %v5142
  %5144 = vmatprep.mubr.f32.mxu0 0.0
  %v5145 = vand.u32 %v4464, 4294901760
  %5146 = vmatmul.mubr.f32.gmra.mrb[0].mxu0 %v5145
  %v5147 = vpop.f32.mrb[0].mxu0
  %v5148 = vadd.f32 %v5047, %v5147
  %v5149 = vpop.f32.mrb[0].mxu0
  %v5150 = vadd.f32 %v5049, %v5149
  %5151 = vmatprep.mubr.f32.mxu0 0.0
  %v5152 = vand.u32 %v4467, 4294901760
  %5153 = vmatmul.mubr.f32.gmra.mrb[0].mxu0 %v5152
  %v5154 = vpop.f32.mrb[0].mxu0
  %v5155 = vadd.f32 %v5054, %v5154
  %v5156 = vpop.f32.mrb[0].mxu0
  %v5157 = vadd.f32 %v5056, %v5156
  %5158 = vdwg.mxu0
  %v5159 = vsel %vm31, %v5134, %v5136
  %v5160 = vsel %vm32, %v5141, %v5143
  %v5161 = vsel %vm33, %v5148, %v5150
  %v5162 = vsel %vm34, %v5155, %v5157
  %s5163 = scalar_lea.vmem %s0, 96
  %v5164 = vld [vmem:[%s5163] sm:$0xff]
  %v5165 = vld [vmem:[%s5163 + $0x8] sm:$0xff]
  %v5166 = vld [vmem:[%s5163 + $0x10] sm:$0xff]
  %v5167 = vld [vmem:[%s5163 + $0x18] sm:$0xff]
  %v5168 = vadd.f32 %v5159, %v5164
  %v5169 = vadd.f32 %v5160, %v5165
  %v5170 = vadd.f32 %v5161, %v5166
  %v5171 = vadd.f32 %v5162, %v5167
  %5176 = vrot.lane.b32.xlu0 %v5159, 32
  %v5177 = vpop.permute.xlu0 %5176
  %5178 = vrot.lane.b32.xlu0 %v5160, 32
  %v5179 = vpop.permute.xlu0 %5178
  %5180 = vrot.lane.b32.xlu0 %v5161, 32
  %v5181 = vpop.permute.xlu0 %5180
  %5182 = vrot.lane.b32.xlu0 %v5162, 32
  %v5183 = vpop.permute.xlu0 %5182
  %5192 = vrot.lane.b32.xlu0 %v5164, 32
  %v5193 = vpop.permute.xlu0 %5192
  %5194 = vrot.lane.b32.xlu0 %v5165, 32
  %v5195 = vpop.permute.xlu0 %5194
  %5196 = vrot.lane.b32.xlu0 %v5166, 32
  %v5197 = vpop.permute.xlu0 %5196
  %5198 = vrot.lane.b32.xlu0 %v5167, 32
  %v5199 = vpop.permute.xlu0 %5198
  %5204 = vmatprep.subr.mxu0 0.0
  %v5205 = vand.u32 %v5177, 4294901760
  %5206 = vmatpush1.msra.mxu0 %v5205
  %5207 = vmatprep.subr.mxu0 0.0
  %v5208 = vand.u32 %v5179, 4294901760
  %5209 = vmatpush1.msra.mxu0 %v5208
  %5210 = vmatprep.subr.mxu0 0.0
  %v5211 = vand.u32 %v5181, 4294901760
  %5212 = vmatpush1.msra.mxu0 %v5211
  %5213 = vmatprep.subr.mxu0 0.0
  %v5214 = vand.u32 %v5183, 4294901760
  %5215 = vmatpush1.msra.mxu0 %v5214
  %5216 = vmatprep.subr.mxu0 0.0
  %5217 = vmatpush1.msra.mxu0 0.0
  %5218 = vmatprep.subr.mxu0 0.0
  %5219 = vmatpush1.msra.mxu0 0.0
  %5220 = vmatprep.subr.mxu0 0.0
  %5221 = vmatpush1.msra.mxu0 0.0
  %5222 = vmatprep.subr.mxu0 0.0
  %5223 = vmatpush1.msra.mxu0 0.0
  %5224 = vmatprep.subr.mxu0 0.0
  %5225 = vmatpush1.msra.mxu0 0.0
  %5226 = vmatprep.subr.mxu0 0.0
  %5227 = vmatpush1.msra.mxu0 0.0
  %5228 = vmatprep.subr.mxu0 0.0
  %5229 = vmatpush1.msra.mxu0 0.0
  %5230 = vmatprep.subr.mxu0 0.0
  %5231 = vmatpush1.msra.mxu0 0.0
  %5232 = vmatprep.subr.mxu0 0.0
  %5233 = vmatpush1.msra.mxu0 0.0
  %5234 = vmatprep.subr.mxu0 0.0
  %5235 = vmatpush1.msra.mxu0 0.0
  %5236 = vmatprep.subr.mxu0 0.0
  %5237 = vmatpush1.msra.mxu0 0.0
  %5238 = vmatprep.subr.mxu0 0.0
  %5239 = vmatpush1.msra.mxu0 0.0
  %5240 = vmatprep.subr.mxu0 0.0
  %5241 = vmatpush1.msra.mxu0 0.0
  %5242 = vmatprep.subr.mxu0 0.0
  %5243 = vmatpush1.msra.mxu0 0.0
  %5244 = vmatprep.subr.mxu0 0.0
  %5245 = vmatpush1.msra.mxu0 0.0
  %5246 = vmatprep.subr.mxu0 0.0
  %5247 = vmatpush1.msra.mxu0 0.0
  %5248 = vmatprep.subr.mxu0 0.0
  %5249 = vmatpush1.msra.mxu0 0.0
  %5250 = vmatprep.subr.mxu0 0.0
  %5251 = vmatpush1.msra.mxu0 0.0
  %5252 = vmatprep.subr.mxu0 0.0
  %5253 = vmatpush1.msra.mxu0 0.0
  %5254 = vmatprep.subr.mxu0 0.0
  %5255 = vmatpush1.msra.mxu0 0.0
  %5256 = vmatprep.subr.mxu0 0.0
  %5257 = vmatpush1.msra.mxu0 0.0
  %5258 = vmatprep.subr.mxu0 0.0
  %5259 = vmatpush1.msra.mxu0 0.0
  %5260 = vmatprep.subr.mxu0 0.0
  %5261 = vmatpush1.msra.mxu0 0.0
  %5262 = vmatprep.subr.mxu0 0.0
  %5263 = vmatpush1.msra.mxu0 0.0
  %5264 = vmatprep.subr.mxu0 0.0
  %5265 = vmatpush1.msra.mxu0 0.0
  %5266 = vmatprep.subr.mxu0 0.0
  %5267 = vmatpush1.msra.mxu0 0.0
  %5268 = vmatprep.subr.mxu0 0.0
  %5269 = vmatpush1.msra.mxu0 0.0
  %5270 = vmatprep.subr.mxu0 0.0
  %5271 = vmatpush1.msra.mxu0 0.0
  %5272 = vmatprep.mubr.f32.mxu0 0.0
  %v5273 = vand.u32 %v774, 4294901760
  %v5274 = vsub.f32 %v774, %v5273
  %v5275 = vand.u32 %v5274, 4294901760
  %v5276 = vsub.f32 %v5274, %v5275
  %v5277 = vand.u32 %v5276, 4294901760
  %5278 = vmatmul.mubr.f32.gmra.mrb[0].mxu0 %v5277
  %v5279 = vpop.f32.mrb[0].mxu0
  %v5280 = vadd.f32 %v5193, %v5279
  %v5281 = vpop.f32.mrb[0].mxu0
  %5282 = vmatprep.mubr.f32.mxu0 0.0
  %v5283 = vand.u32 %v777, 4294901760
  %v5284 = vsub.f32 %v777, %v5283
  %v5285 = vand.u32 %v5284, 4294901760
  %v5286 = vsub.f32 %v5284, %v5285
  %v5287 = vand.u32 %v5286, 4294901760
  %5288 = vmatmul.mubr.f32.gmra.mrb[0].mxu0 %v5287
  %v5289 = vpop.f32.mrb[0].mxu0
  %v5290 = vadd.f32 %v5195, %v5289
  %v5291 = vpop.f32.mrb[0].mxu0
  %5292 = vmatprep.mubr.f32.mxu0 0.0
  %v5293 = vand.u32 %v780, 4294901760
  %v5294 = vsub.f32 %v780, %v5293
  %v5295 = vand.u32 %v5294, 4294901760
  %v5296 = vsub.f32 %v5294, %v5295
  %v5297 = vand.u32 %v5296, 4294901760
  %5298 = vmatmul.mubr.f32.gmra.mrb[0].mxu0 %v5297
  %v5299 = vpop.f32.mrb[0].mxu0
  %v5300 = vadd.f32 %v5197, %v5299
  %v5301 = vpop.f32.mrb[0].mxu0
  %5302 = vmatprep.mubr.f32.mxu0 0.0
  %v5303 = vand.u32 %v783, 4294901760
  %v5304 = vsub.f32 %v783, %v5303
  %v5305 = vand.u32 %v5304, 4294901760
  %v5306 = vsub.f32 %v5304, %v5305
  %v5307 = vand.u32 %v5306, 4294901760
  %5308 = vmatmul.mubr.f32.gmra.mrb[0].mxu0 %v5307
  %v5309 = vpop.f32.mrb[0].mxu0
  %v5310 = vadd.f32 %v5199, %v5309
  %v5311 = vpop.f32.mrb[0].mxu0
  %5312 = vdwg.mxu0
  %5313 = vmatprep.subr.mxu0 0.0
  %v5314 = vand.u32 %v5177, 4294901760
  %v5315 = vsub.f32 %v5177, %v5314
  %v5316 = vand.u32 %v5315, 4294901760
  %v5317 = vsub.f32 %v5315, %v5316
  %v5318 = vand.u32 %v5317, 4294901760
  %5319 = vmatpush1.msra.mxu0 %v5318
  %5320 = vmatprep.subr.mxu0 0.0
  %v5321 = vand.u32 %v5179, 4294901760
  %v5322 = vsub.f32 %v5179, %v5321
  %v5323 = vand.u32 %v5322, 4294901760
  %v5324 = vsub.f32 %v5322, %v5323
  %v5325 = vand.u32 %v5324, 4294901760
  %5326 = vmatpush1.msra.mxu0 %v5325
  %5327 = vmatprep.subr.mxu0 0.0
  %v5328 = vand.u32 %v5181, 4294901760
  %v5329 = vsub.f32 %v5181, %v5328
  %v5330 = vand.u32 %v5329, 4294901760
  %v5331 = vsub.f32 %v5329, %v5330
  %v5332 = vand.u32 %v5331, 4294901760
  %5333 = vmatpush1.msra.mxu0 %v5332
  %5334 = vmatprep.subr.mxu0 0.0
  %v5335 = vand.u32 %v5183, 4294901760
  %v5336 = vsub.f32 %v5183, %v5335
  %v5337 = vand.u32 %v5336, 4294901760
  %v5338 = vsub.f32 %v5336, %v5337
  %v5339 = vand.u32 %v5338, 4294901760
  %5340 = vmatpush1.msra.mxu0 %v5339
  %5341 = vmatprep.subr.mxu0 0.0
  %5342 = vmatpush1.msra.mxu0 0.0
  %5343 = vmatprep.subr.mxu0 0.0
  %5344 = vmatpush1.msra.mxu0 0.0
  %5345 = vmatprep.subr.mxu0 0.0
  %5346 = vmatpush1.msra.mxu0 0.0
  %5347 = vmatprep.subr.mxu0 0.0
  %5348 = vmatpush1.msra.mxu0 0.0
  %5349 = vmatprep.subr.mxu0 0.0
  %5350 = vmatpush1.msra.mxu0 0.0
  %5351 = vmatprep.subr.mxu0 0.0
  %5352 = vmatpush1.msra.mxu0 0.0
  %5353 = vmatprep.subr.mxu0 0.0
  %5354 = vmatpush1.msra.mxu0 0.0
  %5355 = vmatprep.subr.mxu0 0.0
  %5356 = vmatpush1.msra.mxu0 0.0
  %5357 = vmatprep.subr.mxu0 0.0
  %5358 = vmatpush1.msra.mxu0 0.0
  %5359 = vmatprep.subr.mxu0 0.0
  %5360 = vmatpush1.msra.mxu0 0.0
  %5361 = vmatprep.subr.mxu0 0.0
  %5362 = vmatpush1.msra.mxu0 0.0
  %5363 = vmatprep.subr.mxu0 0.0
  %5364 = vmatpush1.msra.mxu0 0.0
  %5365 = vmatprep.subr.mxu0 0.0
  %5366 = vmatpush1.msra.mxu0 0.0
  %5367 = vmatprep.subr.mxu0 0.0
  %5368 = vmatpush1.msra.mxu0 0.0
  %5369 = vmatprep.subr.mxu0 0.0
  %5370 = vmatpush1.msra.mxu0 0.0
  %5371 = vmatprep.subr.mxu0 0.0
  %5372 = vmatpush1.msra.mxu0 0.0
  %5373 = vmatprep.subr.mxu0 0.0
  %5374 = vmatpush1.msra.mxu0 0.0
  %5375 = vmatprep.subr.mxu0 0.0
  %5376 = vmatpush1.msra.mxu0 0.0
  %5377 = vmatprep.subr.mxu0 0.0
  %5378 = vmatpush1.msra.mxu0 0.0
  %5379 = vmatprep.subr.mxu0 0.0
  %5380 = vmatpush1.msra.mxu0 0.0
  %5381 = vmatprep.subr.mxu0 0.0
  %5382 = vmatpush1.msra.mxu0 0.0
  %5383 = vmatprep.subr.mxu0 0.0
  %5384 = vmatpush1.msra.mxu0 0.0
  %5385 = vmatprep.subr.mxu0 0.0
  %5386 = vmatpush1.msra.mxu0 0.0
  %5387 = vmatprep.subr.mxu0 0.0
  %5388 = vmatpush1.msra.mxu0 0.0
  %5389 = vmatprep.subr.mxu0 0.0
  %5390 = vmatpush1.msra.mxu0 0.0
  %5391 = vmatprep.subr.mxu0 0.0
  %5392 = vmatpush1.msra.mxu0 0.0
  %5393 = vmatprep.subr.mxu0 0.0
  %5394 = vmatpush1.msra.mxu0 0.0
  %5395 = vmatprep.subr.mxu0 0.0
  %5396 = vmatpush1.msra.mxu0 0.0
  %5397 = vmatprep.mubr.f32.mxu0 0.0
  %v5398 = vand.u32 %v774, 4294901760
  %5399 = vmatmul.mubr.f32.gmra.mrb[0].mxu0 %v5398
  %v5400 = vpop.f32.mrb[0].mxu0
  %v5401 = vadd.f32 %v5280, %v5400
  %v5402 = vpop.f32.mrb[0].mxu0
  %5403 = vmatprep.mubr.f32.mxu0 0.0
  %v5404 = vand.u32 %v777, 4294901760
  %5405 = vmatmul.mubr.f32.gmra.mrb[0].mxu0 %v5404
  %v5406 = vpop.f32.mrb[0].mxu0
  %v5407 = vadd.f32 %v5290, %v5406
  %v5408 = vpop.f32.mrb[0].mxu0
  %5409 = vmatprep.mubr.f32.mxu0 0.0
  %v5410 = vand.u32 %v780, 4294901760
  %5411 = vmatmul.mubr.f32.gmra.mrb[0].mxu0 %v5410
  %v5412 = vpop.f32.mrb[0].mxu0
  %v5413 = vadd.f32 %v5300, %v5412
  %v5414 = vpop.f32.mrb[0].mxu0
  %5415 = vmatprep.mubr.f32.mxu0 0.0
  %v5416 = vand.u32 %v783, 4294901760
  %5417 = vmatmul.mubr.f32.gmra.mrb[0].mxu0 %v5416
  %v5418 = vpop.f32.mrb[0].mxu0
  %v5419 = vadd.f32 %v5310, %v5418
  %v5420 = vpop.f32.mrb[0].mxu0
  %5421 = vdwg.mxu0
  %5422 = vmatprep.subr.mxu0 0.0
  %v5423 = vand.u32 %v5177, 4294901760
  %v5424 = vsub.f32 %v5177, %v5423
  %5425 = vmatpush1.msra.mxu0 %v5424
  %5426 = vmatprep.subr.mxu0 0.0
  %v5427 = vand.u32 %v5179, 4294901760
  %v5428 = vsub.f32 %v5179, %v5427
  %5429 = vmatpush1.msra.mxu0 %v5428
  %5430 = vmatprep.subr.mxu0 0.0
  %v5431 = vand.u32 %v5181, 4294901760
  %v5432 = vsub.f32 %v5181, %v5431
  %5433 = vmatpush1.msra.mxu0 %v5432
  %5434 = vmatprep.subr.mxu0 0.0
  %v5435 = vand.u32 %v5183, 4294901760
  %v5436 = vsub.f32 %v5183, %v5435
  %5437 = vmatpush1.msra.mxu0 %v5436
  %5438 = vmatprep.subr.mxu0 0.0
  %5439 = vmatpush1.msra.mxu0 0.0
  %5440 = vmatprep.subr.mxu0 0.0
  %5441 = vmatpush1.msra.mxu0 0.0
  %5442 = vmatprep.subr.mxu0 0.0
  %5443 = vmatpush1.msra.mxu0 0.0
  %5444 = vmatprep.subr.mxu0 0.0
  %5445 = vmatpush1.msra.mxu0 0.0
  %5446 = vmatprep.subr.mxu0 0.0
  %5447 = vmatpush1.msra.mxu0 0.0
  %5448 = vmatprep.subr.mxu0 0.0
  %5449 = vmatpush1.msra.mxu0 0.0
  %5450 = vmatprep.subr.mxu0 0.0
  %5451 = vmatpush1.msra.mxu0 0.0
  %5452 = vmatprep.subr.mxu0 0.0
  %5453 = vmatpush1.msra.mxu0 0.0
  %5454 = vmatprep.subr.mxu0 0.0
  %5455 = vmatpush1.msra.mxu0 0.0
  %5456 = vmatprep.subr.mxu0 0.0
  %5457 = vmatpush1.msra.mxu0 0.0
  %5458 = vmatprep.subr.mxu0 0.0
  %5459 = vmatpush1.msra.mxu0 0.0
  %5460 = vmatprep.subr.mxu0 0.0
  %5461 = vmatpush1.msra.mxu0 0.0
  %5462 = vmatprep.subr.mxu0 0.0
  %5463 = vmatpush1.msra.mxu0 0.0
  %5464 = vmatprep.subr.mxu0 0.0
  %5465 = vmatpush1.msra.mxu0 0.0
  %5466 = vmatprep.subr.mxu0 0.0
  %5467 = vmatpush1.msra.mxu0 0.0
  %5468 = vmatprep.subr.mxu0 0.0
  %5469 = vmatpush1.msra.mxu0 0.0
  %5470 = vmatprep.subr.mxu0 0.0
  %5471 = vmatpush1.msra.mxu0 0.0
  %5472 = vmatprep.subr.mxu0 0.0
  %5473 = vmatpush1.msra.mxu0 0.0
  %5474 = vmatprep.subr.mxu0 0.0
  %5475 = vmatpush1.msra.mxu0 0.0
  %5476 = vmatprep.subr.mxu0 0.0
  %5477 = vmatpush1.msra.mxu0 0.0
  %5478 = vmatprep.subr.mxu0 0.0
  %5479 = vmatpush1.msra.mxu0 0.0
  %5480 = vmatprep.subr.mxu0 0.0
  %5481 = vmatpush1.msra.mxu0 0.0
  %5482 = vmatprep.subr.mxu0 0.0
  %5483 = vmatpush1.msra.mxu0 0.0
  %5484 = vmatprep.subr.mxu0 0.0
  %5485 = vmatpush1.msra.mxu0 0.0
  %5486 = vmatprep.subr.mxu0 0.0
  %5487 = vmatpush1.msra.mxu0 0.0
  %5488 = vmatprep.subr.mxu0 0.0
  %5489 = vmatpush1.msra.mxu0 0.0
  %5490 = vmatprep.subr.mxu0 0.0
  %5491 = vmatpush1.msra.mxu0 0.0
  %5492 = vmatprep.subr.mxu0 0.0
  %5493 = vmatpush1.msra.mxu0 0.0
  %5494 = vmatprep.mubr.f32.mxu0 0.0
  %v5495 = vand.u32 %v774, 4294901760
  %v5496 = vsub.f32 %v774, %v5495
  %5497 = vmatmul.mubr.f32.gmra.mrb[0].mxu0 %v5496
  %v5498 = vpop.f32.mrb[0].mxu0
  %v5499 = vadd.f32 %v5401, %v5498
  %v5500 = vpop.f32.mrb[0].mxu0
  %5501 = vmatprep.mubr.f32.mxu0 0.0
  %v5502 = vand.u32 %v777, 4294901760
  %v5503 = vsub.f32 %v777, %v5502
  %5504 = vmatmul.mubr.f32.gmra.mrb[0].mxu0 %v5503
  %v5505 = vpop.f32.mrb[0].mxu0
  %v5506 = vadd.f32 %v5407, %v5505
  %v5507 = vpop.f32.mrb[0].mxu0
  %5508 = vmatprep.mubr.f32.mxu0 0.0
  %v5509 = vand.u32 %v780, 4294901760
  %v5510 = vsub.f32 %v780, %v5509
  %5511 = vmatmul.mubr.f32.gmra.mrb[0].mxu0 %v5510
  %v5512 = vpop.f32.mrb[0].mxu0
  %v5513 = vadd.f32 %v5413, %v5512
  %v5514 = vpop.f32.mrb[0].mxu0
  %5515 = vmatprep.mubr.f32.mxu0 0.0
  %v5516 = vand.u32 %v783, 4294901760
  %v5517 = vsub.f32 %v783, %v5516
  %5518 = vmatmul.mubr.f32.gmra.mrb[0].mxu0 %v5517
  %v5519 = vpop.f32.mrb[0].mxu0
  %v5520 = vadd.f32 %v5419, %v5519
  %v5521 = vpop.f32.mrb[0].mxu0
  %5522 = vdwg.mxu0
  %5523 = vmatprep.subr.mxu0 0.0
  %v5524 = vand.u32 %v5177, 4294901760
  %5525 = vmatpush1.msra.mxu0 %v5524
  %5526 = vmatprep.subr.mxu0 0.0
  %v5527 = vand.u32 %v5179, 4294901760
  %5528 = vmatpush1.msra.mxu0 %v5527
  %5529 = vmatprep.subr.mxu0 0.0
  %v5530 = vand.u32 %v5181, 4294901760
  %5531 = vmatpush1.msra.mxu0 %v5530
  %5532 = vmatprep.subr.mxu0 0.0
  %v5533 = vand.u32 %v5183, 4294901760
  %5534 = vmatpush1.msra.mxu0 %v5533
  %5535 = vmatprep.subr.mxu0 0.0
  %5536 = vmatpush1.msra.mxu0 0.0
  %5537 = vmatprep.subr.mxu0 0.0
  %5538 = vmatpush1.msra.mxu0 0.0
  %5539 = vmatprep.subr.mxu0 0.0
  %5540 = vmatpush1.msra.mxu0 0.0
  %5541 = vmatprep.subr.mxu0 0.0
  %5542 = vmatpush1.msra.mxu0 0.0
  %5543 = vmatprep.subr.mxu0 0.0
  %5544 = vmatpush1.msra.mxu0 0.0
  %5545 = vmatprep.subr.mxu0 0.0
  %5546 = vmatpush1.msra.mxu0 0.0
  %5547 = vmatprep.subr.mxu0 0.0
  %5548 = vmatpush1.msra.mxu0 0.0
  %5549 = vmatprep.subr.mxu0 0.0
  %5550 = vmatpush1.msra.mxu0 0.0
  %5551 = vmatprep.subr.mxu0 0.0
  %5552 = vmatpush1.msra.mxu0 0.0
  %5553 = vmatprep.subr.mxu0 0.0
  %5554 = vmatpush1.msra.mxu0 0.0
  %5555 = vmatprep.subr.mxu0 0.0
  %5556 = vmatpush1.msra.mxu0 0.0
  %5557 = vmatprep.subr.mxu0 0.0
  %5558 = vmatpush1.msra.mxu0 0.0
  %5559 = vmatprep.subr.mxu0 0.0
  %5560 = vmatpush1.msra.mxu0 0.0
  %5561 = vmatprep.subr.mxu0 0.0
  %5562 = vmatpush1.msra.mxu0 0.0
  %5563 = vmatprep.subr.mxu0 0.0
  %5564 = vmatpush1.msra.mxu0 0.0
  %5565 = vmatprep.subr.mxu0 0.0
  %5566 = vmatpush1.msra.mxu0 0.0
  %5567 = vmatprep.subr.mxu0 0.0
  %5568 = vmatpush1.msra.mxu0 0.0
  %5569 = vmatprep.subr.mxu0 0.0
  %5570 = vmatpush1.msra.mxu0 0.0
  %5571 = vmatprep.subr.mxu0 0.0
  %5572 = vmatpush1.msra.mxu0 0.0
  %5573 = vmatprep.subr.mxu0 0.0
  %5574 = vmatpush1.msra.mxu0 0.0
  %5575 = vmatprep.subr.mxu0 0.0
  %5576 = vmatpush1.msra.mxu0 0.0
  %5577 = vmatprep.subr.mxu0 0.0
  %5578 = vmatpush1.msra.mxu0 0.0
  %5579 = vmatprep.subr.mxu0 0.0
  %5580 = vmatpush1.msra.mxu0 0.0
  %5581 = vmatprep.subr.mxu0 0.0
  %5582 = vmatpush1.msra.mxu0 0.0
  %5583 = vmatprep.subr.mxu0 0.0
  %5584 = vmatpush1.msra.mxu0 0.0
  %5585 = vmatprep.subr.mxu0 0.0
  %5586 = vmatpush1.msra.mxu0 0.0
  %5587 = vmatprep.subr.mxu0 0.0
  %5588 = vmatpush1.msra.mxu0 0.0
  %5589 = vmatprep.subr.mxu0 0.0
  %5590 = vmatpush1.msra.mxu0 0.0
  %5591 = vmatprep.mubr.f32.mxu0 0.0
  %v5592 = vand.u32 %v774, 4294901760
  %v5593 = vsub.f32 %v774, %v5592
  %v5594 = vand.u32 %v5593, 4294901760
  %5595 = vmatmul.mubr.f32.gmra.mrb[0].mxu0 %v5594
  %v5596 = vpop.f32.mrb[0].mxu0
  %v5597 = vadd.f32 %v5499, %v5596
  %v5598 = vpop.f32.mrb[0].mxu0
  %5599 = vmatprep.mubr.f32.mxu0 0.0
  %v5600 = vand.u32 %v777, 4294901760
  %v5601 = vsub.f32 %v777, %v5600
  %v5602 = vand.u32 %v5601, 4294901760
  %5603 = vmatmul.mubr.f32.gmra.mrb[0].mxu0 %v5602
  %v5604 = vpop.f32.mrb[0].mxu0
  %v5605 = vadd.f32 %v5506, %v5604
  %v5606 = vpop.f32.mrb[0].mxu0
  %5607 = vmatprep.mubr.f32.mxu0 0.0
  %v5608 = vand.u32 %v780, 4294901760
  %v5609 = vsub.f32 %v780, %v5608
  %v5610 = vand.u32 %v5609, 4294901760
  %5611 = vmatmul.mubr.f32.gmra.mrb[0].mxu0 %v5610
  %v5612 = vpop.f32.mrb[0].mxu0
  %v5613 = vadd.f32 %v5513, %v5612
  %v5614 = vpop.f32.mrb[0].mxu0
  %5615 = vmatprep.mubr.f32.mxu0 0.0
  %v5616 = vand.u32 %v783, 4294901760
  %v5617 = vsub.f32 %v783, %v5616
  %v5618 = vand.u32 %v5617, 4294901760
  %5619 = vmatmul.mubr.f32.gmra.mrb[0].mxu0 %v5618
  %v5620 = vpop.f32.mrb[0].mxu0
  %v5621 = vadd.f32 %v5520, %v5620
  %v5622 = vpop.f32.mrb[0].mxu0
  %5623 = vdwg.mxu0
  %5624 = vmatprep.subr.mxu0 0.0
  %v5625 = vand.u32 %v5177, 4294901760
  %v5626 = vsub.f32 %v5177, %v5625
  %v5627 = vand.u32 %v5626, 4294901760
  %5628 = vmatpush1.msra.mxu0 %v5627
  %5629 = vmatprep.subr.mxu0 0.0
  %v5630 = vand.u32 %v5179, 4294901760
  %v5631 = vsub.f32 %v5179, %v5630
  %v5632 = vand.u32 %v5631, 4294901760
  %5633 = vmatpush1.msra.mxu0 %v5632
  %5634 = vmatprep.subr.mxu0 0.0
  %v5635 = vand.u32 %v5181, 4294901760
  %v5636 = vsub.f32 %v5181, %v5635
  %v5637 = vand.u32 %v5636, 4294901760
  %5638 = vmatpush1.msra.mxu0 %v5637
  %5639 = vmatprep.subr.mxu0 0.0
  %v5640 = vand.u32 %v5183, 4294901760
  %v5641 = vsub.f32 %v5183, %v5640
  %v5642 = vand.u32 %v5641, 4294901760
  %5643 = vmatpush1.msra.mxu0 %v5642
  %5644 = vmatprep.subr.mxu0 0.0
  %5645 = vmatpush1.msra.mxu0 0.0
  %5646 = vmatprep.subr.mxu0 0.0
  %5647 = vmatpush1.msra.mxu0 0.0
  %5648 = vmatprep.subr.mxu0 0.0
  %5649 = vmatpush1.msra.mxu0 0.0
  %5650 = vmatprep.subr.mxu0 0.0
  %5651 = vmatpush1.msra.mxu0 0.0
  %5652 = vmatprep.subr.mxu0 0.0
  %5653 = vmatpush1.msra.mxu0 0.0
  %5654 = vmatprep.subr.mxu0 0.0
  %5655 = vmatpush1.msra.mxu0 0.0
  %5656 = vmatprep.subr.mxu0 0.0
  %5657 = vmatpush1.msra.mxu0 0.0
  %5658 = vmatprep.subr.mxu0 0.0
  %5659 = vmatpush1.msra.mxu0 0.0
  %5660 = vmatprep.subr.mxu0 0.0
  %5661 = vmatpush1.msra.mxu0 0.0
  %5662 = vmatprep.subr.mxu0 0.0
  %5663 = vmatpush1.msra.mxu0 0.0
  %5664 = vmatprep.subr.mxu0 0.0
  %5665 = vmatpush1.msra.mxu0 0.0
  %5666 = vmatprep.subr.mxu0 0.0
  %5667 = vmatpush1.msra.mxu0 0.0
  %5668 = vmatprep.subr.mxu0 0.0
  %5669 = vmatpush1.msra.mxu0 0.0
  %5670 = vmatprep.subr.mxu0 0.0
  %5671 = vmatpush1.msra.mxu0 0.0
  %5672 = vmatprep.subr.mxu0 0.0
  %5673 = vmatpush1.msra.mxu0 0.0
  %5674 = vmatprep.subr.mxu0 0.0
  %5675 = vmatpush1.msra.mxu0 0.0
  %5676 = vmatprep.subr.mxu0 0.0
  %5677 = vmatpush1.msra.mxu0 0.0
  %5678 = vmatprep.subr.mxu0 0.0
  %5679 = vmatpush1.msra.mxu0 0.0
  %5680 = vmatprep.subr.mxu0 0.0
  %5681 = vmatpush1.msra.mxu0 0.0
  %5682 = vmatprep.subr.mxu0 0.0
  %5683 = vmatpush1.msra.mxu0 0.0
  %5684 = vmatprep.subr.mxu0 0.0
  %5685 = vmatpush1.msra.mxu0 0.0
  %5686 = vmatprep.subr.mxu0 0.0
  %5687 = vmatpush1.msra.mxu0 0.0
  %5688 = vmatprep.subr.mxu0 0.0
  %5689 = vmatpush1.msra.mxu0 0.0
  %5690 = vmatprep.subr.mxu0 0.0
  %5691 = vmatpush1.msra.mxu0 0.0
  %5692 = vmatprep.subr.mxu0 0.0
  %5693 = vmatpush1.msra.mxu0 0.0
  %5694 = vmatprep.subr.mxu0 0.0
  %5695 = vmatpush1.msra.mxu0 0.0
  %5696 = vmatprep.subr.mxu0 0.0
  %5697 = vmatpush1.msra.mxu0 0.0
  %5698 = vmatprep.subr.mxu0 0.0
  %5699 = vmatpush1.msra.mxu0 0.0
  %5700 = vmatprep.mubr.f32.mxu0 0.0
  %v5701 = vand.u32 %v774, 4294901760
  %5702 = vmatmul.mubr.f32.gmra.mrb[0].mxu0 %v5701
  %v5703 = vpop.f32.mrb[0].mxu0
  %v5704 = vadd.f32 %v5597, %v5703
  %v5705 = vpop.f32.mrb[0].mxu0
  %5706 = vmatprep.mubr.f32.mxu0 0.0
  %v5707 = vand.u32 %v777, 4294901760
  %5708 = vmatmul.mubr.f32.gmra.mrb[0].mxu0 %v5707
  %v5709 = vpop.f32.mrb[0].mxu0
  %v5710 = vadd.f32 %v5605, %v5709
  %v5711 = vpop.f32.mrb[0].mxu0
  %5712 = vmatprep.mubr.f32.mxu0 0.0
  %v5713 = vand.u32 %v780, 4294901760
  %5714 = vmatmul.mubr.f32.gmra.mrb[0].mxu0 %v5713
  %v5715 = vpop.f32.mrb[0].mxu0
  %v5716 = vadd.f32 %v5613, %v5715
  %v5717 = vpop.f32.mrb[0].mxu0
  %5718 = vmatprep.mubr.f32.mxu0 0.0
  %v5719 = vand.u32 %v783, 4294901760
  %5720 = vmatmul.mubr.f32.gmra.mrb[0].mxu0 %v5719
  %v5721 = vpop.f32.mrb[0].mxu0
  %v5722 = vadd.f32 %v5621, %v5721
  %v5723 = vpop.f32.mrb[0].mxu0
  %5724 = vdwg.mxu0
  %5725 = vmatprep.subr.mxu0 0.0
  %v5726 = vand.u32 %v5177, 4294901760
  %5727 = vmatpush1.msra.mxu0 %v5726
  %5728 = vmatprep.subr.mxu0 0.0
  %v5729 = vand.u32 %v5179, 4294901760
  %5730 = vmatpush1.msra.mxu0 %v5729
  %5731 = vmatprep.subr.mxu0 0.0
  %v5732 = vand.u32 %v5181, 4294901760
  %5733 = vmatpush1.msra.mxu0 %v5732
  %5734 = vmatprep.subr.mxu0 0.0
  %v5735 = vand.u32 %v5183, 4294901760
  %5736 = vmatpush1.msra.mxu0 %v5735
  %5737 = vmatprep.subr.mxu0 0.0
  %5738 = vmatpush1.msra.mxu0 0.0
  %5739 = vmatprep.subr.mxu0 0.0
  %5740 = vmatpush1.msra.mxu0 0.0
  %5741 = vmatprep.subr.mxu0 0.0
  %5742 = vmatpush1.msra.mxu0 0.0
  %5743 = vmatprep.subr.mxu0 0.0
  %5744 = vmatpush1.msra.mxu0 0.0
  %5745 = vmatprep.subr.mxu0 0.0
  %5746 = vmatpush1.msra.mxu0 0.0
  %5747 = vmatprep.subr.mxu0 0.0
  %5748 = vmatpush1.msra.mxu0 0.0
  %5749 = vmatprep.subr.mxu0 0.0
  %5750 = vmatpush1.msra.mxu0 0.0
  %5751 = vmatprep.subr.mxu0 0.0
  %5752 = vmatpush1.msra.mxu0 0.0
  %5753 = vmatprep.subr.mxu0 0.0
  %5754 = vmatpush1.msra.mxu0 0.0
  %5755 = vmatprep.subr.mxu0 0.0
  %5756 = vmatpush1.msra.mxu0 0.0
  %5757 = vmatprep.subr.mxu0 0.0
  %5758 = vmatpush1.msra.mxu0 0.0
  %5759 = vmatprep.subr.mxu0 0.0
  %5760 = vmatpush1.msra.mxu0 0.0
  %5761 = vmatprep.subr.mxu0 0.0
  %5762 = vmatpush1.msra.mxu0 0.0
  %5763 = vmatprep.subr.mxu0 0.0
  %5764 = vmatpush1.msra.mxu0 0.0
  %5765 = vmatprep.subr.mxu0 0.0
  %5766 = vmatpush1.msra.mxu0 0.0
  %5767 = vmatprep.subr.mxu0 0.0
  %5768 = vmatpush1.msra.mxu0 0.0
  %5769 = vmatprep.subr.mxu0 0.0
  %5770 = vmatpush1.msra.mxu0 0.0
  %5771 = vmatprep.subr.mxu0 0.0
  %5772 = vmatpush1.msra.mxu0 0.0
  %5773 = vmatprep.subr.mxu0 0.0
  %5774 = vmatpush1.msra.mxu0 0.0
  %5775 = vmatprep.subr.mxu0 0.0
  %5776 = vmatpush1.msra.mxu0 0.0
  %5777 = vmatprep.subr.mxu0 0.0
  %5778 = vmatpush1.msra.mxu0 0.0
  %5779 = vmatprep.subr.mxu0 0.0
  %5780 = vmatpush1.msra.mxu0 0.0
  %5781 = vmatprep.subr.mxu0 0.0
  %5782 = vmatpush1.msra.mxu0 0.0
  %5783 = vmatprep.subr.mxu0 0.0
  %5784 = vmatpush1.msra.mxu0 0.0
  %5785 = vmatprep.subr.mxu0 0.0
  %5786 = vmatpush1.msra.mxu0 0.0
  %5787 = vmatprep.subr.mxu0 0.0
  %5788 = vmatpush1.msra.mxu0 0.0
  %5789 = vmatprep.subr.mxu0 0.0
  %5790 = vmatpush1.msra.mxu0 0.0
  %5791 = vmatprep.subr.mxu0 0.0
  %5792 = vmatpush1.msra.mxu0 0.0
  %5793 = vmatprep.mubr.f32.mxu0 0.0
  %v5794 = vand.u32 %v774, 4294901760
  %5795 = vmatmul.mubr.f32.gmra.mrb[0].mxu0 %v5794
  %v5796 = vpop.f32.mrb[0].mxu0
  %v5797 = vadd.f32 %v5704, %v5796
  %v5798 = vpop.f32.mrb[0].mxu0
  %5799 = vmatprep.mubr.f32.mxu0 0.0
  %v5800 = vand.u32 %v777, 4294901760
  %5801 = vmatmul.mubr.f32.gmra.mrb[0].mxu0 %v5800
  %v5802 = vpop.f32.mrb[0].mxu0
  %v5803 = vadd.f32 %v5710, %v5802
  %v5804 = vpop.f32.mrb[0].mxu0
  %5805 = vmatprep.mubr.f32.mxu0 0.0
  %v5806 = vand.u32 %v780, 4294901760
  %5807 = vmatmul.mubr.f32.gmra.mrb[0].mxu0 %v5806
  %v5808 = vpop.f32.mrb[0].mxu0
  %v5809 = vadd.f32 %v5716, %v5808
  %v5810 = vpop.f32.mrb[0].mxu0
  %5811 = vmatprep.mubr.f32.mxu0 0.0
  %v5812 = vand.u32 %v783, 4294901760
  %5813 = vmatmul.mubr.f32.gmra.mrb[0].mxu0 %v5812
  %v5814 = vpop.f32.mrb[0].mxu0
  %v5815 = vadd.f32 %v5722, %v5814
  %v5816 = vpop.f32.mrb[0].mxu0
  %5817 = vdwg.mxu0
  %v5818 = vadd.f32 %v5797, %v5168
  %v5819 = vadd.f32 %v5803, %v5169
  %v5820 = vadd.f32 %v5809, %v5170
  %v5821 = vadd.f32 %v5815, %v5171
  %v5822 = vxor.u32 %v5818, 2147483648
  %v5823 = vxor.u32 %v5819, 2147483648
  %v5824 = vxor.u32 %v5820, 2147483648
  %v5825 = vxor.u32 %v5821, 2147483648
  %v5826 = vmul.f32 %v5822, 1.442695
  %v5827 = vpow.pop %v5826
  %v5828 = vmul.f32 %v5823, 1.442695
  %v5829 = vpow.pop %v5828
  %v5830 = vmul.f32 %v5824, 1.442695
  %v5831 = vpow.pop %v5830
  %v5832 = vmul.f32 %v5825, 1.442695
  %v5833 = vpow.pop %v5832
  %v5834 = vadd.f32 %v5827, 1.0
  %v5835 = vadd.f32 %v5829, 1.0
  %v5836 = vadd.f32 %v5831, 1.0
  %v5837 = vadd.f32 %v5833, 1.0
  %v5838 = vrcp.pop %v5834
  %v5839 = vmul.f32 1.0, %v5838
  %v5840 = vrcp.pop %v5835
  %v5841 = vmul.f32 1.0, %v5840
  %v5842 = vrcp.pop %v5836
  %v5843 = vmul.f32 1.0, %v5842
  %v5844 = vrcp.pop %v5837
  %v5845 = vmul.f32 1.0, %v5844
  %5850 = vrot.lane.b32.xlu0 %v5168, 96
  %v5851 = vpop.permute.xlu0 %5850
  %5852 = vrot.lane.b32.xlu0 %v5169, 96
  %v5853 = vpop.permute.xlu0 %5852
  %5854 = vrot.lane.b32.xlu0 %v5170, 96
  %v5855 = vpop.permute.xlu0 %5854
  %5856 = vrot.lane.b32.xlu0 %v5171, 96
  %v5857 = vpop.permute.xlu0 %5856
  %v5862 = vadd.f32 %v5797, %v5851
  %v5863 = vadd.f32 %v5803, %v5853
  %v5864 = vadd.f32 %v5809, %v5855
  %v5865 = vadd.f32 %v5815, %v5857
  %v5866 = vxor.u32 %v5862, 2147483648
  %v5867 = vxor.u32 %v5863, 2147483648
  %v5868 = vxor.u32 %v5864, 2147483648
  %v5869 = vxor.u32 %v5865, 2147483648
  %v5870 = vmul.f32 %v5866, 1.442695
  %v5871 = vpow.pop %v5870
  %v5872 = vmul.f32 %v5867, 1.442695
  %v5873 = vpow.pop %v5872
  %v5874 = vmul.f32 %v5868, 1.442695
  %v5875 = vpow.pop %v5874
  %v5876 = vmul.f32 %v5869, 1.442695
  %v5877 = vpow.pop %v5876
  %v5878 = vadd.f32 %v5871, 1.0
  %v5879 = vadd.f32 %v5873, 1.0
  %v5880 = vadd.f32 %v5875, 1.0
  %v5881 = vadd.f32 %v5877, 1.0
  %v5882 = vrcp.pop %v5878
  %v5883 = vmul.f32 1.0, %v5882
  %v5884 = vrcp.pop %v5879
  %v5885 = vmul.f32 1.0, %v5884
  %v5886 = vrcp.pop %v5880
  %v5887 = vmul.f32 1.0, %v5886
  %v5888 = vrcp.pop %v5881
  %v5889 = vmul.f32 1.0, %v5888
  %5890 = vrot.lane.b32.xlu0 %v5168, 64
  %v5891 = vpop.permute.xlu0 %5890
  %5892 = vrot.lane.b32.xlu0 %v5169, 64
  %v5893 = vpop.permute.xlu0 %5892
  %5894 = vrot.lane.b32.xlu0 %v5170, 64
  %v5895 = vpop.permute.xlu0 %5894
  %5896 = vrot.lane.b32.xlu0 %v5171, 64
  %v5897 = vpop.permute.xlu0 %5896
  %v5902 = vmul.f32 %v5839, %v5891
  %v5903 = vmul.f32 %v5841, %v5893
  %v5904 = vmul.f32 %v5843, %v5895
  %v5905 = vmul.f32 %v5845, %v5897
  %v5906 = vadd.f32 %v5797, %v5902
  %v5907 = vadd.f32 %v5803, %v5903
  %v5908 = vadd.f32 %v5809, %v5904
  %v5909 = vadd.f32 %v5815, %v5905
  %v5910 = vtanh.pop %v5906
  %v5911 = vtanh.pop %v5907
  %v5912 = vtanh.pop %v5908
  %v5913 = vtanh.pop %v5909
  %v5914 = vsub.f32 1.0, %v5883
  %v5915 = vsub.f32 1.0, %v5885
  %v5916 = vsub.f32 1.0, %v5887
  %v5917 = vsub.f32 1.0, %v5889
  %v5918 = vmul.f32 %v5914, %v5910
  %v5919 = vmul.f32 %v5915, %v5911
  %v5920 = vmul.f32 %v5916, %v5912
  %v5921 = vmul.f32 %v5917, %v5913
  %v5922 = vmul.f32 %v5883, %v4453
  %v5923 = vmul.f32 %v5885, %v4454
  %v5924 = vmul.f32 %v5887, %v4455
  %v5925 = vmul.f32 %v5889, %v4456
  %v5926 = vadd.f32 %v5918, %v5922
  %v5927 = vadd.f32 %v5919, %v5923
  %v5928 = vadd.f32 %v5920, %v5924
  %v5929 = vadd.f32 %v5921, %v5925
  %v5931 = vsel %vm35, %v5926, 0
  %v5934 = vsel %vm35, %v5927, 0
  %v5937 = vsel %vm35, %v5928, 0
  %v5940 = vsel %vm35, %v5929, 0
  %v5942 = vand.u32 %v19, 4294901760
  %5943 = vmatprep.subr.mxu0 %v5942
  %v5944 = vand.u32 %v18, 4294901760
  %5945 = vmatpush1.msra.mxu0 %v5944
  %v5946 = vand.u32 %v21, 4294901760
  %5947 = vmatprep.subr.mxu0 %v5946
  %v5948 = vand.u32 %v20, 4294901760
  %5949 = vmatpush1.msra.mxu0 %v5948
  %v5950 = vand.u32 %v23, 4294901760
  %5951 = vmatprep.subr.mxu0 %v5950
  %v5952 = vand.u32 %v22, 4294901760
  %5953 = vmatpush1.msra.mxu0 %v5952
  %v5954 = vand.u32 %v25, 4294901760
  %5955 = vmatprep.subr.mxu0 %v5954
  %v5956 = vand.u32 %v24, 4294901760
  %5957 = vmatpush1.msra.mxu0 %v5956
  %5958 = vmatprep.subr.mxu0 0.0
  %5959 = vmatpush1.msra.mxu0 0.0
  %5960 = vmatprep.subr.mxu0 0.0
  %5961 = vmatpush1.msra.mxu0 0.0
  %5962 = vmatprep.subr.mxu0 0.0
  %5963 = vmatpush1.msra.mxu0 0.0
  %5964 = vmatprep.subr.mxu0 0.0
  %5965 = vmatpush1.msra.mxu0 0.0
  %5966 = vmatprep.subr.mxu0 0.0
  %5967 = vmatpush1.msra.mxu0 0.0
  %5968 = vmatprep.subr.mxu0 0.0
  %5969 = vmatpush1.msra.mxu0 0.0
  %5970 = vmatprep.subr.mxu0 0.0
  %5971 = vmatpush1.msra.mxu0 0.0
  %5972 = vmatprep.subr.mxu0 0.0
  %5973 = vmatpush1.msra.mxu0 0.0
  %5974 = vmatprep.subr.mxu0 0.0
  %5975 = vmatpush1.msra.mxu0 0.0
  %5976 = vmatprep.subr.mxu0 0.0
  %5977 = vmatpush1.msra.mxu0 0.0
  %5978 = vmatprep.subr.mxu0 0.0
  %5979 = vmatpush1.msra.mxu0 0.0
  %5980 = vmatprep.subr.mxu0 0.0
  %5981 = vmatpush1.msra.mxu0 0.0
  %5982 = vmatprep.subr.mxu0 0.0
  %5983 = vmatpush1.msra.mxu0 0.0
  %5984 = vmatprep.subr.mxu0 0.0
  %5985 = vmatpush1.msra.mxu0 0.0
  %5986 = vmatprep.subr.mxu0 0.0
  %5987 = vmatpush1.msra.mxu0 0.0
  %5988 = vmatprep.subr.mxu0 0.0
  %5989 = vmatpush1.msra.mxu0 0.0
  %5990 = vmatprep.subr.mxu0 0.0
  %5991 = vmatpush1.msra.mxu0 0.0
  %5992 = vmatprep.subr.mxu0 0.0
  %5993 = vmatpush1.msra.mxu0 0.0
  %5994 = vmatprep.subr.mxu0 0.0
  %5995 = vmatpush1.msra.mxu0 0.0
  %5996 = vmatprep.subr.mxu0 0.0
  %5997 = vmatpush1.msra.mxu0 0.0
  %5998 = vmatprep.subr.mxu0 0.0
  %5999 = vmatpush1.msra.mxu0 0.0
  %6000 = vmatprep.subr.mxu0 0.0
  %6001 = vmatpush1.msra.mxu0 0.0
  %6002 = vmatprep.subr.mxu0 0.0
  %6003 = vmatpush1.msra.mxu0 0.0
  %6004 = vmatprep.subr.mxu0 0.0
  %6005 = vmatpush1.msra.mxu0 0.0
  %6006 = vmatprep.subr.mxu0 0.0
  %6007 = vmatpush1.msra.mxu0 0.0
  %6008 = vmatprep.subr.mxu0 0.0
  %6009 = vmatpush1.msra.mxu0 0.0
  %6010 = vmatprep.subr.mxu0 0.0
  %6011 = vmatpush1.msra.mxu0 0.0
  %6012 = vmatprep.subr.mxu0 0.0
  %6013 = vmatpush1.msra.mxu0 0.0
  %6014 = vmatprep.mubr.f32.mxu0 0.0
  %v6015 = vand.u32 %v5931, 4294901760
  %v6016 = vsub.f32 %v5931, %v6015
  %v6017 = vand.u32 %v6016, 4294901760
  %v6018 = vsub.f32 %v6016, %v6017
  %v6019 = vand.u32 %v6018, 4294901760
  %6020 = vmatmul.mubr.f32.gmra.mrb[0].mxu0 %v6019
  %v6021 = vpop.f32.mrb[0].mxu0
  %v6022 = vadd.f32 0.0, %v6021
  %v6023 = vpop.f32.mrb[0].mxu0
  %v6024 = vadd.f32 0.0, %v6023
  %6025 = vmatprep.mubr.f32.mxu0 0.0
  %v6026 = vand.u32 %v5934, 4294901760
  %v6027 = vsub.f32 %v5934, %v6026
  %v6028 = vand.u32 %v6027, 4294901760
  %v6029 = vsub.f32 %v6027, %v6028
  %v6030 = vand.u32 %v6029, 4294901760
  %6031 = vmatmul.mubr.f32.gmra.mrb[0].mxu0 %v6030
  %v6032 = vpop.f32.mrb[0].mxu0
  %v6033 = vadd.f32 0.0, %v6032
  %v6034 = vpop.f32.mrb[0].mxu0
  %v6035 = vadd.f32 0.0, %v6034
  %6036 = vmatprep.mubr.f32.mxu0 0.0
  %v6037 = vand.u32 %v5937, 4294901760
  %v6038 = vsub.f32 %v5937, %v6037
  %v6039 = vand.u32 %v6038, 4294901760
  %v6040 = vsub.f32 %v6038, %v6039
  %v6041 = vand.u32 %v6040, 4294901760
  %6042 = vmatmul.mubr.f32.gmra.mrb[0].mxu0 %v6041
  %v6043 = vpop.f32.mrb[0].mxu0
  %v6044 = vadd.f32 0.0, %v6043
  %v6045 = vpop.f32.mrb[0].mxu0
  %v6046 = vadd.f32 0.0, %v6045
  %6047 = vmatprep.mubr.f32.mxu0 0.0
  %v6048 = vand.u32 %v5940, 4294901760
  %v6049 = vsub.f32 %v5940, %v6048
  %v6050 = vand.u32 %v6049, 4294901760
  %v6051 = vsub.f32 %v6049, %v6050
  %v6052 = vand.u32 %v6051, 4294901760
  %6053 = vmatmul.mubr.f32.gmra.mrb[0].mxu0 %v6052
  %v6054 = vpop.f32.mrb[0].mxu0
  %v6055 = vadd.f32 0.0, %v6054
  %v6056 = vpop.f32.mrb[0].mxu0
  %v6057 = vadd.f32 0.0, %v6056
  %6058 = vdwg.mxu0
  %v6059 = vand.u32 %v19, 4294901760
  %v6060 = vsub.f32 %v19, %v6059
  %v6061 = vand.u32 %v6060, 4294901760
  %v6062 = vsub.f32 %v6060, %v6061
  %v6063 = vand.u32 %v6062, 4294901760
  %6064 = vmatprep.subr.mxu0 %v6063
  %v6065 = vand.u32 %v18, 4294901760
  %v6066 = vsub.f32 %v18, %v6065
  %v6067 = vand.u32 %v6066, 4294901760
  %v6068 = vsub.f32 %v6066, %v6067
  %v6069 = vand.u32 %v6068, 4294901760
  %6070 = vmatpush1.msra.mxu0 %v6069
  %v6071 = vand.u32 %v21, 4294901760
  %v6072 = vsub.f32 %v21, %v6071
  %v6073 = vand.u32 %v6072, 4294901760
  %v6074 = vsub.f32 %v6072, %v6073
  %v6075 = vand.u32 %v6074, 4294901760
  %6076 = vmatprep.subr.mxu0 %v6075
  %v6077 = vand.u32 %v20, 4294901760
  %v6078 = vsub.f32 %v20, %v6077
  %v6079 = vand.u32 %v6078, 4294901760
  %v6080 = vsub.f32 %v6078, %v6079
  %v6081 = vand.u32 %v6080, 4294901760
  %6082 = vmatpush1.msra.mxu0 %v6081
  %v6083 = vand.u32 %v23, 4294901760
  %v6084 = vsub.f32 %v23, %v6083
  %v6085 = vand.u32 %v6084, 4294901760
  %v6086 = vsub.f32 %v6084, %v6085
  %v6087 = vand.u32 %v6086, 4294901760
  %6088 = vmatprep.subr.mxu0 %v6087
  %v6089 = vand.u32 %v22, 4294901760
  %v6090 = vsub.f32 %v22, %v6089
  %v6091 = vand.u32 %v6090, 4294901760
  %v6092 = vsub.f32 %v6090, %v6091
  %v6093 = vand.u32 %v6092, 4294901760
  %6094 = vmatpush1.msra.mxu0 %v6093
  %v6095 = vand.u32 %v25, 4294901760
  %v6096 = vsub.f32 %v25, %v6095
  %v6097 = vand.u32 %v6096, 4294901760
  %v6098 = vsub.f32 %v6096, %v6097
  %v6099 = vand.u32 %v6098, 4294901760
  %6100 = vmatprep.subr.mxu0 %v6099
  %v6101 = vand.u32 %v24, 4294901760
  %v6102 = vsub.f32 %v24, %v6101
  %v6103 = vand.u32 %v6102, 4294901760
  %v6104 = vsub.f32 %v6102, %v6103
  %v6105 = vand.u32 %v6104, 4294901760
  %6106 = vmatpush1.msra.mxu0 %v6105
  %6107 = vmatprep.subr.mxu0 0.0
  %6108 = vmatpush1.msra.mxu0 0.0
  %6109 = vmatprep.subr.mxu0 0.0
  %6110 = vmatpush1.msra.mxu0 0.0
  %6111 = vmatprep.subr.mxu0 0.0
  %6112 = vmatpush1.msra.mxu0 0.0
  %6113 = vmatprep.subr.mxu0 0.0
  %6114 = vmatpush1.msra.mxu0 0.0
  %6115 = vmatprep.subr.mxu0 0.0
  %6116 = vmatpush1.msra.mxu0 0.0
  %6117 = vmatprep.subr.mxu0 0.0
  %6118 = vmatpush1.msra.mxu0 0.0
  %6119 = vmatprep.subr.mxu0 0.0
  %6120 = vmatpush1.msra.mxu0 0.0
  %6121 = vmatprep.subr.mxu0 0.0
  %6122 = vmatpush1.msra.mxu0 0.0
  %6123 = vmatprep.subr.mxu0 0.0
  %6124 = vmatpush1.msra.mxu0 0.0
  %6125 = vmatprep.subr.mxu0 0.0
  %6126 = vmatpush1.msra.mxu0 0.0
  %6127 = vmatprep.subr.mxu0 0.0
  %6128 = vmatpush1.msra.mxu0 0.0
  %6129 = vmatprep.subr.mxu0 0.0
  %6130 = vmatpush1.msra.mxu0 0.0
  %6131 = vmatprep.subr.mxu0 0.0
  %6132 = vmatpush1.msra.mxu0 0.0
  %6133 = vmatprep.subr.mxu0 0.0
  %6134 = vmatpush1.msra.mxu0 0.0
  %6135 = vmatprep.subr.mxu0 0.0
  %6136 = vmatpush1.msra.mxu0 0.0
  %6137 = vmatprep.subr.mxu0 0.0
  %6138 = vmatpush1.msra.mxu0 0.0
  %6139 = vmatprep.subr.mxu0 0.0
  %6140 = vmatpush1.msra.mxu0 0.0
  %6141 = vmatprep.subr.mxu0 0.0
  %6142 = vmatpush1.msra.mxu0 0.0
  %6143 = vmatprep.subr.mxu0 0.0
  %6144 = vmatpush1.msra.mxu0 0.0
  %6145 = vmatprep.subr.mxu0 0.0
  %6146 = vmatpush1.msra.mxu0 0.0
  %6147 = vmatprep.subr.mxu0 0.0
  %6148 = vmatpush1.msra.mxu0 0.0
  %6149 = vmatprep.subr.mxu0 0.0
  %6150 = vmatpush1.msra.mxu0 0.0
  %6151 = vmatprep.subr.mxu0 0.0
  %6152 = vmatpush1.msra.mxu0 0.0
  %6153 = vmatprep.subr.mxu0 0.0
  %6154 = vmatpush1.msra.mxu0 0.0
  %6155 = vmatprep.subr.mxu0 0.0
  %6156 = vmatpush1.msra.mxu0 0.0
  %6157 = vmatprep.subr.mxu0 0.0
  %6158 = vmatpush1.msra.mxu0 0.0
  %6159 = vmatprep.subr.mxu0 0.0
  %6160 = vmatpush1.msra.mxu0 0.0
  %6161 = vmatprep.subr.mxu0 0.0
  %6162 = vmatpush1.msra.mxu0 0.0
  %6163 = vmatprep.mubr.f32.mxu0 0.0
  %v6164 = vand.u32 %v5931, 4294901760
  %6165 = vmatmul.mubr.f32.gmra.mrb[0].mxu0 %v6164
  %v6166 = vpop.f32.mrb[0].mxu0
  %v6167 = vadd.f32 %v6022, %v6166
  %v6168 = vpop.f32.mrb[0].mxu0
  %v6169 = vadd.f32 %v6024, %v6168
  %6170 = vmatprep.mubr.f32.mxu0 0.0
  %v6171 = vand.u32 %v5934, 4294901760
  %6172 = vmatmul.mubr.f32.gmra.mrb[0].mxu0 %v6171
  %v6173 = vpop.f32.mrb[0].mxu0
  %v6174 = vadd.f32 %v6033, %v6173
  %v6175 = vpop.f32.mrb[0].mxu0
  %v6176 = vadd.f32 %v6035, %v6175
  %6177 = vmatprep.mubr.f32.mxu0 0.0
  %v6178 = vand.u32 %v5937, 4294901760
  %6179 = vmatmul.mubr.f32.gmra.mrb[0].mxu0 %v6178
  %v6180 = vpop.f32.mrb[0].mxu0
  %v6181 = vadd.f32 %v6044, %v6180
  %v6182 = vpop.f32.mrb[0].mxu0
  %v6183 = vadd.f32 %v6046, %v6182
  %6184 = vmatprep.mubr.f32.mxu0 0.0
  %v6185 = vand.u32 %v5940, 4294901760
  %6186 = vmatmul.mubr.f32.gmra.mrb[0].mxu0 %v6185
  %v6187 = vpop.f32.mrb[0].mxu0
  %v6188 = vadd.f32 %v6055, %v6187
  %v6189 = vpop.f32.mrb[0].mxu0
  %v6190 = vadd.f32 %v6057, %v6189
  %6191 = vdwg.mxu0
  %v6192 = vand.u32 %v19, 4294901760
  %v6193 = vsub.f32 %v19, %v6192
  %6194 = vmatprep.subr.mxu0 %v6193
  %v6195 = vand.u32 %v18, 4294901760
  %v6196 = vsub.f32 %v18, %v6195
  %6197 = vmatpush1.msra.mxu0 %v6196
  %v6198 = vand.u32 %v21, 4294901760
  %v6199 = vsub.f32 %v21, %v6198
  %6200 = vmatprep.subr.mxu0 %v6199
  %v6201 = vand.u32 %v20, 4294901760
  %v6202 = vsub.f32 %v20, %v6201
  %6203 = vmatpush1.msra.mxu0 %v6202
  %v6204 = vand.u32 %v23, 4294901760
  %v6205 = vsub.f32 %v23, %v6204
  %6206 = vmatprep.subr.mxu0 %v6205
  %v6207 = vand.u32 %v22, 4294901760
  %v6208 = vsub.f32 %v22, %v6207
  %6209 = vmatpush1.msra.mxu0 %v6208
  %v6210 = vand.u32 %v25, 4294901760
  %v6211 = vsub.f32 %v25, %v6210
  %6212 = vmatprep.subr.mxu0 %v6211
  %v6213 = vand.u32 %v24, 4294901760
  %v6214 = vsub.f32 %v24, %v6213
  %6215 = vmatpush1.msra.mxu0 %v6214
  %6216 = vmatprep.subr.mxu0 0.0
  %6217 = vmatpush1.msra.mxu0 0.0
  %6218 = vmatprep.subr.mxu0 0.0
  %6219 = vmatpush1.msra.mxu0 0.0
  %6220 = vmatprep.subr.mxu0 0.0
  %6221 = vmatpush1.msra.mxu0 0.0
  %6222 = vmatprep.subr.mxu0 0.0
  %6223 = vmatpush1.msra.mxu0 0.0
  %6224 = vmatprep.subr.mxu0 0.0
  %6225 = vmatpush1.msra.mxu0 0.0
  %6226 = vmatprep.subr.mxu0 0.0
  %6227 = vmatpush1.msra.mxu0 0.0
  %6228 = vmatprep.subr.mxu0 0.0
  %6229 = vmatpush1.msra.mxu0 0.0
  %6230 = vmatprep.subr.mxu0 0.0
  %6231 = vmatpush1.msra.mxu0 0.0
  %6232 = vmatprep.subr.mxu0 0.0
  %6233 = vmatpush1.msra.mxu0 0.0
  %6234 = vmatprep.subr.mxu0 0.0
  %6235 = vmatpush1.msra.mxu0 0.0
  %6236 = vmatprep.subr.mxu0 0.0
  %6237 = vmatpush1.msra.mxu0 0.0
  %6238 = vmatprep.subr.mxu0 0.0
  %6239 = vmatpush1.msra.mxu0 0.0
  %6240 = vmatprep.subr.mxu0 0.0
  %6241 = vmatpush1.msra.mxu0 0.0
  %6242 = vmatprep.subr.mxu0 0.0
  %6243 = vmatpush1.msra.mxu0 0.0
  %6244 = vmatprep.subr.mxu0 0.0
  %6245 = vmatpush1.msra.mxu0 0.0
  %6246 = vmatprep.subr.mxu0 0.0
  %6247 = vmatpush1.msra.mxu0 0.0
  %6248 = vmatprep.subr.mxu0 0.0
  %6249 = vmatpush1.msra.mxu0 0.0
  %6250 = vmatprep.subr.mxu0 0.0
  %6251 = vmatpush1.msra.mxu0 0.0
  %6252 = vmatprep.subr.mxu0 0.0
  %6253 = vmatpush1.msra.mxu0 0.0
  %6254 = vmatprep.subr.mxu0 0.0
  %6255 = vmatpush1.msra.mxu0 0.0
  %6256 = vmatprep.subr.mxu0 0.0
  %6257 = vmatpush1.msra.mxu0 0.0
  %6258 = vmatprep.subr.mxu0 0.0
  %6259 = vmatpush1.msra.mxu0 0.0
  %6260 = vmatprep.subr.mxu0 0.0
  %6261 = vmatpush1.msra.mxu0 0.0
  %6262 = vmatprep.subr.mxu0 0.0
  %6263 = vmatpush1.msra.mxu0 0.0
  %6264 = vmatprep.subr.mxu0 0.0
  %6265 = vmatpush1.msra.mxu0 0.0
  %6266 = vmatprep.subr.mxu0 0.0
  %6267 = vmatpush1.msra.mxu0 0.0
  %6268 = vmatprep.subr.mxu0 0.0
  %6269 = vmatpush1.msra.mxu0 0.0
  %6270 = vmatprep.subr.mxu0 0.0
  %6271 = vmatpush1.msra.mxu0 0.0
  %6272 = vmatprep.mubr.f32.mxu0 0.0
  %v6273 = vand.u32 %v5931, 4294901760
  %v6274 = vsub.f32 %v5931, %v6273
  %6275 = vmatmul.mubr.f32.gmra.mrb[0].mxu0 %v6274
  %v6276 = vpop.f32.mrb[0].mxu0
  %v6277 = vadd.f32 %v6167, %v6276
  %v6278 = vpop.f32.mrb[0].mxu0
  %v6279 = vadd.f32 %v6169, %v6278
  %6280 = vmatprep.mubr.f32.mxu0 0.0
  %v6281 = vand.u32 %v5934, 4294901760
  %v6282 = vsub.f32 %v5934, %v6281
  %6283 = vmatmul.mubr.f32.gmra.mrb[0].mxu0 %v6282
  %v6284 = vpop.f32.mrb[0].mxu0
  %v6285 = vadd.f32 %v6174, %v6284
  %v6286 = vpop.f32.mrb[0].mxu0
  %v6287 = vadd.f32 %v6176, %v6286
  %6288 = vmatprep.mubr.f32.mxu0 0.0
  %v6289 = vand.u32 %v5937, 4294901760
  %v6290 = vsub.f32 %v5937, %v6289
  %6291 = vmatmul.mubr.f32.gmra.mrb[0].mxu0 %v6290
  %v6292 = vpop.f32.mrb[0].mxu0
  %v6293 = vadd.f32 %v6181, %v6292
  %v6294 = vpop.f32.mrb[0].mxu0
  %v6295 = vadd.f32 %v6183, %v6294
  %6296 = vmatprep.mubr.f32.mxu0 0.0
  %v6297 = vand.u32 %v5940, 4294901760
  %v6298 = vsub.f32 %v5940, %v6297
  %6299 = vmatmul.mubr.f32.gmra.mrb[0].mxu0 %v6298
  %v6300 = vpop.f32.mrb[0].mxu0
  %v6301 = vadd.f32 %v6188, %v6300
  %v6302 = vpop.f32.mrb[0].mxu0
  %v6303 = vadd.f32 %v6190, %v6302
  %6304 = vdwg.mxu0
  %v6305 = vand.u32 %v19, 4294901760
  %6306 = vmatprep.subr.mxu0 %v6305
  %v6307 = vand.u32 %v18, 4294901760
  %6308 = vmatpush1.msra.mxu0 %v6307
  %v6309 = vand.u32 %v21, 4294901760
  %6310 = vmatprep.subr.mxu0 %v6309
  %v6311 = vand.u32 %v20, 4294901760
  %6312 = vmatpush1.msra.mxu0 %v6311
  %v6313 = vand.u32 %v23, 4294901760
  %6314 = vmatprep.subr.mxu0 %v6313
  %v6315 = vand.u32 %v22, 4294901760
  %6316 = vmatpush1.msra.mxu0 %v6315
  %v6317 = vand.u32 %v25, 4294901760
  %6318 = vmatprep.subr.mxu0 %v6317
  %v6319 = vand.u32 %v24, 4294901760
  %6320 = vmatpush1.msra.mxu0 %v6319
  %6321 = vmatprep.subr.mxu0 0.0
  %6322 = vmatpush1.msra.mxu0 0.0
  %6323 = vmatprep.subr.mxu0 0.0
  %6324 = vmatpush1.msra.mxu0 0.0
  %6325 = vmatprep.subr.mxu0 0.0
  %6326 = vmatpush1.msra.mxu0 0.0
  %6327 = vmatprep.subr.mxu0 0.0
  %6328 = vmatpush1.msra.mxu0 0.0
  %6329 = vmatprep.subr.mxu0 0.0
  %6330 = vmatpush1.msra.mxu0 0.0
  %6331 = vmatprep.subr.mxu0 0.0
  %6332 = vmatpush1.msra.mxu0 0.0
  %6333 = vmatprep.subr.mxu0 0.0
  %6334 = vmatpush1.msra.mxu0 0.0
  %6335 = vmatprep.subr.mxu0 0.0
  %6336 = vmatpush1.msra.mxu0 0.0
  %6337 = vmatprep.subr.mxu0 0.0
  %6338 = vmatpush1.msra.mxu0 0.0
  %6339 = vmatprep.subr.mxu0 0.0
  %6340 = vmatpush1.msra.mxu0 0.0
  %6341 = vmatprep.subr.mxu0 0.0
  %6342 = vmatpush1.msra.mxu0 0.0
  %6343 = vmatprep.subr.mxu0 0.0
  %6344 = vmatpush1.msra.mxu0 0.0
  %6345 = vmatprep.subr.mxu0 0.0
  %6346 = vmatpush1.msra.mxu0 0.0
  %6347 = vmatprep.subr.mxu0 0.0
  %6348 = vmatpush1.msra.mxu0 0.0
  %6349 = vmatprep.subr.mxu0 0.0
  %6350 = vmatpush1.msra.mxu0 0.0
  %6351 = vmatprep.subr.mxu0 0.0
  %6352 = vmatpush1.msra.mxu0 0.0
  %6353 = vmatprep.subr.mxu0 0.0
  %6354 = vmatpush1.msra.mxu0 0.0
  %6355 = vmatprep.subr.mxu0 0.0
  %6356 = vmatpush1.msra.mxu0 0.0
  %6357 = vmatprep.subr.mxu0 0.0
  %6358 = vmatpush1.msra.mxu0 0.0
  %6359 = vmatprep.subr.mxu0 0.0
  %6360 = vmatpush1.msra.mxu0 0.0
  %6361 = vmatprep.subr.mxu0 0.0
  %6362 = vmatpush1.msra.mxu0 0.0
  %6363 = vmatprep.subr.mxu0 0.0
  %6364 = vmatpush1.msra.mxu0 0.0
  %6365 = vmatprep.subr.mxu0 0.0
  %6366 = vmatpush1.msra.mxu0 0.0
  %6367 = vmatprep.subr.mxu0 0.0
  %6368 = vmatpush1.msra.mxu0 0.0
  %6369 = vmatprep.subr.mxu0 0.0
  %6370 = vmatpush1.msra.mxu0 0.0
  %6371 = vmatprep.subr.mxu0 0.0
  %6372 = vmatpush1.msra.mxu0 0.0
  %6373 = vmatprep.subr.mxu0 0.0
  %6374 = vmatpush1.msra.mxu0 0.0
  %6375 = vmatprep.subr.mxu0 0.0
  %6376 = vmatpush1.msra.mxu0 0.0
  %6377 = vmatprep.mubr.f32.mxu0 0.0
  %v6378 = vand.u32 %v5931, 4294901760
  %v6379 = vsub.f32 %v5931, %v6378
  %v6380 = vand.u32 %v6379, 4294901760
  %6381 = vmatmul.mubr.f32.gmra.mrb[0].mxu0 %v6380
  %v6382 = vpop.f32.mrb[0].mxu0
  %v6383 = vadd.f32 %v6277, %v6382
  %v6384 = vpop.f32.mrb[0].mxu0
  %v6385 = vadd.f32 %v6279, %v6384
  %6386 = vmatprep.mubr.f32.mxu0 0.0
  %v6387 = vand.u32 %v5934, 4294901760
  %v6388 = vsub.f32 %v5934, %v6387
  %v6389 = vand.u32 %v6388, 4294901760
  %6390 = vmatmul.mubr.f32.gmra.mrb[0].mxu0 %v6389
  %v6391 = vpop.f32.mrb[0].mxu0
  %v6392 = vadd.f32 %v6285, %v6391
  %v6393 = vpop.f32.mrb[0].mxu0
  %v6394 = vadd.f32 %v6287, %v6393
  %6395 = vmatprep.mubr.f32.mxu0 0.0
  %v6396 = vand.u32 %v5937, 4294901760
  %v6397 = vsub.f32 %v5937, %v6396
  %v6398 = vand.u32 %v6397, 4294901760
  %6399 = vmatmul.mubr.f32.gmra.mrb[0].mxu0 %v6398
  %v6400 = vpop.f32.mrb[0].mxu0
  %v6401 = vadd.f32 %v6293, %v6400
  %v6402 = vpop.f32.mrb[0].mxu0
  %v6403 = vadd.f32 %v6295, %v6402
  %6404 = vmatprep.mubr.f32.mxu0 0.0
  %v6405 = vand.u32 %v5940, 4294901760
  %v6406 = vsub.f32 %v5940, %v6405
  %v6407 = vand.u32 %v6406, 4294901760
  %6408 = vmatmul.mubr.f32.gmra.mrb[0].mxu0 %v6407
  %v6409 = vpop.f32.mrb[0].mxu0
  %v6410 = vadd.f32 %v6301, %v6409
  %v6411 = vpop.f32.mrb[0].mxu0
  %v6412 = vadd.f32 %v6303, %v6411
  %6413 = vdwg.mxu0
  %v6414 = vand.u32 %v19, 4294901760
  %v6415 = vsub.f32 %v19, %v6414
  %v6416 = vand.u32 %v6415, 4294901760
  %6417 = vmatprep.subr.mxu0 %v6416
  %v6418 = vand.u32 %v18, 4294901760
  %v6419 = vsub.f32 %v18, %v6418
  %v6420 = vand.u32 %v6419, 4294901760
  %6421 = vmatpush1.msra.mxu0 %v6420
  %v6422 = vand.u32 %v21, 4294901760
  %v6423 = vsub.f32 %v21, %v6422
  %v6424 = vand.u32 %v6423, 4294901760
  %6425 = vmatprep.subr.mxu0 %v6424
  %v6426 = vand.u32 %v20, 4294901760
  %v6427 = vsub.f32 %v20, %v6426
  %v6428 = vand.u32 %v6427, 4294901760
  %6429 = vmatpush1.msra.mxu0 %v6428
  %v6430 = vand.u32 %v23, 4294901760
  %v6431 = vsub.f32 %v23, %v6430
  %v6432 = vand.u32 %v6431, 4294901760
  %6433 = vmatprep.subr.mxu0 %v6432
  %v6434 = vand.u32 %v22, 4294901760
  %v6435 = vsub.f32 %v22, %v6434
  %v6436 = vand.u32 %v6435, 4294901760
  %6437 = vmatpush1.msra.mxu0 %v6436
  %v6438 = vand.u32 %v25, 4294901760
  %v6439 = vsub.f32 %v25, %v6438
  %v6440 = vand.u32 %v6439, 4294901760
  %6441 = vmatprep.subr.mxu0 %v6440
  %v6442 = vand.u32 %v24, 4294901760
  %v6443 = vsub.f32 %v24, %v6442
  %v6444 = vand.u32 %v6443, 4294901760
  %6445 = vmatpush1.msra.mxu0 %v6444
  %6446 = vmatprep.subr.mxu0 0.0
  %6447 = vmatpush1.msra.mxu0 0.0
  %6448 = vmatprep.subr.mxu0 0.0
  %6449 = vmatpush1.msra.mxu0 0.0
  %6450 = vmatprep.subr.mxu0 0.0
  %6451 = vmatpush1.msra.mxu0 0.0
  %6452 = vmatprep.subr.mxu0 0.0
  %6453 = vmatpush1.msra.mxu0 0.0
  %6454 = vmatprep.subr.mxu0 0.0
  %6455 = vmatpush1.msra.mxu0 0.0
  %6456 = vmatprep.subr.mxu0 0.0
  %6457 = vmatpush1.msra.mxu0 0.0
  %6458 = vmatprep.subr.mxu0 0.0
  %6459 = vmatpush1.msra.mxu0 0.0
  %6460 = vmatprep.subr.mxu0 0.0
  %6461 = vmatpush1.msra.mxu0 0.0
  %6462 = vmatprep.subr.mxu0 0.0
  %6463 = vmatpush1.msra.mxu0 0.0
  %6464 = vmatprep.subr.mxu0 0.0
  %6465 = vmatpush1.msra.mxu0 0.0
  %6466 = vmatprep.subr.mxu0 0.0
  %6467 = vmatpush1.msra.mxu0 0.0
  %6468 = vmatprep.subr.mxu0 0.0
  %6469 = vmatpush1.msra.mxu0 0.0
  %6470 = vmatprep.subr.mxu0 0.0
  %6471 = vmatpush1.msra.mxu0 0.0
  %6472 = vmatprep.subr.mxu0 0.0
  %6473 = vmatpush1.msra.mxu0 0.0
  %6474 = vmatprep.subr.mxu0 0.0
  %6475 = vmatpush1.msra.mxu0 0.0
  %6476 = vmatprep.subr.mxu0 0.0
  %6477 = vmatpush1.msra.mxu0 0.0
  %6478 = vmatprep.subr.mxu0 0.0
  %6479 = vmatpush1.msra.mxu0 0.0
  %6480 = vmatprep.subr.mxu0 0.0
  %6481 = vmatpush1.msra.mxu0 0.0
  %6482 = vmatprep.subr.mxu0 0.0
  %6483 = vmatpush1.msra.mxu0 0.0
  %6484 = vmatprep.subr.mxu0 0.0
  %6485 = vmatpush1.msra.mxu0 0.0
  %6486 = vmatprep.subr.mxu0 0.0
  %6487 = vmatpush1.msra.mxu0 0.0
  %6488 = vmatprep.subr.mxu0 0.0
  %6489 = vmatpush1.msra.mxu0 0.0
  %6490 = vmatprep.subr.mxu0 0.0
  %6491 = vmatpush1.msra.mxu0 0.0
  %6492 = vmatprep.subr.mxu0 0.0
  %6493 = vmatpush1.msra.mxu0 0.0
  %6494 = vmatprep.subr.mxu0 0.0
  %6495 = vmatpush1.msra.mxu0 0.0
  %6496 = vmatprep.subr.mxu0 0.0
  %6497 = vmatpush1.msra.mxu0 0.0
  %6498 = vmatprep.subr.mxu0 0.0
  %6499 = vmatpush1.msra.mxu0 0.0
  %6500 = vmatprep.subr.mxu0 0.0
  %6501 = vmatpush1.msra.mxu0 0.0
  %6502 = vmatprep.mubr.f32.mxu0 0.0
  %v6503 = vand.u32 %v5931, 4294901760
  %6504 = vmatmul.mubr.f32.gmra.mrb[0].mxu0 %v6503
  %v6505 = vpop.f32.mrb[0].mxu0
  %v6506 = vadd.f32 %v6383, %v6505
  %v6507 = vpop.f32.mrb[0].mxu0
  %v6508 = vadd.f32 %v6385, %v6507
  %6509 = vmatprep.mubr.f32.mxu0 0.0
  %v6510 = vand.u32 %v5934, 4294901760
  %6511 = vmatmul.mubr.f32.gmra.mrb[0].mxu0 %v6510
  %v6512 = vpop.f32.mrb[0].mxu0
  %v6513 = vadd.f32 %v6392, %v6512
  %v6514 = vpop.f32.mrb[0].mxu0
  %v6515 = vadd.f32 %v6394, %v6514
  %6516 = vmatprep.mubr.f32.mxu0 0.0
  %v6517 = vand.u32 %v5937, 4294901760
  %6518 = vmatmul.mubr.f32.gmra.mrb[0].mxu0 %v6517
  %v6519 = vpop.f32.mrb[0].mxu0
  %v6520 = vadd.f32 %v6401, %v6519
  %v6521 = vpop.f32.mrb[0].mxu0
  %v6522 = vadd.f32 %v6403, %v6521
  %6523 = vmatprep.mubr.f32.mxu0 0.0
  %v6524 = vand.u32 %v5940, 4294901760
  %6525 = vmatmul.mubr.f32.gmra.mrb[0].mxu0 %v6524
  %v6526 = vpop.f32.mrb[0].mxu0
  %v6527 = vadd.f32 %v6410, %v6526
  %v6528 = vpop.f32.mrb[0].mxu0
  %v6529 = vadd.f32 %v6412, %v6528
  %6530 = vdwg.mxu0
  %v6531 = vand.u32 %v19, 4294901760
  %6532 = vmatprep.subr.mxu0 %v6531
  %v6533 = vand.u32 %v18, 4294901760
  %6534 = vmatpush1.msra.mxu0 %v6533
  %v6535 = vand.u32 %v21, 4294901760
  %6536 = vmatprep.subr.mxu0 %v6535
  %v6537 = vand.u32 %v20, 4294901760
  %6538 = vmatpush1.msra.mxu0 %v6537
  %v6539 = vand.u32 %v23, 4294901760
  %6540 = vmatprep.subr.mxu0 %v6539
  %v6541 = vand.u32 %v22, 4294901760
  %6542 = vmatpush1.msra.mxu0 %v6541
  %v6543 = vand.u32 %v25, 4294901760
  %6544 = vmatprep.subr.mxu0 %v6543
  %v6545 = vand.u32 %v24, 4294901760
  %6546 = vmatpush1.msra.mxu0 %v6545
  %6547 = vmatprep.subr.mxu0 0.0
  %6548 = vmatpush1.msra.mxu0 0.0
  %6549 = vmatprep.subr.mxu0 0.0
  %6550 = vmatpush1.msra.mxu0 0.0
  %6551 = vmatprep.subr.mxu0 0.0
  %6552 = vmatpush1.msra.mxu0 0.0
  %6553 = vmatprep.subr.mxu0 0.0
  %6554 = vmatpush1.msra.mxu0 0.0
  %6555 = vmatprep.subr.mxu0 0.0
  %6556 = vmatpush1.msra.mxu0 0.0
  %6557 = vmatprep.subr.mxu0 0.0
  %6558 = vmatpush1.msra.mxu0 0.0
  %6559 = vmatprep.subr.mxu0 0.0
  %6560 = vmatpush1.msra.mxu0 0.0
  %6561 = vmatprep.subr.mxu0 0.0
  %6562 = vmatpush1.msra.mxu0 0.0
  %6563 = vmatprep.subr.mxu0 0.0
  %6564 = vmatpush1.msra.mxu0 0.0
  %6565 = vmatprep.subr.mxu0 0.0
  %6566 = vmatpush1.msra.mxu0 0.0
  %6567 = vmatprep.subr.mxu0 0.0
  %6568 = vmatpush1.msra.mxu0 0.0
  %6569 = vmatprep.subr.mxu0 0.0
  %6570 = vmatpush1.msra.mxu0 0.0
  %6571 = vmatprep.subr.mxu0 0.0
  %6572 = vmatpush1.msra.mxu0 0.0
  %6573 = vmatprep.subr.mxu0 0.0
  %6574 = vmatpush1.msra.mxu0 0.0
  %6575 = vmatprep.subr.mxu0 0.0
  %6576 = vmatpush1.msra.mxu0 0.0
  %6577 = vmatprep.subr.mxu0 0.0
  %6578 = vmatpush1.msra.mxu0 0.0
  %6579 = vmatprep.subr.mxu0 0.0
  %6580 = vmatpush1.msra.mxu0 0.0
  %6581 = vmatprep.subr.mxu0 0.0
  %6582 = vmatpush1.msra.mxu0 0.0
  %6583 = vmatprep.subr.mxu0 0.0
  %6584 = vmatpush1.msra.mxu0 0.0
  %6585 = vmatprep.subr.mxu0 0.0
  %6586 = vmatpush1.msra.mxu0 0.0
  %6587 = vmatprep.subr.mxu0 0.0
  %6588 = vmatpush1.msra.mxu0 0.0
  %6589 = vmatprep.subr.mxu0 0.0
  %6590 = vmatpush1.msra.mxu0 0.0
  %6591 = vmatprep.subr.mxu0 0.0
  %6592 = vmatpush1.msra.mxu0 0.0
  %6593 = vmatprep.subr.mxu0 0.0
  %6594 = vmatpush1.msra.mxu0 0.0
  %6595 = vmatprep.subr.mxu0 0.0
  %6596 = vmatpush1.msra.mxu0 0.0
  %6597 = vmatprep.subr.mxu0 0.0
  %6598 = vmatpush1.msra.mxu0 0.0
  %6599 = vmatprep.subr.mxu0 0.0
  %6600 = vmatpush1.msra.mxu0 0.0
  %6601 = vmatprep.subr.mxu0 0.0
  %6602 = vmatpush1.msra.mxu0 0.0
  %6603 = vmatprep.mubr.f32.mxu0 0.0
  %v6604 = vand.u32 %v5931, 4294901760
  %6605 = vmatmul.mubr.f32.gmra.mrb[0].mxu0 %v6604
  %v6606 = vpop.f32.mrb[0].mxu0
  %v6607 = vadd.f32 %v6506, %v6606
  %v6608 = vpop.f32.mrb[0].mxu0
  %v6609 = vadd.f32 %v6508, %v6608
  %6610 = vmatprep.mubr.f32.mxu0 0.0
  %v6611 = vand.u32 %v5934, 4294901760
  %6612 = vmatmul.mubr.f32.gmra.mrb[0].mxu0 %v6611
  %v6613 = vpop.f32.mrb[0].mxu0
  %v6614 = vadd.f32 %v6513, %v6613
  %v6615 = vpop.f32.mrb[0].mxu0
  %v6616 = vadd.f32 %v6515, %v6615
  %6617 = vmatprep.mubr.f32.mxu0 0.0
  %v6618 = vand.u32 %v5937, 4294901760
  %6619 = vmatmul.mubr.f32.gmra.mrb[0].mxu0 %v6618
  %v6620 = vpop.f32.mrb[0].mxu0
  %v6621 = vadd.f32 %v6520, %v6620
  %v6622 = vpop.f32.mrb[0].mxu0
  %v6623 = vadd.f32 %v6522, %v6622
  %6624 = vmatprep.mubr.f32.mxu0 0.0
  %v6625 = vand.u32 %v5940, 4294901760
  %6626 = vmatmul.mubr.f32.gmra.mrb[0].mxu0 %v6625
  %v6627 = vpop.f32.mrb[0].mxu0
  %v6628 = vadd.f32 %v6527, %v6627
  %v6629 = vpop.f32.mrb[0].mxu0
  %v6630 = vadd.f32 %v6529, %v6629
  %6631 = vdwg.mxu0
  %v6632 = vsel %vm31, %v6607, %v6609
  %v6633 = vsel %vm32, %v6614, %v6616
  %v6634 = vsel %vm33, %v6621, %v6623
  %v6635 = vsel %vm34, %v6628, %v6630
  %s6636 = scalar_lea.vmem %s0, 128
  %v6637 = vld [vmem:[%s6636] sm:$0xff]
  %v6638 = vld [vmem:[%s6636 + $0x8] sm:$0xff]
  %v6639 = vld [vmem:[%s6636 + $0x10] sm:$0xff]
  %v6640 = vld [vmem:[%s6636 + $0x18] sm:$0xff]
  %v6641 = vadd.f32 %v6632, %v6637
  %v6642 = vadd.f32 %v6633, %v6638
  %v6643 = vadd.f32 %v6634, %v6639
  %v6644 = vadd.f32 %v6635, %v6640
  %6649 = vrot.lane.b32.xlu0 %v6632, 32
  %v6650 = vpop.permute.xlu0 %6649
  %6651 = vrot.lane.b32.xlu0 %v6633, 32
  %v6652 = vpop.permute.xlu0 %6651
  %6653 = vrot.lane.b32.xlu0 %v6634, 32
  %v6654 = vpop.permute.xlu0 %6653
  %6655 = vrot.lane.b32.xlu0 %v6635, 32
  %v6656 = vpop.permute.xlu0 %6655
  %6665 = vrot.lane.b32.xlu0 %v6637, 32
  %v6666 = vpop.permute.xlu0 %6665
  %6667 = vrot.lane.b32.xlu0 %v6638, 32
  %v6668 = vpop.permute.xlu0 %6667
  %6669 = vrot.lane.b32.xlu0 %v6639, 32
  %v6670 = vpop.permute.xlu0 %6669
  %6671 = vrot.lane.b32.xlu0 %v6640, 32
  %v6672 = vpop.permute.xlu0 %6671
  %6677 = vmatprep.subr.mxu0 0.0
  %v6678 = vand.u32 %v6650, 4294901760
  %6679 = vmatpush1.msra.mxu0 %v6678
  %6680 = vmatprep.subr.mxu0 0.0
  %v6681 = vand.u32 %v6652, 4294901760
  %6682 = vmatpush1.msra.mxu0 %v6681
  %6683 = vmatprep.subr.mxu0 0.0
  %v6684 = vand.u32 %v6654, 4294901760
  %6685 = vmatpush1.msra.mxu0 %v6684
  %6686 = vmatprep.subr.mxu0 0.0
  %v6687 = vand.u32 %v6656, 4294901760
  %6688 = vmatpush1.msra.mxu0 %v6687
  %6689 = vmatprep.subr.mxu0 0.0
  %6690 = vmatpush1.msra.mxu0 0.0
  %6691 = vmatprep.subr.mxu0 0.0
  %6692 = vmatpush1.msra.mxu0 0.0
  %6693 = vmatprep.subr.mxu0 0.0
  %6694 = vmatpush1.msra.mxu0 0.0
  %6695 = vmatprep.subr.mxu0 0.0
  %6696 = vmatpush1.msra.mxu0 0.0
  %6697 = vmatprep.subr.mxu0 0.0
  %6698 = vmatpush1.msra.mxu0 0.0
  %6699 = vmatprep.subr.mxu0 0.0
  %6700 = vmatpush1.msra.mxu0 0.0
  %6701 = vmatprep.subr.mxu0 0.0
  %6702 = vmatpush1.msra.mxu0 0.0
  %6703 = vmatprep.subr.mxu0 0.0
  %6704 = vmatpush1.msra.mxu0 0.0
  %6705 = vmatprep.subr.mxu0 0.0
  %6706 = vmatpush1.msra.mxu0 0.0
  %6707 = vmatprep.subr.mxu0 0.0
  %6708 = vmatpush1.msra.mxu0 0.0
  %6709 = vmatprep.subr.mxu0 0.0
  %6710 = vmatpush1.msra.mxu0 0.0
  %6711 = vmatprep.subr.mxu0 0.0
  %6712 = vmatpush1.msra.mxu0 0.0
  %6713 = vmatprep.subr.mxu0 0.0
  %6714 = vmatpush1.msra.mxu0 0.0
  %6715 = vmatprep.subr.mxu0 0.0
  %6716 = vmatpush1.msra.mxu0 0.0
  %6717 = vmatprep.subr.mxu0 0.0
  %6718 = vmatpush1.msra.mxu0 0.0
  %6719 = vmatprep.subr.mxu0 0.0
  %6720 = vmatpush1.msra.mxu0 0.0
  %6721 = vmatprep.subr.mxu0 0.0
  %6722 = vmatpush1.msra.mxu0 0.0
  %6723 = vmatprep.subr.mxu0 0.0
  %6724 = vmatpush1.msra.mxu0 0.0
  %6725 = vmatprep.subr.mxu0 0.0
  %6726 = vmatpush1.msra.mxu0 0.0
  %6727 = vmatprep.subr.mxu0 0.0
  %6728 = vmatpush1.msra.mxu0 0.0
  %6729 = vmatprep.subr.mxu0 0.0
  %6730 = vmatpush1.msra.mxu0 0.0
  %6731 = vmatprep.subr.mxu0 0.0
  %6732 = vmatpush1.msra.mxu0 0.0
  %6733 = vmatprep.subr.mxu0 0.0
  %6734 = vmatpush1.msra.mxu0 0.0
  %6735 = vmatprep.subr.mxu0 0.0
  %6736 = vmatpush1.msra.mxu0 0.0
  %6737 = vmatprep.subr.mxu0 0.0
  %6738 = vmatpush1.msra.mxu0 0.0
  %6739 = vmatprep.subr.mxu0 0.0
  %6740 = vmatpush1.msra.mxu0 0.0
  %6741 = vmatprep.subr.mxu0 0.0
  %6742 = vmatpush1.msra.mxu0 0.0
  %6743 = vmatprep.subr.mxu0 0.0
  %6744 = vmatpush1.msra.mxu0 0.0
  %6745 = vmatprep.mubr.f32.mxu0 0.0
  %v6746 = vand.u32 %v774, 4294901760
  %v6747 = vsub.f32 %v774, %v6746
  %v6748 = vand.u32 %v6747, 4294901760
  %v6749 = vsub.f32 %v6747, %v6748
  %v6750 = vand.u32 %v6749, 4294901760
  %6751 = vmatmul.mubr.f32.gmra.mrb[0].mxu0 %v6750
  %v6752 = vpop.f32.mrb[0].mxu0
  %v6753 = vadd.f32 %v6666, %v6752
  %v6754 = vpop.f32.mrb[0].mxu0
  %6755 = vmatprep.mubr.f32.mxu0 0.0
  %v6756 = vand.u32 %v777, 4294901760
  %v6757 = vsub.f32 %v777, %v6756
  %v6758 = vand.u32 %v6757, 4294901760
  %v6759 = vsub.f32 %v6757, %v6758
  %v6760 = vand.u32 %v6759, 4294901760
  %6761 = vmatmul.mubr.f32.gmra.mrb[0].mxu0 %v6760
  %v6762 = vpop.f32.mrb[0].mxu0
  %v6763 = vadd.f32 %v6668, %v6762
  %v6764 = vpop.f32.mrb[0].mxu0
  %6765 = vmatprep.mubr.f32.mxu0 0.0
  %v6766 = vand.u32 %v780, 4294901760
  %v6767 = vsub.f32 %v780, %v6766
  %v6768 = vand.u32 %v6767, 4294901760
  %v6769 = vsub.f32 %v6767, %v6768
  %v6770 = vand.u32 %v6769, 4294901760
  %6771 = vmatmul.mubr.f32.gmra.mrb[0].mxu0 %v6770
  %v6772 = vpop.f32.mrb[0].mxu0
  %v6773 = vadd.f32 %v6670, %v6772
  %v6774 = vpop.f32.mrb[0].mxu0
  %6775 = vmatprep.mubr.f32.mxu0 0.0
  %v6776 = vand.u32 %v783, 4294901760
  %v6777 = vsub.f32 %v783, %v6776
  %v6778 = vand.u32 %v6777, 4294901760
  %v6779 = vsub.f32 %v6777, %v6778
  %v6780 = vand.u32 %v6779, 4294901760
  %6781 = vmatmul.mubr.f32.gmra.mrb[0].mxu0 %v6780
  %v6782 = vpop.f32.mrb[0].mxu0
  %v6783 = vadd.f32 %v6672, %v6782
  %v6784 = vpop.f32.mrb[0].mxu0
  %6785 = vdwg.mxu0
  %6786 = vmatprep.subr.mxu0 0.0
  %v6787 = vand.u32 %v6650, 4294901760
  %v6788 = vsub.f32 %v6650, %v6787
  %v6789 = vand.u32 %v6788, 4294901760
  %v6790 = vsub.f32 %v6788, %v6789
  %v6791 = vand.u32 %v6790, 4294901760
  %6792 = vmatpush1.msra.mxu0 %v6791
  %6793 = vmatprep.subr.mxu0 0.0
  %v6794 = vand.u32 %v6652, 4294901760
  %v6795 = vsub.f32 %v6652, %v6794
  %v6796 = vand.u32 %v6795, 4294901760
  %v6797 = vsub.f32 %v6795, %v6796
  %v6798 = vand.u32 %v6797, 4294901760
  %6799 = vmatpush1.msra.mxu0 %v6798
  %6800 = vmatprep.subr.mxu0 0.0
  %v6801 = vand.u32 %v6654, 4294901760
  %v6802 = vsub.f32 %v6654, %v6801
  %v6803 = vand.u32 %v6802, 4294901760
  %v6804 = vsub.f32 %v6802, %v6803
  %v6805 = vand.u32 %v6804, 4294901760
  %6806 = vmatpush1.msra.mxu0 %v6805
  %6807 = vmatprep.subr.mxu0 0.0
  %v6808 = vand.u32 %v6656, 4294901760
  %v6809 = vsub.f32 %v6656, %v6808
  %v6810 = vand.u32 %v6809, 4294901760
  %v6811 = vsub.f32 %v6809, %v6810
  %v6812 = vand.u32 %v6811, 4294901760
  %6813 = vmatpush1.msra.mxu0 %v6812
  %6814 = vmatprep.subr.mxu0 0.0
  %6815 = vmatpush1.msra.mxu0 0.0
  %6816 = vmatprep.subr.mxu0 0.0
  %6817 = vmatpush1.msra.mxu0 0.0
  %6818 = vmatprep.subr.mxu0 0.0
  %6819 = vmatpush1.msra.mxu0 0.0
  %6820 = vmatprep.subr.mxu0 0.0
  %6821 = vmatpush1.msra.mxu0 0.0
  %6822 = vmatprep.subr.mxu0 0.0
  %6823 = vmatpush1.msra.mxu0 0.0
  %6824 = vmatprep.subr.mxu0 0.0
  %6825 = vmatpush1.msra.mxu0 0.0
  %6826 = vmatprep.subr.mxu0 0.0
  %6827 = vmatpush1.msra.mxu0 0.0
  %6828 = vmatprep.subr.mxu0 0.0
  %6829 = vmatpush1.msra.mxu0 0.0
  %6830 = vmatprep.subr.mxu0 0.0
  %6831 = vmatpush1.msra.mxu0 0.0
  %6832 = vmatprep.subr.mxu0 0.0
  %6833 = vmatpush1.msra.mxu0 0.0
  %6834 = vmatprep.subr.mxu0 0.0
  %6835 = vmatpush1.msra.mxu0 0.0
  %6836 = vmatprep.subr.mxu0 0.0
  %6837 = vmatpush1.msra.mxu0 0.0
  %6838 = vmatprep.subr.mxu0 0.0
  %6839 = vmatpush1.msra.mxu0 0.0
  %6840 = vmatprep.subr.mxu0 0.0
  %6841 = vmatpush1.msra.mxu0 0.0
  %6842 = vmatprep.subr.mxu0 0.0
  %6843 = vmatpush1.msra.mxu0 0.0
  %6844 = vmatprep.subr.mxu0 0.0
  %6845 = vmatpush1.msra.mxu0 0.0
  %6846 = vmatprep.subr.mxu0 0.0
  %6847 = vmatpush1.msra.mxu0 0.0
  %6848 = vmatprep.subr.mxu0 0.0
  %6849 = vmatpush1.msra.mxu0 0.0
  %6850 = vmatprep.subr.mxu0 0.0
  %6851 = vmatpush1.msra.mxu0 0.0
  %6852 = vmatprep.subr.mxu0 0.0
  %6853 = vmatpush1.msra.mxu0 0.0
  %6854 = vmatprep.subr.mxu0 0.0
  %6855 = vmatpush1.msra.mxu0 0.0
  %6856 = vmatprep.subr.mxu0 0.0
  %6857 = vmatpush1.msra.mxu0 0.0
  %6858 = vmatprep.subr.mxu0 0.0
  %6859 = vmatpush1.msra.mxu0 0.0
  %6860 = vmatprep.subr.mxu0 0.0
  %6861 = vmatpush1.msra.mxu0 0.0
  %6862 = vmatprep.subr.mxu0 0.0
  %6863 = vmatpush1.msra.mxu0 0.0
  %6864 = vmatprep.subr.mxu0 0.0
  %6865 = vmatpush1.msra.mxu0 0.0
  %6866 = vmatprep.subr.mxu0 0.0
  %6867 = vmatpush1.msra.mxu0 0.0
  %6868 = vmatprep.subr.mxu0 0.0
  %6869 = vmatpush1.msra.mxu0 0.0
  %6870 = vmatprep.mubr.f32.mxu0 0.0
  %v6871 = vand.u32 %v774, 4294901760
  %6872 = vmatmul.mubr.f32.gmra.mrb[0].mxu0 %v6871
  %v6873 = vpop.f32.mrb[0].mxu0
  %v6874 = vadd.f32 %v6753, %v6873
  %v6875 = vpop.f32.mrb[0].mxu0
  %6876 = vmatprep.mubr.f32.mxu0 0.0
  %v6877 = vand.u32 %v777, 4294901760
  %6878 = vmatmul.mubr.f32.gmra.mrb[0].mxu0 %v6877
  %v6879 = vpop.f32.mrb[0].mxu0
  %v6880 = vadd.f32 %v6763, %v6879
  %v6881 = vpop.f32.mrb[0].mxu0
  %6882 = vmatprep.mubr.f32.mxu0 0.0
  %v6883 = vand.u32 %v780, 4294901760
  %6884 = vmatmul.mubr.f32.gmra.mrb[0].mxu0 %v6883
  %v6885 = vpop.f32.mrb[0].mxu0
  %v6886 = vadd.f32 %v6773, %v6885
  %v6887 = vpop.f32.mrb[0].mxu0
  %6888 = vmatprep.mubr.f32.mxu0 0.0
  %v6889 = vand.u32 %v783, 4294901760
  %6890 = vmatmul.mubr.f32.gmra.mrb[0].mxu0 %v6889
  %v6891 = vpop.f32.mrb[0].mxu0
  %v6892 = vadd.f32 %v6783, %v6891
  %v6893 = vpop.f32.mrb[0].mxu0
  %6894 = vdwg.mxu0
  %6895 = vmatprep.subr.mxu0 0.0
  %v6896 = vand.u32 %v6650, 4294901760
  %v6897 = vsub.f32 %v6650, %v6896
  %6898 = vmatpush1.msra.mxu0 %v6897
  %6899 = vmatprep.subr.mxu0 0.0
  %v6900 = vand.u32 %v6652, 4294901760
  %v6901 = vsub.f32 %v6652, %v6900
  %6902 = vmatpush1.msra.mxu0 %v6901
  %6903 = vmatprep.subr.mxu0 0.0
  %v6904 = vand.u32 %v6654, 4294901760
  %v6905 = vsub.f32 %v6654, %v6904
  %6906 = vmatpush1.msra.mxu0 %v6905
  %6907 = vmatprep.subr.mxu0 0.0
  %v6908 = vand.u32 %v6656, 4294901760
  %v6909 = vsub.f32 %v6656, %v6908
  %6910 = vmatpush1.msra.mxu0 %v6909
  %6911 = vmatprep.subr.mxu0 0.0
  %6912 = vmatpush1.msra.mxu0 0.0
  %6913 = vmatprep.subr.mxu0 0.0
  %6914 = vmatpush1.msra.mxu0 0.0
  %6915 = vmatprep.subr.mxu0 0.0
  %6916 = vmatpush1.msra.mxu0 0.0
  %6917 = vmatprep.subr.mxu0 0.0
  %6918 = vmatpush1.msra.mxu0 0.0
  %6919 = vmatprep.subr.mxu0 0.0
  %6920 = vmatpush1.msra.mxu0 0.0
  %6921 = vmatprep.subr.mxu0 0.0
  %6922 = vmatpush1.msra.mxu0 0.0
  %6923 = vmatprep.subr.mxu0 0.0
  %6924 = vmatpush1.msra.mxu0 0.0
  %6925 = vmatprep.subr.mxu0 0.0
  %6926 = vmatpush1.msra.mxu0 0.0
  %6927 = vmatprep.subr.mxu0 0.0
  %6928 = vmatpush1.msra.mxu0 0.0
  %6929 = vmatprep.subr.mxu0 0.0
  %6930 = vmatpush1.msra.mxu0 0.0
  %6931 = vmatprep.subr.mxu0 0.0
  %6932 = vmatpush1.msra.mxu0 0.0
  %6933 = vmatprep.subr.mxu0 0.0
  %6934 = vmatpush1.msra.mxu0 0.0
  %6935 = vmatprep.subr.mxu0 0.0
  %6936 = vmatpush1.msra.mxu0 0.0
  %6937 = vmatprep.subr.mxu0 0.0
  %6938 = vmatpush1.msra.mxu0 0.0
  %6939 = vmatprep.subr.mxu0 0.0
  %6940 = vmatpush1.msra.mxu0 0.0
  %6941 = vmatprep.subr.mxu0 0.0
  %6942 = vmatpush1.msra.mxu0 0.0
  %6943 = vmatprep.subr.mxu0 0.0
  %6944 = vmatpush1.msra.mxu0 0.0
  %6945 = vmatprep.subr.mxu0 0.0
  %6946 = vmatpush1.msra.mxu0 0.0
  %6947 = vmatprep.subr.mxu0 0.0
  %6948 = vmatpush1.msra.mxu0 0.0
  %6949 = vmatprep.subr.mxu0 0.0
  %6950 = vmatpush1.msra.mxu0 0.0
  %6951 = vmatprep.subr.mxu0 0.0
  %6952 = vmatpush1.msra.mxu0 0.0
  %6953 = vmatprep.subr.mxu0 0.0
  %6954 = vmatpush1.msra.mxu0 0.0
  %6955 = vmatprep.subr.mxu0 0.0
  %6956 = vmatpush1.msra.mxu0 0.0
  %6957 = vmatprep.subr.mxu0 0.0
  %6958 = vmatpush1.msra.mxu0 0.0
  %6959 = vmatprep.subr.mxu0 0.0
  %6960 = vmatpush1.msra.mxu0 0.0
  %6961 = vmatprep.subr.mxu0 0.0
  %6962 = vmatpush1.msra.mxu0 0.0
  %6963 = vmatprep.subr.mxu0 0.0
  %6964 = vmatpush1.msra.mxu0 0.0
  %6965 = vmatprep.subr.mxu0 0.0
  %6966 = vmatpush1.msra.mxu0 0.0
  %6967 = vmatprep.mubr.f32.mxu0 0.0
  %v6968 = vand.u32 %v774, 4294901760
  %v6969 = vsub.f32 %v774, %v6968
  %6970 = vmatmul.mubr.f32.gmra.mrb[0].mxu0 %v6969
  %v6971 = vpop.f32.mrb[0].mxu0
  %v6972 = vadd.f32 %v6874, %v6971
  %v6973 = vpop.f32.mrb[0].mxu0
  %6974 = vmatprep.mubr.f32.mxu0 0.0
  %v6975 = vand.u32 %v777, 4294901760
  %v6976 = vsub.f32 %v777, %v6975
  %6977 = vmatmul.mubr.f32.gmra.mrb[0].mxu0 %v6976
  %v6978 = vpop.f32.mrb[0].mxu0
  %v6979 = vadd.f32 %v6880, %v6978
  %v6980 = vpop.f32.mrb[0].mxu0
  %6981 = vmatprep.mubr.f32.mxu0 0.0
  %v6982 = vand.u32 %v780, 4294901760
  %v6983 = vsub.f32 %v780, %v6982
  %6984 = vmatmul.mubr.f32.gmra.mrb[0].mxu0 %v6983
  %v6985 = vpop.f32.mrb[0].mxu0
  %v6986 = vadd.f32 %v6886, %v6985
  %v6987 = vpop.f32.mrb[0].mxu0
  %6988 = vmatprep.mubr.f32.mxu0 0.0
  %v6989 = vand.u32 %v783, 4294901760
  %v6990 = vsub.f32 %v783, %v6989
  %6991 = vmatmul.mubr.f32.gmra.mrb[0].mxu0 %v6990
  %v6992 = vpop.f32.mrb[0].mxu0
  %v6993 = vadd.f32 %v6892, %v6992
  %v6994 = vpop.f32.mrb[0].mxu0
  %6995 = vdwg.mxu0
  %6996 = vmatprep.subr.mxu0 0.0
  %v6997 = vand.u32 %v6650, 4294901760
  %6998 = vmatpush1.msra.mxu0 %v6997
  %6999 = vmatprep.subr.mxu0 0.0
  %v7000 = vand.u32 %v6652, 4294901760
  %7001 = vmatpush1.msra.mxu0 %v7000
  %7002 = vmatprep.subr.mxu0 0.0
  %v7003 = vand.u32 %v6654, 4294901760
  %7004 = vmatpush1.msra.mxu0 %v7003
  %7005 = vmatprep.subr.mxu0 0.0
  %v7006 = vand.u32 %v6656, 4294901760
  %7007 = vmatpush1.msra.mxu0 %v7006
  %7008 = vmatprep.subr.mxu0 0.0
  %7009 = vmatpush1.msra.mxu0 0.0
  %7010 = vmatprep.subr.mxu0 0.0
  %7011 = vmatpush1.msra.mxu0 0.0
  %7012 = vmatprep.subr.mxu0 0.0
  %7013 = vmatpush1.msra.mxu0 0.0
  %7014 = vmatprep.subr.mxu0 0.0
  %7015 = vmatpush1.msra.mxu0 0.0
  %7016 = vmatprep.subr.mxu0 0.0
  %7017 = vmatpush1.msra.mxu0 0.0
  %7018 = vmatprep.subr.mxu0 0.0
  %7019 = vmatpush1.msra.mxu0 0.0
  %7020 = vmatprep.subr.mxu0 0.0
  %7021 = vmatpush1.msra.mxu0 0.0
  %7022 = vmatprep.subr.mxu0 0.0
  %7023 = vmatpush1.msra.mxu0 0.0
  %7024 = vmatprep.subr.mxu0 0.0
  %7025 = vmatpush1.msra.mxu0 0.0
  %7026 = vmatprep.subr.mxu0 0.0
  %7027 = vmatpush1.msra.mxu0 0.0
  %7028 = vmatprep.subr.mxu0 0.0
  %7029 = vmatpush1.msra.mxu0 0.0
  %7030 = vmatprep.subr.mxu0 0.0
  %7031 = vmatpush1.msra.mxu0 0.0
  %7032 = vmatprep.subr.mxu0 0.0
  %7033 = vmatpush1.msra.mxu0 0.0
  %7034 = vmatprep.subr.mxu0 0.0
  %7035 = vmatpush1.msra.mxu0 0.0
  %7036 = vmatprep.subr.mxu0 0.0
  %7037 = vmatpush1.msra.mxu0 0.0
  %7038 = vmatprep.subr.mxu0 0.0
  %7039 = vmatpush1.msra.mxu0 0.0
  %7040 = vmatprep.subr.mxu0 0.0
  %7041 = vmatpush1.msra.mxu0 0.0
  %7042 = vmatprep.subr.mxu0 0.0
  %7043 = vmatpush1.msra.mxu0 0.0
  %7044 = vmatprep.subr.mxu0 0.0
  %7045 = vmatpush1.msra.mxu0 0.0
  %7046 = vmatprep.subr.mxu0 0.0
  %7047 = vmatpush1.msra.mxu0 0.0
  %7048 = vmatprep.subr.mxu0 0.0
  %7049 = vmatpush1.msra.mxu0 0.0
  %7050 = vmatprep.subr.mxu0 0.0
  %7051 = vmatpush1.msra.mxu0 0.0
  %7052 = vmatprep.subr.mxu0 0.0
  %7053 = vmatpush1.msra.mxu0 0.0
  %7054 = vmatprep.subr.mxu0 0.0
  %7055 = vmatpush1.msra.mxu0 0.0
  %7056 = vmatprep.subr.mxu0 0.0
  %7057 = vmatpush1.msra.mxu0 0.0
  %7058 = vmatprep.subr.mxu0 0.0
  %7059 = vmatpush1.msra.mxu0 0.0
  %7060 = vmatprep.subr.mxu0 0.0
  %7061 = vmatpush1.msra.mxu0 0.0
  %7062 = vmatprep.subr.mxu0 0.0
  %7063 = vmatpush1.msra.mxu0 0.0
  %7064 = vmatprep.mubr.f32.mxu0 0.0
  %v7065 = vand.u32 %v774, 4294901760
  %v7066 = vsub.f32 %v774, %v7065
  %v7067 = vand.u32 %v7066, 4294901760
  %7068 = vmatmul.mubr.f32.gmra.mrb[0].mxu0 %v7067
  %v7069 = vpop.f32.mrb[0].mxu0
  %v7070 = vadd.f32 %v6972, %v7069
  %v7071 = vpop.f32.mrb[0].mxu0
  %7072 = vmatprep.mubr.f32.mxu0 0.0
  %v7073 = vand.u32 %v777, 4294901760
  %v7074 = vsub.f32 %v777, %v7073
  %v7075 = vand.u32 %v7074, 4294901760
  %7076 = vmatmul.mubr.f32.gmra.mrb[0].mxu0 %v7075
  %v7077 = vpop.f32.mrb[0].mxu0
  %v7078 = vadd.f32 %v6979, %v7077
  %v7079 = vpop.f32.mrb[0].mxu0
  %7080 = vmatprep.mubr.f32.mxu0 0.0
  %v7081 = vand.u32 %v780, 4294901760
  %v7082 = vsub.f32 %v780, %v7081
  %v7083 = vand.u32 %v7082, 4294901760
  %7084 = vmatmul.mubr.f32.gmra.mrb[0].mxu0 %v7083
  %v7085 = vpop.f32.mrb[0].mxu0
  %v7086 = vadd.f32 %v6986, %v7085
  %v7087 = vpop.f32.mrb[0].mxu0
  %7088 = vmatprep.mubr.f32.mxu0 0.0
  %v7089 = vand.u32 %v783, 4294901760
  %v7090 = vsub.f32 %v783, %v7089
  %v7091 = vand.u32 %v7090, 4294901760
  %7092 = vmatmul.mubr.f32.gmra.mrb[0].mxu0 %v7091
  %v7093 = vpop.f32.mrb[0].mxu0
  %v7094 = vadd.f32 %v6993, %v7093
  %v7095 = vpop.f32.mrb[0].mxu0
  %7096 = vdwg.mxu0
  %7097 = vmatprep.subr.mxu0 0.0
  %v7098 = vand.u32 %v6650, 4294901760
  %v7099 = vsub.f32 %v6650, %v7098
  %v7100 = vand.u32 %v7099, 4294901760
  %7101 = vmatpush1.msra.mxu0 %v7100
  %7102 = vmatprep.subr.mxu0 0.0
  %v7103 = vand.u32 %v6652, 4294901760
  %v7104 = vsub.f32 %v6652, %v7103
  %v7105 = vand.u32 %v7104, 4294901760
  %7106 = vmatpush1.msra.mxu0 %v7105
  %7107 = vmatprep.subr.mxu0 0.0
  %v7108 = vand.u32 %v6654, 4294901760
  %v7109 = vsub.f32 %v6654, %v7108
  %v7110 = vand.u32 %v7109, 4294901760
  %7111 = vmatpush1.msra.mxu0 %v7110
  %7112 = vmatprep.subr.mxu0 0.0
  %v7113 = vand.u32 %v6656, 4294901760
  %v7114 = vsub.f32 %v6656, %v7113
  %v7115 = vand.u32 %v7114, 4294901760
  %7116 = vmatpush1.msra.mxu0 %v7115
  %7117 = vmatprep.subr.mxu0 0.0
  %7118 = vmatpush1.msra.mxu0 0.0
  %7119 = vmatprep.subr.mxu0 0.0
  %7120 = vmatpush1.msra.mxu0 0.0
  %7121 = vmatprep.subr.mxu0 0.0
  %7122 = vmatpush1.msra.mxu0 0.0
  %7123 = vmatprep.subr.mxu0 0.0
  %7124 = vmatpush1.msra.mxu0 0.0
  %7125 = vmatprep.subr.mxu0 0.0
  %7126 = vmatpush1.msra.mxu0 0.0
  %7127 = vmatprep.subr.mxu0 0.0
  %7128 = vmatpush1.msra.mxu0 0.0
  %7129 = vmatprep.subr.mxu0 0.0
  %7130 = vmatpush1.msra.mxu0 0.0
  %7131 = vmatprep.subr.mxu0 0.0
  %7132 = vmatpush1.msra.mxu0 0.0
  %7133 = vmatprep.subr.mxu0 0.0
  %7134 = vmatpush1.msra.mxu0 0.0
  %7135 = vmatprep.subr.mxu0 0.0
  %7136 = vmatpush1.msra.mxu0 0.0
  %7137 = vmatprep.subr.mxu0 0.0
  %7138 = vmatpush1.msra.mxu0 0.0
  %7139 = vmatprep.subr.mxu0 0.0
  %7140 = vmatpush1.msra.mxu0 0.0
  %7141 = vmatprep.subr.mxu0 0.0
  %7142 = vmatpush1.msra.mxu0 0.0
  %7143 = vmatprep.subr.mxu0 0.0
  %7144 = vmatpush1.msra.mxu0 0.0
  %7145 = vmatprep.subr.mxu0 0.0
  %7146 = vmatpush1.msra.mxu0 0.0
  %7147 = vmatprep.subr.mxu0 0.0
  %7148 = vmatpush1.msra.mxu0 0.0
  %7149 = vmatprep.subr.mxu0 0.0
  %7150 = vmatpush1.msra.mxu0 0.0
  %7151 = vmatprep.subr.mxu0 0.0
  %7152 = vmatpush1.msra.mxu0 0.0
  %7153 = vmatprep.subr.mxu0 0.0
  %7154 = vmatpush1.msra.mxu0 0.0
  %7155 = vmatprep.subr.mxu0 0.0
  %7156 = vmatpush1.msra.mxu0 0.0
  %7157 = vmatprep.subr.mxu0 0.0
  %7158 = vmatpush1.msra.mxu0 0.0
  %7159 = vmatprep.subr.mxu0 0.0
  %7160 = vmatpush1.msra.mxu0 0.0
  %7161 = vmatprep.subr.mxu0 0.0
  %7162 = vmatpush1.msra.mxu0 0.0
  %7163 = vmatprep.subr.mxu0 0.0
  %7164 = vmatpush1.msra.mxu0 0.0
  %7165 = vmatprep.subr.mxu0 0.0
  %7166 = vmatpush1.msra.mxu0 0.0
  %7167 = vmatprep.subr.mxu0 0.0
  %7168 = vmatpush1.msra.mxu0 0.0
  %7169 = vmatprep.subr.mxu0 0.0
  %7170 = vmatpush1.msra.mxu0 0.0
  %7171 = vmatprep.subr.mxu0 0.0
  %7172 = vmatpush1.msra.mxu0 0.0
  %7173 = vmatprep.mubr.f32.mxu0 0.0
  %v7174 = vand.u32 %v774, 4294901760
  %7175 = vmatmul.mubr.f32.gmra.mrb[0].mxu0 %v7174
  %v7176 = vpop.f32.mrb[0].mxu0
  %v7177 = vadd.f32 %v7070, %v7176
  %v7178 = vpop.f32.mrb[0].mxu0
  %7179 = vmatprep.mubr.f32.mxu0 0.0
  %v7180 = vand.u32 %v777, 4294901760
  %7181 = vmatmul.mubr.f32.gmra.mrb[0].mxu0 %v7180
  %v7182 = vpop.f32.mrb[0].mxu0
  %v7183 = vadd.f32 %v7078, %v7182
  %v7184 = vpop.f32.mrb[0].mxu0
  %7185 = vmatprep.mubr.f32.mxu0 0.0
  %v7186 = vand.u32 %v780, 4294901760
  %7187 = vmatmul.mubr.f32.gmra.mrb[0].mxu0 %v7186
  %v7188 = vpop.f32.mrb[0].mxu0
  %v7189 = vadd.f32 %v7086, %v7188
  %v7190 = vpop.f32.mrb[0].mxu0
  %7191 = vmatprep.mubr.f32.mxu0 0.0
  %v7192 = vand.u32 %v783, 4294901760
  %7193 = vmatmul.mubr.f32.gmra.mrb[0].mxu0 %v7192
  %v7194 = vpop.f32.mrb[0].mxu0
  %v7195 = vadd.f32 %v7094, %v7194
  %v7196 = vpop.f32.mrb[0].mxu0
  %7197 = vdwg.mxu0
  %7198 = vmatprep.subr.mxu0 0.0
  %v7199 = vand.u32 %v6650, 4294901760
  %7200 = vmatpush1.msra.mxu0 %v7199
  %7201 = vmatprep.subr.mxu0 0.0
  %v7202 = vand.u32 %v6652, 4294901760
  %7203 = vmatpush1.msra.mxu0 %v7202
  %7204 = vmatprep.subr.mxu0 0.0
  %v7205 = vand.u32 %v6654, 4294901760
  %7206 = vmatpush1.msra.mxu0 %v7205
  %7207 = vmatprep.subr.mxu0 0.0
  %v7208 = vand.u32 %v6656, 4294901760
  %7209 = vmatpush1.msra.mxu0 %v7208
  %7210 = vmatprep.subr.mxu0 0.0
  %7211 = vmatpush1.msra.mxu0 0.0
  %7212 = vmatprep.subr.mxu0 0.0
  %7213 = vmatpush1.msra.mxu0 0.0
  %7214 = vmatprep.subr.mxu0 0.0
  %7215 = vmatpush1.msra.mxu0 0.0
  %7216 = vmatprep.subr.mxu0 0.0
  %7217 = vmatpush1.msra.mxu0 0.0
  %7218 = vmatprep.subr.mxu0 0.0
  %7219 = vmatpush1.msra.mxu0 0.0
  %7220 = vmatprep.subr.mxu0 0.0
  %7221 = vmatpush1.msra.mxu0 0.0
  %7222 = vmatprep.subr.mxu0 0.0
  %7223 = vmatpush1.msra.mxu0 0.0
  %7224 = vmatprep.subr.mxu0 0.0
  %7225 = vmatpush1.msra.mxu0 0.0
  %7226 = vmatprep.subr.mxu0 0.0
  %7227 = vmatpush1.msra.mxu0 0.0
  %7228 = vmatprep.subr.mxu0 0.0
  %7229 = vmatpush1.msra.mxu0 0.0
  %7230 = vmatprep.subr.mxu0 0.0
  %7231 = vmatpush1.msra.mxu0 0.0
  %7232 = vmatprep.subr.mxu0 0.0
  %7233 = vmatpush1.msra.mxu0 0.0
  %7234 = vmatprep.subr.mxu0 0.0
  %7235 = vmatpush1.msra.mxu0 0.0
  %7236 = vmatprep.subr.mxu0 0.0
  %7237 = vmatpush1.msra.mxu0 0.0
  %7238 = vmatprep.subr.mxu0 0.0
  %7239 = vmatpush1.msra.mxu0 0.0
  %7240 = vmatprep.subr.mxu0 0.0
  %7241 = vmatpush1.msra.mxu0 0.0
  %7242 = vmatprep.subr.mxu0 0.0
  %7243 = vmatpush1.msra.mxu0 0.0
  %7244 = vmatprep.subr.mxu0 0.0
  %7245 = vmatpush1.msra.mxu0 0.0
  %7246 = vmatprep.subr.mxu0 0.0
  %7247 = vmatpush1.msra.mxu0 0.0
  %7248 = vmatprep.subr.mxu0 0.0
  %7249 = vmatpush1.msra.mxu0 0.0
  %7250 = vmatprep.subr.mxu0 0.0
  %7251 = vmatpush1.msra.mxu0 0.0
  %7252 = vmatprep.subr.mxu0 0.0
  %7253 = vmatpush1.msra.mxu0 0.0
  %7254 = vmatprep.subr.mxu0 0.0
  %7255 = vmatpush1.msra.mxu0 0.0
  %7256 = vmatprep.subr.mxu0 0.0
  %7257 = vmatpush1.msra.mxu0 0.0
  %7258 = vmatprep.subr.mxu0 0.0
  %7259 = vmatpush1.msra.mxu0 0.0
  %7260 = vmatprep.subr.mxu0 0.0
  %7261 = vmatpush1.msra.mxu0 0.0
  %7262 = vmatprep.subr.mxu0 0.0
  %7263 = vmatpush1.msra.mxu0 0.0
  %7264 = vmatprep.subr.mxu0 0.0
  %7265 = vmatpush1.msra.mxu0 0.0
  %7266 = vmatprep.mubr.f32.mxu0 0.0
  %v7267 = vand.u32 %v774, 4294901760
  %7268 = vmatmul.mubr.f32.gmra.mrb[0].mxu0 %v7267
  %v7269 = vpop.f32.mrb[0].mxu0
  %v7270 = vadd.f32 %v7177, %v7269
  %v7271 = vpop.f32.mrb[0].mxu0
  %7272 = vmatprep.mubr.f32.mxu0 0.0
  %v7273 = vand.u32 %v777, 4294901760
  %7274 = vmatmul.mubr.f32.gmra.mrb[0].mxu0 %v7273
  %v7275 = vpop.f32.mrb[0].mxu0
  %v7276 = vadd.f32 %v7183, %v7275
  %v7277 = vpop.f32.mrb[0].mxu0
  %7278 = vmatprep.mubr.f32.mxu0 0.0
  %v7279 = vand.u32 %v780, 4294901760
  %7280 = vmatmul.mubr.f32.gmra.mrb[0].mxu0 %v7279
  %v7281 = vpop.f32.mrb[0].mxu0
  %v7282 = vadd.f32 %v7189, %v7281
  %v7283 = vpop.f32.mrb[0].mxu0
  %7284 = vmatprep.mubr.f32.mxu0 0.0
  %v7285 = vand.u32 %v783, 4294901760
  %7286 = vmatmul.mubr.f32.gmra.mrb[0].mxu0 %v7285
  %v7287 = vpop.f32.mrb[0].mxu0
  %v7288 = vadd.f32 %v7195, %v7287
  %v7289 = vpop.f32.mrb[0].mxu0
  %7290 = vdwg.mxu0
  %v7291 = vadd.f32 %v7270, %v6641
  %v7292 = vadd.f32 %v7276, %v6642
  %v7293 = vadd.f32 %v7282, %v6643
  %v7294 = vadd.f32 %v7288, %v6644
  %v7295 = vxor.u32 %v7291, 2147483648
  %v7296 = vxor.u32 %v7292, 2147483648
  %v7297 = vxor.u32 %v7293, 2147483648
  %v7298 = vxor.u32 %v7294, 2147483648
  %v7299 = vmul.f32 %v7295, 1.442695
  %v7300 = vpow.pop %v7299
  %v7301 = vmul.f32 %v7296, 1.442695
  %v7302 = vpow.pop %v7301
  %v7303 = vmul.f32 %v7297, 1.442695
  %v7304 = vpow.pop %v7303
  %v7305 = vmul.f32 %v7298, 1.442695
  %v7306 = vpow.pop %v7305
  %v7307 = vadd.f32 %v7300, 1.0
  %v7308 = vadd.f32 %v7302, 1.0
  %v7309 = vadd.f32 %v7304, 1.0
  %v7310 = vadd.f32 %v7306, 1.0
  %v7311 = vrcp.pop %v7307
  %v7312 = vmul.f32 1.0, %v7311
  %v7313 = vrcp.pop %v7308
  %v7314 = vmul.f32 1.0, %v7313
  %v7315 = vrcp.pop %v7309
  %v7316 = vmul.f32 1.0, %v7315
  %v7317 = vrcp.pop %v7310
  %v7318 = vmul.f32 1.0, %v7317
  %7323 = vrot.lane.b32.xlu0 %v6641, 96
  %v7324 = vpop.permute.xlu0 %7323
  %7325 = vrot.lane.b32.xlu0 %v6642, 96
  %v7326 = vpop.permute.xlu0 %7325
  %7327 = vrot.lane.b32.xlu0 %v6643, 96
  %v7328 = vpop.permute.xlu0 %7327
  %7329 = vrot.lane.b32.xlu0 %v6644, 96
  %v7330 = vpop.permute.xlu0 %7329
  %v7335 = vadd.f32 %v7270, %v7324
  %v7336 = vadd.f32 %v7276, %v7326
  %v7337 = vadd.f32 %v7282, %v7328
  %v7338 = vadd.f32 %v7288, %v7330
  %v7339 = vxor.u32 %v7335, 2147483648
  %v7340 = vxor.u32 %v7336, 2147483648
  %v7341 = vxor.u32 %v7337, 2147483648
  %v7342 = vxor.u32 %v7338, 2147483648
  %v7343 = vmul.f32 %v7339, 1.442695
  %v7344 = vpow.pop %v7343
  %v7345 = vmul.f32 %v7340, 1.442695
  %v7346 = vpow.pop %v7345
  %v7347 = vmul.f32 %v7341, 1.442695
  %v7348 = vpow.pop %v7347
  %v7349 = vmul.f32 %v7342, 1.442695
  %v7350 = vpow.pop %v7349
  %v7351 = vadd.f32 %v7344, 1.0
  %v7352 = vadd.f32 %v7346, 1.0
  %v7353 = vadd.f32 %v7348, 1.0
  %v7354 = vadd.f32 %v7350, 1.0
  %v7355 = vrcp.pop %v7351
  %v7356 = vmul.f32 1.0, %v7355
  %v7357 = vrcp.pop %v7352
  %v7358 = vmul.f32 1.0, %v7357
  %v7359 = vrcp.pop %v7353
  %v7360 = vmul.f32 1.0, %v7359
  %v7361 = vrcp.pop %v7354
  %v7362 = vmul.f32 1.0, %v7361
  %7363 = vrot.lane.b32.xlu0 %v6641, 64
  %v7364 = vpop.permute.xlu0 %7363
  %7365 = vrot.lane.b32.xlu0 %v6642, 64
  %v7366 = vpop.permute.xlu0 %7365
  %7367 = vrot.lane.b32.xlu0 %v6643, 64
  %v7368 = vpop.permute.xlu0 %7367
  %7369 = vrot.lane.b32.xlu0 %v6644, 64
  %v7370 = vpop.permute.xlu0 %7369
  %v7375 = vmul.f32 %v7312, %v7364
  %v7376 = vmul.f32 %v7314, %v7366
  %v7377 = vmul.f32 %v7316, %v7368
  %v7378 = vmul.f32 %v7318, %v7370
  %v7379 = vadd.f32 %v7270, %v7375
  %v7380 = vadd.f32 %v7276, %v7376
  %v7381 = vadd.f32 %v7282, %v7377
  %v7382 = vadd.f32 %v7288, %v7378
  %v7383 = vtanh.pop %v7379
  %v7384 = vtanh.pop %v7380
  %v7385 = vtanh.pop %v7381
  %v7386 = vtanh.pop %v7382
  %v7387 = vsub.f32 1.0, %v7356
  %v7388 = vsub.f32 1.0, %v7358
  %v7389 = vsub.f32 1.0, %v7360
  %v7390 = vsub.f32 1.0, %v7362
  %v7391 = vmul.f32 %v7387, %v7383
  %v7392 = vmul.f32 %v7388, %v7384
  %v7393 = vmul.f32 %v7389, %v7385
  %v7394 = vmul.f32 %v7390, %v7386
  %v7395 = vmul.f32 %v7356, %v5926
  %v7396 = vmul.f32 %v7358, %v5927
  %v7397 = vmul.f32 %v7360, %v5928
  %v7398 = vmul.f32 %v7362, %v5929
  %v7399 = vadd.f32 %v7391, %v7395
  %v7400 = vadd.f32 %v7392, %v7396
  %v7401 = vadd.f32 %v7393, %v7397
  %v7402 = vadd.f32 %v7394, %v7398
  %v7404 = vsel %vm35, %v7399, 0
  %v7407 = vsel %vm35, %v7400, 0
  %v7410 = vsel %vm35, %v7401, 0
  %v7413 = vsel %vm35, %v7402, 0
  %v7415 = vand.u32 %v19, 4294901760
  %7416 = vmatprep.subr.mxu0 %v7415
  %v7417 = vand.u32 %v18, 4294901760
  %7418 = vmatpush1.msra.mxu0 %v7417
  %v7419 = vand.u32 %v21, 4294901760
  %7420 = vmatprep.subr.mxu0 %v7419
  %v7421 = vand.u32 %v20, 4294901760
  %7422 = vmatpush1.msra.mxu0 %v7421
  %v7423 = vand.u32 %v23, 4294901760
  %7424 = vmatprep.subr.mxu0 %v7423
  %v7425 = vand.u32 %v22, 4294901760
  %7426 = vmatpush1.msra.mxu0 %v7425
  %v7427 = vand.u32 %v25, 4294901760
  %7428 = vmatprep.subr.mxu0 %v7427
  %v7429 = vand.u32 %v24, 4294901760
  %7430 = vmatpush1.msra.mxu0 %v7429
  %7431 = vmatprep.subr.mxu0 0.0
  %7432 = vmatpush1.msra.mxu0 0.0
  %7433 = vmatprep.subr.mxu0 0.0
  %7434 = vmatpush1.msra.mxu0 0.0
  %7435 = vmatprep.subr.mxu0 0.0
  %7436 = vmatpush1.msra.mxu0 0.0
  %7437 = vmatprep.subr.mxu0 0.0
  %7438 = vmatpush1.msra.mxu0 0.0
  %7439 = vmatprep.subr.mxu0 0.0
  %7440 = vmatpush1.msra.mxu0 0.0
  %7441 = vmatprep.subr.mxu0 0.0
  %7442 = vmatpush1.msra.mxu0 0.0
  %7443 = vmatprep.subr.mxu0 0.0
  %7444 = vmatpush1.msra.mxu0 0.0
  %7445 = vmatprep.subr.mxu0 0.0
  %7446 = vmatpush1.msra.mxu0 0.0
  %7447 = vmatprep.subr.mxu0 0.0
  %7448 = vmatpush1.msra.mxu0 0.0
  %7449 = vmatprep.subr.mxu0 0.0
  %7450 = vmatpush1.msra.mxu0 0.0
  %7451 = vmatprep.subr.mxu0 0.0
  %7452 = vmatpush1.msra.mxu0 0.0
  %7453 = vmatprep.subr.mxu0 0.0
  %7454 = vmatpush1.msra.mxu0 0.0
  %7455 = vmatprep.subr.mxu0 0.0
  %7456 = vmatpush1.msra.mxu0 0.0
  %7457 = vmatprep.subr.mxu0 0.0
  %7458 = vmatpush1.msra.mxu0 0.0
  %7459 = vmatprep.subr.mxu0 0.0
  %7460 = vmatpush1.msra.mxu0 0.0
  %7461 = vmatprep.subr.mxu0 0.0
  %7462 = vmatpush1.msra.mxu0 0.0
  %7463 = vmatprep.subr.mxu0 0.0
  %7464 = vmatpush1.msra.mxu0 0.0
  %7465 = vmatprep.subr.mxu0 0.0
  %7466 = vmatpush1.msra.mxu0 0.0
  %7467 = vmatprep.subr.mxu0 0.0
  %7468 = vmatpush1.msra.mxu0 0.0
  %7469 = vmatprep.subr.mxu0 0.0
  %7470 = vmatpush1.msra.mxu0 0.0
  %7471 = vmatprep.subr.mxu0 0.0
  %7472 = vmatpush1.msra.mxu0 0.0
  %7473 = vmatprep.subr.mxu0 0.0
  %7474 = vmatpush1.msra.mxu0 0.0
  %7475 = vmatprep.subr.mxu0 0.0
  %7476 = vmatpush1.msra.mxu0 0.0
  %7477 = vmatprep.subr.mxu0 0.0
  %7478 = vmatpush1.msra.mxu0 0.0
  %7479 = vmatprep.subr.mxu0 0.0
  %7480 = vmatpush1.msra.mxu0 0.0
  %7481 = vmatprep.subr.mxu0 0.0
  %7482 = vmatpush1.msra.mxu0 0.0
  %7483 = vmatprep.subr.mxu0 0.0
  %7484 = vmatpush1.msra.mxu0 0.0
  %7485 = vmatprep.subr.mxu0 0.0
  %7486 = vmatpush1.msra.mxu0 0.0
  %7487 = vmatprep.mubr.f32.mxu0 0.0
  %v7488 = vand.u32 %v7404, 4294901760
  %v7489 = vsub.f32 %v7404, %v7488
  %v7490 = vand.u32 %v7489, 4294901760
  %v7491 = vsub.f32 %v7489, %v7490
  %v7492 = vand.u32 %v7491, 4294901760
  %7493 = vmatmul.mubr.f32.gmra.mrb[0].mxu0 %v7492
  %v7494 = vpop.f32.mrb[0].mxu0
  %v7495 = vadd.f32 0.0, %v7494
  %v7496 = vpop.f32.mrb[0].mxu0
  %v7497 = vadd.f32 0.0, %v7496
  %7498 = vmatprep.mubr.f32.mxu0 0.0
  %v7499 = vand.u32 %v7407, 4294901760
  %v7500 = vsub.f32 %v7407, %v7499
  %v7501 = vand.u32 %v7500, 4294901760
  %v7502 = vsub.f32 %v7500, %v7501
  %v7503 = vand.u32 %v7502, 4294901760
  %7504 = vmatmul.mubr.f32.gmra.mrb[0].mxu0 %v7503
  %v7505 = vpop.f32.mrb[0].mxu0
  %v7506 = vadd.f32 0.0, %v7505
  %v7507 = vpop.f32.mrb[0].mxu0
  %v7508 = vadd.f32 0.0, %v7507
  %7509 = vmatprep.mubr.f32.mxu0 0.0
  %v7510 = vand.u32 %v7410, 4294901760
  %v7511 = vsub.f32 %v7410, %v7510
  %v7512 = vand.u32 %v7511, 4294901760
  %v7513 = vsub.f32 %v7511, %v7512
  %v7514 = vand.u32 %v7513, 4294901760
  %7515 = vmatmul.mubr.f32.gmra.mrb[0].mxu0 %v7514
  %v7516 = vpop.f32.mrb[0].mxu0
  %v7517 = vadd.f32 0.0, %v7516
  %v7518 = vpop.f32.mrb[0].mxu0
  %v7519 = vadd.f32 0.0, %v7518
  %7520 = vmatprep.mubr.f32.mxu0 0.0
  %v7521 = vand.u32 %v7413, 4294901760
  %v7522 = vsub.f32 %v7413, %v7521
  %v7523 = vand.u32 %v7522, 4294901760
  %v7524 = vsub.f32 %v7522, %v7523
  %v7525 = vand.u32 %v7524, 4294901760
  %7526 = vmatmul.mubr.f32.gmra.mrb[0].mxu0 %v7525
  %v7527 = vpop.f32.mrb[0].mxu0
  %v7528 = vadd.f32 0.0, %v7527
  %v7529 = vpop.f32.mrb[0].mxu0
  %v7530 = vadd.f32 0.0, %v7529
  %7531 = vdwg.mxu0
  %v7532 = vand.u32 %v19, 4294901760
  %v7533 = vsub.f32 %v19, %v7532
  %v7534 = vand.u32 %v7533, 4294901760
  %v7535 = vsub.f32 %v7533, %v7534
  %v7536 = vand.u32 %v7535, 4294901760
  %7537 = vmatprep.subr.mxu0 %v7536
  %v7538 = vand.u32 %v18, 4294901760
  %v7539 = vsub.f32 %v18, %v7538
  %v7540 = vand.u32 %v7539, 4294901760
  %v7541 = vsub.f32 %v7539, %v7540
  %v7542 = vand.u32 %v7541, 4294901760
  %7543 = vmatpush1.msra.mxu0 %v7542
  %v7544 = vand.u32 %v21, 4294901760
  %v7545 = vsub.f32 %v21, %v7544
  %v7546 = vand.u32 %v7545, 4294901760
  %v7547 = vsub.f32 %v7545, %v7546
  %v7548 = vand.u32 %v7547, 4294901760
  %7549 = vmatprep.subr.mxu0 %v7548
  %v7550 = vand.u32 %v20, 4294901760
  %v7551 = vsub.f32 %v20, %v7550
  %v7552 = vand.u32 %v7551, 4294901760
  %v7553 = vsub.f32 %v7551, %v7552
  %v7554 = vand.u32 %v7553, 4294901760
  %7555 = vmatpush1.msra.mxu0 %v7554
  %v7556 = vand.u32 %v23, 4294901760
  %v7557 = vsub.f32 %v23, %v7556
  %v7558 = vand.u32 %v7557, 4294901760
  %v7559 = vsub.f32 %v7557, %v7558
  %v7560 = vand.u32 %v7559, 4294901760
  %7561 = vmatprep.subr.mxu0 %v7560
  %v7562 = vand.u32 %v22, 4294901760
  %v7563 = vsub.f32 %v22, %v7562
  %v7564 = vand.u32 %v7563, 4294901760
  %v7565 = vsub.f32 %v7563, %v7564
  %v7566 = vand.u32 %v7565, 4294901760
  %7567 = vmatpush1.msra.mxu0 %v7566
  %v7568 = vand.u32 %v25, 4294901760
  %v7569 = vsub.f32 %v25, %v7568
  %v7570 = vand.u32 %v7569, 4294901760
  %v7571 = vsub.f32 %v7569, %v7570
  %v7572 = vand.u32 %v7571, 4294901760
  %7573 = vmatprep.subr.mxu0 %v7572
  %v7574 = vand.u32 %v24, 4294901760
  %v7575 = vsub.f32 %v24, %v7574
  %v7576 = vand.u32 %v7575, 4294901760
  %v7577 = vsub.f32 %v7575, %v7576
  %v7578 = vand.u32 %v7577, 4294901760
  %7579 = vmatpush1.msra.mxu0 %v7578
  %7580 = vmatprep.subr.mxu0 0.0
  %7581 = vmatpush1.msra.mxu0 0.0
  %7582 = vmatprep.subr.mxu0 0.0
  %7583 = vmatpush1.msra.mxu0 0.0
  %7584 = vmatprep.subr.mxu0 0.0
  %7585 = vmatpush1.msra.mxu0 0.0
  %7586 = vmatprep.subr.mxu0 0.0
  %7587 = vmatpush1.msra.mxu0 0.0
  %7588 = vmatprep.subr.mxu0 0.0
  %7589 = vmatpush1.msra.mxu0 0.0
  %7590 = vmatprep.subr.mxu0 0.0
  %7591 = vmatpush1.msra.mxu0 0.0
  %7592 = vmatprep.subr.mxu0 0.0
  %7593 = vmatpush1.msra.mxu0 0.0
  %7594 = vmatprep.subr.mxu0 0.0
  %7595 = vmatpush1.msra.mxu0 0.0
  %7596 = vmatprep.subr.mxu0 0.0
  %7597 = vmatpush1.msra.mxu0 0.0
  %7598 = vmatprep.subr.mxu0 0.0
  %7599 = vmatpush1.msra.mxu0 0.0
  %7600 = vmatprep.subr.mxu0 0.0
  %7601 = vmatpush1.msra.mxu0 0.0
  %7602 = vmatprep.subr.mxu0 0.0
  %7603 = vmatpush1.msra.mxu0 0.0
  %7604 = vmatprep.subr.mxu0 0.0
  %7605 = vmatpush1.msra.mxu0 0.0
  %7606 = vmatprep.subr.mxu0 0.0
  %7607 = vmatpush1.msra.mxu0 0.0
  %7608 = vmatprep.subr.mxu0 0.0
  %7609 = vmatpush1.msra.mxu0 0.0
  %7610 = vmatprep.subr.mxu0 0.0
  %7611 = vmatpush1.msra.mxu0 0.0
  %7612 = vmatprep.subr.mxu0 0.0
  %7613 = vmatpush1.msra.mxu0 0.0
  %7614 = vmatprep.subr.mxu0 0.0
  %7615 = vmatpush1.msra.mxu0 0.0
  %7616 = vmatprep.subr.mxu0 0.0
  %7617 = vmatpush1.msra.mxu0 0.0
  %7618 = vmatprep.subr.mxu0 0.0
  %7619 = vmatpush1.msra.mxu0 0.0
  %7620 = vmatprep.subr.mxu0 0.0
  %7621 = vmatpush1.msra.mxu0 0.0
  %7622 = vmatprep.subr.mxu0 0.0
  %7623 = vmatpush1.msra.mxu0 0.0
  %7624 = vmatprep.subr.mxu0 0.0
  %7625 = vmatpush1.msra.mxu0 0.0
  %7626 = vmatprep.subr.mxu0 0.0
  %7627 = vmatpush1.msra.mxu0 0.0
  %7628 = vmatprep.subr.mxu0 0.0
  %7629 = vmatpush1.msra.mxu0 0.0
  %7630 = vmatprep.subr.mxu0 0.0
  %7631 = vmatpush1.msra.mxu0 0.0
  %7632 = vmatprep.subr.mxu0 0.0
  %7633 = vmatpush1.msra.mxu0 0.0
  %7634 = vmatprep.subr.mxu0 0.0
  %7635 = vmatpush1.msra.mxu0 0.0
  %7636 = vmatprep.mubr.f32.mxu0 0.0
  %v7637 = vand.u32 %v7404, 4294901760
  %7638 = vmatmul.mubr.f32.gmra.mrb[0].mxu0 %v7637
  %v7639 = vpop.f32.mrb[0].mxu0
  %v7640 = vadd.f32 %v7495, %v7639
  %v7641 = vpop.f32.mrb[0].mxu0
  %v7642 = vadd.f32 %v7497, %v7641
  %7643 = vmatprep.mubr.f32.mxu0 0.0
  %v7644 = vand.u32 %v7407, 4294901760
  %7645 = vmatmul.mubr.f32.gmra.mrb[0].mxu0 %v7644
  %v7646 = vpop.f32.mrb[0].mxu0
  %v7647 = vadd.f32 %v7506, %v7646
  %v7648 = vpop.f32.mrb[0].mxu0
  %v7649 = vadd.f32 %v7508, %v7648
  %7650 = vmatprep.mubr.f32.mxu0 0.0
  %v7651 = vand.u32 %v7410, 4294901760
  %7652 = vmatmul.mubr.f32.gmra.mrb[0].mxu0 %v7651
  %v7653 = vpop.f32.mrb[0].mxu0
  %v7654 = vadd.f32 %v7517, %v7653
  %v7655 = vpop.f32.mrb[0].mxu0
  %v7656 = vadd.f32 %v7519, %v7655
  %7657 = vmatprep.mubr.f32.mxu0 0.0
  %v7658 = vand.u32 %v7413, 4294901760
  %7659 = vmatmul.mubr.f32.gmra.mrb[0].mxu0 %v7658
  %v7660 = vpop.f32.mrb[0].mxu0
  %v7661 = vadd.f32 %v7528, %v7660
  %v7662 = vpop.f32.mrb[0].mxu0
  %v7663 = vadd.f32 %v7530, %v7662
  %7664 = vdwg.mxu0
  %v7665 = vand.u32 %v19, 4294901760
  %v7666 = vsub.f32 %v19, %v7665
  %7667 = vmatprep.subr.mxu0 %v7666
  %v7668 = vand.u32 %v18, 4294901760
  %v7669 = vsub.f32 %v18, %v7668
  %7670 = vmatpush1.msra.mxu0 %v7669
  %v7671 = vand.u32 %v21, 4294901760
  %v7672 = vsub.f32 %v21, %v7671
  %7673 = vmatprep.subr.mxu0 %v7672
  %v7674 = vand.u32 %v20, 4294901760
  %v7675 = vsub.f32 %v20, %v7674
  %7676 = vmatpush1.msra.mxu0 %v7675
  %v7677 = vand.u32 %v23, 4294901760
  %v7678 = vsub.f32 %v23, %v7677
  %7679 = vmatprep.subr.mxu0 %v7678
  %v7680 = vand.u32 %v22, 4294901760
  %v7681 = vsub.f32 %v22, %v7680
  %7682 = vmatpush1.msra.mxu0 %v7681
  %v7683 = vand.u32 %v25, 4294901760
  %v7684 = vsub.f32 %v25, %v7683
  %7685 = vmatprep.subr.mxu0 %v7684
  %v7686 = vand.u32 %v24, 4294901760
  %v7687 = vsub.f32 %v24, %v7686
  %7688 = vmatpush1.msra.mxu0 %v7687
  %7689 = vmatprep.subr.mxu0 0.0
  %7690 = vmatpush1.msra.mxu0 0.0
  %7691 = vmatprep.subr.mxu0 0.0
  %7692 = vmatpush1.msra.mxu0 0.0
  %7693 = vmatprep.subr.mxu0 0.0
  %7694 = vmatpush1.msra.mxu0 0.0
  %7695 = vmatprep.subr.mxu0 0.0
  %7696 = vmatpush1.msra.mxu0 0.0
  %7697 = vmatprep.subr.mxu0 0.0
  %7698 = vmatpush1.msra.mxu0 0.0
  %7699 = vmatprep.subr.mxu0 0.0
  %7700 = vmatpush1.msra.mxu0 0.0
  %7701 = vmatprep.subr.mxu0 0.0
  %7702 = vmatpush1.msra.mxu0 0.0
  %7703 = vmatprep.subr.mxu0 0.0
  %7704 = vmatpush1.msra.mxu0 0.0
  %7705 = vmatprep.subr.mxu0 0.0
  %7706 = vmatpush1.msra.mxu0 0.0
  %7707 = vmatprep.subr.mxu0 0.0
  %7708 = vmatpush1.msra.mxu0 0.0
  %7709 = vmatprep.subr.mxu0 0.0
  %7710 = vmatpush1.msra.mxu0 0.0
  %7711 = vmatprep.subr.mxu0 0.0
  %7712 = vmatpush1.msra.mxu0 0.0
  %7713 = vmatprep.subr.mxu0 0.0
  %7714 = vmatpush1.msra.mxu0 0.0
  %7715 = vmatprep.subr.mxu0 0.0
  %7716 = vmatpush1.msra.mxu0 0.0
  %7717 = vmatprep.subr.mxu0 0.0
  %7718 = vmatpush1.msra.mxu0 0.0
  %7719 = vmatprep.subr.mxu0 0.0
  %7720 = vmatpush1.msra.mxu0 0.0
  %7721 = vmatprep.subr.mxu0 0.0
  %7722 = vmatpush1.msra.mxu0 0.0
  %7723 = vmatprep.subr.mxu0 0.0
  %7724 = vmatpush1.msra.mxu0 0.0
  %7725 = vmatprep.subr.mxu0 0.0
  %7726 = vmatpush1.msra.mxu0 0.0
  %7727 = vmatprep.subr.mxu0 0.0
  %7728 = vmatpush1.msra.mxu0 0.0
  %7729 = vmatprep.subr.mxu0 0.0
  %7730 = vmatpush1.msra.mxu0 0.0
  %7731 = vmatprep.subr.mxu0 0.0
  %7732 = vmatpush1.msra.mxu0 0.0
  %7733 = vmatprep.subr.mxu0 0.0
  %7734 = vmatpush1.msra.mxu0 0.0
  %7735 = vmatprep.subr.mxu0 0.0
  %7736 = vmatpush1.msra.mxu0 0.0
  %7737 = vmatprep.subr.mxu0 0.0
  %7738 = vmatpush1.msra.mxu0 0.0
  %7739 = vmatprep.subr.mxu0 0.0
  %7740 = vmatpush1.msra.mxu0 0.0
  %7741 = vmatprep.subr.mxu0 0.0
  %7742 = vmatpush1.msra.mxu0 0.0
  %7743 = vmatprep.subr.mxu0 0.0
  %7744 = vmatpush1.msra.mxu0 0.0
  %7745 = vmatprep.mubr.f32.mxu0 0.0
  %v7746 = vand.u32 %v7404, 4294901760
  %v7747 = vsub.f32 %v7404, %v7746
  %7748 = vmatmul.mubr.f32.gmra.mrb[0].mxu0 %v7747
  %v7749 = vpop.f32.mrb[0].mxu0
  %v7750 = vadd.f32 %v7640, %v7749
  %v7751 = vpop.f32.mrb[0].mxu0
  %v7752 = vadd.f32 %v7642, %v7751
  %7753 = vmatprep.mubr.f32.mxu0 0.0
  %v7754 = vand.u32 %v7407, 4294901760
  %v7755 = vsub.f32 %v7407, %v7754
  %7756 = vmatmul.mubr.f32.gmra.mrb[0].mxu0 %v7755
  %v7757 = vpop.f32.mrb[0].mxu0
  %v7758 = vadd.f32 %v7647, %v7757
  %v7759 = vpop.f32.mrb[0].mxu0
  %v7760 = vadd.f32 %v7649, %v7759
  %7761 = vmatprep.mubr.f32.mxu0 0.0
  %v7762 = vand.u32 %v7410, 4294901760
  %v7763 = vsub.f32 %v7410, %v7762
  %7764 = vmatmul.mubr.f32.gmra.mrb[0].mxu0 %v7763
  %v7765 = vpop.f32.mrb[0].mxu0
  %v7766 = vadd.f32 %v7654, %v7765
  %v7767 = vpop.f32.mrb[0].mxu0
  %v7768 = vadd.f32 %v7656, %v7767
  %7769 = vmatprep.mubr.f32.mxu0 0.0
  %v7770 = vand.u32 %v7413, 4294901760
  %v7771 = vsub.f32 %v7413, %v7770
  %7772 = vmatmul.mubr.f32.gmra.mrb[0].mxu0 %v7771
  %v7773 = vpop.f32.mrb[0].mxu0
  %v7774 = vadd.f32 %v7661, %v7773
  %v7775 = vpop.f32.mrb[0].mxu0
  %v7776 = vadd.f32 %v7663, %v7775
  %7777 = vdwg.mxu0
  %v7778 = vand.u32 %v19, 4294901760
  %7779 = vmatprep.subr.mxu0 %v7778
  %v7780 = vand.u32 %v18, 4294901760
  %7781 = vmatpush1.msra.mxu0 %v7780
  %v7782 = vand.u32 %v21, 4294901760
  %7783 = vmatprep.subr.mxu0 %v7782
  %v7784 = vand.u32 %v20, 4294901760
  %7785 = vmatpush1.msra.mxu0 %v7784
  %v7786 = vand.u32 %v23, 4294901760
  %7787 = vmatprep.subr.mxu0 %v7786
  %v7788 = vand.u32 %v22, 4294901760
  %7789 = vmatpush1.msra.mxu0 %v7788
  %v7790 = vand.u32 %v25, 4294901760
  %7791 = vmatprep.subr.mxu0 %v7790
  %v7792 = vand.u32 %v24, 4294901760
  %7793 = vmatpush1.msra.mxu0 %v7792
  %7794 = vmatprep.subr.mxu0 0.0
  %7795 = vmatpush1.msra.mxu0 0.0
  %7796 = vmatprep.subr.mxu0 0.0
  %7797 = vmatpush1.msra.mxu0 0.0
  %7798 = vmatprep.subr.mxu0 0.0
  %7799 = vmatpush1.msra.mxu0 0.0
  %7800 = vmatprep.subr.mxu0 0.0
  %7801 = vmatpush1.msra.mxu0 0.0
  %7802 = vmatprep.subr.mxu0 0.0
  %7803 = vmatpush1.msra.mxu0 0.0
  %7804 = vmatprep.subr.mxu0 0.0
  %7805 = vmatpush1.msra.mxu0 0.0
  %7806 = vmatprep.subr.mxu0 0.0
  %7807 = vmatpush1.msra.mxu0 0.0
  %7808 = vmatprep.subr.mxu0 0.0
  %7809 = vmatpush1.msra.mxu0 0.0
  %7810 = vmatprep.subr.mxu0 0.0
  %7811 = vmatpush1.msra.mxu0 0.0
  %7812 = vmatprep.subr.mxu0 0.0
  %7813 = vmatpush1.msra.mxu0 0.0
  %7814 = vmatprep.subr.mxu0 0.0
  %7815 = vmatpush1.msra.mxu0 0.0
  %7816 = vmatprep.subr.mxu0 0.0
  %7817 = vmatpush1.msra.mxu0 0.0
  %7818 = vmatprep.subr.mxu0 0.0
  %7819 = vmatpush1.msra.mxu0 0.0
  %7820 = vmatprep.subr.mxu0 0.0
  %7821 = vmatpush1.msra.mxu0 0.0
  %7822 = vmatprep.subr.mxu0 0.0
  %7823 = vmatpush1.msra.mxu0 0.0
  %7824 = vmatprep.subr.mxu0 0.0
  %7825 = vmatpush1.msra.mxu0 0.0
  %7826 = vmatprep.subr.mxu0 0.0
  %7827 = vmatpush1.msra.mxu0 0.0
  %7828 = vmatprep.subr.mxu0 0.0
  %7829 = vmatpush1.msra.mxu0 0.0
  %7830 = vmatprep.subr.mxu0 0.0
  %7831 = vmatpush1.msra.mxu0 0.0
  %7832 = vmatprep.subr.mxu0 0.0
  %7833 = vmatpush1.msra.mxu0 0.0
  %7834 = vmatprep.subr.mxu0 0.0
  %7835 = vmatpush1.msra.mxu0 0.0
  %7836 = vmatprep.subr.mxu0 0.0
  %7837 = vmatpush1.msra.mxu0 0.0
  %7838 = vmatprep.subr.mxu0 0.0
  %7839 = vmatpush1.msra.mxu0 0.0
  %7840 = vmatprep.subr.mxu0 0.0
  %7841 = vmatpush1.msra.mxu0 0.0
  %7842 = vmatprep.subr.mxu0 0.0
  %7843 = vmatpush1.msra.mxu0 0.0
  %7844 = vmatprep.subr.mxu0 0.0
  %7845 = vmatpush1.msra.mxu0 0.0
  %7846 = vmatprep.subr.mxu0 0.0
  %7847 = vmatpush1.msra.mxu0 0.0
  %7848 = vmatprep.subr.mxu0 0.0
  %7849 = vmatpush1.msra.mxu0 0.0
  %7850 = vmatprep.mubr.f32.mxu0 0.0
  %v7851 = vand.u32 %v7404, 4294901760
  %v7852 = vsub.f32 %v7404, %v7851
  %v7853 = vand.u32 %v7852, 4294901760
  %7854 = vmatmul.mubr.f32.gmra.mrb[0].mxu0 %v7853
  %v7855 = vpop.f32.mrb[0].mxu0
  %v7856 = vadd.f32 %v7750, %v7855
  %v7857 = vpop.f32.mrb[0].mxu0
  %v7858 = vadd.f32 %v7752, %v7857
  %7859 = vmatprep.mubr.f32.mxu0 0.0
  %v7860 = vand.u32 %v7407, 4294901760
  %v7861 = vsub.f32 %v7407, %v7860
  %v7862 = vand.u32 %v7861, 4294901760
  %7863 = vmatmul.mubr.f32.gmra.mrb[0].mxu0 %v7862
  %v7864 = vpop.f32.mrb[0].mxu0
  %v7865 = vadd.f32 %v7758, %v7864
  %v7866 = vpop.f32.mrb[0].mxu0
  %v7867 = vadd.f32 %v7760, %v7866
  %7868 = vmatprep.mubr.f32.mxu0 0.0
  %v7869 = vand.u32 %v7410, 4294901760
  %v7870 = vsub.f32 %v7410, %v7869
  %v7871 = vand.u32 %v7870, 4294901760
  %7872 = vmatmul.mubr.f32.gmra.mrb[0].mxu0 %v7871
  %v7873 = vpop.f32.mrb[0].mxu0
  %v7874 = vadd.f32 %v7766, %v7873
  %v7875 = vpop.f32.mrb[0].mxu0
  %v7876 = vadd.f32 %v7768, %v7875
  %7877 = vmatprep.mubr.f32.mxu0 0.0
  %v7878 = vand.u32 %v7413, 4294901760
  %v7879 = vsub.f32 %v7413, %v7878
  %v7880 = vand.u32 %v7879, 4294901760
  %7881 = vmatmul.mubr.f32.gmra.mrb[0].mxu0 %v7880
  %v7882 = vpop.f32.mrb[0].mxu0
  %v7883 = vadd.f32 %v7774, %v7882
  %v7884 = vpop.f32.mrb[0].mxu0
  %v7885 = vadd.f32 %v7776, %v7884
  %7886 = vdwg.mxu0
  %v7887 = vand.u32 %v19, 4294901760
  %v7888 = vsub.f32 %v19, %v7887
  %v7889 = vand.u32 %v7888, 4294901760
  %7890 = vmatprep.subr.mxu0 %v7889
  %v7891 = vand.u32 %v18, 4294901760
  %v7892 = vsub.f32 %v18, %v7891
  %v7893 = vand.u32 %v7892, 4294901760
  %7894 = vmatpush1.msra.mxu0 %v7893
  %v7895 = vand.u32 %v21, 4294901760
  %v7896 = vsub.f32 %v21, %v7895
  %v7897 = vand.u32 %v7896, 4294901760
  %7898 = vmatprep.subr.mxu0 %v7897
  %v7899 = vand.u32 %v20, 4294901760
  %v7900 = vsub.f32 %v20, %v7899
  %v7901 = vand.u32 %v7900, 4294901760
  %7902 = vmatpush1.msra.mxu0 %v7901
  %v7903 = vand.u32 %v23, 4294901760
  %v7904 = vsub.f32 %v23, %v7903
  %v7905 = vand.u32 %v7904, 4294901760
  %7906 = vmatprep.subr.mxu0 %v7905
  %v7907 = vand.u32 %v22, 4294901760
  %v7908 = vsub.f32 %v22, %v7907
  %v7909 = vand.u32 %v7908, 4294901760
  %7910 = vmatpush1.msra.mxu0 %v7909
  %v7911 = vand.u32 %v25, 4294901760
  %v7912 = vsub.f32 %v25, %v7911
  %v7913 = vand.u32 %v7912, 4294901760
  %7914 = vmatprep.subr.mxu0 %v7913
  %v7915 = vand.u32 %v24, 4294901760
  %v7916 = vsub.f32 %v24, %v7915
  %v7917 = vand.u32 %v7916, 4294901760
  %7918 = vmatpush1.msra.mxu0 %v7917
  %7919 = vmatprep.subr.mxu0 0.0
  %7920 = vmatpush1.msra.mxu0 0.0
  %7921 = vmatprep.subr.mxu0 0.0
  %7922 = vmatpush1.msra.mxu0 0.0
  %7923 = vmatprep.subr.mxu0 0.0
  %7924 = vmatpush1.msra.mxu0 0.0
  %7925 = vmatprep.subr.mxu0 0.0
  %7926 = vmatpush1.msra.mxu0 0.0
  %7927 = vmatprep.subr.mxu0 0.0
  %7928 = vmatpush1.msra.mxu0 0.0
  %7929 = vmatprep.subr.mxu0 0.0
  %7930 = vmatpush1.msra.mxu0 0.0
  %7931 = vmatprep.subr.mxu0 0.0
  %7932 = vmatpush1.msra.mxu0 0.0
  %7933 = vmatprep.subr.mxu0 0.0
  %7934 = vmatpush1.msra.mxu0 0.0
  %7935 = vmatprep.subr.mxu0 0.0
  %7936 = vmatpush1.msra.mxu0 0.0
  %7937 = vmatprep.subr.mxu0 0.0
  %7938 = vmatpush1.msra.mxu0 0.0
  %7939 = vmatprep.subr.mxu0 0.0
  %7940 = vmatpush1.msra.mxu0 0.0
  %7941 = vmatprep.subr.mxu0 0.0
  %7942 = vmatpush1.msra.mxu0 0.0
  %7943 = vmatprep.subr.mxu0 0.0
  %7944 = vmatpush1.msra.mxu0 0.0
  %7945 = vmatprep.subr.mxu0 0.0
  %7946 = vmatpush1.msra.mxu0 0.0
  %7947 = vmatprep.subr.mxu0 0.0
  %7948 = vmatpush1.msra.mxu0 0.0
  %7949 = vmatprep.subr.mxu0 0.0
  %7950 = vmatpush1.msra.mxu0 0.0
  %7951 = vmatprep.subr.mxu0 0.0
  %7952 = vmatpush1.msra.mxu0 0.0
  %7953 = vmatprep.subr.mxu0 0.0
  %7954 = vmatpush1.msra.mxu0 0.0
  %7955 = vmatprep.subr.mxu0 0.0
  %7956 = vmatpush1.msra.mxu0 0.0
  %7957 = vmatprep.subr.mxu0 0.0
  %7958 = vmatpush1.msra.mxu0 0.0
  %7959 = vmatprep.subr.mxu0 0.0
  %7960 = vmatpush1.msra.mxu0 0.0
  %7961 = vmatprep.subr.mxu0 0.0
  %7962 = vmatpush1.msra.mxu0 0.0
  %7963 = vmatprep.subr.mxu0 0.0
  %7964 = vmatpush1.msra.mxu0 0.0
  %7965 = vmatprep.subr.mxu0 0.0
  %7966 = vmatpush1.msra.mxu0 0.0
  %7967 = vmatprep.subr.mxu0 0.0
  %7968 = vmatpush1.msra.mxu0 0.0
  %7969 = vmatprep.subr.mxu0 0.0
  %7970 = vmatpush1.msra.mxu0 0.0
  %7971 = vmatprep.subr.mxu0 0.0
  %7972 = vmatpush1.msra.mxu0 0.0
  %7973 = vmatprep.subr.mxu0 0.0
  %7974 = vmatpush1.msra.mxu0 0.0
  %7975 = vmatprep.mubr.f32.mxu0 0.0
  %v7976 = vand.u32 %v7404, 4294901760
  %7977 = vmatmul.mubr.f32.gmra.mrb[0].mxu0 %v7976
  %v7978 = vpop.f32.mrb[0].mxu0
  %v7979 = vadd.f32 %v7856, %v7978
  %v7980 = vpop.f32.mrb[0].mxu0
  %v7981 = vadd.f32 %v7858, %v7980
  %7982 = vmatprep.mubr.f32.mxu0 0.0
  %v7983 = vand.u32 %v7407, 4294901760
  %7984 = vmatmul.mubr.f32.gmra.mrb[0].mxu0 %v7983
  %v7985 = vpop.f32.mrb[0].mxu0
  %v7986 = vadd.f32 %v7865, %v7985
  %v7987 = vpop.f32.mrb[0].mxu0
  %v7988 = vadd.f32 %v7867, %v7987
  %7989 = vmatprep.mubr.f32.mxu0 0.0
  %v7990 = vand.u32 %v7410, 4294901760
  %7991 = vmatmul.mubr.f32.gmra.mrb[0].mxu0 %v7990
  %v7992 = vpop.f32.mrb[0].mxu0
  %v7993 = vadd.f32 %v7874, %v7992
  %v7994 = vpop.f32.mrb[0].mxu0
  %v7995 = vadd.f32 %v7876, %v7994
  %7996 = vmatprep.mubr.f32.mxu0 0.0
  %v7997 = vand.u32 %v7413, 4294901760
  %7998 = vmatmul.mubr.f32.gmra.mrb[0].mxu0 %v7997
  %v7999 = vpop.f32.mrb[0].mxu0
  %v8000 = vadd.f32 %v7883, %v7999
  %v8001 = vpop.f32.mrb[0].mxu0
  %v8002 = vadd.f32 %v7885, %v8001
  %8003 = vdwg.mxu0
  %v8004 = vand.u32 %v19, 4294901760
  %8005 = vmatprep.subr.mxu0 %v8004
  %v8006 = vand.u32 %v18, 4294901760
  %8007 = vmatpush1.msra.mxu0 %v8006
  %v8008 = vand.u32 %v21, 4294901760
  %8009 = vmatprep.subr.mxu0 %v8008
  %v8010 = vand.u32 %v20, 4294901760
  %8011 = vmatpush1.msra.mxu0 %v8010
  %v8012 = vand.u32 %v23, 4294901760
  %8013 = vmatprep.subr.mxu0 %v8012
  %v8014 = vand.u32 %v22, 4294901760
  %8015 = vmatpush1.msra.mxu0 %v8014
  %v8016 = vand.u32 %v25, 4294901760
  %8017 = vmatprep.subr.mxu0 %v8016
  %v8018 = vand.u32 %v24, 4294901760
  %8019 = vmatpush1.msra.mxu0 %v8018
  %8020 = vmatprep.subr.mxu0 0.0
  %8021 = vmatpush1.msra.mxu0 0.0
  %8022 = vmatprep.subr.mxu0 0.0
  %8023 = vmatpush1.msra.mxu0 0.0
  %8024 = vmatprep.subr.mxu0 0.0
  %8025 = vmatpush1.msra.mxu0 0.0
  %8026 = vmatprep.subr.mxu0 0.0
  %8027 = vmatpush1.msra.mxu0 0.0
  %8028 = vmatprep.subr.mxu0 0.0
  %8029 = vmatpush1.msra.mxu0 0.0
  %8030 = vmatprep.subr.mxu0 0.0
  %8031 = vmatpush1.msra.mxu0 0.0
  %8032 = vmatprep.subr.mxu0 0.0
  %8033 = vmatpush1.msra.mxu0 0.0
  %8034 = vmatprep.subr.mxu0 0.0
  %8035 = vmatpush1.msra.mxu0 0.0
  %8036 = vmatprep.subr.mxu0 0.0
  %8037 = vmatpush1.msra.mxu0 0.0
  %8038 = vmatprep.subr.mxu0 0.0
  %8039 = vmatpush1.msra.mxu0 0.0
  %8040 = vmatprep.subr.mxu0 0.0
  %8041 = vmatpush1.msra.mxu0 0.0
  %8042 = vmatprep.subr.mxu0 0.0
  %8043 = vmatpush1.msra.mxu0 0.0
  %8044 = vmatprep.subr.mxu0 0.0
  %8045 = vmatpush1.msra.mxu0 0.0
  %8046 = vmatprep.subr.mxu0 0.0
  %8047 = vmatpush1.msra.mxu0 0.0
  %8048 = vmatprep.subr.mxu0 0.0
  %8049 = vmatpush1.msra.mxu0 0.0
  %8050 = vmatprep.subr.mxu0 0.0
  %8051 = vmatpush1.msra.mxu0 0.0
  %8052 = vmatprep.subr.mxu0 0.0
  %8053 = vmatpush1.msra.mxu0 0.0
  %8054 = vmatprep.subr.mxu0 0.0
  %8055 = vmatpush1.msra.mxu0 0.0
  %8056 = vmatprep.subr.mxu0 0.0
  %8057 = vmatpush1.msra.mxu0 0.0
  %8058 = vmatprep.subr.mxu0 0.0
  %8059 = vmatpush1.msra.mxu0 0.0
  %8060 = vmatprep.subr.mxu0 0.0
  %8061 = vmatpush1.msra.mxu0 0.0
  %8062 = vmatprep.subr.mxu0 0.0
  %8063 = vmatpush1.msra.mxu0 0.0
  %8064 = vmatprep.subr.mxu0 0.0
  %8065 = vmatpush1.msra.mxu0 0.0
  %8066 = vmatprep.subr.mxu0 0.0
  %8067 = vmatpush1.msra.mxu0 0.0
  %8068 = vmatprep.subr.mxu0 0.0
  %8069 = vmatpush1.msra.mxu0 0.0
  %8070 = vmatprep.subr.mxu0 0.0
  %8071 = vmatpush1.msra.mxu0 0.0
  %8072 = vmatprep.subr.mxu0 0.0
  %8073 = vmatpush1.msra.mxu0 0.0
  %8074 = vmatprep.subr.mxu0 0.0
  %8075 = vmatpush1.msra.mxu0 0.0
  %8076 = vmatprep.mubr.f32.mxu0 0.0
  %v8077 = vand.u32 %v7404, 4294901760
  %8078 = vmatmul.mubr.f32.gmra.mrb[0].mxu0 %v8077
  %v8079 = vpop.f32.mrb[0].mxu0
  %v8080 = vadd.f32 %v7979, %v8079
  %v8081 = vpop.f32.mrb[0].mxu0
  %v8082 = vadd.f32 %v7981, %v8081
  %8083 = vmatprep.mubr.f32.mxu0 0.0
  %v8084 = vand.u32 %v7407, 4294901760
  %8085 = vmatmul.mubr.f32.gmra.mrb[0].mxu0 %v8084
  %v8086 = vpop.f32.mrb[0].mxu0
  %v8087 = vadd.f32 %v7986, %v8086
  %v8088 = vpop.f32.mrb[0].mxu0
  %v8089 = vadd.f32 %v7988, %v8088
  %8090 = vmatprep.mubr.f32.mxu0 0.0
  %v8091 = vand.u32 %v7410, 4294901760
  %8092 = vmatmul.mubr.f32.gmra.mrb[0].mxu0 %v8091
  %v8093 = vpop.f32.mrb[0].mxu0
  %v8094 = vadd.f32 %v7993, %v8093
  %v8095 = vpop.f32.mrb[0].mxu0
  %v8096 = vadd.f32 %v7995, %v8095
  %8097 = vmatprep.mubr.f32.mxu0 0.0
  %v8098 = vand.u32 %v7413, 4294901760
  %8099 = vmatmul.mubr.f32.gmra.mrb[0].mxu0 %v8098
  %v8100 = vpop.f32.mrb[0].mxu0
  %v8101 = vadd.f32 %v8000, %v8100
  %v8102 = vpop.f32.mrb[0].mxu0
  %v8103 = vadd.f32 %v8002, %v8102
  %8104 = vdwg.mxu0
  %v8105 = vsel %vm31, %v8080, %v8082
  %v8106 = vsel %vm32, %v8087, %v8089
  %v8107 = vsel %vm33, %v8094, %v8096
  %v8108 = vsel %vm34, %v8101, %v8103
  %s8109 = scalar_lea.vmem %s0, 160
  %v8110 = vld [vmem:[%s8109] sm:$0xff]
  %v8111 = vld [vmem:[%s8109 + $0x8] sm:$0xff]
  %v8112 = vld [vmem:[%s8109 + $0x10] sm:$0xff]
  %v8113 = vld [vmem:[%s8109 + $0x18] sm:$0xff]
  %v8114 = vadd.f32 %v8105, %v8110
  %v8115 = vadd.f32 %v8106, %v8111
  %v8116 = vadd.f32 %v8107, %v8112
  %v8117 = vadd.f32 %v8108, %v8113
  %8122 = vrot.lane.b32.xlu0 %v8105, 32
  %v8123 = vpop.permute.xlu0 %8122
  %8124 = vrot.lane.b32.xlu0 %v8106, 32
  %v8125 = vpop.permute.xlu0 %8124
  %8126 = vrot.lane.b32.xlu0 %v8107, 32
  %v8127 = vpop.permute.xlu0 %8126
  %8128 = vrot.lane.b32.xlu0 %v8108, 32
  %v8129 = vpop.permute.xlu0 %8128
  %8138 = vrot.lane.b32.xlu0 %v8110, 32
  %v8139 = vpop.permute.xlu0 %8138
  %8140 = vrot.lane.b32.xlu0 %v8111, 32
  %v8141 = vpop.permute.xlu0 %8140
  %8142 = vrot.lane.b32.xlu0 %v8112, 32
  %v8143 = vpop.permute.xlu0 %8142
  %8144 = vrot.lane.b32.xlu0 %v8113, 32
  %v8145 = vpop.permute.xlu0 %8144
  %8150 = vmatprep.subr.mxu0 0.0
  %v8151 = vand.u32 %v8123, 4294901760
  %8152 = vmatpush1.msra.mxu0 %v8151
  %8153 = vmatprep.subr.mxu0 0.0
  %v8154 = vand.u32 %v8125, 4294901760
  %8155 = vmatpush1.msra.mxu0 %v8154
  %8156 = vmatprep.subr.mxu0 0.0
  %v8157 = vand.u32 %v8127, 4294901760
  %8158 = vmatpush1.msra.mxu0 %v8157
  %8159 = vmatprep.subr.mxu0 0.0
  %v8160 = vand.u32 %v8129, 4294901760
  %8161 = vmatpush1.msra.mxu0 %v8160
  %8162 = vmatprep.subr.mxu0 0.0
  %8163 = vmatpush1.msra.mxu0 0.0
  %8164 = vmatprep.subr.mxu0 0.0
  %8165 = vmatpush1.msra.mxu0 0.0
  %8166 = vmatprep.subr.mxu0 0.0
  %8167 = vmatpush1.msra.mxu0 0.0
  %8168 = vmatprep.subr.mxu0 0.0
  %8169 = vmatpush1.msra.mxu0 0.0
  %8170 = vmatprep.subr.mxu0 0.0
  %8171 = vmatpush1.msra.mxu0 0.0
  %8172 = vmatprep.subr.mxu0 0.0
  %8173 = vmatpush1.msra.mxu0 0.0
  %8174 = vmatprep.subr.mxu0 0.0
  %8175 = vmatpush1.msra.mxu0 0.0
  %8176 = vmatprep.subr.mxu0 0.0
  %8177 = vmatpush1.msra.mxu0 0.0
  %8178 = vmatprep.subr.mxu0 0.0
  %8179 = vmatpush1.msra.mxu0 0.0
  %8180 = vmatprep.subr.mxu0 0.0
  %8181 = vmatpush1.msra.mxu0 0.0
  %8182 = vmatprep.subr.mxu0 0.0
  %8183 = vmatpush1.msra.mxu0 0.0
  %8184 = vmatprep.subr.mxu0 0.0
  %8185 = vmatpush1.msra.mxu0 0.0
  %8186 = vmatprep.subr.mxu0 0.0
  %8187 = vmatpush1.msra.mxu0 0.0
  %8188 = vmatprep.subr.mxu0 0.0
  %8189 = vmatpush1.msra.mxu0 0.0
  %8190 = vmatprep.subr.mxu0 0.0
  %8191 = vmatpush1.msra.mxu0 0.0
  %8192 = vmatprep.subr.mxu0 0.0
  %8193 = vmatpush1.msra.mxu0 0.0
  %8194 = vmatprep.subr.mxu0 0.0
  %8195 = vmatpush1.msra.mxu0 0.0
  %8196 = vmatprep.subr.mxu0 0.0
  %8197 = vmatpush1.msra.mxu0 0.0
  %8198 = vmatprep.subr.mxu0 0.0
  %8199 = vmatpush1.msra.mxu0 0.0
  %8200 = vmatprep.subr.mxu0 0.0
  %8201 = vmatpush1.msra.mxu0 0.0
  %8202 = vmatprep.subr.mxu0 0.0
  %8203 = vmatpush1.msra.mxu0 0.0
  %8204 = vmatprep.subr.mxu0 0.0
  %8205 = vmatpush1.msra.mxu0 0.0
  %8206 = vmatprep.subr.mxu0 0.0
  %8207 = vmatpush1.msra.mxu0 0.0
  %8208 = vmatprep.subr.mxu0 0.0
  %8209 = vmatpush1.msra.mxu0 0.0
  %8210 = vmatprep.subr.mxu0 0.0
  %8211 = vmatpush1.msra.mxu0 0.0
  %8212 = vmatprep.subr.mxu0 0.0
  %8213 = vmatpush1.msra.mxu0 0.0
  %8214 = vmatprep.subr.mxu0 0.0
  %8215 = vmatpush1.msra.mxu0 0.0
  %8216 = vmatprep.subr.mxu0 0.0
  %8217 = vmatpush1.msra.mxu0 0.0
  %8218 = vmatprep.mubr.f32.mxu0 0.0
  %v8219 = vand.u32 %v774, 4294901760
  %v8220 = vsub.f32 %v774, %v8219
  %v8221 = vand.u32 %v8220, 4294901760
  %v8222 = vsub.f32 %v8220, %v8221
  %v8223 = vand.u32 %v8222, 4294901760
  %8224 = vmatmul.mubr.f32.gmra.mrb[0].mxu0 %v8223
  %v8225 = vpop.f32.mrb[0].mxu0
  %v8226 = vadd.f32 %v8139, %v8225
  %v8227 = vpop.f32.mrb[0].mxu0
  %8228 = vmatprep.mubr.f32.mxu0 0.0
  %v8229 = vand.u32 %v777, 4294901760
  %v8230 = vsub.f32 %v777, %v8229
  %v8231 = vand.u32 %v8230, 4294901760
  %v8232 = vsub.f32 %v8230, %v8231
  %v8233 = vand.u32 %v8232, 4294901760
  %8234 = vmatmul.mubr.f32.gmra.mrb[0].mxu0 %v8233
  %v8235 = vpop.f32.mrb[0].mxu0
  %v8236 = vadd.f32 %v8141, %v8235
  %v8237 = vpop.f32.mrb[0].mxu0
  %8238 = vmatprep.mubr.f32.mxu0 0.0
  %v8239 = vand.u32 %v780, 4294901760
  %v8240 = vsub.f32 %v780, %v8239
  %v8241 = vand.u32 %v8240, 4294901760
  %v8242 = vsub.f32 %v8240, %v8241
  %v8243 = vand.u32 %v8242, 4294901760
  %8244 = vmatmul.mubr.f32.gmra.mrb[0].mxu0 %v8243
  %v8245 = vpop.f32.mrb[0].mxu0
  %v8246 = vadd.f32 %v8143, %v8245
  %v8247 = vpop.f32.mrb[0].mxu0
  %8248 = vmatprep.mubr.f32.mxu0 0.0
  %v8249 = vand.u32 %v783, 4294901760
  %v8250 = vsub.f32 %v783, %v8249
  %v8251 = vand.u32 %v8250, 4294901760
  %v8252 = vsub.f32 %v8250, %v8251
  %v8253 = vand.u32 %v8252, 4294901760
  %8254 = vmatmul.mubr.f32.gmra.mrb[0].mxu0 %v8253
  %v8255 = vpop.f32.mrb[0].mxu0
  %v8256 = vadd.f32 %v8145, %v8255
  %v8257 = vpop.f32.mrb[0].mxu0
  %8258 = vdwg.mxu0
  %8259 = vmatprep.subr.mxu0 0.0
  %v8260 = vand.u32 %v8123, 4294901760
  %v8261 = vsub.f32 %v8123, %v8260
  %v8262 = vand.u32 %v8261, 4294901760
  %v8263 = vsub.f32 %v8261, %v8262
  %v8264 = vand.u32 %v8263, 4294901760
  %8265 = vmatpush1.msra.mxu0 %v8264
  %8266 = vmatprep.subr.mxu0 0.0
  %v8267 = vand.u32 %v8125, 4294901760
  %v8268 = vsub.f32 %v8125, %v8267
  %v8269 = vand.u32 %v8268, 4294901760
  %v8270 = vsub.f32 %v8268, %v8269
  %v8271 = vand.u32 %v8270, 4294901760
  %8272 = vmatpush1.msra.mxu0 %v8271
  %8273 = vmatprep.subr.mxu0 0.0
  %v8274 = vand.u32 %v8127, 4294901760
  %v8275 = vsub.f32 %v8127, %v8274
  %v8276 = vand.u32 %v8275, 4294901760
  %v8277 = vsub.f32 %v8275, %v8276
  %v8278 = vand.u32 %v8277, 4294901760
  %8279 = vmatpush1.msra.mxu0 %v8278
  %8280 = vmatprep.subr.mxu0 0.0
  %v8281 = vand.u32 %v8129, 4294901760
  %v8282 = vsub.f32 %v8129, %v8281
  %v8283 = vand.u32 %v8282, 4294901760
  %v8284 = vsub.f32 %v8282, %v8283
  %v8285 = vand.u32 %v8284, 4294901760
  %8286 = vmatpush1.msra.mxu0 %v8285
  %8287 = vmatprep.subr.mxu0 0.0
  %8288 = vmatpush1.msra.mxu0 0.0
  %8289 = vmatprep.subr.mxu0 0.0
  %8290 = vmatpush1.msra.mxu0 0.0
  %8291 = vmatprep.subr.mxu0 0.0
  %8292 = vmatpush1.msra.mxu0 0.0
  %8293 = vmatprep.subr.mxu0 0.0
  %8294 = vmatpush1.msra.mxu0 0.0
  %8295 = vmatprep.subr.mxu0 0.0
  %8296 = vmatpush1.msra.mxu0 0.0
  %8297 = vmatprep.subr.mxu0 0.0
  %8298 = vmatpush1.msra.mxu0 0.0
  %8299 = vmatprep.subr.mxu0 0.0
  %8300 = vmatpush1.msra.mxu0 0.0
  %8301 = vmatprep.subr.mxu0 0.0
  %8302 = vmatpush1.msra.mxu0 0.0
  %8303 = vmatprep.subr.mxu0 0.0
  %8304 = vmatpush1.msra.mxu0 0.0
  %8305 = vmatprep.subr.mxu0 0.0
  %8306 = vmatpush1.msra.mxu0 0.0
  %8307 = vmatprep.subr.mxu0 0.0
  %8308 = vmatpush1.msra.mxu0 0.0
  %8309 = vmatprep.subr.mxu0 0.0
  %8310 = vmatpush1.msra.mxu0 0.0
  %8311 = vmatprep.subr.mxu0 0.0
  %8312 = vmatpush1.msra.mxu0 0.0
  %8313 = vmatprep.subr.mxu0 0.0
  %8314 = vmatpush1.msra.mxu0 0.0
  %8315 = vmatprep.subr.mxu0 0.0
  %8316 = vmatpush1.msra.mxu0 0.0
  %8317 = vmatprep.subr.mxu0 0.0
  %8318 = vmatpush1.msra.mxu0 0.0
  %8319 = vmatprep.subr.mxu0 0.0
  %8320 = vmatpush1.msra.mxu0 0.0
  %8321 = vmatprep.subr.mxu0 0.0
  %8322 = vmatpush1.msra.mxu0 0.0
  %8323 = vmatprep.subr.mxu0 0.0
  %8324 = vmatpush1.msra.mxu0 0.0
  %8325 = vmatprep.subr.mxu0 0.0
  %8326 = vmatpush1.msra.mxu0 0.0
  %8327 = vmatprep.subr.mxu0 0.0
  %8328 = vmatpush1.msra.mxu0 0.0
  %8329 = vmatprep.subr.mxu0 0.0
  %8330 = vmatpush1.msra.mxu0 0.0
  %8331 = vmatprep.subr.mxu0 0.0
  %8332 = vmatpush1.msra.mxu0 0.0
  %8333 = vmatprep.subr.mxu0 0.0
  %8334 = vmatpush1.msra.mxu0 0.0
  %8335 = vmatprep.subr.mxu0 0.0
  %8336 = vmatpush1.msra.mxu0 0.0
  %8337 = vmatprep.subr.mxu0 0.0
  %8338 = vmatpush1.msra.mxu0 0.0
  %8339 = vmatprep.subr.mxu0 0.0
  %8340 = vmatpush1.msra.mxu0 0.0
  %8341 = vmatprep.subr.mxu0 0.0
  %8342 = vmatpush1.msra.mxu0 0.0
  %8343 = vmatprep.mubr.f32.mxu0 0.0
  %v8344 = vand.u32 %v774, 4294901760
  %8345 = vmatmul.mubr.f32.gmra.mrb[0].mxu0 %v8344
  %v8346 = vpop.f32.mrb[0].mxu0
  %v8347 = vadd.f32 %v8226, %v8346
  %v8348 = vpop.f32.mrb[0].mxu0
  %8349 = vmatprep.mubr.f32.mxu0 0.0
  %v8350 = vand.u32 %v777, 4294901760
  %8351 = vmatmul.mubr.f32.gmra.mrb[0].mxu0 %v8350
  %v8352 = vpop.f32.mrb[0].mxu0
  %v8353 = vadd.f32 %v8236, %v8352
  %v8354 = vpop.f32.mrb[0].mxu0
  %8355 = vmatprep.mubr.f32.mxu0 0.0
  %v8356 = vand.u32 %v780, 4294901760
  %8357 = vmatmul.mubr.f32.gmra.mrb[0].mxu0 %v8356
  %v8358 = vpop.f32.mrb[0].mxu0
  %v8359 = vadd.f32 %v8246, %v8358
  %v8360 = vpop.f32.mrb[0].mxu0
  %8361 = vmatprep.mubr.f32.mxu0 0.0
  %v8362 = vand.u32 %v783, 4294901760
  %8363 = vmatmul.mubr.f32.gmra.mrb[0].mxu0 %v8362
  %v8364 = vpop.f32.mrb[0].mxu0
  %v8365 = vadd.f32 %v8256, %v8364
  %v8366 = vpop.f32.mrb[0].mxu0
  %8367 = vdwg.mxu0
  %8368 = vmatprep.subr.mxu0 0.0
  %v8369 = vand.u32 %v8123, 4294901760
  %v8370 = vsub.f32 %v8123, %v8369
  %8371 = vmatpush1.msra.mxu0 %v8370
  %8372 = vmatprep.subr.mxu0 0.0
  %v8373 = vand.u32 %v8125, 4294901760
  %v8374 = vsub.f32 %v8125, %v8373
  %8375 = vmatpush1.msra.mxu0 %v8374
  %8376 = vmatprep.subr.mxu0 0.0
  %v8377 = vand.u32 %v8127, 4294901760
  %v8378 = vsub.f32 %v8127, %v8377
  %8379 = vmatpush1.msra.mxu0 %v8378
  %8380 = vmatprep.subr.mxu0 0.0
  %v8381 = vand.u32 %v8129, 4294901760
  %v8382 = vsub.f32 %v8129, %v8381
  %8383 = vmatpush1.msra.mxu0 %v8382
  %8384 = vmatprep.subr.mxu0 0.0
  %8385 = vmatpush1.msra.mxu0 0.0
  %8386 = vmatprep.subr.mxu0 0.0
  %8387 = vmatpush1.msra.mxu0 0.0
  %8388 = vmatprep.subr.mxu0 0.0
  %8389 = vmatpush1.msra.mxu0 0.0
  %8390 = vmatprep.subr.mxu0 0.0
  %8391 = vmatpush1.msra.mxu0 0.0
  %8392 = vmatprep.subr.mxu0 0.0
  %8393 = vmatpush1.msra.mxu0 0.0
  %8394 = vmatprep.subr.mxu0 0.0
  %8395 = vmatpush1.msra.mxu0 0.0
  %8396 = vmatprep.subr.mxu0 0.0
  %8397 = vmatpush1.msra.mxu0 0.0
  %8398 = vmatprep.subr.mxu0 0.0
  %8399 = vmatpush1.msra.mxu0 0.0
  %8400 = vmatprep.subr.mxu0 0.0
  %8401 = vmatpush1.msra.mxu0 0.0
  %8402 = vmatprep.subr.mxu0 0.0
  %8403 = vmatpush1.msra.mxu0 0.0
  %8404 = vmatprep.subr.mxu0 0.0
  %8405 = vmatpush1.msra.mxu0 0.0
  %8406 = vmatprep.subr.mxu0 0.0
  %8407 = vmatpush1.msra.mxu0 0.0
  %8408 = vmatprep.subr.mxu0 0.0
  %8409 = vmatpush1.msra.mxu0 0.0
  %8410 = vmatprep.subr.mxu0 0.0
  %8411 = vmatpush1.msra.mxu0 0.0
  %8412 = vmatprep.subr.mxu0 0.0
  %8413 = vmatpush1.msra.mxu0 0.0
  %8414 = vmatprep.subr.mxu0 0.0
  %8415 = vmatpush1.msra.mxu0 0.0
  %8416 = vmatprep.subr.mxu0 0.0
  %8417 = vmatpush1.msra.mxu0 0.0
  %8418 = vmatprep.subr.mxu0 0.0
  %8419 = vmatpush1.msra.mxu0 0.0
  %8420 = vmatprep.subr.mxu0 0.0
  %8421 = vmatpush1.msra.mxu0 0.0
  %8422 = vmatprep.subr.mxu0 0.0
  %8423 = vmatpush1.msra.mxu0 0.0
  %8424 = vmatprep.subr.mxu0 0.0
  %8425 = vmatpush1.msra.mxu0 0.0
  %8426 = vmatprep.subr.mxu0 0.0
  %8427 = vmatpush1.msra.mxu0 0.0
  %8428 = vmatprep.subr.mxu0 0.0
  %8429 = vmatpush1.msra.mxu0 0.0
  %8430 = vmatprep.subr.mxu0 0.0
  %8431 = vmatpush1.msra.mxu0 0.0
  %8432 = vmatprep.subr.mxu0 0.0
  %8433 = vmatpush1.msra.mxu0 0.0
  %8434 = vmatprep.subr.mxu0 0.0
  %8435 = vmatpush1.msra.mxu0 0.0
  %8436 = vmatprep.subr.mxu0 0.0
  %8437 = vmatpush1.msra.mxu0 0.0
  %8438 = vmatprep.subr.mxu0 0.0
  %8439 = vmatpush1.msra.mxu0 0.0
  %8440 = vmatprep.mubr.f32.mxu0 0.0
  %v8441 = vand.u32 %v774, 4294901760
  %v8442 = vsub.f32 %v774, %v8441
  %8443 = vmatmul.mubr.f32.gmra.mrb[0].mxu0 %v8442
  %v8444 = vpop.f32.mrb[0].mxu0
  %v8445 = vadd.f32 %v8347, %v8444
  %v8446 = vpop.f32.mrb[0].mxu0
  %8447 = vmatprep.mubr.f32.mxu0 0.0
  %v8448 = vand.u32 %v777, 4294901760
  %v8449 = vsub.f32 %v777, %v8448
  %8450 = vmatmul.mubr.f32.gmra.mrb[0].mxu0 %v8449
  %v8451 = vpop.f32.mrb[0].mxu0
  %v8452 = vadd.f32 %v8353, %v8451
  %v8453 = vpop.f32.mrb[0].mxu0
  %8454 = vmatprep.mubr.f32.mxu0 0.0
  %v8455 = vand.u32 %v780, 4294901760
  %v8456 = vsub.f32 %v780, %v8455
  %8457 = vmatmul.mubr.f32.gmra.mrb[0].mxu0 %v8456
  %v8458 = vpop.f32.mrb[0].mxu0
  %v8459 = vadd.f32 %v8359, %v8458
  %v8460 = vpop.f32.mrb[0].mxu0
  %8461 = vmatprep.mubr.f32.mxu0 0.0
  %v8462 = vand.u32 %v783, 4294901760
  %v8463 = vsub.f32 %v783, %v8462
  %8464 = vmatmul.mubr.f32.gmra.mrb[0].mxu0 %v8463
  %v8465 = vpop.f32.mrb[0].mxu0
  %v8466 = vadd.f32 %v8365, %v8465
  %v8467 = vpop.f32.mrb[0].mxu0
  %8468 = vdwg.mxu0
  %8469 = vmatprep.subr.mxu0 0.0
  %v8470 = vand.u32 %v8123, 4294901760
  %8471 = vmatpush1.msra.mxu0 %v8470
  %8472 = vmatprep.subr.mxu0 0.0
  %v8473 = vand.u32 %v8125, 4294901760
  %8474 = vmatpush1.msra.mxu0 %v8473
  %8475 = vmatprep.subr.mxu0 0.0
  %v8476 = vand.u32 %v8127, 4294901760
  %8477 = vmatpush1.msra.mxu0 %v8476
  %8478 = vmatprep.subr.mxu0 0.0
  %v8479 = vand.u32 %v8129, 4294901760
  %8480 = vmatpush1.msra.mxu0 %v8479
  %8481 = vmatprep.subr.mxu0 0.0
  %8482 = vmatpush1.msra.mxu0 0.0
  %8483 = vmatprep.subr.mxu0 0.0
  %8484 = vmatpush1.msra.mxu0 0.0
  %8485 = vmatprep.subr.mxu0 0.0
  %8486 = vmatpush1.msra.mxu0 0.0
  %8487 = vmatprep.subr.mxu0 0.0
  %8488 = vmatpush1.msra.mxu0 0.0
  %8489 = vmatprep.subr.mxu0 0.0
  %8490 = vmatpush1.msra.mxu0 0.0
  %8491 = vmatprep.subr.mxu0 0.0
  %8492 = vmatpush1.msra.mxu0 0.0
  %8493 = vmatprep.subr.mxu0 0.0
  %8494 = vmatpush1.msra.mxu0 0.0
  %8495 = vmatprep.subr.mxu0 0.0
  %8496 = vmatpush1.msra.mxu0 0.0
  %8497 = vmatprep.subr.mxu0 0.0
  %8498 = vmatpush1.msra.mxu0 0.0
  %8499 = vmatprep.subr.mxu0 0.0
  %8500 = vmatpush1.msra.mxu0 0.0
  %8501 = vmatprep.subr.mxu0 0.0
  %8502 = vmatpush1.msra.mxu0 0.0
  %8503 = vmatprep.subr.mxu0 0.0
  %8504 = vmatpush1.msra.mxu0 0.0
  %8505 = vmatprep.subr.mxu0 0.0
  %8506 = vmatpush1.msra.mxu0 0.0
  %8507 = vmatprep.subr.mxu0 0.0
  %8508 = vmatpush1.msra.mxu0 0.0
  %8509 = vmatprep.subr.mxu0 0.0
  %8510 = vmatpush1.msra.mxu0 0.0
  %8511 = vmatprep.subr.mxu0 0.0
  %8512 = vmatpush1.msra.mxu0 0.0
  %8513 = vmatprep.subr.mxu0 0.0
  %8514 = vmatpush1.msra.mxu0 0.0
  %8515 = vmatprep.subr.mxu0 0.0
  %8516 = vmatpush1.msra.mxu0 0.0
  %8517 = vmatprep.subr.mxu0 0.0
  %8518 = vmatpush1.msra.mxu0 0.0
  %8519 = vmatprep.subr.mxu0 0.0
  %8520 = vmatpush1.msra.mxu0 0.0
  %8521 = vmatprep.subr.mxu0 0.0
  %8522 = vmatpush1.msra.mxu0 0.0
  %8523 = vmatprep.subr.mxu0 0.0
  %8524 = vmatpush1.msra.mxu0 0.0
  %8525 = vmatprep.subr.mxu0 0.0
  %8526 = vmatpush1.msra.mxu0 0.0
  %8527 = vmatprep.subr.mxu0 0.0
  %8528 = vmatpush1.msra.mxu0 0.0
  %8529 = vmatprep.subr.mxu0 0.0
  %8530 = vmatpush1.msra.mxu0 0.0
  %8531 = vmatprep.subr.mxu0 0.0
  %8532 = vmatpush1.msra.mxu0 0.0
  %8533 = vmatprep.subr.mxu0 0.0
  %8534 = vmatpush1.msra.mxu0 0.0
  %8535 = vmatprep.subr.mxu0 0.0
  %8536 = vmatpush1.msra.mxu0 0.0
  %8537 = vmatprep.mubr.f32.mxu0 0.0
  %v8538 = vand.u32 %v774, 4294901760
  %v8539 = vsub.f32 %v774, %v8538
  %v8540 = vand.u32 %v8539, 4294901760
  %8541 = vmatmul.mubr.f32.gmra.mrb[0].mxu0 %v8540
  %v8542 = vpop.f32.mrb[0].mxu0
  %v8543 = vadd.f32 %v8445, %v8542
  %v8544 = vpop.f32.mrb[0].mxu0
  %8545 = vmatprep.mubr.f32.mxu0 0.0
  %v8546 = vand.u32 %v777, 4294901760
  %v8547 = vsub.f32 %v777, %v8546
  %v8548 = vand.u32 %v8547, 4294901760
  %8549 = vmatmul.mubr.f32.gmra.mrb[0].mxu0 %v8548
  %v8550 = vpop.f32.mrb[0].mxu0
  %v8551 = vadd.f32 %v8452, %v8550
  %v8552 = vpop.f32.mrb[0].mxu0
  %8553 = vmatprep.mubr.f32.mxu0 0.0
  %v8554 = vand.u32 %v780, 4294901760
  %v8555 = vsub.f32 %v780, %v8554
  %v8556 = vand.u32 %v8555, 4294901760
  %8557 = vmatmul.mubr.f32.gmra.mrb[0].mxu0 %v8556
  %v8558 = vpop.f32.mrb[0].mxu0
  %v8559 = vadd.f32 %v8459, %v8558
  %v8560 = vpop.f32.mrb[0].mxu0
  %8561 = vmatprep.mubr.f32.mxu0 0.0
  %v8562 = vand.u32 %v783, 4294901760
  %v8563 = vsub.f32 %v783, %v8562
  %v8564 = vand.u32 %v8563, 4294901760
  %8565 = vmatmul.mubr.f32.gmra.mrb[0].mxu0 %v8564
  %v8566 = vpop.f32.mrb[0].mxu0
  %v8567 = vadd.f32 %v8466, %v8566
  %v8568 = vpop.f32.mrb[0].mxu0
  %8569 = vdwg.mxu0
  %8570 = vmatprep.subr.mxu0 0.0
  %v8571 = vand.u32 %v8123, 4294901760
  %v8572 = vsub.f32 %v8123, %v8571
  %v8573 = vand.u32 %v8572, 4294901760
  %8574 = vmatpush1.msra.mxu0 %v8573
  %8575 = vmatprep.subr.mxu0 0.0
  %v8576 = vand.u32 %v8125, 4294901760
  %v8577 = vsub.f32 %v8125, %v8576
  %v8578 = vand.u32 %v8577, 4294901760
  %8579 = vmatpush1.msra.mxu0 %v8578
  %8580 = vmatprep.subr.mxu0 0.0
  %v8581 = vand.u32 %v8127, 4294901760
  %v8582 = vsub.f32 %v8127, %v8581
  %v8583 = vand.u32 %v8582, 4294901760
  %8584 = vmatpush1.msra.mxu0 %v8583
  %8585 = vmatprep.subr.mxu0 0.0
  %v8586 = vand.u32 %v8129, 4294901760
  %v8587 = vsub.f32 %v8129, %v8586
  %v8588 = vand.u32 %v8587, 4294901760
  %8589 = vmatpush1.msra.mxu0 %v8588
  %8590 = vmatprep.subr.mxu0 0.0
  %8591 = vmatpush1.msra.mxu0 0.0
  %8592 = vmatprep.subr.mxu0 0.0
  %8593 = vmatpush1.msra.mxu0 0.0
  %8594 = vmatprep.subr.mxu0 0.0
  %8595 = vmatpush1.msra.mxu0 0.0
  %8596 = vmatprep.subr.mxu0 0.0
  %8597 = vmatpush1.msra.mxu0 0.0
  %8598 = vmatprep.subr.mxu0 0.0
  %8599 = vmatpush1.msra.mxu0 0.0
  %8600 = vmatprep.subr.mxu0 0.0
  %8601 = vmatpush1.msra.mxu0 0.0
  %8602 = vmatprep.subr.mxu0 0.0
  %8603 = vmatpush1.msra.mxu0 0.0
  %8604 = vmatprep.subr.mxu0 0.0
  %8605 = vmatpush1.msra.mxu0 0.0
  %8606 = vmatprep.subr.mxu0 0.0
  %8607 = vmatpush1.msra.mxu0 0.0
  %8608 = vmatprep.subr.mxu0 0.0
  %8609 = vmatpush1.msra.mxu0 0.0
  %8610 = vmatprep.subr.mxu0 0.0
  %8611 = vmatpush1.msra.mxu0 0.0
  %8612 = vmatprep.subr.mxu0 0.0
  %8613 = vmatpush1.msra.mxu0 0.0
  %8614 = vmatprep.subr.mxu0 0.0
  %8615 = vmatpush1.msra.mxu0 0.0
  %8616 = vmatprep.subr.mxu0 0.0
  %8617 = vmatpush1.msra.mxu0 0.0
  %8618 = vmatprep.subr.mxu0 0.0
  %8619 = vmatpush1.msra.mxu0 0.0
  %8620 = vmatprep.subr.mxu0 0.0
  %8621 = vmatpush1.msra.mxu0 0.0
  %8622 = vmatprep.subr.mxu0 0.0
  %8623 = vmatpush1.msra.mxu0 0.0
  %8624 = vmatprep.subr.mxu0 0.0
  %8625 = vmatpush1.msra.mxu0 0.0
  %8626 = vmatprep.subr.mxu0 0.0
  %8627 = vmatpush1.msra.mxu0 0.0
  %8628 = vmatprep.subr.mxu0 0.0
  %8629 = vmatpush1.msra.mxu0 0.0
  %8630 = vmatprep.subr.mxu0 0.0
  %8631 = vmatpush1.msra.mxu0 0.0
  %8632 = vmatprep.subr.mxu0 0.0
  %8633 = vmatpush1.msra.mxu0 0.0
  %8634 = vmatprep.subr.mxu0 0.0
  %8635 = vmatpush1.msra.mxu0 0.0
  %8636 = vmatprep.subr.mxu0 0.0
  %8637 = vmatpush1.msra.mxu0 0.0
  %8638 = vmatprep.subr.mxu0 0.0
  %8639 = vmatpush1.msra.mxu0 0.0
  %8640 = vmatprep.subr.mxu0 0.0
  %8641 = vmatpush1.msra.mxu0 0.0
  %8642 = vmatprep.subr.mxu0 0.0
  %8643 = vmatpush1.msra.mxu0 0.0
  %8644 = vmatprep.subr.mxu0 0.0
  %8645 = vmatpush1.msra.mxu0 0.0
  %8646 = vmatprep.mubr.f32.mxu0 0.0
  %v8647 = vand.u32 %v774, 4294901760
  %8648 = vmatmul.mubr.f32.gmra.mrb[0].mxu0 %v8647
  %v8649 = vpop.f32.mrb[0].mxu0
  %v8650 = vadd.f32 %v8543, %v8649
  %v8651 = vpop.f32.mrb[0].mxu0
  %8652 = vmatprep.mubr.f32.mxu0 0.0
  %v8653 = vand.u32 %v777, 4294901760
  %8654 = vmatmul.mubr.f32.gmra.mrb[0].mxu0 %v8653
  %v8655 = vpop.f32.mrb[0].mxu0
  %v8656 = vadd.f32 %v8551, %v8655
  %v8657 = vpop.f32.mrb[0].mxu0
  %8658 = vmatprep.mubr.f32.mxu0 0.0
  %v8659 = vand.u32 %v780, 4294901760
  %8660 = vmatmul.mubr.f32.gmra.mrb[0].mxu0 %v8659
  %v8661 = vpop.f32.mrb[0].mxu0
  %v8662 = vadd.f32 %v8559, %v8661
  %v8663 = vpop.f32.mrb[0].mxu0
  %8664 = vmatprep.mubr.f32.mxu0 0.0
  %v8665 = vand.u32 %v783, 4294901760
  %8666 = vmatmul.mubr.f32.gmra.mrb[0].mxu0 %v8665
  %v8667 = vpop.f32.mrb[0].mxu0
  %v8668 = vadd.f32 %v8567, %v8667
  %v8669 = vpop.f32.mrb[0].mxu0
  %8670 = vdwg.mxu0
  %8671 = vmatprep.subr.mxu0 0.0
  %v8672 = vand.u32 %v8123, 4294901760
  %8673 = vmatpush1.msra.mxu0 %v8672
  %8674 = vmatprep.subr.mxu0 0.0
  %v8675 = vand.u32 %v8125, 4294901760
  %8676 = vmatpush1.msra.mxu0 %v8675
  %8677 = vmatprep.subr.mxu0 0.0
  %v8678 = vand.u32 %v8127, 4294901760
  %8679 = vmatpush1.msra.mxu0 %v8678
  %8680 = vmatprep.subr.mxu0 0.0
  %v8681 = vand.u32 %v8129, 4294901760
  %8682 = vmatpush1.msra.mxu0 %v8681
  %8683 = vmatprep.subr.mxu0 0.0
  %8684 = vmatpush1.msra.mxu0 0.0
  %8685 = vmatprep.subr.mxu0 0.0
  %8686 = vmatpush1.msra.mxu0 0.0
  %8687 = vmatprep.subr.mxu0 0.0
  %8688 = vmatpush1.msra.mxu0 0.0
  %8689 = vmatprep.subr.mxu0 0.0
  %8690 = vmatpush1.msra.mxu0 0.0
  %8691 = vmatprep.subr.mxu0 0.0
  %8692 = vmatpush1.msra.mxu0 0.0
  %8693 = vmatprep.subr.mxu0 0.0
  %8694 = vmatpush1.msra.mxu0 0.0
  %8695 = vmatprep.subr.mxu0 0.0
  %8696 = vmatpush1.msra.mxu0 0.0
  %8697 = vmatprep.subr.mxu0 0.0
  %8698 = vmatpush1.msra.mxu0 0.0
  %8699 = vmatprep.subr.mxu0 0.0
  %8700 = vmatpush1.msra.mxu0 0.0
  %8701 = vmatprep.subr.mxu0 0.0
  %8702 = vmatpush1.msra.mxu0 0.0
  %8703 = vmatprep.subr.mxu0 0.0
  %8704 = vmatpush1.msra.mxu0 0.0
  %8705 = vmatprep.subr.mxu0 0.0
  %8706 = vmatpush1.msra.mxu0 0.0
  %8707 = vmatprep.subr.mxu0 0.0
  %8708 = vmatpush1.msra.mxu0 0.0
  %8709 = vmatprep.subr.mxu0 0.0
  %8710 = vmatpush1.msra.mxu0 0.0
  %8711 = vmatprep.subr.mxu0 0.0
  %8712 = vmatpush1.msra.mxu0 0.0
  %8713 = vmatprep.subr.mxu0 0.0
  %8714 = vmatpush1.msra.mxu0 0.0
  %8715 = vmatprep.subr.mxu0 0.0
  %8716 = vmatpush1.msra.mxu0 0.0
  %8717 = vmatprep.subr.mxu0 0.0
  %8718 = vmatpush1.msra.mxu0 0.0
  %8719 = vmatprep.subr.mxu0 0.0
  %8720 = vmatpush1.msra.mxu0 0.0
  %8721 = vmatprep.subr.mxu0 0.0
  %8722 = vmatpush1.msra.mxu0 0.0
  %8723 = vmatprep.subr.mxu0 0.0
  %8724 = vmatpush1.msra.mxu0 0.0
  %8725 = vmatprep.subr.mxu0 0.0
  %8726 = vmatpush1.msra.mxu0 0.0
  %8727 = vmatprep.subr.mxu0 0.0
  %8728 = vmatpush1.msra.mxu0 0.0
  %8729 = vmatprep.subr.mxu0 0.0
  %8730 = vmatpush1.msra.mxu0 0.0
  %8731 = vmatprep.subr.mxu0 0.0
  %8732 = vmatpush1.msra.mxu0 0.0
  %8733 = vmatprep.subr.mxu0 0.0
  %8734 = vmatpush1.msra.mxu0 0.0
  %8735 = vmatprep.subr.mxu0 0.0
  %8736 = vmatpush1.msra.mxu0 0.0
  %8737 = vmatprep.subr.mxu0 0.0
  %8738 = vmatpush1.msra.mxu0 0.0
  %8739 = vmatprep.mubr.f32.mxu0 0.0
  %v8740 = vand.u32 %v774, 4294901760
  %8741 = vmatmul.mubr.f32.gmra.mrb[0].mxu0 %v8740
  %v8742 = vpop.f32.mrb[0].mxu0
  %v8743 = vadd.f32 %v8650, %v8742
  %v8744 = vpop.f32.mrb[0].mxu0
  %8745 = vmatprep.mubr.f32.mxu0 0.0
  %v8746 = vand.u32 %v777, 4294901760
  %8747 = vmatmul.mubr.f32.gmra.mrb[0].mxu0 %v8746
  %v8748 = vpop.f32.mrb[0].mxu0
  %v8749 = vadd.f32 %v8656, %v8748
  %v8750 = vpop.f32.mrb[0].mxu0
  %8751 = vmatprep.mubr.f32.mxu0 0.0
  %v8752 = vand.u32 %v780, 4294901760
  %8753 = vmatmul.mubr.f32.gmra.mrb[0].mxu0 %v8752
  %v8754 = vpop.f32.mrb[0].mxu0
  %v8755 = vadd.f32 %v8662, %v8754
  %v8756 = vpop.f32.mrb[0].mxu0
  %8757 = vmatprep.mubr.f32.mxu0 0.0
  %v8758 = vand.u32 %v783, 4294901760
  %8759 = vmatmul.mubr.f32.gmra.mrb[0].mxu0 %v8758
  %v8760 = vpop.f32.mrb[0].mxu0
  %v8761 = vadd.f32 %v8668, %v8760
  %v8762 = vpop.f32.mrb[0].mxu0
  %8763 = vdwg.mxu0
  %v8764 = vadd.f32 %v8743, %v8114
  %v8765 = vadd.f32 %v8749, %v8115
  %v8766 = vadd.f32 %v8755, %v8116
  %v8767 = vadd.f32 %v8761, %v8117
  %v8768 = vxor.u32 %v8764, 2147483648
  %v8769 = vxor.u32 %v8765, 2147483648
  %v8770 = vxor.u32 %v8766, 2147483648
  %v8771 = vxor.u32 %v8767, 2147483648
  %v8772 = vmul.f32 %v8768, 1.442695
  %v8773 = vpow.pop %v8772
  %v8774 = vmul.f32 %v8769, 1.442695
  %v8775 = vpow.pop %v8774
  %v8776 = vmul.f32 %v8770, 1.442695
  %v8777 = vpow.pop %v8776
  %v8778 = vmul.f32 %v8771, 1.442695
  %v8779 = vpow.pop %v8778
  %v8780 = vadd.f32 %v8773, 1.0
  %v8781 = vadd.f32 %v8775, 1.0
  %v8782 = vadd.f32 %v8777, 1.0
  %v8783 = vadd.f32 %v8779, 1.0
  %v8784 = vrcp.pop %v8780
  %v8785 = vmul.f32 1.0, %v8784
  %v8786 = vrcp.pop %v8781
  %v8787 = vmul.f32 1.0, %v8786
  %v8788 = vrcp.pop %v8782
  %v8789 = vmul.f32 1.0, %v8788
  %v8790 = vrcp.pop %v8783
  %v8791 = vmul.f32 1.0, %v8790
  %8796 = vrot.lane.b32.xlu0 %v8114, 96
  %v8797 = vpop.permute.xlu0 %8796
  %8798 = vrot.lane.b32.xlu0 %v8115, 96
  %v8799 = vpop.permute.xlu0 %8798
  %8800 = vrot.lane.b32.xlu0 %v8116, 96
  %v8801 = vpop.permute.xlu0 %8800
  %8802 = vrot.lane.b32.xlu0 %v8117, 96
  %v8803 = vpop.permute.xlu0 %8802
  %v8808 = vadd.f32 %v8743, %v8797
  %v8809 = vadd.f32 %v8749, %v8799
  %v8810 = vadd.f32 %v8755, %v8801
  %v8811 = vadd.f32 %v8761, %v8803
  %v8812 = vxor.u32 %v8808, 2147483648
  %v8813 = vxor.u32 %v8809, 2147483648
  %v8814 = vxor.u32 %v8810, 2147483648
  %v8815 = vxor.u32 %v8811, 2147483648
  %v8816 = vmul.f32 %v8812, 1.442695
  %v8817 = vpow.pop %v8816
  %v8818 = vmul.f32 %v8813, 1.442695
  %v8819 = vpow.pop %v8818
  %v8820 = vmul.f32 %v8814, 1.442695
  %v8821 = vpow.pop %v8820
  %v8822 = vmul.f32 %v8815, 1.442695
  %v8823 = vpow.pop %v8822
  %v8824 = vadd.f32 %v8817, 1.0
  %v8825 = vadd.f32 %v8819, 1.0
  %v8826 = vadd.f32 %v8821, 1.0
  %v8827 = vadd.f32 %v8823, 1.0
  %v8828 = vrcp.pop %v8824
  %v8829 = vmul.f32 1.0, %v8828
  %v8830 = vrcp.pop %v8825
  %v8831 = vmul.f32 1.0, %v8830
  %v8832 = vrcp.pop %v8826
  %v8833 = vmul.f32 1.0, %v8832
  %v8834 = vrcp.pop %v8827
  %v8835 = vmul.f32 1.0, %v8834
  %8836 = vrot.lane.b32.xlu0 %v8114, 64
  %v8837 = vpop.permute.xlu0 %8836
  %8838 = vrot.lane.b32.xlu0 %v8115, 64
  %v8839 = vpop.permute.xlu0 %8838
  %8840 = vrot.lane.b32.xlu0 %v8116, 64
  %v8841 = vpop.permute.xlu0 %8840
  %8842 = vrot.lane.b32.xlu0 %v8117, 64
  %v8843 = vpop.permute.xlu0 %8842
  %v8848 = vmul.f32 %v8785, %v8837
  %v8849 = vmul.f32 %v8787, %v8839
  %v8850 = vmul.f32 %v8789, %v8841
  %v8851 = vmul.f32 %v8791, %v8843
  %v8852 = vadd.f32 %v8743, %v8848
  %v8853 = vadd.f32 %v8749, %v8849
  %v8854 = vadd.f32 %v8755, %v8850
  %v8855 = vadd.f32 %v8761, %v8851
  %v8856 = vtanh.pop %v8852
  %v8857 = vtanh.pop %v8853
  %v8858 = vtanh.pop %v8854
  %v8859 = vtanh.pop %v8855
  %v8860 = vsub.f32 1.0, %v8829
  %v8861 = vsub.f32 1.0, %v8831
  %v8862 = vsub.f32 1.0, %v8833
  %v8863 = vsub.f32 1.0, %v8835
  %v8864 = vmul.f32 %v8860, %v8856
  %v8865 = vmul.f32 %v8861, %v8857
  %v8866 = vmul.f32 %v8862, %v8858
  %v8867 = vmul.f32 %v8863, %v8859
  %v8868 = vmul.f32 %v8829, %v7399
  %v8869 = vmul.f32 %v8831, %v7400
  %v8870 = vmul.f32 %v8833, %v7401
  %v8871 = vmul.f32 %v8835, %v7402
  %v8872 = vadd.f32 %v8864, %v8868
  %v8873 = vadd.f32 %v8865, %v8869
  %v8874 = vadd.f32 %v8866, %v8870
  %v8875 = vadd.f32 %v8867, %v8871
  %v8877 = vsel %vm35, %v8872, 0
  %v8880 = vsel %vm35, %v8873, 0
  %v8883 = vsel %vm35, %v8874, 0
  %v8886 = vsel %vm35, %v8875, 0
  %v8888 = vand.u32 %v19, 4294901760
  %8889 = vmatprep.subr.mxu0 %v8888
  %v8890 = vand.u32 %v18, 4294901760
  %8891 = vmatpush1.msra.mxu0 %v8890
  %v8892 = vand.u32 %v21, 4294901760
  %8893 = vmatprep.subr.mxu0 %v8892
  %v8894 = vand.u32 %v20, 4294901760
  %8895 = vmatpush1.msra.mxu0 %v8894
  %v8896 = vand.u32 %v23, 4294901760
  %8897 = vmatprep.subr.mxu0 %v8896
  %v8898 = vand.u32 %v22, 4294901760
  %8899 = vmatpush1.msra.mxu0 %v8898
  %v8900 = vand.u32 %v25, 4294901760
  %8901 = vmatprep.subr.mxu0 %v8900
  %v8902 = vand.u32 %v24, 4294901760
  %8903 = vmatpush1.msra.mxu0 %v8902
  %8904 = vmatprep.subr.mxu0 0.0
  %8905 = vmatpush1.msra.mxu0 0.0
  %8906 = vmatprep.subr.mxu0 0.0
  %8907 = vmatpush1.msra.mxu0 0.0
  %8908 = vmatprep.subr.mxu0 0.0
  %8909 = vmatpush1.msra.mxu0 0.0
  %8910 = vmatprep.subr.mxu0 0.0
  %8911 = vmatpush1.msra.mxu0 0.0
  %8912 = vmatprep.subr.mxu0 0.0
  %8913 = vmatpush1.msra.mxu0 0.0
  %8914 = vmatprep.subr.mxu0 0.0
  %8915 = vmatpush1.msra.mxu0 0.0
  %8916 = vmatprep.subr.mxu0 0.0
  %8917 = vmatpush1.msra.mxu0 0.0
  %8918 = vmatprep.subr.mxu0 0.0
  %8919 = vmatpush1.msra.mxu0 0.0
  %8920 = vmatprep.subr.mxu0 0.0
  %8921 = vmatpush1.msra.mxu0 0.0
  %8922 = vmatprep.subr.mxu0 0.0
  %8923 = vmatpush1.msra.mxu0 0.0
  %8924 = vmatprep.subr.mxu0 0.0
  %8925 = vmatpush1.msra.mxu0 0.0
  %8926 = vmatprep.subr.mxu0 0.0
  %8927 = vmatpush1.msra.mxu0 0.0
  %8928 = vmatprep.subr.mxu0 0.0
  %8929 = vmatpush1.msra.mxu0 0.0
  %8930 = vmatprep.subr.mxu0 0.0
  %8931 = vmatpush1.msra.mxu0 0.0
  %8932 = vmatprep.subr.mxu0 0.0
  %8933 = vmatpush1.msra.mxu0 0.0
  %8934 = vmatprep.subr.mxu0 0.0
  %8935 = vmatpush1.msra.mxu0 0.0
  %8936 = vmatprep.subr.mxu0 0.0
  %8937 = vmatpush1.msra.mxu0 0.0
  %8938 = vmatprep.subr.mxu0 0.0
  %8939 = vmatpush1.msra.mxu0 0.0
  %8940 = vmatprep.subr.mxu0 0.0
  %8941 = vmatpush1.msra.mxu0 0.0
  %8942 = vmatprep.subr.mxu0 0.0
  %8943 = vmatpush1.msra.mxu0 0.0
  %8944 = vmatprep.subr.mxu0 0.0
  %8945 = vmatpush1.msra.mxu0 0.0
  %8946 = vmatprep.subr.mxu0 0.0
  %8947 = vmatpush1.msra.mxu0 0.0
  %8948 = vmatprep.subr.mxu0 0.0
  %8949 = vmatpush1.msra.mxu0 0.0
  %8950 = vmatprep.subr.mxu0 0.0
  %8951 = vmatpush1.msra.mxu0 0.0
  %8952 = vmatprep.subr.mxu0 0.0
  %8953 = vmatpush1.msra.mxu0 0.0
  %8954 = vmatprep.subr.mxu0 0.0
  %8955 = vmatpush1.msra.mxu0 0.0
  %8956 = vmatprep.subr.mxu0 0.0
  %8957 = vmatpush1.msra.mxu0 0.0
  %8958 = vmatprep.subr.mxu0 0.0
  %8959 = vmatpush1.msra.mxu0 0.0
  %8960 = vmatprep.mubr.f32.mxu0 0.0
  %v8961 = vand.u32 %v8877, 4294901760
  %v8962 = vsub.f32 %v8877, %v8961
  %v8963 = vand.u32 %v8962, 4294901760
  %v8964 = vsub.f32 %v8962, %v8963
  %v8965 = vand.u32 %v8964, 4294901760
  %8966 = vmatmul.mubr.f32.gmra.mrb[0].mxu0 %v8965
  %v8967 = vpop.f32.mrb[0].mxu0
  %v8968 = vadd.f32 0.0, %v8967
  %v8969 = vpop.f32.mrb[0].mxu0
  %v8970 = vadd.f32 0.0, %v8969
  %8971 = vmatprep.mubr.f32.mxu0 0.0
  %v8972 = vand.u32 %v8880, 4294901760
  %v8973 = vsub.f32 %v8880, %v8972
  %v8974 = vand.u32 %v8973, 4294901760
  %v8975 = vsub.f32 %v8973, %v8974
  %v8976 = vand.u32 %v8975, 4294901760
  %8977 = vmatmul.mubr.f32.gmra.mrb[0].mxu0 %v8976
  %v8978 = vpop.f32.mrb[0].mxu0
  %v8979 = vadd.f32 0.0, %v8978
  %v8980 = vpop.f32.mrb[0].mxu0
  %v8981 = vadd.f32 0.0, %v8980
  %8982 = vmatprep.mubr.f32.mxu0 0.0
  %v8983 = vand.u32 %v8883, 4294901760
  %v8984 = vsub.f32 %v8883, %v8983
  %v8985 = vand.u32 %v8984, 4294901760
  %v8986 = vsub.f32 %v8984, %v8985
  %v8987 = vand.u32 %v8986, 4294901760
  %8988 = vmatmul.mubr.f32.gmra.mrb[0].mxu0 %v8987
  %v8989 = vpop.f32.mrb[0].mxu0
  %v8990 = vadd.f32 0.0, %v8989
  %v8991 = vpop.f32.mrb[0].mxu0
  %v8992 = vadd.f32 0.0, %v8991
  %8993 = vmatprep.mubr.f32.mxu0 0.0
  %v8994 = vand.u32 %v8886, 4294901760
  %v8995 = vsub.f32 %v8886, %v8994
  %v8996 = vand.u32 %v8995, 4294901760
  %v8997 = vsub.f32 %v8995, %v8996
  %v8998 = vand.u32 %v8997, 4294901760
  %8999 = vmatmul.mubr.f32.gmra.mrb[0].mxu0 %v8998
  %v9000 = vpop.f32.mrb[0].mxu0
  %v9001 = vadd.f32 0.0, %v9000
  %v9002 = vpop.f32.mrb[0].mxu0
  %v9003 = vadd.f32 0.0, %v9002
  %9004 = vdwg.mxu0
  %v9005 = vand.u32 %v19, 4294901760
  %v9006 = vsub.f32 %v19, %v9005
  %v9007 = vand.u32 %v9006, 4294901760
  %v9008 = vsub.f32 %v9006, %v9007
  %v9009 = vand.u32 %v9008, 4294901760
  %9010 = vmatprep.subr.mxu0 %v9009
  %v9011 = vand.u32 %v18, 4294901760
  %v9012 = vsub.f32 %v18, %v9011
  %v9013 = vand.u32 %v9012, 4294901760
  %v9014 = vsub.f32 %v9012, %v9013
  %v9015 = vand.u32 %v9014, 4294901760
  %9016 = vmatpush1.msra.mxu0 %v9015
  %v9017 = vand.u32 %v21, 4294901760
  %v9018 = vsub.f32 %v21, %v9017
  %v9019 = vand.u32 %v9018, 4294901760
  %v9020 = vsub.f32 %v9018, %v9019
  %v9021 = vand.u32 %v9020, 4294901760
  %9022 = vmatprep.subr.mxu0 %v9021
  %v9023 = vand.u32 %v20, 4294901760
  %v9024 = vsub.f32 %v20, %v9023
  %v9025 = vand.u32 %v9024, 4294901760
  %v9026 = vsub.f32 %v9024, %v9025
  %v9027 = vand.u32 %v9026, 4294901760
  %9028 = vmatpush1.msra.mxu0 %v9027
  %v9029 = vand.u32 %v23, 4294901760
  %v9030 = vsub.f32 %v23, %v9029
  %v9031 = vand.u32 %v9030, 4294901760
  %v9032 = vsub.f32 %v9030, %v9031
  %v9033 = vand.u32 %v9032, 4294901760
  %9034 = vmatprep.subr.mxu0 %v9033
  %v9035 = vand.u32 %v22, 4294901760
  %v9036 = vsub.f32 %v22, %v9035
  %v9037 = vand.u32 %v9036, 4294901760
  %v9038 = vsub.f32 %v9036, %v9037
  %v9039 = vand.u32 %v9038, 4294901760
  %9040 = vmatpush1.msra.mxu0 %v9039
  %v9041 = vand.u32 %v25, 4294901760
  %v9042 = vsub.f32 %v25, %v9041
  %v9043 = vand.u32 %v9042, 4294901760
  %v9044 = vsub.f32 %v9042, %v9043
  %v9045 = vand.u32 %v9044, 4294901760
  %9046 = vmatprep.subr.mxu0 %v9045
  %v9047 = vand.u32 %v24, 4294901760
  %v9048 = vsub.f32 %v24, %v9047
  %v9049 = vand.u32 %v9048, 4294901760
  %v9050 = vsub.f32 %v9048, %v9049
  %v9051 = vand.u32 %v9050, 4294901760
  %9052 = vmatpush1.msra.mxu0 %v9051
  %9053 = vmatprep.subr.mxu0 0.0
  %9054 = vmatpush1.msra.mxu0 0.0
  %9055 = vmatprep.subr.mxu0 0.0
  %9056 = vmatpush1.msra.mxu0 0.0
  %9057 = vmatprep.subr.mxu0 0.0
  %9058 = vmatpush1.msra.mxu0 0.0
  %9059 = vmatprep.subr.mxu0 0.0
  %9060 = vmatpush1.msra.mxu0 0.0
  %9061 = vmatprep.subr.mxu0 0.0
  %9062 = vmatpush1.msra.mxu0 0.0
  %9063 = vmatprep.subr.mxu0 0.0
  %9064 = vmatpush1.msra.mxu0 0.0
  %9065 = vmatprep.subr.mxu0 0.0
  %9066 = vmatpush1.msra.mxu0 0.0
  %9067 = vmatprep.subr.mxu0 0.0
  %9068 = vmatpush1.msra.mxu0 0.0
  %9069 = vmatprep.subr.mxu0 0.0
  %9070 = vmatpush1.msra.mxu0 0.0
  %9071 = vmatprep.subr.mxu0 0.0
  %9072 = vmatpush1.msra.mxu0 0.0
  %9073 = vmatprep.subr.mxu0 0.0
  %9074 = vmatpush1.msra.mxu0 0.0
  %9075 = vmatprep.subr.mxu0 0.0
  %9076 = vmatpush1.msra.mxu0 0.0
  %9077 = vmatprep.subr.mxu0 0.0
  %9078 = vmatpush1.msra.mxu0 0.0
  %9079 = vmatprep.subr.mxu0 0.0
  %9080 = vmatpush1.msra.mxu0 0.0
  %9081 = vmatprep.subr.mxu0 0.0
  %9082 = vmatpush1.msra.mxu0 0.0
  %9083 = vmatprep.subr.mxu0 0.0
  %9084 = vmatpush1.msra.mxu0 0.0
  %9085 = vmatprep.subr.mxu0 0.0
  %9086 = vmatpush1.msra.mxu0 0.0
  %9087 = vmatprep.subr.mxu0 0.0
  %9088 = vmatpush1.msra.mxu0 0.0
  %9089 = vmatprep.subr.mxu0 0.0
  %9090 = vmatpush1.msra.mxu0 0.0
  %9091 = vmatprep.subr.mxu0 0.0
  %9092 = vmatpush1.msra.mxu0 0.0
  %9093 = vmatprep.subr.mxu0 0.0
  %9094 = vmatpush1.msra.mxu0 0.0
  %9095 = vmatprep.subr.mxu0 0.0
  %9096 = vmatpush1.msra.mxu0 0.0
  %9097 = vmatprep.subr.mxu0 0.0
  %9098 = vmatpush1.msra.mxu0 0.0
  %9099 = vmatprep.subr.mxu0 0.0
  %9100 = vmatpush1.msra.mxu0 0.0
  %9101 = vmatprep.subr.mxu0 0.0
  %9102 = vmatpush1.msra.mxu0 0.0
  %9103 = vmatprep.subr.mxu0 0.0
  %9104 = vmatpush1.msra.mxu0 0.0
  %9105 = vmatprep.subr.mxu0 0.0
  %9106 = vmatpush1.msra.mxu0 0.0
  %9107 = vmatprep.subr.mxu0 0.0
  %9108 = vmatpush1.msra.mxu0 0.0
  %9109 = vmatprep.mubr.f32.mxu0 0.0
  %v9110 = vand.u32 %v8877, 4294901760
  %9111 = vmatmul.mubr.f32.gmra.mrb[0].mxu0 %v9110
  %v9112 = vpop.f32.mrb[0].mxu0
  %v9113 = vadd.f32 %v8968, %v9112
  %v9114 = vpop.f32.mrb[0].mxu0
  %v9115 = vadd.f32 %v8970, %v9114
  %9116 = vmatprep.mubr.f32.mxu0 0.0
  %v9117 = vand.u32 %v8880, 4294901760
  %9118 = vmatmul.mubr.f32.gmra.mrb[0].mxu0 %v9117
  %v9119 = vpop.f32.mrb[0].mxu0
  %v9120 = vadd.f32 %v8979, %v9119
  %v9121 = vpop.f32.mrb[0].mxu0
  %v9122 = vadd.f32 %v8981, %v9121
  %9123 = vmatprep.mubr.f32.mxu0 0.0
  %v9124 = vand.u32 %v8883, 4294901760
  %9125 = vmatmul.mubr.f32.gmra.mrb[0].mxu0 %v9124
  %v9126 = vpop.f32.mrb[0].mxu0
  %v9127 = vadd.f32 %v8990, %v9126
  %v9128 = vpop.f32.mrb[0].mxu0
  %v9129 = vadd.f32 %v8992, %v9128
  %9130 = vmatprep.mubr.f32.mxu0 0.0
  %v9131 = vand.u32 %v8886, 4294901760
  %9132 = vmatmul.mubr.f32.gmra.mrb[0].mxu0 %v9131
  %v9133 = vpop.f32.mrb[0].mxu0
  %v9134 = vadd.f32 %v9001, %v9133
  %v9135 = vpop.f32.mrb[0].mxu0
  %v9136 = vadd.f32 %v9003, %v9135
  %9137 = vdwg.mxu0
  %v9138 = vand.u32 %v19, 4294901760
  %v9139 = vsub.f32 %v19, %v9138
  %9140 = vmatprep.subr.mxu0 %v9139
  %v9141 = vand.u32 %v18, 4294901760
  %v9142 = vsub.f32 %v18, %v9141
  %9143 = vmatpush1.msra.mxu0 %v9142
  %v9144 = vand.u32 %v21, 4294901760
  %v9145 = vsub.f32 %v21, %v9144
  %9146 = vmatprep.subr.mxu0 %v9145
  %v9147 = vand.u32 %v20, 4294901760
  %v9148 = vsub.f32 %v20, %v9147
  %9149 = vmatpush1.msra.mxu0 %v9148
  %v9150 = vand.u32 %v23, 4294901760
  %v9151 = vsub.f32 %v23, %v9150
  %9152 = vmatprep.subr.mxu0 %v9151
  %v9153 = vand.u32 %v22, 4294901760
  %v9154 = vsub.f32 %v22, %v9153
  %9155 = vmatpush1.msra.mxu0 %v9154
  %v9156 = vand.u32 %v25, 4294901760
  %v9157 = vsub.f32 %v25, %v9156
  %9158 = vmatprep.subr.mxu0 %v9157
  %v9159 = vand.u32 %v24, 4294901760
  %v9160 = vsub.f32 %v24, %v9159
  %9161 = vmatpush1.msra.mxu0 %v9160
  %9162 = vmatprep.subr.mxu0 0.0
  %9163 = vmatpush1.msra.mxu0 0.0
  %9164 = vmatprep.subr.mxu0 0.0
  %9165 = vmatpush1.msra.mxu0 0.0
  %9166 = vmatprep.subr.mxu0 0.0
  %9167 = vmatpush1.msra.mxu0 0.0
  %9168 = vmatprep.subr.mxu0 0.0
  %9169 = vmatpush1.msra.mxu0 0.0
  %9170 = vmatprep.subr.mxu0 0.0
  %9171 = vmatpush1.msra.mxu0 0.0
  %9172 = vmatprep.subr.mxu0 0.0
  %9173 = vmatpush1.msra.mxu0 0.0
  %9174 = vmatprep.subr.mxu0 0.0
  %9175 = vmatpush1.msra.mxu0 0.0
  %9176 = vmatprep.subr.mxu0 0.0
  %9177 = vmatpush1.msra.mxu0 0.0
  %9178 = vmatprep.subr.mxu0 0.0
  %9179 = vmatpush1.msra.mxu0 0.0
  %9180 = vmatprep.subr.mxu0 0.0
  %9181 = vmatpush1.msra.mxu0 0.0
  %9182 = vmatprep.subr.mxu0 0.0
  %9183 = vmatpush1.msra.mxu0 0.0
  %9184 = vmatprep.subr.mxu0 0.0
  %9185 = vmatpush1.msra.mxu0 0.0
  %9186 = vmatprep.subr.mxu0 0.0
  %9187 = vmatpush1.msra.mxu0 0.0
  %9188 = vmatprep.subr.mxu0 0.0
  %9189 = vmatpush1.msra.mxu0 0.0
  %9190 = vmatprep.subr.mxu0 0.0
  %9191 = vmatpush1.msra.mxu0 0.0
  %9192 = vmatprep.subr.mxu0 0.0
  %9193 = vmatpush1.msra.mxu0 0.0
  %9194 = vmatprep.subr.mxu0 0.0
  %9195 = vmatpush1.msra.mxu0 0.0
  %9196 = vmatprep.subr.mxu0 0.0
  %9197 = vmatpush1.msra.mxu0 0.0
  %9198 = vmatprep.subr.mxu0 0.0
  %9199 = vmatpush1.msra.mxu0 0.0
  %9200 = vmatprep.subr.mxu0 0.0
  %9201 = vmatpush1.msra.mxu0 0.0
  %9202 = vmatprep.subr.mxu0 0.0
  %9203 = vmatpush1.msra.mxu0 0.0
  %9204 = vmatprep.subr.mxu0 0.0
  %9205 = vmatpush1.msra.mxu0 0.0
  %9206 = vmatprep.subr.mxu0 0.0
  %9207 = vmatpush1.msra.mxu0 0.0
  %9208 = vmatprep.subr.mxu0 0.0
  %9209 = vmatpush1.msra.mxu0 0.0
  %9210 = vmatprep.subr.mxu0 0.0
  %9211 = vmatpush1.msra.mxu0 0.0
  %9212 = vmatprep.subr.mxu0 0.0
  %9213 = vmatpush1.msra.mxu0 0.0
  %9214 = vmatprep.subr.mxu0 0.0
  %9215 = vmatpush1.msra.mxu0 0.0
  %9216 = vmatprep.subr.mxu0 0.0
  %9217 = vmatpush1.msra.mxu0 0.0
  %9218 = vmatprep.mubr.f32.mxu0 0.0
  %v9219 = vand.u32 %v8877, 4294901760
  %v9220 = vsub.f32 %v8877, %v9219
  %9221 = vmatmul.mubr.f32.gmra.mrb[0].mxu0 %v9220
  %v9222 = vpop.f32.mrb[0].mxu0
  %v9223 = vadd.f32 %v9113, %v9222
  %v9224 = vpop.f32.mrb[0].mxu0
  %v9225 = vadd.f32 %v9115, %v9224
  %9226 = vmatprep.mubr.f32.mxu0 0.0
  %v9227 = vand.u32 %v8880, 4294901760
  %v9228 = vsub.f32 %v8880, %v9227
  %9229 = vmatmul.mubr.f32.gmra.mrb[0].mxu0 %v9228
  %v9230 = vpop.f32.mrb[0].mxu0
  %v9231 = vadd.f32 %v9120, %v9230
  %v9232 = vpop.f32.mrb[0].mxu0
  %v9233 = vadd.f32 %v9122, %v9232
  %9234 = vmatprep.mubr.f32.mxu0 0.0
  %v9235 = vand.u32 %v8883, 4294901760
  %v9236 = vsub.f32 %v8883, %v9235
  %9237 = vmatmul.mubr.f32.gmra.mrb[0].mxu0 %v9236
  %v9238 = vpop.f32.mrb[0].mxu0
  %v9239 = vadd.f32 %v9127, %v9238
  %v9240 = vpop.f32.mrb[0].mxu0
  %v9241 = vadd.f32 %v9129, %v9240
  %9242 = vmatprep.mubr.f32.mxu0 0.0
  %v9243 = vand.u32 %v8886, 4294901760
  %v9244 = vsub.f32 %v8886, %v9243
  %9245 = vmatmul.mubr.f32.gmra.mrb[0].mxu0 %v9244
  %v9246 = vpop.f32.mrb[0].mxu0
  %v9247 = vadd.f32 %v9134, %v9246
  %v9248 = vpop.f32.mrb[0].mxu0
  %v9249 = vadd.f32 %v9136, %v9248
  %9250 = vdwg.mxu0
  %v9251 = vand.u32 %v19, 4294901760
  %9252 = vmatprep.subr.mxu0 %v9251
  %v9253 = vand.u32 %v18, 4294901760
  %9254 = vmatpush1.msra.mxu0 %v9253
  %v9255 = vand.u32 %v21, 4294901760
  %9256 = vmatprep.subr.mxu0 %v9255
  %v9257 = vand.u32 %v20, 4294901760
  %9258 = vmatpush1.msra.mxu0 %v9257
  %v9259 = vand.u32 %v23, 4294901760
  %9260 = vmatprep.subr.mxu0 %v9259
  %v9261 = vand.u32 %v22, 4294901760
  %9262 = vmatpush1.msra.mxu0 %v9261
  %v9263 = vand.u32 %v25, 4294901760
  %9264 = vmatprep.subr.mxu0 %v9263
  %v9265 = vand.u32 %v24, 4294901760
  %9266 = vmatpush1.msra.mxu0 %v9265
  %9267 = vmatprep.subr.mxu0 0.0
  %9268 = vmatpush1.msra.mxu0 0.0
  %9269 = vmatprep.subr.mxu0 0.0
  %9270 = vmatpush1.msra.mxu0 0.0
  %9271 = vmatprep.subr.mxu0 0.0
  %9272 = vmatpush1.msra.mxu0 0.0
  %9273 = vmatprep.subr.mxu0 0.0
  %9274 = vmatpush1.msra.mxu0 0.0
  %9275 = vmatprep.subr.mxu0 0.0
  %9276 = vmatpush1.msra.mxu0 0.0
  %9277 = vmatprep.subr.mxu0 0.0
  %9278 = vmatpush1.msra.mxu0 0.0
  %9279 = vmatprep.subr.mxu0 0.0
  %9280 = vmatpush1.msra.mxu0 0.0
  %9281 = vmatprep.subr.mxu0 0.0
  %9282 = vmatpush1.msra.mxu0 0.0
  %9283 = vmatprep.subr.mxu0 0.0
  %9284 = vmatpush1.msra.mxu0 0.0
  %9285 = vmatprep.subr.mxu0 0.0
  %9286 = vmatpush1.msra.mxu0 0.0
  %9287 = vmatprep.subr.mxu0 0.0
  %9288 = vmatpush1.msra.mxu0 0.0
  %9289 = vmatprep.subr.mxu0 0.0
  %9290 = vmatpush1.msra.mxu0 0.0
  %9291 = vmatprep.subr.mxu0 0.0
  %9292 = vmatpush1.msra.mxu0 0.0
  %9293 = vmatprep.subr.mxu0 0.0
  %9294 = vmatpush1.msra.mxu0 0.0
  %9295 = vmatprep.subr.mxu0 0.0
  %9296 = vmatpush1.msra.mxu0 0.0
  %9297 = vmatprep.subr.mxu0 0.0
  %9298 = vmatpush1.msra.mxu0 0.0
  %9299 = vmatprep.subr.mxu0 0.0
  %9300 = vmatpush1.msra.mxu0 0.0
  %9301 = vmatprep.subr.mxu0 0.0
  %9302 = vmatpush1.msra.mxu0 0.0
  %9303 = vmatprep.subr.mxu0 0.0
  %9304 = vmatpush1.msra.mxu0 0.0
  %9305 = vmatprep.subr.mxu0 0.0
  %9306 = vmatpush1.msra.mxu0 0.0
  %9307 = vmatprep.subr.mxu0 0.0
  %9308 = vmatpush1.msra.mxu0 0.0
  %9309 = vmatprep.subr.mxu0 0.0
  %9310 = vmatpush1.msra.mxu0 0.0
  %9311 = vmatprep.subr.mxu0 0.0
  %9312 = vmatpush1.msra.mxu0 0.0
  %9313 = vmatprep.subr.mxu0 0.0
  %9314 = vmatpush1.msra.mxu0 0.0
  %9315 = vmatprep.subr.mxu0 0.0
  %9316 = vmatpush1.msra.mxu0 0.0
  %9317 = vmatprep.subr.mxu0 0.0
  %9318 = vmatpush1.msra.mxu0 0.0
  %9319 = vmatprep.subr.mxu0 0.0
  %9320 = vmatpush1.msra.mxu0 0.0
  %9321 = vmatprep.subr.mxu0 0.0
  %9322 = vmatpush1.msra.mxu0 0.0
  %9323 = vmatprep.mubr.f32.mxu0 0.0
  %v9324 = vand.u32 %v8877, 4294901760
  %v9325 = vsub.f32 %v8877, %v9324
  %v9326 = vand.u32 %v9325, 4294901760
  %9327 = vmatmul.mubr.f32.gmra.mrb[0].mxu0 %v9326
  %v9328 = vpop.f32.mrb[0].mxu0
  %v9329 = vadd.f32 %v9223, %v9328
  %v9330 = vpop.f32.mrb[0].mxu0
  %v9331 = vadd.f32 %v9225, %v9330
  %9332 = vmatprep.mubr.f32.mxu0 0.0
  %v9333 = vand.u32 %v8880, 4294901760
  %v9334 = vsub.f32 %v8880, %v9333
  %v9335 = vand.u32 %v9334, 4294901760
  %9336 = vmatmul.mubr.f32.gmra.mrb[0].mxu0 %v9335
  %v9337 = vpop.f32.mrb[0].mxu0
  %v9338 = vadd.f32 %v9231, %v9337
  %v9339 = vpop.f32.mrb[0].mxu0
  %v9340 = vadd.f32 %v9233, %v9339
  %9341 = vmatprep.mubr.f32.mxu0 0.0
  %v9342 = vand.u32 %v8883, 4294901760
  %v9343 = vsub.f32 %v8883, %v9342
  %v9344 = vand.u32 %v9343, 4294901760
  %9345 = vmatmul.mubr.f32.gmra.mrb[0].mxu0 %v9344
  %v9346 = vpop.f32.mrb[0].mxu0
  %v9347 = vadd.f32 %v9239, %v9346
  %v9348 = vpop.f32.mrb[0].mxu0
  %v9349 = vadd.f32 %v9241, %v9348
  %9350 = vmatprep.mubr.f32.mxu0 0.0
  %v9351 = vand.u32 %v8886, 4294901760
  %v9352 = vsub.f32 %v8886, %v9351
  %v9353 = vand.u32 %v9352, 4294901760
  %9354 = vmatmul.mubr.f32.gmra.mrb[0].mxu0 %v9353
  %v9355 = vpop.f32.mrb[0].mxu0
  %v9356 = vadd.f32 %v9247, %v9355
  %v9357 = vpop.f32.mrb[0].mxu0
  %v9358 = vadd.f32 %v9249, %v9357
  %9359 = vdwg.mxu0
  %v9360 = vand.u32 %v19, 4294901760
  %v9361 = vsub.f32 %v19, %v9360
  %v9362 = vand.u32 %v9361, 4294901760
  %9363 = vmatprep.subr.mxu0 %v9362
  %v9364 = vand.u32 %v18, 4294901760
  %v9365 = vsub.f32 %v18, %v9364
  %v9366 = vand.u32 %v9365, 4294901760
  %9367 = vmatpush1.msra.mxu0 %v9366
  %v9368 = vand.u32 %v21, 4294901760
  %v9369 = vsub.f32 %v21, %v9368
  %v9370 = vand.u32 %v9369, 4294901760
  %9371 = vmatprep.subr.mxu0 %v9370
  %v9372 = vand.u32 %v20, 4294901760
  %v9373 = vsub.f32 %v20, %v9372
  %v9374 = vand.u32 %v9373, 4294901760
  %9375 = vmatpush1.msra.mxu0 %v9374
  %v9376 = vand.u32 %v23, 4294901760
  %v9377 = vsub.f32 %v23, %v9376
  %v9378 = vand.u32 %v9377, 4294901760
  %9379 = vmatprep.subr.mxu0 %v9378
  %v9380 = vand.u32 %v22, 4294901760
  %v9381 = vsub.f32 %v22, %v9380
  %v9382 = vand.u32 %v9381, 4294901760
  %9383 = vmatpush1.msra.mxu0 %v9382
  %v9384 = vand.u32 %v25, 4294901760
  %v9385 = vsub.f32 %v25, %v9384
  %v9386 = vand.u32 %v9385, 4294901760
  %9387 = vmatprep.subr.mxu0 %v9386
  %v9388 = vand.u32 %v24, 4294901760
  %v9389 = vsub.f32 %v24, %v9388
  %v9390 = vand.u32 %v9389, 4294901760
  %9391 = vmatpush1.msra.mxu0 %v9390
  %9392 = vmatprep.subr.mxu0 0.0
  %9393 = vmatpush1.msra.mxu0 0.0
  %9394 = vmatprep.subr.mxu0 0.0
  %9395 = vmatpush1.msra.mxu0 0.0
  %9396 = vmatprep.subr.mxu0 0.0
  %9397 = vmatpush1.msra.mxu0 0.0
  %9398 = vmatprep.subr.mxu0 0.0
  %9399 = vmatpush1.msra.mxu0 0.0
  %9400 = vmatprep.subr.mxu0 0.0
  %9401 = vmatpush1.msra.mxu0 0.0
  %9402 = vmatprep.subr.mxu0 0.0
  %9403 = vmatpush1.msra.mxu0 0.0
  %9404 = vmatprep.subr.mxu0 0.0
  %9405 = vmatpush1.msra.mxu0 0.0
  %9406 = vmatprep.subr.mxu0 0.0
  %9407 = vmatpush1.msra.mxu0 0.0
  %9408 = vmatprep.subr.mxu0 0.0
  %9409 = vmatpush1.msra.mxu0 0.0
  %9410 = vmatprep.subr.mxu0 0.0
  %9411 = vmatpush1.msra.mxu0 0.0
  %9412 = vmatprep.subr.mxu0 0.0
  %9413 = vmatpush1.msra.mxu0 0.0
  %9414 = vmatprep.subr.mxu0 0.0
  %9415 = vmatpush1.msra.mxu0 0.0
  %9416 = vmatprep.subr.mxu0 0.0
  %9417 = vmatpush1.msra.mxu0 0.0
  %9418 = vmatprep.subr.mxu0 0.0
  %9419 = vmatpush1.msra.mxu0 0.0
  %9420 = vmatprep.subr.mxu0 0.0
  %9421 = vmatpush1.msra.mxu0 0.0
  %9422 = vmatprep.subr.mxu0 0.0
  %9423 = vmatpush1.msra.mxu0 0.0
  %9424 = vmatprep.subr.mxu0 0.0
  %9425 = vmatpush1.msra.mxu0 0.0
  %9426 = vmatprep.subr.mxu0 0.0
  %9427 = vmatpush1.msra.mxu0 0.0
  %9428 = vmatprep.subr.mxu0 0.0
  %9429 = vmatpush1.msra.mxu0 0.0
  %9430 = vmatprep.subr.mxu0 0.0
  %9431 = vmatpush1.msra.mxu0 0.0
  %9432 = vmatprep.subr.mxu0 0.0
  %9433 = vmatpush1.msra.mxu0 0.0
  %9434 = vmatprep.subr.mxu0 0.0
  %9435 = vmatpush1.msra.mxu0 0.0
  %9436 = vmatprep.subr.mxu0 0.0
  %9437 = vmatpush1.msra.mxu0 0.0
  %9438 = vmatprep.subr.mxu0 0.0
  %9439 = vmatpush1.msra.mxu0 0.0
  %9440 = vmatprep.subr.mxu0 0.0
  %9441 = vmatpush1.msra.mxu0 0.0
  %9442 = vmatprep.subr.mxu0 0.0
  %9443 = vmatpush1.msra.mxu0 0.0
  %9444 = vmatprep.subr.mxu0 0.0
  %9445 = vmatpush1.msra.mxu0 0.0
  %9446 = vmatprep.subr.mxu0 0.0
  %9447 = vmatpush1.msra.mxu0 0.0
  %9448 = vmatprep.mubr.f32.mxu0 0.0
  %v9449 = vand.u32 %v8877, 4294901760
  %9450 = vmatmul.mubr.f32.gmra.mrb[0].mxu0 %v9449
  %v9451 = vpop.f32.mrb[0].mxu0
  %v9452 = vadd.f32 %v9329, %v9451
  %v9453 = vpop.f32.mrb[0].mxu0
  %v9454 = vadd.f32 %v9331, %v9453
  %9455 = vmatprep.mubr.f32.mxu0 0.0
  %v9456 = vand.u32 %v8880, 4294901760
  %9457 = vmatmul.mubr.f32.gmra.mrb[0].mxu0 %v9456
  %v9458 = vpop.f32.mrb[0].mxu0
  %v9459 = vadd.f32 %v9338, %v9458
  %v9460 = vpop.f32.mrb[0].mxu0
  %v9461 = vadd.f32 %v9340, %v9460
  %9462 = vmatprep.mubr.f32.mxu0 0.0
  %v9463 = vand.u32 %v8883, 4294901760
  %9464 = vmatmul.mubr.f32.gmra.mrb[0].mxu0 %v9463
  %v9465 = vpop.f32.mrb[0].mxu0
  %v9466 = vadd.f32 %v9347, %v9465
  %v9467 = vpop.f32.mrb[0].mxu0
  %v9468 = vadd.f32 %v9349, %v9467
  %9469 = vmatprep.mubr.f32.mxu0 0.0
  %v9470 = vand.u32 %v8886, 4294901760
  %9471 = vmatmul.mubr.f32.gmra.mrb[0].mxu0 %v9470
  %v9472 = vpop.f32.mrb[0].mxu0
  %v9473 = vadd.f32 %v9356, %v9472
  %v9474 = vpop.f32.mrb[0].mxu0
  %v9475 = vadd.f32 %v9358, %v9474
  %9476 = vdwg.mxu0
  %v9477 = vand.u32 %v19, 4294901760
  %9478 = vmatprep.subr.mxu0 %v9477
  %v9479 = vand.u32 %v18, 4294901760
  %9480 = vmatpush1.msra.mxu0 %v9479
  %v9481 = vand.u32 %v21, 4294901760
  %9482 = vmatprep.subr.mxu0 %v9481
  %v9483 = vand.u32 %v20, 4294901760
  %9484 = vmatpush1.msra.mxu0 %v9483
  %v9485 = vand.u32 %v23, 4294901760
  %9486 = vmatprep.subr.mxu0 %v9485
  %v9487 = vand.u32 %v22, 4294901760
  %9488 = vmatpush1.msra.mxu0 %v9487
  %v9489 = vand.u32 %v25, 4294901760
  %9490 = vmatprep.subr.mxu0 %v9489
  %v9491 = vand.u32 %v24, 4294901760
  %9492 = vmatpush1.msra.mxu0 %v9491
  %9493 = vmatprep.subr.mxu0 0.0
  %9494 = vmatpush1.msra.mxu0 0.0
  %9495 = vmatprep.subr.mxu0 0.0
  %9496 = vmatpush1.msra.mxu0 0.0
  %9497 = vmatprep.subr.mxu0 0.0
  %9498 = vmatpush1.msra.mxu0 0.0
  %9499 = vmatprep.subr.mxu0 0.0
  %9500 = vmatpush1.msra.mxu0 0.0
  %9501 = vmatprep.subr.mxu0 0.0
  %9502 = vmatpush1.msra.mxu0 0.0
  %9503 = vmatprep.subr.mxu0 0.0
  %9504 = vmatpush1.msra.mxu0 0.0
  %9505 = vmatprep.subr.mxu0 0.0
  %9506 = vmatpush1.msra.mxu0 0.0
  %9507 = vmatprep.subr.mxu0 0.0
  %9508 = vmatpush1.msra.mxu0 0.0
  %9509 = vmatprep.subr.mxu0 0.0
  %9510 = vmatpush1.msra.mxu0 0.0
  %9511 = vmatprep.subr.mxu0 0.0
  %9512 = vmatpush1.msra.mxu0 0.0
  %9513 = vmatprep.subr.mxu0 0.0
  %9514 = vmatpush1.msra.mxu0 0.0
  %9515 = vmatprep.subr.mxu0 0.0
  %9516 = vmatpush1.msra.mxu0 0.0
  %9517 = vmatprep.subr.mxu0 0.0
  %9518 = vmatpush1.msra.mxu0 0.0
  %9519 = vmatprep.subr.mxu0 0.0
  %9520 = vmatpush1.msra.mxu0 0.0
  %9521 = vmatprep.subr.mxu0 0.0
  %9522 = vmatpush1.msra.mxu0 0.0
  %9523 = vmatprep.subr.mxu0 0.0
  %9524 = vmatpush1.msra.mxu0 0.0
  %9525 = vmatprep.subr.mxu0 0.0
  %9526 = vmatpush1.msra.mxu0 0.0
  %9527 = vmatprep.subr.mxu0 0.0
  %9528 = vmatpush1.msra.mxu0 0.0
  %9529 = vmatprep.subr.mxu0 0.0
  %9530 = vmatpush1.msra.mxu0 0.0
  %9531 = vmatprep.subr.mxu0 0.0
  %9532 = vmatpush1.msra.mxu0 0.0
  %9533 = vmatprep.subr.mxu0 0.0
  %9534 = vmatpush1.msra.mxu0 0.0
  %9535 = vmatprep.subr.mxu0 0.0
  %9536 = vmatpush1.msra.mxu0 0.0
  %9537 = vmatprep.subr.mxu0 0.0
  %9538 = vmatpush1.msra.mxu0 0.0
  %9539 = vmatprep.subr.mxu0 0.0
  %9540 = vmatpush1.msra.mxu0 0.0
  %9541 = vmatprep.subr.mxu0 0.0
  %9542 = vmatpush1.msra.mxu0 0.0
  %9543 = vmatprep.subr.mxu0 0.0
  %9544 = vmatpush1.msra.mxu0 0.0
  %9545 = vmatprep.subr.mxu0 0.0
  %9546 = vmatpush1.msra.mxu0 0.0
  %9547 = vmatprep.subr.mxu0 0.0
  %9548 = vmatpush1.msra.mxu0 0.0
  %9549 = vmatprep.mubr.f32.mxu0 0.0
  %v9550 = vand.u32 %v8877, 4294901760
  %9551 = vmatmul.mubr.f32.gmra.mrb[0].mxu0 %v9550
  %v9552 = vpop.f32.mrb[0].mxu0
  %v9553 = vadd.f32 %v9452, %v9552
  %v9554 = vpop.f32.mrb[0].mxu0
  %v9555 = vadd.f32 %v9454, %v9554
  %9556 = vmatprep.mubr.f32.mxu0 0.0
  %v9557 = vand.u32 %v8880, 4294901760
  %9558 = vmatmul.mubr.f32.gmra.mrb[0].mxu0 %v9557
  %v9559 = vpop.f32.mrb[0].mxu0
  %v9560 = vadd.f32 %v9459, %v9559
  %v9561 = vpop.f32.mrb[0].mxu0
  %v9562 = vadd.f32 %v9461, %v9561
  %9563 = vmatprep.mubr.f32.mxu0 0.0
  %v9564 = vand.u32 %v8883, 4294901760
  %9565 = vmatmul.mubr.f32.gmra.mrb[0].mxu0 %v9564
  %v9566 = vpop.f32.mrb[0].mxu0
  %v9567 = vadd.f32 %v9466, %v9566
  %v9568 = vpop.f32.mrb[0].mxu0
  %v9569 = vadd.f32 %v9468, %v9568
  %9570 = vmatprep.mubr.f32.mxu0 0.0
  %v9571 = vand.u32 %v8886, 4294901760
  %9572 = vmatmul.mubr.f32.gmra.mrb[0].mxu0 %v9571
  %v9573 = vpop.f32.mrb[0].mxu0
  %v9574 = vadd.f32 %v9473, %v9573
  %v9575 = vpop.f32.mrb[0].mxu0
  %v9576 = vadd.f32 %v9475, %v9575
  %9577 = vdwg.mxu0
  %v9578 = vsel %vm31, %v9553, %v9555
  %v9579 = vsel %vm32, %v9560, %v9562
  %v9580 = vsel %vm33, %v9567, %v9569
  %v9581 = vsel %vm34, %v9574, %v9576
  %s9582 = scalar_lea.vmem %s0, 192
  %v9583 = vld [vmem:[%s9582] sm:$0xff]
  %v9584 = vld [vmem:[%s9582 + $0x8] sm:$0xff]
  %v9585 = vld [vmem:[%s9582 + $0x10] sm:$0xff]
  %v9586 = vld [vmem:[%s9582 + $0x18] sm:$0xff]
  %v9587 = vadd.f32 %v9578, %v9583
  %v9588 = vadd.f32 %v9579, %v9584
  %v9589 = vadd.f32 %v9580, %v9585
  %v9590 = vadd.f32 %v9581, %v9586
  %9595 = vrot.lane.b32.xlu0 %v9578, 32
  %v9596 = vpop.permute.xlu0 %9595
  %9597 = vrot.lane.b32.xlu0 %v9579, 32
  %v9598 = vpop.permute.xlu0 %9597
  %9599 = vrot.lane.b32.xlu0 %v9580, 32
  %v9600 = vpop.permute.xlu0 %9599
  %9601 = vrot.lane.b32.xlu0 %v9581, 32
  %v9602 = vpop.permute.xlu0 %9601
  %9611 = vrot.lane.b32.xlu0 %v9583, 32
  %v9612 = vpop.permute.xlu0 %9611
  %9613 = vrot.lane.b32.xlu0 %v9584, 32
  %v9614 = vpop.permute.xlu0 %9613
  %9615 = vrot.lane.b32.xlu0 %v9585, 32
  %v9616 = vpop.permute.xlu0 %9615
  %9617 = vrot.lane.b32.xlu0 %v9586, 32
  %v9618 = vpop.permute.xlu0 %9617
  %9623 = vmatprep.subr.mxu0 0.0
  %v9624 = vand.u32 %v9596, 4294901760
  %9625 = vmatpush1.msra.mxu0 %v9624
  %9626 = vmatprep.subr.mxu0 0.0
  %v9627 = vand.u32 %v9598, 4294901760
  %9628 = vmatpush1.msra.mxu0 %v9627
  %9629 = vmatprep.subr.mxu0 0.0
  %v9630 = vand.u32 %v9600, 4294901760
  %9631 = vmatpush1.msra.mxu0 %v9630
  %9632 = vmatprep.subr.mxu0 0.0
  %v9633 = vand.u32 %v9602, 4294901760
  %9634 = vmatpush1.msra.mxu0 %v9633
  %9635 = vmatprep.subr.mxu0 0.0
  %9636 = vmatpush1.msra.mxu0 0.0
  %9637 = vmatprep.subr.mxu0 0.0
  %9638 = vmatpush1.msra.mxu0 0.0
  %9639 = vmatprep.subr.mxu0 0.0
  %9640 = vmatpush1.msra.mxu0 0.0
  %9641 = vmatprep.subr.mxu0 0.0
  %9642 = vmatpush1.msra.mxu0 0.0
  %9643 = vmatprep.subr.mxu0 0.0
  %9644 = vmatpush1.msra.mxu0 0.0
  %9645 = vmatprep.subr.mxu0 0.0
  %9646 = vmatpush1.msra.mxu0 0.0
  %9647 = vmatprep.subr.mxu0 0.0
  %9648 = vmatpush1.msra.mxu0 0.0
  %9649 = vmatprep.subr.mxu0 0.0
  %9650 = vmatpush1.msra.mxu0 0.0
  %9651 = vmatprep.subr.mxu0 0.0
  %9652 = vmatpush1.msra.mxu0 0.0
  %9653 = vmatprep.subr.mxu0 0.0
  %9654 = vmatpush1.msra.mxu0 0.0
  %9655 = vmatprep.subr.mxu0 0.0
  %9656 = vmatpush1.msra.mxu0 0.0
  %9657 = vmatprep.subr.mxu0 0.0
  %9658 = vmatpush1.msra.mxu0 0.0
  %9659 = vmatprep.subr.mxu0 0.0
  %9660 = vmatpush1.msra.mxu0 0.0
  %9661 = vmatprep.subr.mxu0 0.0
  %9662 = vmatpush1.msra.mxu0 0.0
  %9663 = vmatprep.subr.mxu0 0.0
  %9664 = vmatpush1.msra.mxu0 0.0
  %9665 = vmatprep.subr.mxu0 0.0
  %9666 = vmatpush1.msra.mxu0 0.0
  %9667 = vmatprep.subr.mxu0 0.0
  %9668 = vmatpush1.msra.mxu0 0.0
  %9669 = vmatprep.subr.mxu0 0.0
  %9670 = vmatpush1.msra.mxu0 0.0
  %9671 = vmatprep.subr.mxu0 0.0
  %9672 = vmatpush1.msra.mxu0 0.0
  %9673 = vmatprep.subr.mxu0 0.0
  %9674 = vmatpush1.msra.mxu0 0.0
  %9675 = vmatprep.subr.mxu0 0.0
  %9676 = vmatpush1.msra.mxu0 0.0
  %9677 = vmatprep.subr.mxu0 0.0
  %9678 = vmatpush1.msra.mxu0 0.0
  %9679 = vmatprep.subr.mxu0 0.0
  %9680 = vmatpush1.msra.mxu0 0.0
  %9681 = vmatprep.subr.mxu0 0.0
  %9682 = vmatpush1.msra.mxu0 0.0
  %9683 = vmatprep.subr.mxu0 0.0
  %9684 = vmatpush1.msra.mxu0 0.0
  %9685 = vmatprep.subr.mxu0 0.0
  %9686 = vmatpush1.msra.mxu0 0.0
  %9687 = vmatprep.subr.mxu0 0.0
  %9688 = vmatpush1.msra.mxu0 0.0
  %9689 = vmatprep.subr.mxu0 0.0
  %9690 = vmatpush1.msra.mxu0 0.0
  %9691 = vmatprep.mubr.f32.mxu0 0.0
  %v9692 = vand.u32 %v774, 4294901760
  %v9693 = vsub.f32 %v774, %v9692
  %v9694 = vand.u32 %v9693, 4294901760
  %v9695 = vsub.f32 %v9693, %v9694
  %v9696 = vand.u32 %v9695, 4294901760
  %9697 = vmatmul.mubr.f32.gmra.mrb[0].mxu0 %v9696
  %v9698 = vpop.f32.mrb[0].mxu0
  %v9699 = vadd.f32 %v9612, %v9698
  %v9700 = vpop.f32.mrb[0].mxu0
  %9701 = vmatprep.mubr.f32.mxu0 0.0
  %v9702 = vand.u32 %v777, 4294901760
  %v9703 = vsub.f32 %v777, %v9702
  %v9704 = vand.u32 %v9703, 4294901760
  %v9705 = vsub.f32 %v9703, %v9704
  %v9706 = vand.u32 %v9705, 4294901760
  %9707 = vmatmul.mubr.f32.gmra.mrb[0].mxu0 %v9706
  %v9708 = vpop.f32.mrb[0].mxu0
  %v9709 = vadd.f32 %v9614, %v9708
  %v9710 = vpop.f32.mrb[0].mxu0
  %9711 = vmatprep.mubr.f32.mxu0 0.0
  %v9712 = vand.u32 %v780, 4294901760
  %v9713 = vsub.f32 %v780, %v9712
  %v9714 = vand.u32 %v9713, 4294901760
  %v9715 = vsub.f32 %v9713, %v9714
  %v9716 = vand.u32 %v9715, 4294901760
  %9717 = vmatmul.mubr.f32.gmra.mrb[0].mxu0 %v9716
  %v9718 = vpop.f32.mrb[0].mxu0
  %v9719 = vadd.f32 %v9616, %v9718
  %v9720 = vpop.f32.mrb[0].mxu0
  %9721 = vmatprep.mubr.f32.mxu0 0.0
  %v9722 = vand.u32 %v783, 4294901760
  %v9723 = vsub.f32 %v783, %v9722
  %v9724 = vand.u32 %v9723, 4294901760
  %v9725 = vsub.f32 %v9723, %v9724
  %v9726 = vand.u32 %v9725, 4294901760
  %9727 = vmatmul.mubr.f32.gmra.mrb[0].mxu0 %v9726
  %v9728 = vpop.f32.mrb[0].mxu0
  %v9729 = vadd.f32 %v9618, %v9728
  %v9730 = vpop.f32.mrb[0].mxu0
  %9731 = vdwg.mxu0
  %9732 = vmatprep.subr.mxu0 0.0
  %v9733 = vand.u32 %v9596, 4294901760
  %v9734 = vsub.f32 %v9596, %v9733
  %v9735 = vand.u32 %v9734, 4294901760
  %v9736 = vsub.f32 %v9734, %v9735
  %v9737 = vand.u32 %v9736, 4294901760
  %9738 = vmatpush1.msra.mxu0 %v9737
  %9739 = vmatprep.subr.mxu0 0.0
  %v9740 = vand.u32 %v9598, 4294901760
  %v9741 = vsub.f32 %v9598, %v9740
  %v9742 = vand.u32 %v9741, 4294901760
  %v9743 = vsub.f32 %v9741, %v9742
  %v9744 = vand.u32 %v9743, 4294901760
  %9745 = vmatpush1.msra.mxu0 %v9744
  %9746 = vmatprep.subr.mxu0 0.0
  %v9747 = vand.u32 %v9600, 4294901760
  %v9748 = vsub.f32 %v9600, %v9747
  %v9749 = vand.u32 %v9748, 4294901760
  %v9750 = vsub.f32 %v9748, %v9749
  %v9751 = vand.u32 %v9750, 4294901760
  %9752 = vmatpush1.msra.mxu0 %v9751
  %9753 = vmatprep.subr.mxu0 0.0
  %v9754 = vand.u32 %v9602, 4294901760
  %v9755 = vsub.f32 %v9602, %v9754
  %v9756 = vand.u32 %v9755, 4294901760
  %v9757 = vsub.f32 %v9755, %v9756
  %v9758 = vand.u32 %v9757, 4294901760
  %9759 = vmatpush1.msra.mxu0 %v9758
  %9760 = vmatprep.subr.mxu0 0.0
  %9761 = vmatpush1.msra.mxu0 0.0
  %9762 = vmatprep.subr.mxu0 0.0
  %9763 = vmatpush1.msra.mxu0 0.0
  %9764 = vmatprep.subr.mxu0 0.0
  %9765 = vmatpush1.msra.mxu0 0.0
  %9766 = vmatprep.subr.mxu0 0.0
  %9767 = vmatpush1.msra.mxu0 0.0
  %9768 = vmatprep.subr.mxu0 0.0
  %9769 = vmatpush1.msra.mxu0 0.0
  %9770 = vmatprep.subr.mxu0 0.0
  %9771 = vmatpush1.msra.mxu0 0.0
  %9772 = vmatprep.subr.mxu0 0.0
  %9773 = vmatpush1.msra.mxu0 0.0
  %9774 = vmatprep.subr.mxu0 0.0
  %9775 = vmatpush1.msra.mxu0 0.0
  %9776 = vmatprep.subr.mxu0 0.0
  %9777 = vmatpush1.msra.mxu0 0.0
  %9778 = vmatprep.subr.mxu0 0.0
  %9779 = vmatpush1.msra.mxu0 0.0
  %9780 = vmatprep.subr.mxu0 0.0
  %9781 = vmatpush1.msra.mxu0 0.0
  %9782 = vmatprep.subr.mxu0 0.0
  %9783 = vmatpush1.msra.mxu0 0.0
  %9784 = vmatprep.subr.mxu0 0.0
  %9785 = vmatpush1.msra.mxu0 0.0
  %9786 = vmatprep.subr.mxu0 0.0
  %9787 = vmatpush1.msra.mxu0 0.0
  %9788 = vmatprep.subr.mxu0 0.0
  %9789 = vmatpush1.msra.mxu0 0.0
  %9790 = vmatprep.subr.mxu0 0.0
  %9791 = vmatpush1.msra.mxu0 0.0
  %9792 = vmatprep.subr.mxu0 0.0
  %9793 = vmatpush1.msra.mxu0 0.0
  %9794 = vmatprep.subr.mxu0 0.0
  %9795 = vmatpush1.msra.mxu0 0.0
  %9796 = vmatprep.subr.mxu0 0.0
  %9797 = vmatpush1.msra.mxu0 0.0
  %9798 = vmatprep.subr.mxu0 0.0
  %9799 = vmatpush1.msra.mxu0 0.0
  %9800 = vmatprep.subr.mxu0 0.0
  %9801 = vmatpush1.msra.mxu0 0.0
  %9802 = vmatprep.subr.mxu0 0.0
  %9803 = vmatpush1.msra.mxu0 0.0
  %9804 = vmatprep.subr.mxu0 0.0
  %9805 = vmatpush1.msra.mxu0 0.0
  %9806 = vmatprep.subr.mxu0 0.0
  %9807 = vmatpush1.msra.mxu0 0.0
  %9808 = vmatprep.subr.mxu0 0.0
  %9809 = vmatpush1.msra.mxu0 0.0
  %9810 = vmatprep.subr.mxu0 0.0
  %9811 = vmatpush1.msra.mxu0 0.0
  %9812 = vmatprep.subr.mxu0 0.0
  %9813 = vmatpush1.msra.mxu0 0.0
  %9814 = vmatprep.subr.mxu0 0.0
  %9815 = vmatpush1.msra.mxu0 0.0
  %9816 = vmatprep.mubr.f32.mxu0 0.0
  %v9817 = vand.u32 %v774, 4294901760
  %9818 = vmatmul.mubr.f32.gmra.mrb[0].mxu0 %v9817
  %v9819 = vpop.f32.mrb[0].mxu0
  %v9820 = vadd.f32 %v9699, %v9819
  %v9821 = vpop.f32.mrb[0].mxu0
  %9822 = vmatprep.mubr.f32.mxu0 0.0
  %v9823 = vand.u32 %v777, 4294901760
  %9824 = vmatmul.mubr.f32.gmra.mrb[0].mxu0 %v9823
  %v9825 = vpop.f32.mrb[0].mxu0
  %v9826 = vadd.f32 %v9709, %v9825
  %v9827 = vpop.f32.mrb[0].mxu0
  %9828 = vmatprep.mubr.f32.mxu0 0.0
  %v9829 = vand.u32 %v780, 4294901760
  %9830 = vmatmul.mubr.f32.gmra.mrb[0].mxu0 %v9829
  %v9831 = vpop.f32.mrb[0].mxu0
  %v9832 = vadd.f32 %v9719, %v9831
  %v9833 = vpop.f32.mrb[0].mxu0
  %9834 = vmatprep.mubr.f32.mxu0 0.0
  %v9835 = vand.u32 %v783, 4294901760
  %9836 = vmatmul.mubr.f32.gmra.mrb[0].mxu0 %v9835
  %v9837 = vpop.f32.mrb[0].mxu0
  %v9838 = vadd.f32 %v9729, %v9837
  %v9839 = vpop.f32.mrb[0].mxu0
  %9840 = vdwg.mxu0
  %9841 = vmatprep.subr.mxu0 0.0
  %v9842 = vand.u32 %v9596, 4294901760
  %v9843 = vsub.f32 %v9596, %v9842
  %9844 = vmatpush1.msra.mxu0 %v9843
  %9845 = vmatprep.subr.mxu0 0.0
  %v9846 = vand.u32 %v9598, 4294901760
  %v9847 = vsub.f32 %v9598, %v9846
  %9848 = vmatpush1.msra.mxu0 %v9847
  %9849 = vmatprep.subr.mxu0 0.0
  %v9850 = vand.u32 %v9600, 4294901760
  %v9851 = vsub.f32 %v9600, %v9850
  %9852 = vmatpush1.msra.mxu0 %v9851
  %9853 = vmatprep.subr.mxu0 0.0
  %v9854 = vand.u32 %v9602, 4294901760
  %v9855 = vsub.f32 %v9602, %v9854
  %9856 = vmatpush1.msra.mxu0 %v9855
  %9857 = vmatprep.subr.mxu0 0.0
  %9858 = vmatpush1.msra.mxu0 0.0
  %9859 = vmatprep.subr.mxu0 0.0
  %9860 = vmatpush1.msra.mxu0 0.0
  %9861 = vmatprep.subr.mxu0 0.0
  %9862 = vmatpush1.msra.mxu0 0.0
  %9863 = vmatprep.subr.mxu0 0.0
  %9864 = vmatpush1.msra.mxu0 0.0
  %9865 = vmatprep.subr.mxu0 0.0
  %9866 = vmatpush1.msra.mxu0 0.0
  %9867 = vmatprep.subr.mxu0 0.0
  %9868 = vmatpush1.msra.mxu0 0.0
  %9869 = vmatprep.subr.mxu0 0.0
  %9870 = vmatpush1.msra.mxu0 0.0
  %9871 = vmatprep.subr.mxu0 0.0
  %9872 = vmatpush1.msra.mxu0 0.0
  %9873 = vmatprep.subr.mxu0 0.0
  %9874 = vmatpush1.msra.mxu0 0.0
  %9875 = vmatprep.subr.mxu0 0.0
  %9876 = vmatpush1.msra.mxu0 0.0
  %9877 = vmatprep.subr.mxu0 0.0
  %9878 = vmatpush1.msra.mxu0 0.0
  %9879 = vmatprep.subr.mxu0 0.0
  %9880 = vmatpush1.msra.mxu0 0.0
  %9881 = vmatprep.subr.mxu0 0.0
  %9882 = vmatpush1.msra.mxu0 0.0
  %9883 = vmatprep.subr.mxu0 0.0
  %9884 = vmatpush1.msra.mxu0 0.0
  %9885 = vmatprep.subr.mxu0 0.0
  %9886 = vmatpush1.msra.mxu0 0.0
  %9887 = vmatprep.subr.mxu0 0.0
  %9888 = vmatpush1.msra.mxu0 0.0
  %9889 = vmatprep.subr.mxu0 0.0
  %9890 = vmatpush1.msra.mxu0 0.0
  %9891 = vmatprep.subr.mxu0 0.0
  %9892 = vmatpush1.msra.mxu0 0.0
  %9893 = vmatprep.subr.mxu0 0.0
  %9894 = vmatpush1.msra.mxu0 0.0
  %9895 = vmatprep.subr.mxu0 0.0
  %9896 = vmatpush1.msra.mxu0 0.0
  %9897 = vmatprep.subr.mxu0 0.0
  %9898 = vmatpush1.msra.mxu0 0.0
  %9899 = vmatprep.subr.mxu0 0.0
  %9900 = vmatpush1.msra.mxu0 0.0
  %9901 = vmatprep.subr.mxu0 0.0
  %9902 = vmatpush1.msra.mxu0 0.0
  %9903 = vmatprep.subr.mxu0 0.0
  %9904 = vmatpush1.msra.mxu0 0.0
  %9905 = vmatprep.subr.mxu0 0.0
  %9906 = vmatpush1.msra.mxu0 0.0
  %9907 = vmatprep.subr.mxu0 0.0
  %9908 = vmatpush1.msra.mxu0 0.0
  %9909 = vmatprep.subr.mxu0 0.0
  %9910 = vmatpush1.msra.mxu0 0.0
  %9911 = vmatprep.subr.mxu0 0.0
  %9912 = vmatpush1.msra.mxu0 0.0
  %9913 = vmatprep.mubr.f32.mxu0 0.0
  %v9914 = vand.u32 %v774, 4294901760
  %v9915 = vsub.f32 %v774, %v9914
  %9916 = vmatmul.mubr.f32.gmra.mrb[0].mxu0 %v9915
  %v9917 = vpop.f32.mrb[0].mxu0
  %v9918 = vadd.f32 %v9820, %v9917
  %v9919 = vpop.f32.mrb[0].mxu0
  %9920 = vmatprep.mubr.f32.mxu0 0.0
  %v9921 = vand.u32 %v777, 4294901760
  %v9922 = vsub.f32 %v777, %v9921
  %9923 = vmatmul.mubr.f32.gmra.mrb[0].mxu0 %v9922
  %v9924 = vpop.f32.mrb[0].mxu0
  %v9925 = vadd.f32 %v9826, %v9924
  %v9926 = vpop.f32.mrb[0].mxu0
  %9927 = vmatprep.mubr.f32.mxu0 0.0
  %v9928 = vand.u32 %v780, 4294901760
  %v9929 = vsub.f32 %v780, %v9928
  %9930 = vmatmul.mubr.f32.gmra.mrb[0].mxu0 %v9929
  %v9931 = vpop.f32.mrb[0].mxu0
  %v9932 = vadd.f32 %v9832, %v9931
  %v9933 = vpop.f32.mrb[0].mxu0
  %9934 = vmatprep.mubr.f32.mxu0 0.0
  %v9935 = vand.u32 %v783, 4294901760
  %v9936 = vsub.f32 %v783, %v9935
  %9937 = vmatmul.mubr.f32.gmra.mrb[0].mxu0 %v9936
  %v9938 = vpop.f32.mrb[0].mxu0
  %v9939 = vadd.f32 %v9838, %v9938
  %v9940 = vpop.f32.mrb[0].mxu0
  %9941 = vdwg.mxu0
  %9942 = vmatprep.subr.mxu0 0.0
  %v9943 = vand.u32 %v9596, 4294901760
  %9944 = vmatpush1.msra.mxu0 %v9943
  %9945 = vmatprep.subr.mxu0 0.0
  %v9946 = vand.u32 %v9598, 4294901760
  %9947 = vmatpush1.msra.mxu0 %v9946
  %9948 = vmatprep.subr.mxu0 0.0
  %v9949 = vand.u32 %v9600, 4294901760
  %9950 = vmatpush1.msra.mxu0 %v9949
  %9951 = vmatprep.subr.mxu0 0.0
  %v9952 = vand.u32 %v9602, 4294901760
  %9953 = vmatpush1.msra.mxu0 %v9952
  %9954 = vmatprep.subr.mxu0 0.0
  %9955 = vmatpush1.msra.mxu0 0.0
  %9956 = vmatprep.subr.mxu0 0.0
  %9957 = vmatpush1.msra.mxu0 0.0
  %9958 = vmatprep.subr.mxu0 0.0
  %9959 = vmatpush1.msra.mxu0 0.0
  %9960 = vmatprep.subr.mxu0 0.0
  %9961 = vmatpush1.msra.mxu0 0.0
  %9962 = vmatprep.subr.mxu0 0.0
  %9963 = vmatpush1.msra.mxu0 0.0
  %9964 = vmatprep.subr.mxu0 0.0
  %9965 = vmatpush1.msra.mxu0 0.0
  %9966 = vmatprep.subr.mxu0 0.0
  %9967 = vmatpush1.msra.mxu0 0.0
  %9968 = vmatprep.subr.mxu0 0.0
  %9969 = vmatpush1.msra.mxu0 0.0
  %9970 = vmatprep.subr.mxu0 0.0
  %9971 = vmatpush1.msra.mxu0 0.0
  %9972 = vmatprep.subr.mxu0 0.0
  %9973 = vmatpush1.msra.mxu0 0.0
  %9974 = vmatprep.subr.mxu0 0.0
  %9975 = vmatpush1.msra.mxu0 0.0
  %9976 = vmatprep.subr.mxu0 0.0
  %9977 = vmatpush1.msra.mxu0 0.0
  %9978 = vmatprep.subr.mxu0 0.0
  %9979 = vmatpush1.msra.mxu0 0.0
  %9980 = vmatprep.subr.mxu0 0.0
  %9981 = vmatpush1.msra.mxu0 0.0
  %9982 = vmatprep.subr.mxu0 0.0
  %9983 = vmatpush1.msra.mxu0 0.0
  %9984 = vmatprep.subr.mxu0 0.0
  %9985 = vmatpush1.msra.mxu0 0.0
  %9986 = vmatprep.subr.mxu0 0.0
  %9987 = vmatpush1.msra.mxu0 0.0
  %9988 = vmatprep.subr.mxu0 0.0
  %9989 = vmatpush1.msra.mxu0 0.0
  %9990 = vmatprep.subr.mxu0 0.0
  %9991 = vmatpush1.msra.mxu0 0.0
  %9992 = vmatprep.subr.mxu0 0.0
  %9993 = vmatpush1.msra.mxu0 0.0
  %9994 = vmatprep.subr.mxu0 0.0
  %9995 = vmatpush1.msra.mxu0 0.0
  %9996 = vmatprep.subr.mxu0 0.0
  %9997 = vmatpush1.msra.mxu0 0.0
  %9998 = vmatprep.subr.mxu0 0.0
  %9999 = vmatpush1.msra.mxu0 0.0
  %10000 = vmatprep.subr.mxu0 0.0
  %10001 = vmatpush1.msra.mxu0 0.0
  %10002 = vmatprep.subr.mxu0 0.0
  %10003 = vmatpush1.msra.mxu0 0.0
  %10004 = vmatprep.subr.mxu0 0.0
  %10005 = vmatpush1.msra.mxu0 0.0
  %10006 = vmatprep.subr.mxu0 0.0
  %10007 = vmatpush1.msra.mxu0 0.0
  %10008 = vmatprep.subr.mxu0 0.0
  %10009 = vmatpush1.msra.mxu0 0.0
  %10010 = vmatprep.mubr.f32.mxu0 0.0
  %v10011 = vand.u32 %v774, 4294901760
  %v10012 = vsub.f32 %v774, %v10011
  %v10013 = vand.u32 %v10012, 4294901760
  %10014 = vmatmul.mubr.f32.gmra.mrb[0].mxu0 %v10013
  %v10015 = vpop.f32.mrb[0].mxu0
  %v10016 = vadd.f32 %v9918, %v10015
  %v10017 = vpop.f32.mrb[0].mxu0
  %10018 = vmatprep.mubr.f32.mxu0 0.0
  %v10019 = vand.u32 %v777, 4294901760
  %v10020 = vsub.f32 %v777, %v10019
  %v10021 = vand.u32 %v10020, 4294901760
  %10022 = vmatmul.mubr.f32.gmra.mrb[0].mxu0 %v10021
  %v10023 = vpop.f32.mrb[0].mxu0
  %v10024 = vadd.f32 %v9925, %v10023
  %v10025 = vpop.f32.mrb[0].mxu0
  %10026 = vmatprep.mubr.f32.mxu0 0.0
  %v10027 = vand.u32 %v780, 4294901760
  %v10028 = vsub.f32 %v780, %v10027
  %v10029 = vand.u32 %v10028, 4294901760
  %10030 = vmatmul.mubr.f32.gmra.mrb[0].mxu0 %v10029
  %v10031 = vpop.f32.mrb[0].mxu0
  %v10032 = vadd.f32 %v9932, %v10031
  %v10033 = vpop.f32.mrb[0].mxu0
  %10034 = vmatprep.mubr.f32.mxu0 0.0
  %v10035 = vand.u32 %v783, 4294901760
  %v10036 = vsub.f32 %v783, %v10035
  %v10037 = vand.u32 %v10036, 4294901760
  %10038 = vmatmul.mubr.f32.gmra.mrb[0].mxu0 %v10037
  %v10039 = vpop.f32.mrb[0].mxu0
  %v10040 = vadd.f32 %v9939, %v10039
  %v10041 = vpop.f32.mrb[0].mxu0
  %10042 = vdwg.mxu0
  %10043 = vmatprep.subr.mxu0 0.0
  %v10044 = vand.u32 %v9596, 4294901760
  %v10045 = vsub.f32 %v9596, %v10044
  %v10046 = vand.u32 %v10045, 4294901760
  %10047 = vmatpush1.msra.mxu0 %v10046
  %10048 = vmatprep.subr.mxu0 0.0
  %v10049 = vand.u32 %v9598, 4294901760
  %v10050 = vsub.f32 %v9598, %v10049
  %v10051 = vand.u32 %v10050, 4294901760
  %10052 = vmatpush1.msra.mxu0 %v10051
  %10053 = vmatprep.subr.mxu0 0.0
  %v10054 = vand.u32 %v9600, 4294901760
  %v10055 = vsub.f32 %v9600, %v10054
  %v10056 = vand.u32 %v10055, 4294901760
  %10057 = vmatpush1.msra.mxu0 %v10056
  %10058 = vmatprep.subr.mxu0 0.0
  %v10059 = vand.u32 %v9602, 4294901760
  %v10060 = vsub.f32 %v9602, %v10059
  %v10061 = vand.u32 %v10060, 4294901760
  %10062 = vmatpush1.msra.mxu0 %v10061
  %10063 = vmatprep.subr.mxu0 0.0
  %10064 = vmatpush1.msra.mxu0 0.0
  %10065 = vmatprep.subr.mxu0 0.0
  %10066 = vmatpush1.msra.mxu0 0.0
  %10067 = vmatprep.subr.mxu0 0.0
  %10068 = vmatpush1.msra.mxu0 0.0
  %10069 = vmatprep.subr.mxu0 0.0
  %10070 = vmatpush1.msra.mxu0 0.0
  %10071 = vmatprep.subr.mxu0 0.0
  %10072 = vmatpush1.msra.mxu0 0.0
  %10073 = vmatprep.subr.mxu0 0.0
  %10074 = vmatpush1.msra.mxu0 0.0
  %10075 = vmatprep.subr.mxu0 0.0
  %10076 = vmatpush1.msra.mxu0 0.0
  %10077 = vmatprep.subr.mxu0 0.0
  %10078 = vmatpush1.msra.mxu0 0.0
  %10079 = vmatprep.subr.mxu0 0.0
  %10080 = vmatpush1.msra.mxu0 0.0
  %10081 = vmatprep.subr.mxu0 0.0
  %10082 = vmatpush1.msra.mxu0 0.0
  %10083 = vmatprep.subr.mxu0 0.0
  %10084 = vmatpush1.msra.mxu0 0.0
  %10085 = vmatprep.subr.mxu0 0.0
  %10086 = vmatpush1.msra.mxu0 0.0
  %10087 = vmatprep.subr.mxu0 0.0
  %10088 = vmatpush1.msra.mxu0 0.0
  %10089 = vmatprep.subr.mxu0 0.0
  %10090 = vmatpush1.msra.mxu0 0.0
  %10091 = vmatprep.subr.mxu0 0.0
  %10092 = vmatpush1.msra.mxu0 0.0
  %10093 = vmatprep.subr.mxu0 0.0
  %10094 = vmatpush1.msra.mxu0 0.0
  %10095 = vmatprep.subr.mxu0 0.0
  %10096 = vmatpush1.msra.mxu0 0.0
  %10097 = vmatprep.subr.mxu0 0.0
  %10098 = vmatpush1.msra.mxu0 0.0
  %10099 = vmatprep.subr.mxu0 0.0
  %10100 = vmatpush1.msra.mxu0 0.0
  %10101 = vmatprep.subr.mxu0 0.0
  %10102 = vmatpush1.msra.mxu0 0.0
  %10103 = vmatprep.subr.mxu0 0.0
  %10104 = vmatpush1.msra.mxu0 0.0
  %10105 = vmatprep.subr.mxu0 0.0
  %10106 = vmatpush1.msra.mxu0 0.0
  %10107 = vmatprep.subr.mxu0 0.0
  %10108 = vmatpush1.msra.mxu0 0.0
  %10109 = vmatprep.subr.mxu0 0.0
  %10110 = vmatpush1.msra.mxu0 0.0
  %10111 = vmatprep.subr.mxu0 0.0
  %10112 = vmatpush1.msra.mxu0 0.0
  %10113 = vmatprep.subr.mxu0 0.0
  %10114 = vmatpush1.msra.mxu0 0.0
  %10115 = vmatprep.subr.mxu0 0.0
  %10116 = vmatpush1.msra.mxu0 0.0
  %10117 = vmatprep.subr.mxu0 0.0
  %10118 = vmatpush1.msra.mxu0 0.0
  %10119 = vmatprep.mubr.f32.mxu0 0.0
  %v10120 = vand.u32 %v774, 4294901760
  %10121 = vmatmul.mubr.f32.gmra.mrb[0].mxu0 %v10120
  %v10122 = vpop.f32.mrb[0].mxu0
  %v10123 = vadd.f32 %v10016, %v10122
  %v10124 = vpop.f32.mrb[0].mxu0
  %10125 = vmatprep.mubr.f32.mxu0 0.0
  %v10126 = vand.u32 %v777, 4294901760
  %10127 = vmatmul.mubr.f32.gmra.mrb[0].mxu0 %v10126
  %v10128 = vpop.f32.mrb[0].mxu0
  %v10129 = vadd.f32 %v10024, %v10128
  %v10130 = vpop.f32.mrb[0].mxu0
  %10131 = vmatprep.mubr.f32.mxu0 0.0
  %v10132 = vand.u32 %v780, 4294901760
  %10133 = vmatmul.mubr.f32.gmra.mrb[0].mxu0 %v10132
  %v10134 = vpop.f32.mrb[0].mxu0
  %v10135 = vadd.f32 %v10032, %v10134
  %v10136 = vpop.f32.mrb[0].mxu0
  %10137 = vmatprep.mubr.f32.mxu0 0.0
  %v10138 = vand.u32 %v783, 4294901760
  %10139 = vmatmul.mubr.f32.gmra.mrb[0].mxu0 %v10138
  %v10140 = vpop.f32.mrb[0].mxu0
  %v10141 = vadd.f32 %v10040, %v10140
  %v10142 = vpop.f32.mrb[0].mxu0
  %10143 = vdwg.mxu0
  %10144 = vmatprep.subr.mxu0 0.0
  %v10145 = vand.u32 %v9596, 4294901760
  %10146 = vmatpush1.msra.mxu0 %v10145
  %10147 = vmatprep.subr.mxu0 0.0
  %v10148 = vand.u32 %v9598, 4294901760
  %10149 = vmatpush1.msra.mxu0 %v10148
  %10150 = vmatprep.subr.mxu0 0.0
  %v10151 = vand.u32 %v9600, 4294901760
  %10152 = vmatpush1.msra.mxu0 %v10151
  %10153 = vmatprep.subr.mxu0 0.0
  %v10154 = vand.u32 %v9602, 4294901760
  %10155 = vmatpush1.msra.mxu0 %v10154
  %10156 = vmatprep.subr.mxu0 0.0
  %10157 = vmatpush1.msra.mxu0 0.0
  %10158 = vmatprep.subr.mxu0 0.0
  %10159 = vmatpush1.msra.mxu0 0.0
  %10160 = vmatprep.subr.mxu0 0.0
  %10161 = vmatpush1.msra.mxu0 0.0
  %10162 = vmatprep.subr.mxu0 0.0
  %10163 = vmatpush1.msra.mxu0 0.0
  %10164 = vmatprep.subr.mxu0 0.0
  %10165 = vmatpush1.msra.mxu0 0.0
  %10166 = vmatprep.subr.mxu0 0.0
  %10167 = vmatpush1.msra.mxu0 0.0
  %10168 = vmatprep.subr.mxu0 0.0
  %10169 = vmatpush1.msra.mxu0 0.0
  %10170 = vmatprep.subr.mxu0 0.0
  %10171 = vmatpush1.msra.mxu0 0.0
  %10172 = vmatprep.subr.mxu0 0.0
  %10173 = vmatpush1.msra.mxu0 0.0
  %10174 = vmatprep.subr.mxu0 0.0
  %10175 = vmatpush1.msra.mxu0 0.0
  %10176 = vmatprep.subr.mxu0 0.0
  %10177 = vmatpush1.msra.mxu0 0.0
  %10178 = vmatprep.subr.mxu0 0.0
  %10179 = vmatpush1.msra.mxu0 0.0
  %10180 = vmatprep.subr.mxu0 0.0
  %10181 = vmatpush1.msra.mxu0 0.0
  %10182 = vmatprep.subr.mxu0 0.0
  %10183 = vmatpush1.msra.mxu0 0.0
  %10184 = vmatprep.subr.mxu0 0.0
  %10185 = vmatpush1.msra.mxu0 0.0
  %10186 = vmatprep.subr.mxu0 0.0
  %10187 = vmatpush1.msra.mxu0 0.0
  %10188 = vmatprep.subr.mxu0 0.0
  %10189 = vmatpush1.msra.mxu0 0.0
  %10190 = vmatprep.subr.mxu0 0.0
  %10191 = vmatpush1.msra.mxu0 0.0
  %10192 = vmatprep.subr.mxu0 0.0
  %10193 = vmatpush1.msra.mxu0 0.0
  %10194 = vmatprep.subr.mxu0 0.0
  %10195 = vmatpush1.msra.mxu0 0.0
  %10196 = vmatprep.subr.mxu0 0.0
  %10197 = vmatpush1.msra.mxu0 0.0
  %10198 = vmatprep.subr.mxu0 0.0
  %10199 = vmatpush1.msra.mxu0 0.0
  %10200 = vmatprep.subr.mxu0 0.0
  %10201 = vmatpush1.msra.mxu0 0.0
  %10202 = vmatprep.subr.mxu0 0.0
  %10203 = vmatpush1.msra.mxu0 0.0
  %10204 = vmatprep.subr.mxu0 0.0
  %10205 = vmatpush1.msra.mxu0 0.0
  %10206 = vmatprep.subr.mxu0 0.0
  %10207 = vmatpush1.msra.mxu0 0.0
  %10208 = vmatprep.subr.mxu0 0.0
  %10209 = vmatpush1.msra.mxu0 0.0
  %10210 = vmatprep.subr.mxu0 0.0
  %10211 = vmatpush1.msra.mxu0 0.0
  %10212 = vmatprep.mubr.f32.mxu0 0.0
  %v10213 = vand.u32 %v774, 4294901760
  %10214 = vmatmul.mubr.f32.gmra.mrb[0].mxu0 %v10213
  %v10215 = vpop.f32.mrb[0].mxu0
  %v10216 = vadd.f32 %v10123, %v10215
  %v10217 = vpop.f32.mrb[0].mxu0
  %10218 = vmatprep.mubr.f32.mxu0 0.0
  %v10219 = vand.u32 %v777, 4294901760
  %10220 = vmatmul.mubr.f32.gmra.mrb[0].mxu0 %v10219
  %v10221 = vpop.f32.mrb[0].mxu0
  %v10222 = vadd.f32 %v10129, %v10221
  %v10223 = vpop.f32.mrb[0].mxu0
  %10224 = vmatprep.mubr.f32.mxu0 0.0
  %v10225 = vand.u32 %v780, 4294901760
  %10226 = vmatmul.mubr.f32.gmra.mrb[0].mxu0 %v10225
  %v10227 = vpop.f32.mrb[0].mxu0
  %v10228 = vadd.f32 %v10135, %v10227
  %v10229 = vpop.f32.mrb[0].mxu0
  %10230 = vmatprep.mubr.f32.mxu0 0.0
  %v10231 = vand.u32 %v783, 4294901760
  %10232 = vmatmul.mubr.f32.gmra.mrb[0].mxu0 %v10231
  %v10233 = vpop.f32.mrb[0].mxu0
  %v10234 = vadd.f32 %v10141, %v10233
  %v10235 = vpop.f32.mrb[0].mxu0
  %10236 = vdwg.mxu0
  %v10237 = vadd.f32 %v10216, %v9587
  %v10238 = vadd.f32 %v10222, %v9588
  %v10239 = vadd.f32 %v10228, %v9589
  %v10240 = vadd.f32 %v10234, %v9590
  %v10241 = vxor.u32 %v10237, 2147483648
  %v10242 = vxor.u32 %v10238, 2147483648
  %v10243 = vxor.u32 %v10239, 2147483648
  %v10244 = vxor.u32 %v10240, 2147483648
  %v10245 = vmul.f32 %v10241, 1.442695
  %v10246 = vpow.pop %v10245
  %v10247 = vmul.f32 %v10242, 1.442695
  %v10248 = vpow.pop %v10247
  %v10249 = vmul.f32 %v10243, 1.442695
  %v10250 = vpow.pop %v10249
  %v10251 = vmul.f32 %v10244, 1.442695
  %v10252 = vpow.pop %v10251
  %v10253 = vadd.f32 %v10246, 1.0
  %v10254 = vadd.f32 %v10248, 1.0
  %v10255 = vadd.f32 %v10250, 1.0
  %v10256 = vadd.f32 %v10252, 1.0
  %v10257 = vrcp.pop %v10253
  %v10258 = vmul.f32 1.0, %v10257
  %v10259 = vrcp.pop %v10254
  %v10260 = vmul.f32 1.0, %v10259
  %v10261 = vrcp.pop %v10255
  %v10262 = vmul.f32 1.0, %v10261
  %v10263 = vrcp.pop %v10256
  %v10264 = vmul.f32 1.0, %v10263
  %10269 = vrot.lane.b32.xlu0 %v9587, 96
  %v10270 = vpop.permute.xlu0 %10269
  %10271 = vrot.lane.b32.xlu0 %v9588, 96
  %v10272 = vpop.permute.xlu0 %10271
  %10273 = vrot.lane.b32.xlu0 %v9589, 96
  %v10274 = vpop.permute.xlu0 %10273
  %10275 = vrot.lane.b32.xlu0 %v9590, 96
  %v10276 = vpop.permute.xlu0 %10275
  %v10281 = vadd.f32 %v10216, %v10270
  %v10282 = vadd.f32 %v10222, %v10272
  %v10283 = vadd.f32 %v10228, %v10274
  %v10284 = vadd.f32 %v10234, %v10276
  %v10285 = vxor.u32 %v10281, 2147483648
  %v10286 = vxor.u32 %v10282, 2147483648
  %v10287 = vxor.u32 %v10283, 2147483648
  %v10288 = vxor.u32 %v10284, 2147483648
  %v10289 = vmul.f32 %v10285, 1.442695
  %v10290 = vpow.pop %v10289
  %v10291 = vmul.f32 %v10286, 1.442695
  %v10292 = vpow.pop %v10291
  %v10293 = vmul.f32 %v10287, 1.442695
  %v10294 = vpow.pop %v10293
  %v10295 = vmul.f32 %v10288, 1.442695
  %v10296 = vpow.pop %v10295
  %v10297 = vadd.f32 %v10290, 1.0
  %v10298 = vadd.f32 %v10292, 1.0
  %v10299 = vadd.f32 %v10294, 1.0
  %v10300 = vadd.f32 %v10296, 1.0
  %v10301 = vrcp.pop %v10297
  %v10302 = vmul.f32 1.0, %v10301
  %v10303 = vrcp.pop %v10298
  %v10304 = vmul.f32 1.0, %v10303
  %v10305 = vrcp.pop %v10299
  %v10306 = vmul.f32 1.0, %v10305
  %v10307 = vrcp.pop %v10300
  %v10308 = vmul.f32 1.0, %v10307
  %10309 = vrot.lane.b32.xlu0 %v9587, 64
  %v10310 = vpop.permute.xlu0 %10309
  %10311 = vrot.lane.b32.xlu0 %v9588, 64
  %v10312 = vpop.permute.xlu0 %10311
  %10313 = vrot.lane.b32.xlu0 %v9589, 64
  %v10314 = vpop.permute.xlu0 %10313
  %10315 = vrot.lane.b32.xlu0 %v9590, 64
  %v10316 = vpop.permute.xlu0 %10315
  %v10321 = vmul.f32 %v10258, %v10310
  %v10322 = vmul.f32 %v10260, %v10312
  %v10323 = vmul.f32 %v10262, %v10314
  %v10324 = vmul.f32 %v10264, %v10316
  %v10325 = vadd.f32 %v10216, %v10321
  %v10326 = vadd.f32 %v10222, %v10322
  %v10327 = vadd.f32 %v10228, %v10323
  %v10328 = vadd.f32 %v10234, %v10324
  %v10329 = vtanh.pop %v10325
  %v10330 = vtanh.pop %v10326
  %v10331 = vtanh.pop %v10327
  %v10332 = vtanh.pop %v10328
  %v10333 = vsub.f32 1.0, %v10302
  %v10334 = vsub.f32 1.0, %v10304
  %v10335 = vsub.f32 1.0, %v10306
  %v10336 = vsub.f32 1.0, %v10308
  %v10337 = vmul.f32 %v10333, %v10329
  %v10338 = vmul.f32 %v10334, %v10330
  %v10339 = vmul.f32 %v10335, %v10331
  %v10340 = vmul.f32 %v10336, %v10332
  %v10341 = vmul.f32 %v10302, %v8872
  %v10342 = vmul.f32 %v10304, %v8873
  %v10343 = vmul.f32 %v10306, %v8874
  %v10344 = vmul.f32 %v10308, %v8875
  %v10345 = vadd.f32 %v10337, %v10341
  %v10346 = vadd.f32 %v10338, %v10342
  %v10347 = vadd.f32 %v10339, %v10343
  %v10348 = vadd.f32 %v10340, %v10344
  %v10350 = vsel %vm35, %v10345, 0
  %v10353 = vsel %vm35, %v10346, 0
  %v10356 = vsel %vm35, %v10347, 0
  %v10359 = vsel %vm35, %v10348, 0
  %v10361 = vand.u32 %v19, 4294901760
  %10362 = vmatprep.subr.mxu0 %v10361
  %v10363 = vand.u32 %v18, 4294901760
  %10364 = vmatpush1.msra.mxu0 %v10363
  %v10365 = vand.u32 %v21, 4294901760
  %10366 = vmatprep.subr.mxu0 %v10365
  %v10367 = vand.u32 %v20, 4294901760
  %10368 = vmatpush1.msra.mxu0 %v10367
  %v10369 = vand.u32 %v23, 4294901760
  %10370 = vmatprep.subr.mxu0 %v10369
  %v10371 = vand.u32 %v22, 4294901760
  %10372 = vmatpush1.msra.mxu0 %v10371
  %v10373 = vand.u32 %v25, 4294901760
  %10374 = vmatprep.subr.mxu0 %v10373
  %v10375 = vand.u32 %v24, 4294901760
  %10376 = vmatpush1.msra.mxu0 %v10375
  %10377 = vmatprep.subr.mxu0 0.0
  %10378 = vmatpush1.msra.mxu0 0.0
  %10379 = vmatprep.subr.mxu0 0.0
  %10380 = vmatpush1.msra.mxu0 0.0
  %10381 = vmatprep.subr.mxu0 0.0
  %10382 = vmatpush1.msra.mxu0 0.0
  %10383 = vmatprep.subr.mxu0 0.0
  %10384 = vmatpush1.msra.mxu0 0.0
  %10385 = vmatprep.subr.mxu0 0.0
  %10386 = vmatpush1.msra.mxu0 0.0
  %10387 = vmatprep.subr.mxu0 0.0
  %10388 = vmatpush1.msra.mxu0 0.0
  %10389 = vmatprep.subr.mxu0 0.0
  %10390 = vmatpush1.msra.mxu0 0.0
  %10391 = vmatprep.subr.mxu0 0.0
  %10392 = vmatpush1.msra.mxu0 0.0
  %10393 = vmatprep.subr.mxu0 0.0
  %10394 = vmatpush1.msra.mxu0 0.0
  %10395 = vmatprep.subr.mxu0 0.0
  %10396 = vmatpush1.msra.mxu0 0.0
  %10397 = vmatprep.subr.mxu0 0.0
  %10398 = vmatpush1.msra.mxu0 0.0
  %10399 = vmatprep.subr.mxu0 0.0
  %10400 = vmatpush1.msra.mxu0 0.0
  %10401 = vmatprep.subr.mxu0 0.0
  %10402 = vmatpush1.msra.mxu0 0.0
  %10403 = vmatprep.subr.mxu0 0.0
  %10404 = vmatpush1.msra.mxu0 0.0
  %10405 = vmatprep.subr.mxu0 0.0
  %10406 = vmatpush1.msra.mxu0 0.0
  %10407 = vmatprep.subr.mxu0 0.0
  %10408 = vmatpush1.msra.mxu0 0.0
  %10409 = vmatprep.subr.mxu0 0.0
  %10410 = vmatpush1.msra.mxu0 0.0
  %10411 = vmatprep.subr.mxu0 0.0
  %10412 = vmatpush1.msra.mxu0 0.0
  %10413 = vmatprep.subr.mxu0 0.0
  %10414 = vmatpush1.msra.mxu0 0.0
  %10415 = vmatprep.subr.mxu0 0.0
  %10416 = vmatpush1.msra.mxu0 0.0
  %10417 = vmatprep.subr.mxu0 0.0
  %10418 = vmatpush1.msra.mxu0 0.0
  %10419 = vmatprep.subr.mxu0 0.0
  %10420 = vmatpush1.msra.mxu0 0.0
  %10421 = vmatprep.subr.mxu0 0.0
  %10422 = vmatpush1.msra.mxu0 0.0
  %10423 = vmatprep.subr.mxu0 0.0
  %10424 = vmatpush1.msra.mxu0 0.0
  %10425 = vmatprep.subr.mxu0 0.0
  %10426 = vmatpush1.msra.mxu0 0.0
  %10427 = vmatprep.subr.mxu0 0.0
  %10428 = vmatpush1.msra.mxu0 0.0
  %10429 = vmatprep.subr.mxu0 0.0
  %10430 = vmatpush1.msra.mxu0 0.0
  %10431 = vmatprep.subr.mxu0 0.0
  %10432 = vmatpush1.msra.mxu0 0.0
  %10433 = vmatprep.mubr.f32.mxu0 0.0
  %v10434 = vand.u32 %v10350, 4294901760
  %v10435 = vsub.f32 %v10350, %v10434
  %v10436 = vand.u32 %v10435, 4294901760
  %v10437 = vsub.f32 %v10435, %v10436
  %v10438 = vand.u32 %v10437, 4294901760
  %10439 = vmatmul.mubr.f32.gmra.mrb[0].mxu0 %v10438
  %v10440 = vpop.f32.mrb[0].mxu0
  %v10441 = vadd.f32 0.0, %v10440
  %v10442 = vpop.f32.mrb[0].mxu0
  %v10443 = vadd.f32 0.0, %v10442
  %10444 = vmatprep.mubr.f32.mxu0 0.0
  %v10445 = vand.u32 %v10353, 4294901760
  %v10446 = vsub.f32 %v10353, %v10445
  %v10447 = vand.u32 %v10446, 4294901760
  %v10448 = vsub.f32 %v10446, %v10447
  %v10449 = vand.u32 %v10448, 4294901760
  %10450 = vmatmul.mubr.f32.gmra.mrb[0].mxu0 %v10449
  %v10451 = vpop.f32.mrb[0].mxu0
  %v10452 = vadd.f32 0.0, %v10451
  %v10453 = vpop.f32.mrb[0].mxu0
  %v10454 = vadd.f32 0.0, %v10453
  %10455 = vmatprep.mubr.f32.mxu0 0.0
  %v10456 = vand.u32 %v10356, 4294901760
  %v10457 = vsub.f32 %v10356, %v10456
  %v10458 = vand.u32 %v10457, 4294901760
  %v10459 = vsub.f32 %v10457, %v10458
  %v10460 = vand.u32 %v10459, 4294901760
  %10461 = vmatmul.mubr.f32.gmra.mrb[0].mxu0 %v10460
  %v10462 = vpop.f32.mrb[0].mxu0
  %v10463 = vadd.f32 0.0, %v10462
  %v10464 = vpop.f32.mrb[0].mxu0
  %v10465 = vadd.f32 0.0, %v10464
  %10466 = vmatprep.mubr.f32.mxu0 0.0
  %v10467 = vand.u32 %v10359, 4294901760
  %v10468 = vsub.f32 %v10359, %v10467
  %v10469 = vand.u32 %v10468, 4294901760
  %v10470 = vsub.f32 %v10468, %v10469
  %v10471 = vand.u32 %v10470, 4294901760
  %10472 = vmatmul.mubr.f32.gmra.mrb[0].mxu0 %v10471
  %v10473 = vpop.f32.mrb[0].mxu0
  %v10474 = vadd.f32 0.0, %v10473
  %v10475 = vpop.f32.mrb[0].mxu0
  %v10476 = vadd.f32 0.0, %v10475
  %10477 = vdwg.mxu0
  %v10478 = vand.u32 %v19, 4294901760
  %v10479 = vsub.f32 %v19, %v10478
  %v10480 = vand.u32 %v10479, 4294901760
  %v10481 = vsub.f32 %v10479, %v10480
  %v10482 = vand.u32 %v10481, 4294901760
  %10483 = vmatprep.subr.mxu0 %v10482
  %v10484 = vand.u32 %v18, 4294901760
  %v10485 = vsub.f32 %v18, %v10484
  %v10486 = vand.u32 %v10485, 4294901760
  %v10487 = vsub.f32 %v10485, %v10486
  %v10488 = vand.u32 %v10487, 4294901760
  %10489 = vmatpush1.msra.mxu0 %v10488
  %v10490 = vand.u32 %v21, 4294901760
  %v10491 = vsub.f32 %v21, %v10490
  %v10492 = vand.u32 %v10491, 4294901760
  %v10493 = vsub.f32 %v10491, %v10492
  %v10494 = vand.u32 %v10493, 4294901760
  %10495 = vmatprep.subr.mxu0 %v10494
  %v10496 = vand.u32 %v20, 4294901760
  %v10497 = vsub.f32 %v20, %v10496
  %v10498 = vand.u32 %v10497, 4294901760
  %v10499 = vsub.f32 %v10497, %v10498
  %v10500 = vand.u32 %v10499, 4294901760
  %10501 = vmatpush1.msra.mxu0 %v10500
  %v10502 = vand.u32 %v23, 4294901760
  %v10503 = vsub.f32 %v23, %v10502
  %v10504 = vand.u32 %v10503, 4294901760
  %v10505 = vsub.f32 %v10503, %v10504
  %v10506 = vand.u32 %v10505, 4294901760
  %10507 = vmatprep.subr.mxu0 %v10506
  %v10508 = vand.u32 %v22, 4294901760
  %v10509 = vsub.f32 %v22, %v10508
  %v10510 = vand.u32 %v10509, 4294901760
  %v10511 = vsub.f32 %v10509, %v10510
  %v10512 = vand.u32 %v10511, 4294901760
  %10513 = vmatpush1.msra.mxu0 %v10512
  %v10514 = vand.u32 %v25, 4294901760
  %v10515 = vsub.f32 %v25, %v10514
  %v10516 = vand.u32 %v10515, 4294901760
  %v10517 = vsub.f32 %v10515, %v10516
  %v10518 = vand.u32 %v10517, 4294901760
  %10519 = vmatprep.subr.mxu0 %v10518
  %v10520 = vand.u32 %v24, 4294901760
  %v10521 = vsub.f32 %v24, %v10520
  %v10522 = vand.u32 %v10521, 4294901760
  %v10523 = vsub.f32 %v10521, %v10522
  %v10524 = vand.u32 %v10523, 4294901760
  %10525 = vmatpush1.msra.mxu0 %v10524
  %10526 = vmatprep.subr.mxu0 0.0
  %10527 = vmatpush1.msra.mxu0 0.0
  %10528 = vmatprep.subr.mxu0 0.0
  %10529 = vmatpush1.msra.mxu0 0.0
  %10530 = vmatprep.subr.mxu0 0.0
  %10531 = vmatpush1.msra.mxu0 0.0
  %10532 = vmatprep.subr.mxu0 0.0
  %10533 = vmatpush1.msra.mxu0 0.0
  %10534 = vmatprep.subr.mxu0 0.0
  %10535 = vmatpush1.msra.mxu0 0.0
  %10536 = vmatprep.subr.mxu0 0.0
  %10537 = vmatpush1.msra.mxu0 0.0
  %10538 = vmatprep.subr.mxu0 0.0
  %10539 = vmatpush1.msra.mxu0 0.0
  %10540 = vmatprep.subr.mxu0 0.0
  %10541 = vmatpush1.msra.mxu0 0.0
  %10542 = vmatprep.subr.mxu0 0.0
  %10543 = vmatpush1.msra.mxu0 0.0
  %10544 = vmatprep.subr.mxu0 0.0
  %10545 = vmatpush1.msra.mxu0 0.0
  %10546 = vmatprep.subr.mxu0 0.0
  %10547 = vmatpush1.msra.mxu0 0.0
  %10548 = vmatprep.subr.mxu0 0.0
  %10549 = vmatpush1.msra.mxu0 0.0
  %10550 = vmatprep.subr.mxu0 0.0
  %10551 = vmatpush1.msra.mxu0 0.0
  %10552 = vmatprep.subr.mxu0 0.0
  %10553 = vmatpush1.msra.mxu0 0.0
  %10554 = vmatprep.subr.mxu0 0.0
  %10555 = vmatpush1.msra.mxu0 0.0
  %10556 = vmatprep.subr.mxu0 0.0
  %10557 = vmatpush1.msra.mxu0 0.0
  %10558 = vmatprep.subr.mxu0 0.0
  %10559 = vmatpush1.msra.mxu0 0.0
  %10560 = vmatprep.subr.mxu0 0.0
  %10561 = vmatpush1.msra.mxu0 0.0
  %10562 = vmatprep.subr.mxu0 0.0
  %10563 = vmatpush1.msra.mxu0 0.0
  %10564 = vmatprep.subr.mxu0 0.0
  %10565 = vmatpush1.msra.mxu0 0.0
  %10566 = vmatprep.subr.mxu0 0.0
  %10567 = vmatpush1.msra.mxu0 0.0
  %10568 = vmatprep.subr.mxu0 0.0
  %10569 = vmatpush1.msra.mxu0 0.0
  %10570 = vmatprep.subr.mxu0 0.0
  %10571 = vmatpush1.msra.mxu0 0.0
  %10572 = vmatprep.subr.mxu0 0.0
  %10573 = vmatpush1.msra.mxu0 0.0
  %10574 = vmatprep.subr.mxu0 0.0
  %10575 = vmatpush1.msra.mxu0 0.0
  %10576 = vmatprep.subr.mxu0 0.0
  %10577 = vmatpush1.msra.mxu0 0.0
  %10578 = vmatprep.subr.mxu0 0.0
  %10579 = vmatpush1.msra.mxu0 0.0
  %10580 = vmatprep.subr.mxu0 0.0
  %10581 = vmatpush1.msra.mxu0 0.0
  %10582 = vmatprep.mubr.f32.mxu0 0.0
  %v10583 = vand.u32 %v10350, 4294901760
  %10584 = vmatmul.mubr.f32.gmra.mrb[0].mxu0 %v10583
  %v10585 = vpop.f32.mrb[0].mxu0
  %v10586 = vadd.f32 %v10441, %v10585
  %v10587 = vpop.f32.mrb[0].mxu0
  %v10588 = vadd.f32 %v10443, %v10587
  %10589 = vmatprep.mubr.f32.mxu0 0.0
  %v10590 = vand.u32 %v10353, 4294901760
  %10591 = vmatmul.mubr.f32.gmra.mrb[0].mxu0 %v10590
  %v10592 = vpop.f32.mrb[0].mxu0
  %v10593 = vadd.f32 %v10452, %v10592
  %v10594 = vpop.f32.mrb[0].mxu0
  %v10595 = vadd.f32 %v10454, %v10594
  %10596 = vmatprep.mubr.f32.mxu0 0.0
  %v10597 = vand.u32 %v10356, 4294901760
  %10598 = vmatmul.mubr.f32.gmra.mrb[0].mxu0 %v10597
  %v10599 = vpop.f32.mrb[0].mxu0
  %v10600 = vadd.f32 %v10463, %v10599
  %v10601 = vpop.f32.mrb[0].mxu0
  %v10602 = vadd.f32 %v10465, %v10601
  %10603 = vmatprep.mubr.f32.mxu0 0.0
  %v10604 = vand.u32 %v10359, 4294901760
  %10605 = vmatmul.mubr.f32.gmra.mrb[0].mxu0 %v10604
  %v10606 = vpop.f32.mrb[0].mxu0
  %v10607 = vadd.f32 %v10474, %v10606
  %v10608 = vpop.f32.mrb[0].mxu0
  %v10609 = vadd.f32 %v10476, %v10608
  %10610 = vdwg.mxu0
  %v10611 = vand.u32 %v19, 4294901760
  %v10612 = vsub.f32 %v19, %v10611
  %10613 = vmatprep.subr.mxu0 %v10612
  %v10614 = vand.u32 %v18, 4294901760
  %v10615 = vsub.f32 %v18, %v10614
  %10616 = vmatpush1.msra.mxu0 %v10615
  %v10617 = vand.u32 %v21, 4294901760
  %v10618 = vsub.f32 %v21, %v10617
  %10619 = vmatprep.subr.mxu0 %v10618
  %v10620 = vand.u32 %v20, 4294901760
  %v10621 = vsub.f32 %v20, %v10620
  %10622 = vmatpush1.msra.mxu0 %v10621
  %v10623 = vand.u32 %v23, 4294901760
  %v10624 = vsub.f32 %v23, %v10623
  %10625 = vmatprep.subr.mxu0 %v10624
  %v10626 = vand.u32 %v22, 4294901760
  %v10627 = vsub.f32 %v22, %v10626
  %10628 = vmatpush1.msra.mxu0 %v10627
  %v10629 = vand.u32 %v25, 4294901760
  %v10630 = vsub.f32 %v25, %v10629
  %10631 = vmatprep.subr.mxu0 %v10630
  %v10632 = vand.u32 %v24, 4294901760
  %v10633 = vsub.f32 %v24, %v10632
  %10634 = vmatpush1.msra.mxu0 %v10633
  %10635 = vmatprep.subr.mxu0 0.0
  %10636 = vmatpush1.msra.mxu0 0.0
  %10637 = vmatprep.subr.mxu0 0.0
  %10638 = vmatpush1.msra.mxu0 0.0
  %10639 = vmatprep.subr.mxu0 0.0
  %10640 = vmatpush1.msra.mxu0 0.0
  %10641 = vmatprep.subr.mxu0 0.0
  %10642 = vmatpush1.msra.mxu0 0.0
  %10643 = vmatprep.subr.mxu0 0.0
  %10644 = vmatpush1.msra.mxu0 0.0
  %10645 = vmatprep.subr.mxu0 0.0
  %10646 = vmatpush1.msra.mxu0 0.0
  %10647 = vmatprep.subr.mxu0 0.0
  %10648 = vmatpush1.msra.mxu0 0.0
  %10649 = vmatprep.subr.mxu0 0.0
  %10650 = vmatpush1.msra.mxu0 0.0
  %10651 = vmatprep.subr.mxu0 0.0
  %10652 = vmatpush1.msra.mxu0 0.0
  %10653 = vmatprep.subr.mxu0 0.0
  %10654 = vmatpush1.msra.mxu0 0.0
  %10655 = vmatprep.subr.mxu0 0.0
  %10656 = vmatpush1.msra.mxu0 0.0
  %10657 = vmatprep.subr.mxu0 0.0
  %10658 = vmatpush1.msra.mxu0 0.0
  %10659 = vmatprep.subr.mxu0 0.0
  %10660 = vmatpush1.msra.mxu0 0.0
  %10661 = vmatprep.subr.mxu0 0.0
  %10662 = vmatpush1.msra.mxu0 0.0
  %10663 = vmatprep.subr.mxu0 0.0
  %10664 = vmatpush1.msra.mxu0 0.0
  %10665 = vmatprep.subr.mxu0 0.0
  %10666 = vmatpush1.msra.mxu0 0.0
  %10667 = vmatprep.subr.mxu0 0.0
  %10668 = vmatpush1.msra.mxu0 0.0
  %10669 = vmatprep.subr.mxu0 0.0
  %10670 = vmatpush1.msra.mxu0 0.0
  %10671 = vmatprep.subr.mxu0 0.0
  %10672 = vmatpush1.msra.mxu0 0.0
  %10673 = vmatprep.subr.mxu0 0.0
  %10674 = vmatpush1.msra.mxu0 0.0
  %10675 = vmatprep.subr.mxu0 0.0
  %10676 = vmatpush1.msra.mxu0 0.0
  %10677 = vmatprep.subr.mxu0 0.0
  %10678 = vmatpush1.msra.mxu0 0.0
  %10679 = vmatprep.subr.mxu0 0.0
  %10680 = vmatpush1.msra.mxu0 0.0
  %10681 = vmatprep.subr.mxu0 0.0
  %10682 = vmatpush1.msra.mxu0 0.0
  %10683 = vmatprep.subr.mxu0 0.0
  %10684 = vmatpush1.msra.mxu0 0.0
  %10685 = vmatprep.subr.mxu0 0.0
  %10686 = vmatpush1.msra.mxu0 0.0
  %10687 = vmatprep.subr.mxu0 0.0
  %10688 = vmatpush1.msra.mxu0 0.0
  %10689 = vmatprep.subr.mxu0 0.0
  %10690 = vmatpush1.msra.mxu0 0.0
  %10691 = vmatprep.mubr.f32.mxu0 0.0
  %v10692 = vand.u32 %v10350, 4294901760
  %v10693 = vsub.f32 %v10350, %v10692
  %10694 = vmatmul.mubr.f32.gmra.mrb[0].mxu0 %v10693
  %v10695 = vpop.f32.mrb[0].mxu0
  %v10696 = vadd.f32 %v10586, %v10695
  %v10697 = vpop.f32.mrb[0].mxu0
  %v10698 = vadd.f32 %v10588, %v10697
  %10699 = vmatprep.mubr.f32.mxu0 0.0
  %v10700 = vand.u32 %v10353, 4294901760
  %v10701 = vsub.f32 %v10353, %v10700
  %10702 = vmatmul.mubr.f32.gmra.mrb[0].mxu0 %v10701
  %v10703 = vpop.f32.mrb[0].mxu0
  %v10704 = vadd.f32 %v10593, %v10703
  %v10705 = vpop.f32.mrb[0].mxu0
  %v10706 = vadd.f32 %v10595, %v10705
  %10707 = vmatprep.mubr.f32.mxu0 0.0
  %v10708 = vand.u32 %v10356, 4294901760
  %v10709 = vsub.f32 %v10356, %v10708
  %10710 = vmatmul.mubr.f32.gmra.mrb[0].mxu0 %v10709
  %v10711 = vpop.f32.mrb[0].mxu0
  %v10712 = vadd.f32 %v10600, %v10711
  %v10713 = vpop.f32.mrb[0].mxu0
  %v10714 = vadd.f32 %v10602, %v10713
  %10715 = vmatprep.mubr.f32.mxu0 0.0
  %v10716 = vand.u32 %v10359, 4294901760
  %v10717 = vsub.f32 %v10359, %v10716
  %10718 = vmatmul.mubr.f32.gmra.mrb[0].mxu0 %v10717
  %v10719 = vpop.f32.mrb[0].mxu0
  %v10720 = vadd.f32 %v10607, %v10719
  %v10721 = vpop.f32.mrb[0].mxu0
  %v10722 = vadd.f32 %v10609, %v10721
  %10723 = vdwg.mxu0
  %v10724 = vand.u32 %v19, 4294901760
  %10725 = vmatprep.subr.mxu0 %v10724
  %v10726 = vand.u32 %v18, 4294901760
  %10727 = vmatpush1.msra.mxu0 %v10726
  %v10728 = vand.u32 %v21, 4294901760
  %10729 = vmatprep.subr.mxu0 %v10728
  %v10730 = vand.u32 %v20, 4294901760
  %10731 = vmatpush1.msra.mxu0 %v10730
  %v10732 = vand.u32 %v23, 4294901760
  %10733 = vmatprep.subr.mxu0 %v10732
  %v10734 = vand.u32 %v22, 4294901760
  %10735 = vmatpush1.msra.mxu0 %v10734
  %v10736 = vand.u32 %v25, 4294901760
  %10737 = vmatprep.subr.mxu0 %v10736
  %v10738 = vand.u32 %v24, 4294901760
  %10739 = vmatpush1.msra.mxu0 %v10738
  %10740 = vmatprep.subr.mxu0 0.0
  %10741 = vmatpush1.msra.mxu0 0.0
  %10742 = vmatprep.subr.mxu0 0.0
  %10743 = vmatpush1.msra.mxu0 0.0
  %10744 = vmatprep.subr.mxu0 0.0
  %10745 = vmatpush1.msra.mxu0 0.0
  %10746 = vmatprep.subr.mxu0 0.0
  %10747 = vmatpush1.msra.mxu0 0.0
  %10748 = vmatprep.subr.mxu0 0.0
  %10749 = vmatpush1.msra.mxu0 0.0
  %10750 = vmatprep.subr.mxu0 0.0
  %10751 = vmatpush1.msra.mxu0 0.0
  %10752 = vmatprep.subr.mxu0 0.0
  %10753 = vmatpush1.msra.mxu0 0.0
  %10754 = vmatprep.subr.mxu0 0.0
  %10755 = vmatpush1.msra.mxu0 0.0
  %10756 = vmatprep.subr.mxu0 0.0
  %10757 = vmatpush1.msra.mxu0 0.0
  %10758 = vmatprep.subr.mxu0 0.0
  %10759 = vmatpush1.msra.mxu0 0.0
  %10760 = vmatprep.subr.mxu0 0.0
  %10761 = vmatpush1.msra.mxu0 0.0
  %10762 = vmatprep.subr.mxu0 0.0
  %10763 = vmatpush1.msra.mxu0 0.0
  %10764 = vmatprep.subr.mxu0 0.0
  %10765 = vmatpush1.msra.mxu0 0.0
  %10766 = vmatprep.subr.mxu0 0.0
  %10767 = vmatpush1.msra.mxu0 0.0
  %10768 = vmatprep.subr.mxu0 0.0
  %10769 = vmatpush1.msra.mxu0 0.0
  %10770 = vmatprep.subr.mxu0 0.0
  %10771 = vmatpush1.msra.mxu0 0.0
  %10772 = vmatprep.subr.mxu0 0.0
  %10773 = vmatpush1.msra.mxu0 0.0
  %10774 = vmatprep.subr.mxu0 0.0
  %10775 = vmatpush1.msra.mxu0 0.0
  %10776 = vmatprep.subr.mxu0 0.0
  %10777 = vmatpush1.msra.mxu0 0.0
  %10778 = vmatprep.subr.mxu0 0.0
  %10779 = vmatpush1.msra.mxu0 0.0
  %10780 = vmatprep.subr.mxu0 0.0
  %10781 = vmatpush1.msra.mxu0 0.0
  %10782 = vmatprep.subr.mxu0 0.0
  %10783 = vmatpush1.msra.mxu0 0.0
  %10784 = vmatprep.subr.mxu0 0.0
  %10785 = vmatpush1.msra.mxu0 0.0
  %10786 = vmatprep.subr.mxu0 0.0
  %10787 = vmatpush1.msra.mxu0 0.0
  %10788 = vmatprep.subr.mxu0 0.0
  %10789 = vmatpush1.msra.mxu0 0.0
  %10790 = vmatprep.subr.mxu0 0.0
  %10791 = vmatpush1.msra.mxu0 0.0
  %10792 = vmatprep.subr.mxu0 0.0
  %10793 = vmatpush1.msra.mxu0 0.0
  %10794 = vmatprep.subr.mxu0 0.0
  %10795 = vmatpush1.msra.mxu0 0.0
  %10796 = vmatprep.mubr.f32.mxu0 0.0
  %v10797 = vand.u32 %v10350, 4294901760
  %v10798 = vsub.f32 %v10350, %v10797
  %v10799 = vand.u32 %v10798, 4294901760
  %10800 = vmatmul.mubr.f32.gmra.mrb[0].mxu0 %v10799
  %v10801 = vpop.f32.mrb[0].mxu0
  %v10802 = vadd.f32 %v10696, %v10801
  %v10803 = vpop.f32.mrb[0].mxu0
  %v10804 = vadd.f32 %v10698, %v10803
  %10805 = vmatprep.mubr.f32.mxu0 0.0
  %v10806 = vand.u32 %v10353, 4294901760
  %v10807 = vsub.f32 %v10353, %v10806
  %v10808 = vand.u32 %v10807, 4294901760
  %10809 = vmatmul.mubr.f32.gmra.mrb[0].mxu0 %v10808
  %v10810 = vpop.f32.mrb[0].mxu0
  %v10811 = vadd.f32 %v10704, %v10810
  %v10812 = vpop.f32.mrb[0].mxu0
  %v10813 = vadd.f32 %v10706, %v10812
  %10814 = vmatprep.mubr.f32.mxu0 0.0
  %v10815 = vand.u32 %v10356, 4294901760
  %v10816 = vsub.f32 %v10356, %v10815
  %v10817 = vand.u32 %v10816, 4294901760
  %10818 = vmatmul.mubr.f32.gmra.mrb[0].mxu0 %v10817
  %v10819 = vpop.f32.mrb[0].mxu0
  %v10820 = vadd.f32 %v10712, %v10819
  %v10821 = vpop.f32.mrb[0].mxu0
  %v10822 = vadd.f32 %v10714, %v10821
  %10823 = vmatprep.mubr.f32.mxu0 0.0
  %v10824 = vand.u32 %v10359, 4294901760
  %v10825 = vsub.f32 %v10359, %v10824
  %v10826 = vand.u32 %v10825, 4294901760
  %10827 = vmatmul.mubr.f32.gmra.mrb[0].mxu0 %v10826
  %v10828 = vpop.f32.mrb[0].mxu0
  %v10829 = vadd.f32 %v10720, %v10828
  %v10830 = vpop.f32.mrb[0].mxu0
  %v10831 = vadd.f32 %v10722, %v10830
  %10832 = vdwg.mxu0
  %v10833 = vand.u32 %v19, 4294901760
  %v10834 = vsub.f32 %v19, %v10833
  %v10835 = vand.u32 %v10834, 4294901760
  %10836 = vmatprep.subr.mxu0 %v10835
  %v10837 = vand.u32 %v18, 4294901760
  %v10838 = vsub.f32 %v18, %v10837
  %v10839 = vand.u32 %v10838, 4294901760
  %10840 = vmatpush1.msra.mxu0 %v10839
  %v10841 = vand.u32 %v21, 4294901760
  %v10842 = vsub.f32 %v21, %v10841
  %v10843 = vand.u32 %v10842, 4294901760
  %10844 = vmatprep.subr.mxu0 %v10843
  %v10845 = vand.u32 %v20, 4294901760
  %v10846 = vsub.f32 %v20, %v10845
  %v10847 = vand.u32 %v10846, 4294901760
  %10848 = vmatpush1.msra.mxu0 %v10847
  %v10849 = vand.u32 %v23, 4294901760
  %v10850 = vsub.f32 %v23, %v10849
  %v10851 = vand.u32 %v10850, 4294901760
  %10852 = vmatprep.subr.mxu0 %v10851
  %v10853 = vand.u32 %v22, 4294901760
  %v10854 = vsub.f32 %v22, %v10853
  %v10855 = vand.u32 %v10854, 4294901760
  %10856 = vmatpush1.msra.mxu0 %v10855
  %v10857 = vand.u32 %v25, 4294901760
  %v10858 = vsub.f32 %v25, %v10857
  %v10859 = vand.u32 %v10858, 4294901760
  %10860 = vmatprep.subr.mxu0 %v10859
  %v10861 = vand.u32 %v24, 4294901760
  %v10862 = vsub.f32 %v24, %v10861
  %v10863 = vand.u32 %v10862, 4294901760
  %10864 = vmatpush1.msra.mxu0 %v10863
  %10865 = vmatprep.subr.mxu0 0.0
  %10866 = vmatpush1.msra.mxu0 0.0
  %10867 = vmatprep.subr.mxu0 0.0
  %10868 = vmatpush1.msra.mxu0 0.0
  %10869 = vmatprep.subr.mxu0 0.0
  %10870 = vmatpush1.msra.mxu0 0.0
  %10871 = vmatprep.subr.mxu0 0.0
  %10872 = vmatpush1.msra.mxu0 0.0
  %10873 = vmatprep.subr.mxu0 0.0
  %10874 = vmatpush1.msra.mxu0 0.0
  %10875 = vmatprep.subr.mxu0 0.0
  %10876 = vmatpush1.msra.mxu0 0.0
  %10877 = vmatprep.subr.mxu0 0.0
  %10878 = vmatpush1.msra.mxu0 0.0
  %10879 = vmatprep.subr.mxu0 0.0
  %10880 = vmatpush1.msra.mxu0 0.0
  %10881 = vmatprep.subr.mxu0 0.0
  %10882 = vmatpush1.msra.mxu0 0.0
  %10883 = vmatprep.subr.mxu0 0.0
  %10884 = vmatpush1.msra.mxu0 0.0
  %10885 = vmatprep.subr.mxu0 0.0
  %10886 = vmatpush1.msra.mxu0 0.0
  %10887 = vmatprep.subr.mxu0 0.0
  %10888 = vmatpush1.msra.mxu0 0.0
  %10889 = vmatprep.subr.mxu0 0.0
  %10890 = vmatpush1.msra.mxu0 0.0
  %10891 = vmatprep.subr.mxu0 0.0
  %10892 = vmatpush1.msra.mxu0 0.0
  %10893 = vmatprep.subr.mxu0 0.0
  %10894 = vmatpush1.msra.mxu0 0.0
  %10895 = vmatprep.subr.mxu0 0.0
  %10896 = vmatpush1.msra.mxu0 0.0
  %10897 = vmatprep.subr.mxu0 0.0
  %10898 = vmatpush1.msra.mxu0 0.0
  %10899 = vmatprep.subr.mxu0 0.0
  %10900 = vmatpush1.msra.mxu0 0.0
  %10901 = vmatprep.subr.mxu0 0.0
  %10902 = vmatpush1.msra.mxu0 0.0
  %10903 = vmatprep.subr.mxu0 0.0
  %10904 = vmatpush1.msra.mxu0 0.0
  %10905 = vmatprep.subr.mxu0 0.0
  %10906 = vmatpush1.msra.mxu0 0.0
  %10907 = vmatprep.subr.mxu0 0.0
  %10908 = vmatpush1.msra.mxu0 0.0
  %10909 = vmatprep.subr.mxu0 0.0
  %10910 = vmatpush1.msra.mxu0 0.0
  %10911 = vmatprep.subr.mxu0 0.0
  %10912 = vmatpush1.msra.mxu0 0.0
  %10913 = vmatprep.subr.mxu0 0.0
  %10914 = vmatpush1.msra.mxu0 0.0
  %10915 = vmatprep.subr.mxu0 0.0
  %10916 = vmatpush1.msra.mxu0 0.0
  %10917 = vmatprep.subr.mxu0 0.0
  %10918 = vmatpush1.msra.mxu0 0.0
  %10919 = vmatprep.subr.mxu0 0.0
  %10920 = vmatpush1.msra.mxu0 0.0
  %10921 = vmatprep.mubr.f32.mxu0 0.0
  %v10922 = vand.u32 %v10350, 4294901760
  %10923 = vmatmul.mubr.f32.gmra.mrb[0].mxu0 %v10922
  %v10924 = vpop.f32.mrb[0].mxu0
  %v10925 = vadd.f32 %v10802, %v10924
  %v10926 = vpop.f32.mrb[0].mxu0
  %v10927 = vadd.f32 %v10804, %v10926
  %10928 = vmatprep.mubr.f32.mxu0 0.0
  %v10929 = vand.u32 %v10353, 4294901760
  %10930 = vmatmul.mubr.f32.gmra.mrb[0].mxu0 %v10929
  %v10931 = vpop.f32.mrb[0].mxu0
  %v10932 = vadd.f32 %v10811, %v10931
  %v10933 = vpop.f32.mrb[0].mxu0
  %v10934 = vadd.f32 %v10813, %v10933
  %10935 = vmatprep.mubr.f32.mxu0 0.0
  %v10936 = vand.u32 %v10356, 4294901760
  %10937 = vmatmul.mubr.f32.gmra.mrb[0].mxu0 %v10936
  %v10938 = vpop.f32.mrb[0].mxu0
  %v10939 = vadd.f32 %v10820, %v10938
  %v10940 = vpop.f32.mrb[0].mxu0
  %v10941 = vadd.f32 %v10822, %v10940
  %10942 = vmatprep.mubr.f32.mxu0 0.0
  %v10943 = vand.u32 %v10359, 4294901760
  %10944 = vmatmul.mubr.f32.gmra.mrb[0].mxu0 %v10943
  %v10945 = vpop.f32.mrb[0].mxu0
  %v10946 = vadd.f32 %v10829, %v10945
  %v10947 = vpop.f32.mrb[0].mxu0
  %v10948 = vadd.f32 %v10831, %v10947
  %10949 = vdwg.mxu0
  %v10950 = vand.u32 %v19, 4294901760
  %10951 = vmatprep.subr.mxu0 %v10950
  %v10952 = vand.u32 %v18, 4294901760
  %10953 = vmatpush1.msra.mxu0 %v10952
  %v10954 = vand.u32 %v21, 4294901760
  %10955 = vmatprep.subr.mxu0 %v10954
  %v10956 = vand.u32 %v20, 4294901760
  %10957 = vmatpush1.msra.mxu0 %v10956
  %v10958 = vand.u32 %v23, 4294901760
  %10959 = vmatprep.subr.mxu0 %v10958
  %v10960 = vand.u32 %v22, 4294901760
  %10961 = vmatpush1.msra.mxu0 %v10960
  %v10962 = vand.u32 %v25, 4294901760
  %10963 = vmatprep.subr.mxu0 %v10962
  %v10964 = vand.u32 %v24, 4294901760
  %10965 = vmatpush1.msra.mxu0 %v10964
  %10966 = vmatprep.subr.mxu0 0.0
  %10967 = vmatpush1.msra.mxu0 0.0
  %10968 = vmatprep.subr.mxu0 0.0
  %10969 = vmatpush1.msra.mxu0 0.0
  %10970 = vmatprep.subr.mxu0 0.0
  %10971 = vmatpush1.msra.mxu0 0.0
  %10972 = vmatprep.subr.mxu0 0.0
  %10973 = vmatpush1.msra.mxu0 0.0
  %10974 = vmatprep.subr.mxu0 0.0
  %10975 = vmatpush1.msra.mxu0 0.0
  %10976 = vmatprep.subr.mxu0 0.0
  %10977 = vmatpush1.msra.mxu0 0.0
  %10978 = vmatprep.subr.mxu0 0.0
  %10979 = vmatpush1.msra.mxu0 0.0
  %10980 = vmatprep.subr.mxu0 0.0
  %10981 = vmatpush1.msra.mxu0 0.0
  %10982 = vmatprep.subr.mxu0 0.0
  %10983 = vmatpush1.msra.mxu0 0.0
  %10984 = vmatprep.subr.mxu0 0.0
  %10985 = vmatpush1.msra.mxu0 0.0
  %10986 = vmatprep.subr.mxu0 0.0
  %10987 = vmatpush1.msra.mxu0 0.0
  %10988 = vmatprep.subr.mxu0 0.0
  %10989 = vmatpush1.msra.mxu0 0.0
  %10990 = vmatprep.subr.mxu0 0.0
  %10991 = vmatpush1.msra.mxu0 0.0
  %10992 = vmatprep.subr.mxu0 0.0
  %10993 = vmatpush1.msra.mxu0 0.0
  %10994 = vmatprep.subr.mxu0 0.0
  %10995 = vmatpush1.msra.mxu0 0.0
  %10996 = vmatprep.subr.mxu0 0.0
  %10997 = vmatpush1.msra.mxu0 0.0
  %10998 = vmatprep.subr.mxu0 0.0
  %10999 = vmatpush1.msra.mxu0 0.0
  %11000 = vmatprep.subr.mxu0 0.0
  %11001 = vmatpush1.msra.mxu0 0.0
  %11002 = vmatprep.subr.mxu0 0.0
  %11003 = vmatpush1.msra.mxu0 0.0
  %11004 = vmatprep.subr.mxu0 0.0
  %11005 = vmatpush1.msra.mxu0 0.0
  %11006 = vmatprep.subr.mxu0 0.0
  %11007 = vmatpush1.msra.mxu0 0.0
  %11008 = vmatprep.subr.mxu0 0.0
  %11009 = vmatpush1.msra.mxu0 0.0
  %11010 = vmatprep.subr.mxu0 0.0
  %11011 = vmatpush1.msra.mxu0 0.0
  %11012 = vmatprep.subr.mxu0 0.0
  %11013 = vmatpush1.msra.mxu0 0.0
  %11014 = vmatprep.subr.mxu0 0.0
  %11015 = vmatpush1.msra.mxu0 0.0
  %11016 = vmatprep.subr.mxu0 0.0
  %11017 = vmatpush1.msra.mxu0 0.0
  %11018 = vmatprep.subr.mxu0 0.0
  %11019 = vmatpush1.msra.mxu0 0.0
  %11020 = vmatprep.subr.mxu0 0.0
  %11021 = vmatpush1.msra.mxu0 0.0
  %11022 = vmatprep.mubr.f32.mxu0 0.0
  %v11023 = vand.u32 %v10350, 4294901760
  %11024 = vmatmul.mubr.f32.gmra.mrb[0].mxu0 %v11023
  %v11025 = vpop.f32.mrb[0].mxu0
  %v11026 = vadd.f32 %v10925, %v11025
  %v11027 = vpop.f32.mrb[0].mxu0
  %v11028 = vadd.f32 %v10927, %v11027
  %11029 = vmatprep.mubr.f32.mxu0 0.0
  %v11030 = vand.u32 %v10353, 4294901760
  %11031 = vmatmul.mubr.f32.gmra.mrb[0].mxu0 %v11030
  %v11032 = vpop.f32.mrb[0].mxu0
  %v11033 = vadd.f32 %v10932, %v11032
  %v11034 = vpop.f32.mrb[0].mxu0
  %v11035 = vadd.f32 %v10934, %v11034
  %11036 = vmatprep.mubr.f32.mxu0 0.0
  %v11037 = vand.u32 %v10356, 4294901760
  %11038 = vmatmul.mubr.f32.gmra.mrb[0].mxu0 %v11037
  %v11039 = vpop.f32.mrb[0].mxu0
  %v11040 = vadd.f32 %v10939, %v11039
  %v11041 = vpop.f32.mrb[0].mxu0
  %v11042 = vadd.f32 %v10941, %v11041
  %11043 = vmatprep.mubr.f32.mxu0 0.0
  %v11044 = vand.u32 %v10359, 4294901760
  %11045 = vmatmul.mubr.f32.gmra.mrb[0].mxu0 %v11044
  %v11046 = vpop.f32.mrb[0].mxu0
  %v11047 = vadd.f32 %v10946, %v11046
  %v11048 = vpop.f32.mrb[0].mxu0
  %v11049 = vadd.f32 %v10948, %v11048
  %11050 = vdwg.mxu0
  %v11051 = vsel %vm31, %v11026, %v11028
  %v11052 = vsel %vm32, %v11033, %v11035
  %v11053 = vsel %vm33, %v11040, %v11042
  %v11054 = vsel %vm34, %v11047, %v11049
  %s11055 = scalar_lea.vmem %s0, 224
  %v11056 = vld [vmem:[%s11055] sm:$0xff]
  %v11057 = vld [vmem:[%s11055 + $0x8] sm:$0xff]
  %v11058 = vld [vmem:[%s11055 + $0x10] sm:$0xff]
  %v11059 = vld [vmem:[%s11055 + $0x18] sm:$0xff]
  %v11060 = vadd.f32 %v11051, %v11056
  %v11061 = vadd.f32 %v11052, %v11057
  %v11062 = vadd.f32 %v11053, %v11058
  %v11063 = vadd.f32 %v11054, %v11059
  %11068 = vrot.lane.b32.xlu0 %v11051, 32
  %v11069 = vpop.permute.xlu0 %11068
  %11070 = vrot.lane.b32.xlu0 %v11052, 32
  %v11071 = vpop.permute.xlu0 %11070
  %11072 = vrot.lane.b32.xlu0 %v11053, 32
  %v11073 = vpop.permute.xlu0 %11072
  %11074 = vrot.lane.b32.xlu0 %v11054, 32
  %v11075 = vpop.permute.xlu0 %11074
  %11084 = vrot.lane.b32.xlu0 %v11056, 32
  %v11085 = vpop.permute.xlu0 %11084
  %11086 = vrot.lane.b32.xlu0 %v11057, 32
  %v11087 = vpop.permute.xlu0 %11086
  %11088 = vrot.lane.b32.xlu0 %v11058, 32
  %v11089 = vpop.permute.xlu0 %11088
  %11090 = vrot.lane.b32.xlu0 %v11059, 32
  %v11091 = vpop.permute.xlu0 %11090
  %11096 = vmatprep.subr.mxu0 0.0
  %v11097 = vand.u32 %v11069, 4294901760
  %11098 = vmatpush1.msra.mxu0 %v11097
  %11099 = vmatprep.subr.mxu0 0.0
  %v11100 = vand.u32 %v11071, 4294901760
  %11101 = vmatpush1.msra.mxu0 %v11100
  %11102 = vmatprep.subr.mxu0 0.0
  %v11103 = vand.u32 %v11073, 4294901760
  %11104 = vmatpush1.msra.mxu0 %v11103
  %11105 = vmatprep.subr.mxu0 0.0
  %v11106 = vand.u32 %v11075, 4294901760
  %11107 = vmatpush1.msra.mxu0 %v11106
  %11108 = vmatprep.subr.mxu0 0.0
  %11109 = vmatpush1.msra.mxu0 0.0
  %11110 = vmatprep.subr.mxu0 0.0
  %11111 = vmatpush1.msra.mxu0 0.0
  %11112 = vmatprep.subr.mxu0 0.0
  %11113 = vmatpush1.msra.mxu0 0.0
  %11114 = vmatprep.subr.mxu0 0.0
  %11115 = vmatpush1.msra.mxu0 0.0
  %11116 = vmatprep.subr.mxu0 0.0
  %11117 = vmatpush1.msra.mxu0 0.0
  %11118 = vmatprep.subr.mxu0 0.0
  %11119 = vmatpush1.msra.mxu0 0.0
  %11120 = vmatprep.subr.mxu0 0.0
  %11121 = vmatpush1.msra.mxu0 0.0
  %11122 = vmatprep.subr.mxu0 0.0
  %11123 = vmatpush1.msra.mxu0 0.0
  %11124 = vmatprep.subr.mxu0 0.0
  %11125 = vmatpush1.msra.mxu0 0.0
  %11126 = vmatprep.subr.mxu0 0.0
  %11127 = vmatpush1.msra.mxu0 0.0
  %11128 = vmatprep.subr.mxu0 0.0
  %11129 = vmatpush1.msra.mxu0 0.0
  %11130 = vmatprep.subr.mxu0 0.0
  %11131 = vmatpush1.msra.mxu0 0.0
  %11132 = vmatprep.subr.mxu0 0.0
  %11133 = vmatpush1.msra.mxu0 0.0
  %11134 = vmatprep.subr.mxu0 0.0
  %11135 = vmatpush1.msra.mxu0 0.0
  %11136 = vmatprep.subr.mxu0 0.0
  %11137 = vmatpush1.msra.mxu0 0.0
  %11138 = vmatprep.subr.mxu0 0.0
  %11139 = vmatpush1.msra.mxu0 0.0
  %11140 = vmatprep.subr.mxu0 0.0
  %11141 = vmatpush1.msra.mxu0 0.0
  %11142 = vmatprep.subr.mxu0 0.0
  %11143 = vmatpush1.msra.mxu0 0.0
  %11144 = vmatprep.subr.mxu0 0.0
  %11145 = vmatpush1.msra.mxu0 0.0
  %11146 = vmatprep.subr.mxu0 0.0
  %11147 = vmatpush1.msra.mxu0 0.0
  %11148 = vmatprep.subr.mxu0 0.0
  %11149 = vmatpush1.msra.mxu0 0.0
  %11150 = vmatprep.subr.mxu0 0.0
  %11151 = vmatpush1.msra.mxu0 0.0
  %11152 = vmatprep.subr.mxu0 0.0
  %11153 = vmatpush1.msra.mxu0 0.0
  %11154 = vmatprep.subr.mxu0 0.0
  %11155 = vmatpush1.msra.mxu0 0.0
  %11156 = vmatprep.subr.mxu0 0.0
  %11157 = vmatpush1.msra.mxu0 0.0
  %11158 = vmatprep.subr.mxu0 0.0
  %11159 = vmatpush1.msra.mxu0 0.0
  %11160 = vmatprep.subr.mxu0 0.0
  %11161 = vmatpush1.msra.mxu0 0.0
  %11162 = vmatprep.subr.mxu0 0.0
  %11163 = vmatpush1.msra.mxu0 0.0
  %11164 = vmatprep.mubr.f32.mxu0 0.0
  %v11165 = vand.u32 %v774, 4294901760
  %v11166 = vsub.f32 %v774, %v11165
  %v11167 = vand.u32 %v11166, 4294901760
  %v11168 = vsub.f32 %v11166, %v11167
  %v11169 = vand.u32 %v11168, 4294901760
  %11170 = vmatmul.mubr.f32.gmra.mrb[0].mxu0 %v11169
  %v11171 = vpop.f32.mrb[0].mxu0
  %v11172 = vadd.f32 %v11085, %v11171
  %v11173 = vpop.f32.mrb[0].mxu0
  %11174 = vmatprep.mubr.f32.mxu0 0.0
  %v11175 = vand.u32 %v777, 4294901760
  %v11176 = vsub.f32 %v777, %v11175
  %v11177 = vand.u32 %v11176, 4294901760
  %v11178 = vsub.f32 %v11176, %v11177
  %v11179 = vand.u32 %v11178, 4294901760
  %11180 = vmatmul.mubr.f32.gmra.mrb[0].mxu0 %v11179
  %v11181 = vpop.f32.mrb[0].mxu0
  %v11182 = vadd.f32 %v11087, %v11181
  %v11183 = vpop.f32.mrb[0].mxu0
  %11184 = vmatprep.mubr.f32.mxu0 0.0
  %v11185 = vand.u32 %v780, 4294901760
  %v11186 = vsub.f32 %v780, %v11185
  %v11187 = vand.u32 %v11186, 4294901760
  %v11188 = vsub.f32 %v11186, %v11187
  %v11189 = vand.u32 %v11188, 4294901760
  %11190 = vmatmul.mubr.f32.gmra.mrb[0].mxu0 %v11189
  %v11191 = vpop.f32.mrb[0].mxu0
  %v11192 = vadd.f32 %v11089, %v11191
  %v11193 = vpop.f32.mrb[0].mxu0
  %11194 = vmatprep.mubr.f32.mxu0 0.0
  %v11195 = vand.u32 %v783, 4294901760
  %v11196 = vsub.f32 %v783, %v11195
  %v11197 = vand.u32 %v11196, 4294901760
  %v11198 = vsub.f32 %v11196, %v11197
  %v11199 = vand.u32 %v11198, 4294901760
  %11200 = vmatmul.mubr.f32.gmra.mrb[0].mxu0 %v11199
  %v11201 = vpop.f32.mrb[0].mxu0
  %v11202 = vadd.f32 %v11091, %v11201
  %v11203 = vpop.f32.mrb[0].mxu0
  %11204 = vdwg.mxu0
  %11205 = vmatprep.subr.mxu0 0.0
  %v11206 = vand.u32 %v11069, 4294901760
  %v11207 = vsub.f32 %v11069, %v11206
  %v11208 = vand.u32 %v11207, 4294901760
  %v11209 = vsub.f32 %v11207, %v11208
  %v11210 = vand.u32 %v11209, 4294901760
  %11211 = vmatpush1.msra.mxu0 %v11210
  %11212 = vmatprep.subr.mxu0 0.0
  %v11213 = vand.u32 %v11071, 4294901760
  %v11214 = vsub.f32 %v11071, %v11213
  %v11215 = vand.u32 %v11214, 4294901760
  %v11216 = vsub.f32 %v11214, %v11215
  %v11217 = vand.u32 %v11216, 4294901760
  %11218 = vmatpush1.msra.mxu0 %v11217
  %11219 = vmatprep.subr.mxu0 0.0
  %v11220 = vand.u32 %v11073, 4294901760
  %v11221 = vsub.f32 %v11073, %v11220
  %v11222 = vand.u32 %v11221, 4294901760
  %v11223 = vsub.f32 %v11221, %v11222
  %v11224 = vand.u32 %v11223, 4294901760
  %11225 = vmatpush1.msra.mxu0 %v11224
  %11226 = vmatprep.subr.mxu0 0.0
  %v11227 = vand.u32 %v11075, 4294901760
  %v11228 = vsub.f32 %v11075, %v11227
  %v11229 = vand.u32 %v11228, 4294901760
  %v11230 = vsub.f32 %v11228, %v11229
  %v11231 = vand.u32 %v11230, 4294901760
  %11232 = vmatpush1.msra.mxu0 %v11231
  %11233 = vmatprep.subr.mxu0 0.0
  %11234 = vmatpush1.msra.mxu0 0.0
  %11235 = vmatprep.subr.mxu0 0.0
  %11236 = vmatpush1.msra.mxu0 0.0
  %11237 = vmatprep.subr.mxu0 0.0
  %11238 = vmatpush1.msra.mxu0 0.0
  %11239 = vmatprep.subr.mxu0 0.0
  %11240 = vmatpush1.msra.mxu0 0.0
  %11241 = vmatprep.subr.mxu0 0.0
  %11242 = vmatpush1.msra.mxu0 0.0
  %11243 = vmatprep.subr.mxu0 0.0
  %11244 = vmatpush1.msra.mxu0 0.0
  %11245 = vmatprep.subr.mxu0 0.0
  %11246 = vmatpush1.msra.mxu0 0.0
  %11247 = vmatprep.subr.mxu0 0.0
  %11248 = vmatpush1.msra.mxu0 0.0
  %11249 = vmatprep.subr.mxu0 0.0
  %11250 = vmatpush1.msra.mxu0 0.0
  %11251 = vmatprep.subr.mxu0 0.0
  %11252 = vmatpush1.msra.mxu0 0.0
  %11253 = vmatprep.subr.mxu0 0.0
  %11254 = vmatpush1.msra.mxu0 0.0
  %11255 = vmatprep.subr.mxu0 0.0
  %11256 = vmatpush1.msra.mxu0 0.0
  %11257 = vmatprep.subr.mxu0 0.0
  %11258 = vmatpush1.msra.mxu0 0.0
  %11259 = vmatprep.subr.mxu0 0.0
  %11260 = vmatpush1.msra.mxu0 0.0
  %11261 = vmatprep.subr.mxu0 0.0
  %11262 = vmatpush1.msra.mxu0 0.0
  %11263 = vmatprep.subr.mxu0 0.0
  %11264 = vmatpush1.msra.mxu0 0.0
  %11265 = vmatprep.subr.mxu0 0.0
  %11266 = vmatpush1.msra.mxu0 0.0
  %11267 = vmatprep.subr.mxu0 0.0
  %11268 = vmatpush1.msra.mxu0 0.0
  %11269 = vmatprep.subr.mxu0 0.0
  %11270 = vmatpush1.msra.mxu0 0.0
  %11271 = vmatprep.subr.mxu0 0.0
  %11272 = vmatpush1.msra.mxu0 0.0
  %11273 = vmatprep.subr.mxu0 0.0
  %11274 = vmatpush1.msra.mxu0 0.0
  %11275 = vmatprep.subr.mxu0 0.0
  %11276 = vmatpush1.msra.mxu0 0.0
  %11277 = vmatprep.subr.mxu0 0.0
  %11278 = vmatpush1.msra.mxu0 0.0
  %11279 = vmatprep.subr.mxu0 0.0
  %11280 = vmatpush1.msra.mxu0 0.0
  %11281 = vmatprep.subr.mxu0 0.0
  %11282 = vmatpush1.msra.mxu0 0.0
  %11283 = vmatprep.subr.mxu0 0.0
  %11284 = vmatpush1.msra.mxu0 0.0
  %11285 = vmatprep.subr.mxu0 0.0
  %11286 = vmatpush1.msra.mxu0 0.0
  %11287 = vmatprep.subr.mxu0 0.0
  %11288 = vmatpush1.msra.mxu0 0.0
  %11289 = vmatprep.mubr.f32.mxu0 0.0
  %v11290 = vand.u32 %v774, 4294901760
  %11291 = vmatmul.mubr.f32.gmra.mrb[0].mxu0 %v11290
  %v11292 = vpop.f32.mrb[0].mxu0
  %v11293 = vadd.f32 %v11172, %v11292
  %v11294 = vpop.f32.mrb[0].mxu0
  %11295 = vmatprep.mubr.f32.mxu0 0.0
  %v11296 = vand.u32 %v777, 4294901760
  %11297 = vmatmul.mubr.f32.gmra.mrb[0].mxu0 %v11296
  %v11298 = vpop.f32.mrb[0].mxu0
  %v11299 = vadd.f32 %v11182, %v11298
  %v11300 = vpop.f32.mrb[0].mxu0
  %11301 = vmatprep.mubr.f32.mxu0 0.0
  %v11302 = vand.u32 %v780, 4294901760
  %11303 = vmatmul.mubr.f32.gmra.mrb[0].mxu0 %v11302
  %v11304 = vpop.f32.mrb[0].mxu0
  %v11305 = vadd.f32 %v11192, %v11304
  %v11306 = vpop.f32.mrb[0].mxu0
  %11307 = vmatprep.mubr.f32.mxu0 0.0
  %v11308 = vand.u32 %v783, 4294901760
  %11309 = vmatmul.mubr.f32.gmra.mrb[0].mxu0 %v11308
  %v11310 = vpop.f32.mrb[0].mxu0
  %v11311 = vadd.f32 %v11202, %v11310
  %v11312 = vpop.f32.mrb[0].mxu0
  %11313 = vdwg.mxu0
  %11314 = vmatprep.subr.mxu0 0.0
  %v11315 = vand.u32 %v11069, 4294901760
  %v11316 = vsub.f32 %v11069, %v11315
  %11317 = vmatpush1.msra.mxu0 %v11316
  %11318 = vmatprep.subr.mxu0 0.0
  %v11319 = vand.u32 %v11071, 4294901760
  %v11320 = vsub.f32 %v11071, %v11319
  %11321 = vmatpush1.msra.mxu0 %v11320
  %11322 = vmatprep.subr.mxu0 0.0
  %v11323 = vand.u32 %v11073, 4294901760
  %v11324 = vsub.f32 %v11073, %v11323
  %11325 = vmatpush1.msra.mxu0 %v11324
  %11326 = vmatprep.subr.mxu0 0.0
  %v11327 = vand.u32 %v11075, 4294901760
  %v11328 = vsub.f32 %v11075, %v11327
  %11329 = vmatpush1.msra.mxu0 %v11328
  %11330 = vmatprep.subr.mxu0 0.0
  %11331 = vmatpush1.msra.mxu0 0.0
  %11332 = vmatprep.subr.mxu0 0.0
  %11333 = vmatpush1.msra.mxu0 0.0
  %11334 = vmatprep.subr.mxu0 0.0
  %11335 = vmatpush1.msra.mxu0 0.0
  %11336 = vmatprep.subr.mxu0 0.0
  %11337 = vmatpush1.msra.mxu0 0.0
  %11338 = vmatprep.subr.mxu0 0.0
  %11339 = vmatpush1.msra.mxu0 0.0
  %11340 = vmatprep.subr.mxu0 0.0
  %11341 = vmatpush1.msra.mxu0 0.0
  %11342 = vmatprep.subr.mxu0 0.0
  %11343 = vmatpush1.msra.mxu0 0.0
  %11344 = vmatprep.subr.mxu0 0.0
  %11345 = vmatpush1.msra.mxu0 0.0
  %11346 = vmatprep.subr.mxu0 0.0
  %11347 = vmatpush1.msra.mxu0 0.0
  %11348 = vmatprep.subr.mxu0 0.0
  %11349 = vmatpush1.msra.mxu0 0.0
  %11350 = vmatprep.subr.mxu0 0.0
  %11351 = vmatpush1.msra.mxu0 0.0
  %11352 = vmatprep.subr.mxu0 0.0
  %11353 = vmatpush1.msra.mxu0 0.0
  %11354 = vmatprep.subr.mxu0 0.0
  %11355 = vmatpush1.msra.mxu0 0.0
  %11356 = vmatprep.subr.mxu0 0.0
  %11357 = vmatpush1.msra.mxu0 0.0
  %11358 = vmatprep.subr.mxu0 0.0
  %11359 = vmatpush1.msra.mxu0 0.0
  %11360 = vmatprep.subr.mxu0 0.0
  %11361 = vmatpush1.msra.mxu0 0.0
  %11362 = vmatprep.subr.mxu0 0.0
  %11363 = vmatpush1.msra.mxu0 0.0
  %11364 = vmatprep.subr.mxu0 0.0
  %11365 = vmatpush1.msra.mxu0 0.0
  %11366 = vmatprep.subr.mxu0 0.0
  %11367 = vmatpush1.msra.mxu0 0.0
  %11368 = vmatprep.subr.mxu0 0.0
  %11369 = vmatpush1.msra.mxu0 0.0
  %11370 = vmatprep.subr.mxu0 0.0
  %11371 = vmatpush1.msra.mxu0 0.0
  %11372 = vmatprep.subr.mxu0 0.0
  %11373 = vmatpush1.msra.mxu0 0.0
  %11374 = vmatprep.subr.mxu0 0.0
  %11375 = vmatpush1.msra.mxu0 0.0
  %11376 = vmatprep.subr.mxu0 0.0
  %11377 = vmatpush1.msra.mxu0 0.0
  %11378 = vmatprep.subr.mxu0 0.0
  %11379 = vmatpush1.msra.mxu0 0.0
  %11380 = vmatprep.subr.mxu0 0.0
  %11381 = vmatpush1.msra.mxu0 0.0
  %11382 = vmatprep.subr.mxu0 0.0
  %11383 = vmatpush1.msra.mxu0 0.0
  %11384 = vmatprep.subr.mxu0 0.0
  %11385 = vmatpush1.msra.mxu0 0.0
  %11386 = vmatprep.mubr.f32.mxu0 0.0
  %v11387 = vand.u32 %v774, 4294901760
  %v11388 = vsub.f32 %v774, %v11387
  %11389 = vmatmul.mubr.f32.gmra.mrb[0].mxu0 %v11388
  %v11390 = vpop.f32.mrb[0].mxu0
  %v11391 = vadd.f32 %v11293, %v11390
  %v11392 = vpop.f32.mrb[0].mxu0
  %11393 = vmatprep.mubr.f32.mxu0 0.0
  %v11394 = vand.u32 %v777, 4294901760
  %v11395 = vsub.f32 %v777, %v11394
  %11396 = vmatmul.mubr.f32.gmra.mrb[0].mxu0 %v11395
  %v11397 = vpop.f32.mrb[0].mxu0
  %v11398 = vadd.f32 %v11299, %v11397
  %v11399 = vpop.f32.mrb[0].mxu0
  %11400 = vmatprep.mubr.f32.mxu0 0.0
  %v11401 = vand.u32 %v780, 4294901760
  %v11402 = vsub.f32 %v780, %v11401
  %11403 = vmatmul.mubr.f32.gmra.mrb[0].mxu0 %v11402
  %v11404 = vpop.f32.mrb[0].mxu0
  %v11405 = vadd.f32 %v11305, %v11404
  %v11406 = vpop.f32.mrb[0].mxu0
  %11407 = vmatprep.mubr.f32.mxu0 0.0
  %v11408 = vand.u32 %v783, 4294901760
  %v11409 = vsub.f32 %v783, %v11408
  %11410 = vmatmul.mubr.f32.gmra.mrb[0].mxu0 %v11409
  %v11411 = vpop.f32.mrb[0].mxu0
  %v11412 = vadd.f32 %v11311, %v11411
  %v11413 = vpop.f32.mrb[0].mxu0
  %11414 = vdwg.mxu0
  %11415 = vmatprep.subr.mxu0 0.0
  %v11416 = vand.u32 %v11069, 4294901760
  %11417 = vmatpush1.msra.mxu0 %v11416
  %11418 = vmatprep.subr.mxu0 0.0
  %v11419 = vand.u32 %v11071, 4294901760
  %11420 = vmatpush1.msra.mxu0 %v11419
  %11421 = vmatprep.subr.mxu0 0.0
  %v11422 = vand.u32 %v11073, 4294901760
  %11423 = vmatpush1.msra.mxu0 %v11422
  %11424 = vmatprep.subr.mxu0 0.0
  %v11425 = vand.u32 %v11075, 4294901760
  %11426 = vmatpush1.msra.mxu0 %v11425
  %11427 = vmatprep.subr.mxu0 0.0
  %11428 = vmatpush1.msra.mxu0 0.0
  %11429 = vmatprep.subr.mxu0 0.0
  %11430 = vmatpush1.msra.mxu0 0.0
  %11431 = vmatprep.subr.mxu0 0.0
  %11432 = vmatpush1.msra.mxu0 0.0
  %11433 = vmatprep.subr.mxu0 0.0
  %11434 = vmatpush1.msra.mxu0 0.0
  %11435 = vmatprep.subr.mxu0 0.0
  %11436 = vmatpush1.msra.mxu0 0.0
  %11437 = vmatprep.subr.mxu0 0.0
  %11438 = vmatpush1.msra.mxu0 0.0
  %11439 = vmatprep.subr.mxu0 0.0
  %11440 = vmatpush1.msra.mxu0 0.0
  %11441 = vmatprep.subr.mxu0 0.0
  %11442 = vmatpush1.msra.mxu0 0.0
  %11443 = vmatprep.subr.mxu0 0.0
  %11444 = vmatpush1.msra.mxu0 0.0
  %11445 = vmatprep.subr.mxu0 0.0
  %11446 = vmatpush1.msra.mxu0 0.0
  %11447 = vmatprep.subr.mxu0 0.0
  %11448 = vmatpush1.msra.mxu0 0.0
  %11449 = vmatprep.subr.mxu0 0.0
  %11450 = vmatpush1.msra.mxu0 0.0
  %11451 = vmatprep.subr.mxu0 0.0
  %11452 = vmatpush1.msra.mxu0 0.0
  %11453 = vmatprep.subr.mxu0 0.0
  %11454 = vmatpush1.msra.mxu0 0.0
  %11455 = vmatprep.subr.mxu0 0.0
  %11456 = vmatpush1.msra.mxu0 0.0
  %11457 = vmatprep.subr.mxu0 0.0
  %11458 = vmatpush1.msra.mxu0 0.0
  %11459 = vmatprep.subr.mxu0 0.0
  %11460 = vmatpush1.msra.mxu0 0.0
  %11461 = vmatprep.subr.mxu0 0.0
  %11462 = vmatpush1.msra.mxu0 0.0
  %11463 = vmatprep.subr.mxu0 0.0
  %11464 = vmatpush1.msra.mxu0 0.0
  %11465 = vmatprep.subr.mxu0 0.0
  %11466 = vmatpush1.msra.mxu0 0.0
  %11467 = vmatprep.subr.mxu0 0.0
  %11468 = vmatpush1.msra.mxu0 0.0
  %11469 = vmatprep.subr.mxu0 0.0
  %11470 = vmatpush1.msra.mxu0 0.0
  %11471 = vmatprep.subr.mxu0 0.0
  %11472 = vmatpush1.msra.mxu0 0.0
  %11473 = vmatprep.subr.mxu0 0.0
  %11474 = vmatpush1.msra.mxu0 0.0
  %11475 = vmatprep.subr.mxu0 0.0
  %11476 = vmatpush1.msra.mxu0 0.0
  %11477 = vmatprep.subr.mxu0 0.0
  %11478 = vmatpush1.msra.mxu0 0.0
  %11479 = vmatprep.subr.mxu0 0.0
  %11480 = vmatpush1.msra.mxu0 0.0
  %11481 = vmatprep.subr.mxu0 0.0
  %11482 = vmatpush1.msra.mxu0 0.0
  %11483 = vmatprep.mubr.f32.mxu0 0.0
  %v11484 = vand.u32 %v774, 4294901760
  %v11485 = vsub.f32 %v774, %v11484
  %v11486 = vand.u32 %v11485, 4294901760
  %11487 = vmatmul.mubr.f32.gmra.mrb[0].mxu0 %v11486
  %v11488 = vpop.f32.mrb[0].mxu0
  %v11489 = vadd.f32 %v11391, %v11488
  %v11490 = vpop.f32.mrb[0].mxu0
  %11491 = vmatprep.mubr.f32.mxu0 0.0
  %v11492 = vand.u32 %v777, 4294901760
  %v11493 = vsub.f32 %v777, %v11492
  %v11494 = vand.u32 %v11493, 4294901760
  %11495 = vmatmul.mubr.f32.gmra.mrb[0].mxu0 %v11494
  %v11496 = vpop.f32.mrb[0].mxu0
  %v11497 = vadd.f32 %v11398, %v11496
  %v11498 = vpop.f32.mrb[0].mxu0
  %11499 = vmatprep.mubr.f32.mxu0 0.0
  %v11500 = vand.u32 %v780, 4294901760
  %v11501 = vsub.f32 %v780, %v11500
  %v11502 = vand.u32 %v11501, 4294901760
  %11503 = vmatmul.mubr.f32.gmra.mrb[0].mxu0 %v11502
  %v11504 = vpop.f32.mrb[0].mxu0
  %v11505 = vadd.f32 %v11405, %v11504
  %v11506 = vpop.f32.mrb[0].mxu0
  %11507 = vmatprep.mubr.f32.mxu0 0.0
  %v11508 = vand.u32 %v783, 4294901760
  %v11509 = vsub.f32 %v783, %v11508
  %v11510 = vand.u32 %v11509, 4294901760
  %11511 = vmatmul.mubr.f32.gmra.mrb[0].mxu0 %v11510
  %v11512 = vpop.f32.mrb[0].mxu0
  %v11513 = vadd.f32 %v11412, %v11512
  %v11514 = vpop.f32.mrb[0].mxu0
  %11515 = vdwg.mxu0
  %11516 = vmatprep.subr.mxu0 0.0
  %v11517 = vand.u32 %v11069, 4294901760
  %v11518 = vsub.f32 %v11069, %v11517
  %v11519 = vand.u32 %v11518, 4294901760
  %11520 = vmatpush1.msra.mxu0 %v11519
  %11521 = vmatprep.subr.mxu0 0.0
  %v11522 = vand.u32 %v11071, 4294901760
  %v11523 = vsub.f32 %v11071, %v11522
  %v11524 = vand.u32 %v11523, 4294901760
  %11525 = vmatpush1.msra.mxu0 %v11524
  %11526 = vmatprep.subr.mxu0 0.0
  %v11527 = vand.u32 %v11073, 4294901760
  %v11528 = vsub.f32 %v11073, %v11527
  %v11529 = vand.u32 %v11528, 4294901760
  %11530 = vmatpush1.msra.mxu0 %v11529
  %11531 = vmatprep.subr.mxu0 0.0
  %v11532 = vand.u32 %v11075, 4294901760
  %v11533 = vsub.f32 %v11075, %v11532
  %v11534 = vand.u32 %v11533, 4294901760
  %11535 = vmatpush1.msra.mxu0 %v11534
  %11536 = vmatprep.subr.mxu0 0.0
  %11537 = vmatpush1.msra.mxu0 0.0
  %11538 = vmatprep.subr.mxu0 0.0
  %11539 = vmatpush1.msra.mxu0 0.0
  %11540 = vmatprep.subr.mxu0 0.0
  %11541 = vmatpush1.msra.mxu0 0.0
  %11542 = vmatprep.subr.mxu0 0.0
  %11543 = vmatpush1.msra.mxu0 0.0
  %11544 = vmatprep.subr.mxu0 0.0
  %11545 = vmatpush1.msra.mxu0 0.0
  %11546 = vmatprep.subr.mxu0 0.0
  %11547 = vmatpush1.msra.mxu0 0.0
  %11548 = vmatprep.subr.mxu0 0.0
  %11549 = vmatpush1.msra.mxu0 0.0
  %11550 = vmatprep.subr.mxu0 0.0
  %11551 = vmatpush1.msra.mxu0 0.0
  %11552 = vmatprep.subr.mxu0 0.0
  %11553 = vmatpush1.msra.mxu0 0.0
  %11554 = vmatprep.subr.mxu0 0.0
  %11555 = vmatpush1.msra.mxu0 0.0
  %11556 = vmatprep.subr.mxu0 0.0
  %11557 = vmatpush1.msra.mxu0 0.0
  %11558 = vmatprep.subr.mxu0 0.0
  %11559 = vmatpush1.msra.mxu0 0.0
  %11560 = vmatprep.subr.mxu0 0.0
  %11561 = vmatpush1.msra.mxu0 0.0
  %11562 = vmatprep.subr.mxu0 0.0
  %11563 = vmatpush1.msra.mxu0 0.0
  %11564 = vmatprep.subr.mxu0 0.0
  %11565 = vmatpush1.msra.mxu0 0.0
  %11566 = vmatprep.subr.mxu0 0.0
  %11567 = vmatpush1.msra.mxu0 0.0
  %11568 = vmatprep.subr.mxu0 0.0
  %11569 = vmatpush1.msra.mxu0 0.0
  %11570 = vmatprep.subr.mxu0 0.0
  %11571 = vmatpush1.msra.mxu0 0.0
  %11572 = vmatprep.subr.mxu0 0.0
  %11573 = vmatpush1.msra.mxu0 0.0
  %11574 = vmatprep.subr.mxu0 0.0
  %11575 = vmatpush1.msra.mxu0 0.0
  %11576 = vmatprep.subr.mxu0 0.0
  %11577 = vmatpush1.msra.mxu0 0.0
  %11578 = vmatprep.subr.mxu0 0.0
  %11579 = vmatpush1.msra.mxu0 0.0
  %11580 = vmatprep.subr.mxu0 0.0
  %11581 = vmatpush1.msra.mxu0 0.0
  %11582 = vmatprep.subr.mxu0 0.0
  %11583 = vmatpush1.msra.mxu0 0.0
  %11584 = vmatprep.subr.mxu0 0.0
  %11585 = vmatpush1.msra.mxu0 0.0
  %11586 = vmatprep.subr.mxu0 0.0
  %11587 = vmatpush1.msra.mxu0 0.0
  %11588 = vmatprep.subr.mxu0 0.0
  %11589 = vmatpush1.msra.mxu0 0.0
  %11590 = vmatprep.subr.mxu0 0.0
  %11591 = vmatpush1.msra.mxu0 0.0
  %11592 = vmatprep.mubr.f32.mxu0 0.0
  %v11593 = vand.u32 %v774, 4294901760
  %11594 = vmatmul.mubr.f32.gmra.mrb[0].mxu0 %v11593
  %v11595 = vpop.f32.mrb[0].mxu0
  %v11596 = vadd.f32 %v11489, %v11595
  %v11597 = vpop.f32.mrb[0].mxu0
  %11598 = vmatprep.mubr.f32.mxu0 0.0
  %v11599 = vand.u32 %v777, 4294901760
  %11600 = vmatmul.mubr.f32.gmra.mrb[0].mxu0 %v11599
  %v11601 = vpop.f32.mrb[0].mxu0
  %v11602 = vadd.f32 %v11497, %v11601
  %v11603 = vpop.f32.mrb[0].mxu0
  %11604 = vmatprep.mubr.f32.mxu0 0.0
  %v11605 = vand.u32 %v780, 4294901760
  %11606 = vmatmul.mubr.f32.gmra.mrb[0].mxu0 %v11605
  %v11607 = vpop.f32.mrb[0].mxu0
  %v11608 = vadd.f32 %v11505, %v11607
  %v11609 = vpop.f32.mrb[0].mxu0
  %11610 = vmatprep.mubr.f32.mxu0 0.0
  %v11611 = vand.u32 %v783, 4294901760
  %11612 = vmatmul.mubr.f32.gmra.mrb[0].mxu0 %v11611
  %v11613 = vpop.f32.mrb[0].mxu0
  %v11614 = vadd.f32 %v11513, %v11613
  %v11615 = vpop.f32.mrb[0].mxu0
  %11616 = vdwg.mxu0
  %11617 = vmatprep.subr.mxu0 0.0
  %v11618 = vand.u32 %v11069, 4294901760
  %11619 = vmatpush1.msra.mxu0 %v11618
  %11620 = vmatprep.subr.mxu0 0.0
  %v11621 = vand.u32 %v11071, 4294901760
  %11622 = vmatpush1.msra.mxu0 %v11621
  %11623 = vmatprep.subr.mxu0 0.0
  %v11624 = vand.u32 %v11073, 4294901760
  %11625 = vmatpush1.msra.mxu0 %v11624
  %11626 = vmatprep.subr.mxu0 0.0
  %v11627 = vand.u32 %v11075, 4294901760
  %11628 = vmatpush1.msra.mxu0 %v11627
  %11629 = vmatprep.subr.mxu0 0.0
  %11630 = vmatpush1.msra.mxu0 0.0
  %11631 = vmatprep.subr.mxu0 0.0
  %11632 = vmatpush1.msra.mxu0 0.0
  %11633 = vmatprep.subr.mxu0 0.0
  %11634 = vmatpush1.msra.mxu0 0.0
  %11635 = vmatprep.subr.mxu0 0.0
  %11636 = vmatpush1.msra.mxu0 0.0
  %11637 = vmatprep.subr.mxu0 0.0
  %11638 = vmatpush1.msra.mxu0 0.0
  %11639 = vmatprep.subr.mxu0 0.0
  %11640 = vmatpush1.msra.mxu0 0.0
  %11641 = vmatprep.subr.mxu0 0.0
  %11642 = vmatpush1.msra.mxu0 0.0
  %11643 = vmatprep.subr.mxu0 0.0
  %11644 = vmatpush1.msra.mxu0 0.0
  %11645 = vmatprep.subr.mxu0 0.0
  %11646 = vmatpush1.msra.mxu0 0.0
  %11647 = vmatprep.subr.mxu0 0.0
  %11648 = vmatpush1.msra.mxu0 0.0
  %11649 = vmatprep.subr.mxu0 0.0
  %11650 = vmatpush1.msra.mxu0 0.0
  %11651 = vmatprep.subr.mxu0 0.0
  %11652 = vmatpush1.msra.mxu0 0.0
  %11653 = vmatprep.subr.mxu0 0.0
  %11654 = vmatpush1.msra.mxu0 0.0
  %11655 = vmatprep.subr.mxu0 0.0
  %11656 = vmatpush1.msra.mxu0 0.0
  %11657 = vmatprep.subr.mxu0 0.0
  %11658 = vmatpush1.msra.mxu0 0.0
  %11659 = vmatprep.subr.mxu0 0.0
  %11660 = vmatpush1.msra.mxu0 0.0
  %11661 = vmatprep.subr.mxu0 0.0
  %11662 = vmatpush1.msra.mxu0 0.0
  %11663 = vmatprep.subr.mxu0 0.0
  %11664 = vmatpush1.msra.mxu0 0.0
  %11665 = vmatprep.subr.mxu0 0.0
  %11666 = vmatpush1.msra.mxu0 0.0
  %11667 = vmatprep.subr.mxu0 0.0
  %11668 = vmatpush1.msra.mxu0 0.0
  %11669 = vmatprep.subr.mxu0 0.0
  %11670 = vmatpush1.msra.mxu0 0.0
  %11671 = vmatprep.subr.mxu0 0.0
  %11672 = vmatpush1.msra.mxu0 0.0
  %11673 = vmatprep.subr.mxu0 0.0
  %11674 = vmatpush1.msra.mxu0 0.0
  %11675 = vmatprep.subr.mxu0 0.0
  %11676 = vmatpush1.msra.mxu0 0.0
  %11677 = vmatprep.subr.mxu0 0.0
  %11678 = vmatpush1.msra.mxu0 0.0
  %11679 = vmatprep.subr.mxu0 0.0
  %11680 = vmatpush1.msra.mxu0 0.0
  %11681 = vmatprep.subr.mxu0 0.0
  %11682 = vmatpush1.msra.mxu0 0.0
  %11683 = vmatprep.subr.mxu0 0.0
  %11684 = vmatpush1.msra.mxu0 0.0
  %11685 = vmatprep.mubr.f32.mxu0 0.0
  %v11686 = vand.u32 %v774, 4294901760
  %11687 = vmatmul.mubr.f32.gmra.mrb[0].mxu0 %v11686
  %v11688 = vpop.f32.mrb[0].mxu0
  %v11689 = vadd.f32 %v11596, %v11688
  %v11690 = vpop.f32.mrb[0].mxu0
  %11691 = vmatprep.mubr.f32.mxu0 0.0
  %v11692 = vand.u32 %v777, 4294901760
  %11693 = vmatmul.mubr.f32.gmra.mrb[0].mxu0 %v11692
  %v11694 = vpop.f32.mrb[0].mxu0
  %v11695 = vadd.f32 %v11602, %v11694
  %v11696 = vpop.f32.mrb[0].mxu0
  %11697 = vmatprep.mubr.f32.mxu0 0.0
  %v11698 = vand.u32 %v780, 4294901760
  %11699 = vmatmul.mubr.f32.gmra.mrb[0].mxu0 %v11698
  %v11700 = vpop.f32.mrb[0].mxu0
  %v11701 = vadd.f32 %v11608, %v11700
  %v11702 = vpop.f32.mrb[0].mxu0
  %11703 = vmatprep.mubr.f32.mxu0 0.0
  %v11704 = vand.u32 %v783, 4294901760
  %11705 = vmatmul.mubr.f32.gmra.mrb[0].mxu0 %v11704
  %v11706 = vpop.f32.mrb[0].mxu0
  %v11707 = vadd.f32 %v11614, %v11706
  %v11708 = vpop.f32.mrb[0].mxu0
  %11709 = vdwg.mxu0
  %v11710 = vadd.f32 %v11689, %v11060
  %v11711 = vadd.f32 %v11695, %v11061
  %v11712 = vadd.f32 %v11701, %v11062
  %v11713 = vadd.f32 %v11707, %v11063
  %v11714 = vxor.u32 %v11710, 2147483648
  %v11715 = vxor.u32 %v11711, 2147483648
  %v11716 = vxor.u32 %v11712, 2147483648
  %v11717 = vxor.u32 %v11713, 2147483648
  %v11718 = vmul.f32 %v11714, 1.442695
  %v11719 = vpow.pop %v11718
  %v11720 = vmul.f32 %v11715, 1.442695
  %v11721 = vpow.pop %v11720
  %v11722 = vmul.f32 %v11716, 1.442695
  %v11723 = vpow.pop %v11722
  %v11724 = vmul.f32 %v11717, 1.442695
  %v11725 = vpow.pop %v11724
  %v11726 = vadd.f32 %v11719, 1.0
  %v11727 = vadd.f32 %v11721, 1.0
  %v11728 = vadd.f32 %v11723, 1.0
  %v11729 = vadd.f32 %v11725, 1.0
  %v11730 = vrcp.pop %v11726
  %v11731 = vmul.f32 1.0, %v11730
  %v11732 = vrcp.pop %v11727
  %v11733 = vmul.f32 1.0, %v11732
  %v11734 = vrcp.pop %v11728
  %v11735 = vmul.f32 1.0, %v11734
  %v11736 = vrcp.pop %v11729
  %v11737 = vmul.f32 1.0, %v11736
  %11742 = vrot.lane.b32.xlu0 %v11060, 96
  %v11743 = vpop.permute.xlu0 %11742
  %11744 = vrot.lane.b32.xlu0 %v11061, 96
  %v11745 = vpop.permute.xlu0 %11744
  %11746 = vrot.lane.b32.xlu0 %v11062, 96
  %v11747 = vpop.permute.xlu0 %11746
  %11748 = vrot.lane.b32.xlu0 %v11063, 96
  %v11749 = vpop.permute.xlu0 %11748
  %v11754 = vadd.f32 %v11689, %v11743
  %v11755 = vadd.f32 %v11695, %v11745
  %v11756 = vadd.f32 %v11701, %v11747
  %v11757 = vadd.f32 %v11707, %v11749
  %v11758 = vxor.u32 %v11754, 2147483648
  %v11759 = vxor.u32 %v11755, 2147483648
  %v11760 = vxor.u32 %v11756, 2147483648
  %v11761 = vxor.u32 %v11757, 2147483648
  %v11762 = vmul.f32 %v11758, 1.442695
  %v11763 = vpow.pop %v11762
  %v11764 = vmul.f32 %v11759, 1.442695
  %v11765 = vpow.pop %v11764
  %v11766 = vmul.f32 %v11760, 1.442695
  %v11767 = vpow.pop %v11766
  %v11768 = vmul.f32 %v11761, 1.442695
  %v11769 = vpow.pop %v11768
  %v11770 = vadd.f32 %v11763, 1.0
  %v11771 = vadd.f32 %v11765, 1.0
  %v11772 = vadd.f32 %v11767, 1.0
  %v11773 = vadd.f32 %v11769, 1.0
  %v11774 = vrcp.pop %v11770
  %v11775 = vmul.f32 1.0, %v11774
  %v11776 = vrcp.pop %v11771
  %v11777 = vmul.f32 1.0, %v11776
  %v11778 = vrcp.pop %v11772
  %v11779 = vmul.f32 1.0, %v11778
  %v11780 = vrcp.pop %v11773
  %v11781 = vmul.f32 1.0, %v11780
  %11782 = vrot.lane.b32.xlu0 %v11060, 64
  %v11783 = vpop.permute.xlu0 %11782
  %11784 = vrot.lane.b32.xlu0 %v11061, 64
  %v11785 = vpop.permute.xlu0 %11784
  %11786 = vrot.lane.b32.xlu0 %v11062, 64
  %v11787 = vpop.permute.xlu0 %11786
  %11788 = vrot.lane.b32.xlu0 %v11063, 64
  %v11789 = vpop.permute.xlu0 %11788
  %v11794 = vmul.f32 %v11731, %v11783
  %v11795 = vmul.f32 %v11733, %v11785
  %v11796 = vmul.f32 %v11735, %v11787
  %v11797 = vmul.f32 %v11737, %v11789
  %v11798 = vadd.f32 %v11689, %v11794
  %v11799 = vadd.f32 %v11695, %v11795
  %v11800 = vadd.f32 %v11701, %v11796
  %v11801 = vadd.f32 %v11707, %v11797
  %v11802 = vtanh.pop %v11798
  %v11803 = vtanh.pop %v11799
  %v11804 = vtanh.pop %v11800
  %v11805 = vtanh.pop %v11801
  %v11806 = vsub.f32 1.0, %v11775
  %v11807 = vsub.f32 1.0, %v11777
  %v11808 = vsub.f32 1.0, %v11779
  %v11809 = vsub.f32 1.0, %v11781
  %v11810 = vmul.f32 %v11806, %v11802
  %v11811 = vmul.f32 %v11807, %v11803
  %v11812 = vmul.f32 %v11808, %v11804
  %v11813 = vmul.f32 %v11809, %v11805
  %v11814 = vmul.f32 %v11775, %v10345
  %v11815 = vmul.f32 %v11777, %v10346
  %v11816 = vmul.f32 %v11779, %v10347
  %v11817 = vmul.f32 %v11781, %v10348
  %v11818 = vadd.f32 %v11810, %v11814
  %v11819 = vadd.f32 %v11811, %v11815
  %v11820 = vadd.f32 %v11812, %v11816
  %v11821 = vadd.f32 %v11813, %v11817
  %11822 = vst.msk [vmem:[%s3] sm:$0xff] %vm35, %v11818
  %11823 = vst.msk [vmem:[%s3 + $0x8] sm:$0xff] %vm35, %v11819
  %11824 = vst.msk [vmem:[%s3 + $0x10] sm:$0xff] %vm35, %v11820
  %11825 = vst.msk [vmem:[%s3 + $0x18] sm:$0xff] %vm35, %v11821
  // Predicated region
  $region14: #{_lambda_.1} parent=0 // pred_check
    _
  $region15: #{_lambda_.1} parent=0 // pred_check_branch
    %11827 = sbr.rel (0) target = $region17
  $region16: #{_lambda_.1} parent=0 // pred_region
    _
  $region17: #{_lambda_.1} parent=0 // pred_fallthru
    _
  // Predicated region
  $region18: #{_lambda_.1} parent=0 // pred_check
    _
  $region19: #{_lambda_.1} parent=0 // pred_check_branch
    %11829 = sbr.rel (0) target = $region21
  $region20: #{_lambda_.1} parent=0 // pred_region
    _
  $region21: #{_lambda_.1} parent=0 // pred_fallthru
    _

</llo_original>
